<compile_context>
chip_gen: v5e
topology: v5e:2x2
jax: 0.10.0
libtpu: 0.0.40
codegen_flags: <defaults>
</compile_context>

<pallas_src>
import numpy as np
import jax
import jax.numpy as jnp
from jax.experimental import pallas as pl
from jax.experimental.pallas import tpu as pltpu

PAD = 128           # head feature width / output lane width
HID = 256           # shared-trunk hidden width
BN_EPS = 1e-5       # PyTorch BatchNorm1d default eps
SHARED_DIMS = [None, 256, 256, 128]        # [feature_input_dim, 256, 256, 128]
HEAD_DIMS = [128, 128, 128, 128, 1]


def _cdiv(a, b):
    return -(-a // b)


def _round_up(n, m):
    return _cdiv(n, m) * m


# ----------------------------- Pallas kernel -------------------------------

def _resblock(x, sc1, sh1, w1, sh2, w2, wd=None, bd=None):
    """Pre-activation VectorResBlock with BN folded.

    out = fc2(relu(fc1(relu(x*sc1+sh1)) + sh2)) + skip(x)
    BN2 scale is pre-folded into w1 columns; sh2 is the additive shift.
    skip(x) = x (identity) when wd is None, else x @ wd + bd (BNd folded in).
    Activations stay f32; weights may be bf16 (f32 MXU accumulation).
    """
    h = jnp.maximum(x * sc1 + sh1, 0.0)
    h = jnp.dot(h.astype(w1.dtype), w1, preferred_element_type=jnp.float32) + sh2
    h = jnp.maximum(h, 0.0)
    out = jnp.dot(h.astype(w2.dtype), w2, preferred_element_type=jnp.float32)
    if wd is None:
        identity = x
    else:
        identity = jnp.dot(x.astype(wd.dtype), wd,
                           preferred_element_type=jnp.float32) + bd
    return out + identity


def bestgain_kernel(x_ref,
                    s1_sc1, s1_sh1, s1_w1, s1_sh2, s1_w2, s1_wd, s1_bd,
                    s2_sc1, s2_sh1, s2_w1, s2_sh2, s2_w2,
                    s3_sc1, s3_sh1, s3_w1, s3_sh2, s3_w2, s3_wd, s3_bd,
                    gm_sc1, gm_sh1, gm_w1, gm_sh2, gm_w2,
                    gl_sc1, gl_sh1, gl_w1, gl_sh2, gl_w2v, gl_wd, gl_bd,
                    out_ref):
    x = x_ref[...]                                           # (tm, fin_pad)

    # shared trunk: 3 x (VectorResBlock -> ReLU)
    feat = jnp.maximum(
        _resblock(x, s1_sc1[...], s1_sh1[...], s1_w1[...],
                  s1_sh2[...], s1_w2[...], s1_wd[...], s1_bd[...]), 0.0)   # (tm, 256)
    feat = jnp.maximum(
        _resblock(feat, s2_sc1[...], s2_sh1[...], s2_w1[...],
                  s2_sh2[...], s2_w2[...]), 0.0)                           # identity skip
    feat = jnp.maximum(
        _resblock(feat, s3_sc1[...], s3_sh1[...], s3_w1[...],
                  s3_sh2[...], s3_w2[...], s3_wd[...], s3_bd[...]), 0.0)   # (tm, 128)

    ngroups = gm_w1.shape[0]
    gw = gm_w1.shape[-1]
    group = gw // PAD                                        # 1 or 2 heads per group

    # Group input: each head in a group sees the same shared feature, so the
    # paired path duplicates feat into both 128-lane halves of a 256-lane slab.
    gin = jnp.concatenate([feat] * group, axis=-1) if group > 1 else feat

    # Per-head-group path: 3 x (block-diag ResBlock -> ReLU), then the final
    # (group*128 -> per-head scalar) block.  Each head's scalar lands directly
    # in its own lane h of a (tm, 128) tile (packed into the weights), so
    # summing group outputs packs the result lane-densely with no relayouts.
    acc = None
    for p in range(ngroups):
        y = gin
        for b in range(3):
            y = jnp.maximum(
                _resblock(y, gm_sc1[p, b], gm_sh1[p, b], gm_w1[p, b],
                          gm_sh2[p, b], gm_w2[p, b]), 0.0)   # identity skip
        # final block (128 -> 1 per head), fc2 is 1x1 -> lane-scale, no matmul
        t = jnp.maximum(y * gl_sc1[p] + gl_sh1[p], 0.0)
        u = jnp.dot(t.astype(gl_w1.dtype), gl_w1[p],
                    preferred_element_type=jnp.float32) + gl_sh2[p]
        u = jnp.maximum(u, 0.0) * gl_w2v[p]
        iden = jnp.dot(y.astype(gl_wd.dtype), gl_wd[p],
                       preferred_element_type=jnp.float32) + gl_bd[p]
        o = u + iden                                          # nonzero only at group lanes
        acc = o if acc is None else acc + o                   # running accumulator

    out_ref[...] = acc                                        # (tm, 128), lane-dense store


# ------------------------------ JAX wrapper ---------------------------------

def bestgain_forward(x, packed, num_bs, *, tm=256):
    """x: (B, feature_input_dim) f32 -> (B, num_bs) f32 (== torch forward, eval mode)."""
    B, fin = x.shape
    assert 1 <= num_bs <= PAD

    fin_pad = packed[2].shape[0]            # s1_w1 rows (fin rounded up to 8)
    assert fin <= fin_pad

    # Batch tiling: >=2 grid steps whenever the batch allows so both v7x
    # TensorCores get work; tile size also limits wasted padded rows.
    n_steps = max(2, _cdiv(B, tm)) if B >= 16 else 1
    tm_eff = _round_up(_cdiv(B, n_steps), 8)
    B_pad = tm_eff * n_steps

    x32 = x.astype(jnp.float32)
    if B_pad != B or fin_pad != fin:
        x_in = jnp.zeros((B_pad, fin_pad), jnp.float32).at[:B, :fin].set(x32)
    else:
        x_in = x32

    in_specs = [pl.BlockSpec((tm_eff, fin_pad), lambda i: (i, 0))]
    for a in packed:
        # Parameters are resident every grid step (full-array block, constant
        # index) -> a single pipeline buffer is enough.
        in_specs.append(pl.BlockSpec(a.shape,
                                     (lambda nd: (lambda i: (0,) * nd))(a.ndim),
                                     pipeline_mode=pl.Buffered(1)))

    # Param VMEM (single-buffered): ~0.9 MiB bf16 per head pair + ~0.6 MiB
    # trunk; fits default scoped VMEM for small/medium num_bs on all
    # generations.  Raise vmem_limit_bytes for num_bs >~ 32.
    out = pl.pallas_call(
        bestgain_kernel,
        out_shape=jax.ShapeDtypeStruct((B_pad, PAD), jnp.float32),
        grid=(n_steps,),
        in_specs=in_specs,
        out_specs=pl.BlockSpec((tm_eff, PAD), lambda i: (i, 0)),
        compiler_params=pltpu.CompilerParams(dimension_semantics=("parallel",)),
    )(x_in, *packed)

    return out[:B, :num_bs]                 # strip padding rows / lanes


def bestgain_pred(x, packed, num_bs, params_norm=(20.0, 7.0), **kw):
    """PyTorch .pred(): de-normalized best-gain prediction."""
    out = bestgain_forward(x, packed, num_bs, **kw)
    return params_norm[0] * (out - params_norm[1])


# --------------------- deterministic parameter creation ---------------------

def init_raw_params(key, feature_input_dim, num_bs):
    dims = list(SHARED_DIMS)
    dims[0] = feature_input_dim

    def next_key():
        nonlocal key
        key, sub = jax.random.split(key)
        return sub

    def make_bn(n):  # simulate a trained BN: gamma/beta/running mean/var
        gamma = 1.0 + 0.1 * jax.random.normal(next_key(), (n,), jnp.float32)
        beta = 0.1 * jax.random.normal(next_key(), (n,), jnp.float32)
        mean = 0.1 * jax.random.normal(next_key(), (n,), jnp.float32)
        var = jnp.abs(1.0 + 0.1 * jax.random.normal(next_key(), (n,), jnp.float32))
        return gamma, beta, mean, var

    def make_linear(out_f, in_f):  # xavier_normal, bias=False
        std = (2.0 / (in_f + out_f)) ** 0.5
        return std * jax.random.normal(next_key(), (out_f, in_f), jnp.float32)

    def make_block(in_f, out_f):
        blk = {"bn1": make_bn(in_f), "w1": make_linear(out_f, in_f),
               "bn2": make_bn(out_f), "w2": make_linear(out_f, out_f)}
        if in_f != out_f:
            blk["wd"] = make_linear(out_f, in_f)
            blk["bnd"] = make_bn(out_f)
        return blk

    shared = [make_block(dims[i], dims[i + 1]) for i in range(len(dims) - 1)]
    heads = [[make_block(HEAD_DIMS[i], HEAD_DIMS[i + 1])
              for i in range(len(HEAD_DIMS) - 1)] for _ in range(num_bs)]
    return shared, heads


# ------------------------------ weight packing -------------------------------

def _fold_bn(bn):
    gamma, beta, mean, var = bn
    scale = gamma / jnp.sqrt(var + BN_EPS)
    shift = beta - mean * scale
    return scale, shift


def _row(v, n, off=0):
    return jnp.zeros((1, n), jnp.float32).at[0, off:off + v.shape[0]].set(v)


def _pack_shared_block(blk, in_dim, in_pad, out_dim, wdtype):
    """Fold BN, pre-scale fc1/downsample by their trailing BN, transpose."""
    sc1, sh1 = _fold_bn(blk["bn1"])
    sc2, sh2 = _fold_bn(blk["bn2"])
    w1t = jnp.zeros((in_pad, out_dim), jnp.float32).at[:in_dim, :].set(
        (blk["w1"] * sc2[:, None]).T)
    w2t = blk["w2"].T
    parts = [_row(sc1, in_pad), _row(sh1, in_pad),
             w1t.astype(wdtype), _row(sh2, out_dim), w2t.astype(wdtype)]
    if "wd" in blk:
        scd, shd = _fold_bn(blk["bnd"])
        wdt = jnp.zeros((in_pad, out_dim), jnp.float32).at[:in_dim, :].set(
            (blk["wd"] * scd[:, None]).T)
        parts += [wdt.astype(wdtype), _row(shd, out_dim)]
    return parts


def pack_params(shared, heads, num_bs, weight_dtype=jnp.bfloat16, head_group=2):
    """Fold BN + pack.  head_group=2 builds 256-lane block-diagonal head-pair
    weights (v6e/v7x MXU-friendly); head_group=1 keeps 128-wide per-head
    weights (v5e).  Matmul weights cast to weight_dtype; biases stay f32."""
    assert 1 <= num_bs <= PAD and head_group in (1, 2)
    fin = shared[0]["w1"].shape[1]
    fin_pad = _round_up(fin, 8)

    s1 = _pack_shared_block(shared[0], fin, fin_pad, HID, weight_dtype)   # fin->256
    s2 = _pack_shared_block(shared[1], HID, HID, HID, weight_dtype)       # 256->256
    s3 = _pack_shared_block(shared[2], HID, HID, PAD, weight_dtype)       # 256->128

    G = 1 if num_bs == 1 else head_group
    GW = G * PAD
    NG = _cdiv(num_bs, G)

    gm_sc1 = jnp.zeros((NG, 3, 1, GW), jnp.float32)
    gm_sh1 = jnp.zeros((NG, 3, 1, GW), jnp.float32)
    gm_w1 = jnp.zeros((NG, 3, GW, GW), jnp.float32)
    gm_sh2 = jnp.zeros((NG, 3, 1, GW), jnp.float32)
    gm_w2 = jnp.zeros((NG, 3, GW, GW), jnp.float32)

    gl_sc1 = jnp.zeros((NG, 1, GW), jnp.float32)
    gl_sh1 = jnp.zeros((NG, 1, GW), jnp.float32)
    gl_w1 = jnp.zeros((NG, GW, PAD), jnp.float32)
    gl_sh2 = jnp.zeros((NG, 1, PAD), jnp.float32)
    gl_w2v = jnp.zeros((NG, 1, PAD), jnp.float32)
    gl_wd = jnp.zeros((NG, GW, PAD), jnp.float32)
    gl_bd = jnp.zeros((NG, 1, PAD), jnp.float32)

    for h in range(num_bs):
        p, j = divmod(h, G)
        lo = j * PAD
        for b in range(3):                                   # 128->128, identity skip
            blk = heads[h][b]
            sc1, sh1 = _fold_bn(blk["bn1"])
            sc2, sh2 = _fold_bn(blk["bn2"])
            gm_sc1 = gm_sc1.at[p, b, 0, lo:lo + PAD].set(sc1)
            gm_sh1 = gm_sh1.at[p, b, 0, lo:lo + PAD].set(sh1)
            gm_w1 = gm_w1.at[p, b, lo:lo + PAD, lo:lo + PAD].set(
                (blk["w1"] * sc2[:, None]).T)
            gm_sh2 = gm_sh2.at[p, b, 0, lo:lo + PAD].set(sh2)
            gm_w2 = gm_w2.at[p, b, lo:lo + PAD, lo:lo + PAD].set(blk["w2"].T)
        blk = heads[h][3]                                    # 128 -> 1, downsample skip
        sc1, sh1 = _fold_bn(blk["bn1"])
        sc2, sh2 = _fold_bn(blk["bn2"])
        scd, shd = _fold_bn(blk["bnd"])
        gl_sc1 = gl_sc1.at[p, 0, lo:lo + PAD].set(sc1)
        gl_sh1 = gl_sh1.at[p, 0, lo:lo + PAD].set(sh1)
        gl_w1 = gl_w1.at[p, lo:lo + PAD, h].set(blk["w1"][0] * sc2[0])
        gl_sh2 = gl_sh2.at[p, 0, h].set(sh2[0])
        gl_w2v = gl_w2v.at[p, 0, h].set(blk["w2"][0, 0])     # 1x1 fc2 -> lane scale
        gl_wd = gl_wd.at[p, lo:lo + PAD, h].set(blk["wd"][0] * scd[0])
        gl_bd = gl_bd.at[p, 0, h].set(shd[0])

    gm = [gm_sc1, gm_sh1, gm_w1.astype(weight_dtype), gm_sh2,
          gm_w2.astype(weight_dtype)]
    gl = [gl_sc1, gl_sh1, gl_w1.astype(weight_dtype), gl_sh2, gl_w2v,
          gl_wd.astype(weight_dtype), gl_bd]
    return tuple(list(s1) + list(s2) + list(s3) + gm + gl)


# ----------------------------- pure-JAX reference ---------------------------

def _ref_block(x, blk):
    sc1, sh1 = _fold_bn(blk["bn1"])
    out = jnp.maximum(x * sc1 + sh1, 0.0)
    out = out @ blk["w1"].T
    sc2, sh2 = _fold_bn(blk["bn2"])
    out = jnp.maximum(out * sc2 + sh2, 0.0)
    out = out @ blk["w2"].T
    if "wd" in blk:
        scd, shd = _fold_bn(blk["bnd"])
        identity = (x @ blk["wd"].T) * scd + shd
    else:
        identity = x
    return out + identity


def ref_forward(x, shared, heads):
    feat = x
    for blk in shared:
        feat = jnp.maximum(_ref_block(feat, blk), 0.0)
    outs = []
    for head in heads:
        y = feat
        for b in range(3):
            y = jnp.maximum(_ref_block(y, head[b]), 0.0)
        y = _ref_block(y, head[3])          # final block: no trailing ReLU
        outs.append(y)                      # (B, 1)
    return jnp.concatenate(outs, axis=-1)   # torch.concat(outputs, dim=-1)


# ---------------------------------- main ------------------------------------

if __name__ == "__main__":
    feature_input_dim = 32
    num_bs = 3
    batch = 64                 # -> 2 parallel grid steps of 32 rows

    key = jax.random.PRNGKey(0)
    key, xk = jax.random.split(key)
    x = jax.random.normal(xk, (batch, feature_input_dim), jnp.float32)

    shared, heads = init_raw_params(key, feature_input_dim, num_bs)
    ref = ref_forward(x, shared, heads)

    # f32 weights + paired (block-diagonal 256-lane) heads: strict check.
    packed_f32 = pack_params(shared, heads, num_bs,
                             weight_dtype=jnp.float32, head_group=2)
    out_f32 = jax.block_until_ready(bestgain_forward(x, packed_f32, num_bs))
    assert out_f32.shape == (batch, num_bs)
    np.testing.assert_allclose(np.asarray(out_f32), np.asarray(ref),
                               rtol=2e-3, atol=2e-3)

    # default fast path: bf16 matmul weights (f32 accumulate), paired heads.
    packed_bf16 = pack_params(shared, heads, num_bs)
    out_bf16 = jax.block_until_ready(bestgain_forward(x, packed_bf16, num_bs))
    assert out_bf16.shape == (batch, num_bs)
    np.testing.assert_allclose(np.asarray(out_bf16), np.asarray(ref),
                               rtol=1e-1, atol=1e-1)

    # un-paired path (128-wide heads, the v5e layout) also checked.
    packed_g1 = pack_params(shared, heads, num_bs,
                            weight_dtype=jnp.float32, head_group=1)
    out_g1 = jax.block_until_ready(bestgain_forward(x, packed_g1, num_bs))
    np.testing.assert_allclose(np.asarray(out_g1), np.asarray(ref),
                               rtol=2e-3, atol=2e-3)

    print("KERNEL_OK")
</pallas_src>

<mosaic_0001>
module attributes {stable_mosaic.version = 11 : i64} {
  func.func @bestgain_kernel(%arg0: i32, %arg1: memref<32x32xf32, #tpu.memory_space<vmem>>, %arg2: memref<1x32xf32, #tpu.memory_space<vmem>>, %arg3: memref<1x32xf32, #tpu.memory_space<vmem>>, %arg4: memref<32x256xf32, #tpu.memory_space<vmem>>, %arg5: memref<1x256xf32, #tpu.memory_space<vmem>>, %arg6: memref<256x256xf32, #tpu.memory_space<vmem>>, %arg7: memref<32x256xf32, #tpu.memory_space<vmem>>, %arg8: memref<1x256xf32, #tpu.memory_space<vmem>>, %arg9: memref<1x256xf32, #tpu.memory_space<vmem>>, %arg10: memref<1x256xf32, #tpu.memory_space<vmem>>, %arg11: memref<256x256xf32, #tpu.memory_space<vmem>>, %arg12: memref<1x256xf32, #tpu.memory_space<vmem>>, %arg13: memref<256x256xf32, #tpu.memory_space<vmem>>, %arg14: memref<1x256xf32, #tpu.memory_space<vmem>>, %arg15: memref<1x256xf32, #tpu.memory_space<vmem>>, %arg16: memref<256x128xf32, #tpu.memory_space<vmem>>, %arg17: memref<1x128xf32, #tpu.memory_space<vmem>>, %arg18: memref<128x128xf32, #tpu.memory_space<vmem>>, %arg19: memref<256x128xf32, #tpu.memory_space<vmem>>, %arg20: memref<1x128xf32, #tpu.memory_space<vmem>>, %arg21: memref<2x3x1x256xf32, #tpu.memory_space<vmem>>, %arg22: memref<2x3x1x256xf32, #tpu.memory_space<vmem>>, %arg23: memref<2x3x256x256xf32, #tpu.memory_space<vmem>>, %arg24: memref<2x3x1x256xf32, #tpu.memory_space<vmem>>, %arg25: memref<2x3x256x256xf32, #tpu.memory_space<vmem>>, %arg26: memref<2x1x256xf32, #tpu.memory_space<vmem>>, %arg27: memref<2x1x256xf32, #tpu.memory_space<vmem>>, %arg28: memref<2x256x128xf32, #tpu.memory_space<vmem>>, %arg29: memref<2x1x128xf32, #tpu.memory_space<vmem>>, %arg30: memref<2x1x128xf32, #tpu.memory_space<vmem>>, %arg31: memref<2x256x128xf32, #tpu.memory_space<vmem>>, %arg32: memref<2x1x128xf32, #tpu.memory_space<vmem>>, %arg33: memref<32x128xf32, #tpu.memory_space<vmem>>) attributes {dimension_semantics = [#tpu.dimension_semantics<parallel>], iteration_bounds = array<i64: 2>, scalar_prefetch = 0 : i64, scratch_operands = 0 : i64, tpu.core_type = #tpu.core_type<tc>, window_params = [{transform_indices = @transform_0, window_bounds = array<i64: 32, 32>}, {pipeline_mode = #tpu.pipeline_mode<synchronous>, transform_indices = @transform_1, window_bounds = array<i64: 1, 32>}, {pipeline_mode = #tpu.pipeline_mode<synchronous>, transform_indices = @transform_2, window_bounds = array<i64: 1, 32>}, {pipeline_mode = #tpu.pipeline_mode<synchronous>, transform_indices = @transform_3, window_bounds = array<i64: 32, 256>}, {pipeline_mode = #tpu.pipeline_mode<synchronous>, transform_indices = @transform_4, window_bounds = array<i64: 1, 256>}, {pipeline_mode = #tpu.pipeline_mode<synchronous>, transform_indices = @transform_5, window_bounds = array<i64: 256, 256>}, {pipeline_mode = #tpu.pipeline_mode<synchronous>, transform_indices = @transform_6, window_bounds = array<i64: 32, 256>}, {pipeline_mode = #tpu.pipeline_mode<synchronous>, transform_indices = @transform_7, window_bounds = array<i64: 1, 256>}, {pipeline_mode = #tpu.pipeline_mode<synchronous>, transform_indices = @transform_8, window_bounds = array<i64: 1, 256>}, {pipeline_mode = #tpu.pipeline_mode<synchronous>, transform_indices = @transform_9, window_bounds = array<i64: 1, 256>}, {pipeline_mode = #tpu.pipeline_mode<synchronous>, transform_indices = @transform_10, window_bounds = array<i64: 256, 256>}, {pipeline_mode = #tpu.pipeline_mode<synchronous>, transform_indices = @transform_11, window_bounds = array<i64: 1, 256>}, {pipeline_mode = #tpu.pipeline_mode<synchronous>, transform_indices = @transform_12, window_bounds = array<i64: 256, 256>}, {pipeline_mode = #tpu.pipeline_mode<synchronous>, transform_indices = @transform_13, window_bounds = array<i64: 1, 256>}, {pipeline_mode = #tpu.pipeline_mode<synchronous>, transform_indices = @transform_14, window_bounds = array<i64: 1, 256>}, {pipeline_mode = #tpu.pipeline_mode<synchronous>, transform_indices = @transform_15, window_bounds = array<i64: 256, 128>}, {pipeline_mode = #tpu.pipeline_mode<synchronous>, transform_indices = @transform_16, window_bounds = array<i64: 1, 128>}, {pipeline_mode = #tpu.pipeline_mode<synchronous>, transform_indices = @transform_17, window_bounds = array<i64: 128, 128>}, {pipeline_mode = #tpu.pipeline_mode<synchronous>, transform_indices = @transform_18, window_bounds = array<i64: 256, 128>}, {pipeline_mode = #tpu.pipeline_mode<synchronous>, transform_indices = @transform_19, window_bounds = array<i64: 1, 128>}, {pipeline_mode = #tpu.pipeline_mode<synchronous>, transform_indices = @transform_20, window_bounds = array<i64: 2, 3, 1, 256>}, {pipeline_mode = #tpu.pipeline_mode<synchronous>, transform_indices = @transform_21, window_bounds = array<i64: 2, 3, 1, 256>}, {pipeline_mode = #tpu.pipeline_mode<synchronous>, transform_indices = @transform_22, window_bounds = array<i64: 2, 3, 256, 256>}, {pipeline_mode = #tpu.pipeline_mode<synchronous>, transform_indices = @transform_23, window_bounds = array<i64: 2, 3, 1, 256>}, {pipeline_mode = #tpu.pipeline_mode<synchronous>, transform_indices = @transform_24, window_bounds = array<i64: 2, 3, 256, 256>}, {pipeline_mode = #tpu.pipeline_mode<synchronous>, transform_indices = @transform_25, window_bounds = array<i64: 2, 1, 256>}, {pipeline_mode = #tpu.pipeline_mode<synchronous>, transform_indices = @transform_26, window_bounds = array<i64: 2, 1, 256>}, {pipeline_mode = #tpu.pipeline_mode<synchronous>, transform_indices = @transform_27, window_bounds = array<i64: 2, 256, 128>}, {pipeline_mode = #tpu.pipeline_mode<synchronous>, transform_indices = @transform_28, window_bounds = array<i64: 2, 1, 128>}, {pipeline_mode = #tpu.pipeline_mode<synchronous>, transform_indices = @transform_29, window_bounds = array<i64: 2, 1, 128>}, {pipeline_mode = #tpu.pipeline_mode<synchronous>, transform_indices = @transform_30, window_bounds = array<i64: 2, 256, 128>}, {pipeline_mode = #tpu.pipeline_mode<synchronous>, transform_indices = @transform_31, window_bounds = array<i64: 2, 1, 128>}, {transform_indices = @transform_32, window_bounds = array<i64: 32, 128>}]} {
    %c0 = arith.constant 0 : index
    %c0_0 = arith.constant 0 : index
    %0 = vector.load %arg1[%c0, %c0_0] : memref<32x32xf32, #tpu.memory_space<vmem>>, vector<32x32xf32>
    %c0_1 = arith.constant 0 : index
    %c0_2 = arith.constant 0 : index
    %1 = vector.load %arg2[%c0_1, %c0_2] : memref<1x32xf32, #tpu.memory_space<vmem>>, vector<1x32xf32>
    %c0_3 = arith.constant 0 : index
    %c0_4 = arith.constant 0 : index
    %2 = vector.load %arg3[%c0_3, %c0_4] : memref<1x32xf32, #tpu.memory_space<vmem>>, vector<1x32xf32>
    %c0_5 = arith.constant 0 : index
    %c0_6 = arith.constant 0 : index
    %3 = vector.load %arg4[%c0_5, %c0_6] : memref<32x256xf32, #tpu.memory_space<vmem>>, vector<32x256xf32>
    %c0_7 = arith.constant 0 : index
    %c0_8 = arith.constant 0 : index
    %4 = vector.load %arg5[%c0_7, %c0_8] : memref<1x256xf32, #tpu.memory_space<vmem>>, vector<1x256xf32>
    %c0_9 = arith.constant 0 : index
    %c0_10 = arith.constant 0 : index
    %5 = vector.load %arg6[%c0_9, %c0_10] : memref<256x256xf32, #tpu.memory_space<vmem>>, vector<256x256xf32>
    %c0_11 = arith.constant 0 : index
    %c0_12 = arith.constant 0 : index
    %6 = vector.load %arg7[%c0_11, %c0_12] : memref<32x256xf32, #tpu.memory_space<vmem>>, vector<32x256xf32>
    %c0_13 = arith.constant 0 : index
    %c0_14 = arith.constant 0 : index
    %7 = vector.load %arg8[%c0_13, %c0_14] : memref<1x256xf32, #tpu.memory_space<vmem>>, vector<1x256xf32>
    %8 = vector.broadcast %1 : vector<1x32xf32> to vector<32x32xf32>
    %9 = arith.mulf %0, %8 : vector<32x32xf32>
    %10 = vector.broadcast %2 : vector<1x32xf32> to vector<32x32xf32>
    %11 = arith.addf %9, %10 : vector<32x32xf32>
    %cst = arith.constant 0.000000e+00 : f32
    %12 = vector.broadcast %cst : f32 to vector<32x32xf32>
    %13 = arith.maximumf %11, %12 : vector<32x32xf32>
    %cst_15 = arith.constant dense<0.000000e+00> : vector<32x256xf32>
    %14 = tpu.matmul %13, %3, %cst_15 {dimension_numbers = #tpu.dot_dimension_numbers<[1], [0], [0], [1], [0, 0, 1, 1], [], []>} : vector<32x32xf32>, vector<32x256xf32>, vector<32x256xf32> -> vector<32x256xf32>
    %15 = vector.broadcast %4 : vector<1x256xf32> to vector<32x256xf32>
    %16 = arith.addf %14, %15 : vector<32x256xf32>
    %cst_16 = arith.constant 0.000000e+00 : f32
    %17 = vector.broadcast %cst_16 : f32 to vector<32x256xf32>
    %18 = arith.maximumf %16, %17 : vector<32x256xf32>
    %cst_17 = arith.constant dense<0.000000e+00> : vector<32x256xf32>
    %19 = tpu.matmul %18, %5, %cst_17 {dimension_numbers = #tpu.dot_dimension_numbers<[1], [0], [0], [1], [0, 0, 1, 1], [], []>} : vector<32x256xf32>, vector<256x256xf32>, vector<32x256xf32> -> vector<32x256xf32>
    %cst_18 = arith.constant dense<0.000000e+00> : vector<32x256xf32>
    %20 = tpu.matmul %0, %6, %cst_18 {dimension_numbers = #tpu.dot_dimension_numbers<[1], [0], [0], [1], [0, 0, 1, 1], [], []>} : vector<32x32xf32>, vector<32x256xf32>, vector<32x256xf32> -> vector<32x256xf32>
    %21 = vector.broadcast %7 : vector<1x256xf32> to vector<32x256xf32>
    %22 = arith.addf %20, %21 : vector<32x256xf32>
    %23 = arith.addf %19, %22 : vector<32x256xf32>
    %cst_19 = arith.constant 0.000000e+00 : f32
    %24 = vector.broadcast %cst_19 : f32 to vector<32x256xf32>
    %25 = arith.maximumf %23, %24 : vector<32x256xf32>
    %c0_20 = arith.constant 0 : index
    %c0_21 = arith.constant 0 : index
    %26 = vector.load %arg9[%c0_20, %c0_21] : memref<1x256xf32, #tpu.memory_space<vmem>>, vector<1x256xf32>
    %c0_22 = arith.constant 0 : index
    %c0_23 = arith.constant 0 : index
    %27 = vector.load %arg10[%c0_22, %c0_23] : memref<1x256xf32, #tpu.memory_space<vmem>>, vector<1x256xf32>
    %c0_24 = arith.constant 0 : index
    %c0_25 = arith.constant 0 : index
    %28 = vector.load %arg11[%c0_24, %c0_25] : memref<256x256xf32, #tpu.memory_space<vmem>>, vector<256x256xf32>
    %c0_26 = arith.constant 0 : index
    %c0_27 = arith.constant 0 : index
    %29 = vector.load %arg12[%c0_26, %c0_27] : memref<1x256xf32, #tpu.memory_space<vmem>>, vector<1x256xf32>
    %c0_28 = arith.constant 0 : index
    %c0_29 = arith.constant 0 : index
    %30 = vector.load %arg13[%c0_28, %c0_29] : memref<256x256xf32, #tpu.memory_space<vmem>>, vector<256x256xf32>
    %31 = vector.broadcast %26 : vector<1x256xf32> to vector<32x256xf32>
    %32 = arith.mulf %25, %31 : vector<32x256xf32>
    %33 = vector.broadcast %27 : vector<1x256xf32> to vector<32x256xf32>
    %34 = arith.addf %32, %33 : vector<32x256xf32>
    %cst_30 = arith.constant 0.000000e+00 : f32
    %35 = vector.broadcast %cst_30 : f32 to vector<32x256xf32>
    %36 = arith.maximumf %34, %35 : vector<32x256xf32>
    %cst_31 = arith.constant dense<0.000000e+00> : vector<32x256xf32>
    %37 = tpu.matmul %36, %28, %cst_31 {dimension_numbers = #tpu.dot_dimension_numbers<[1], [0], [0], [1], [0, 0, 1, 1], [], []>} : vector<32x256xf32>, vector<256x256xf32>, vector<32x256xf32> -> vector<32x256xf32>
    %38 = vector.broadcast %29 : vector<1x256xf32> to vector<32x256xf32>
    %39 = arith.addf %37, %38 : vector<32x256xf32>
    %cst_32 = arith.constant 0.000000e+00 : f32
    %40 = vector.broadcast %cst_32 : f32 to vector<32x256xf32>
    %41 = arith.maximumf %39, %40 : vector<32x256xf32>
    %cst_33 = arith.constant dense<0.000000e+00> : vector<32x256xf32>
    %42 = tpu.matmul %41, %30, %cst_33 {dimension_numbers = #tpu.dot_dimension_numbers<[1], [0], [0], [1], [0, 0, 1, 1], [], []>} : vector<32x256xf32>, vector<256x256xf32>, vector<32x256xf32> -> vector<32x256xf32>
    %43 = arith.addf %42, %25 : vector<32x256xf32>
    %cst_34 = arith.constant 0.000000e+00 : f32
    %44 = vector.broadcast %cst_34 : f32 to vector<32x256xf32>
    %45 = arith.maximumf %43, %44 : vector<32x256xf32>
    %c0_35 = arith.constant 0 : index
    %c0_36 = arith.constant 0 : index
    %46 = vector.load %arg14[%c0_35, %c0_36] : memref<1x256xf32, #tpu.memory_space<vmem>>, vector<1x256xf32>
    %c0_37 = arith.constant 0 : index
    %c0_38 = arith.constant 0 : index
    %47 = vector.load %arg15[%c0_37, %c0_38] : memref<1x256xf32, #tpu.memory_space<vmem>>, vector<1x256xf32>
    %c0_39 = arith.constant 0 : index
    %c0_40 = arith.constant 0 : index
    %48 = vector.load %arg16[%c0_39, %c0_40] : memref<256x128xf32, #tpu.memory_space<vmem>>, vector<256x128xf32>
    %c0_41 = arith.constant 0 : index
    %c0_42 = arith.constant 0 : index
    %49 = vector.load %arg17[%c0_41, %c0_42] : memref<1x128xf32, #tpu.memory_space<vmem>>, vector<1x128xf32>
    %c0_43 = arith.constant 0 : index
    %c0_44 = arith.constant 0 : index
    %50 = vector.load %arg18[%c0_43, %c0_44] : memref<128x128xf32, #tpu.memory_space<vmem>>, vector<128x128xf32>
    %c0_45 = arith.constant 0 : index
    %c0_46 = arith.constant 0 : index
    %51 = vector.load %arg19[%c0_45, %c0_46] : memref<256x128xf32, #tpu.memory_space<vmem>>, vector<256x128xf32>
    %c0_47 = arith.constant 0 : index
    %c0_48 = arith.constant 0 : index
    %52 = vector.load %arg20[%c0_47, %c0_48] : memref<1x128xf32, #tpu.memory_space<vmem>>, vector<1x128xf32>
    %53 = vector.broadcast %46 : vector<1x256xf32> to vector<32x256xf32>
    %54 = arith.mulf %45, %53 : vector<32x256xf32>
    %55 = vector.broadcast %47 : vector<1x256xf32> to vector<32x256xf32>
    %56 = arith.addf %54, %55 : vector<32x256xf32>
    %cst_49 = arith.constant 0.000000e+00 : f32
    %57 = vector.broadcast %cst_49 : f32 to vector<32x256xf32>
    %58 = arith.maximumf %56, %57 : vector<32x256xf32>
    %cst_50 = arith.constant dense<0.000000e+00> : vector<32x128xf32>
    %59 = tpu.matmul %58, %48, %cst_50 {dimension_numbers = #tpu.dot_dimension_numbers<[1], [0], [0], [1], [0, 0, 1, 1], [], []>} : vector<32x256xf32>, vector<256x128xf32>, vector<32x128xf32> -> vector<32x128xf32>
    %60 = vector.broadcast %49 : vector<1x128xf32> to vector<32x128xf32>
    %61 = arith.addf %59, %60 : vector<32x128xf32>
    %cst_51 = arith.constant 0.000000e+00 : f32
    %62 = vector.broadcast %cst_51 : f32 to vector<32x128xf32>
    %63 = arith.maximumf %61, %62 : vector<32x128xf32>
    %cst_52 = arith.constant dense<0.000000e+00> : vector<32x128xf32>
    %64 = tpu.matmul %63, %50, %cst_52 {dimension_numbers = #tpu.dot_dimension_numbers<[1], [0], [0], [1], [0, 0, 1, 1], [], []>} : vector<32x128xf32>, vector<128x128xf32>, vector<32x128xf32> -> vector<32x128xf32>
    %cst_53 = arith.constant dense<0.000000e+00> : vector<32x128xf32>
    %65 = tpu.matmul %45, %51, %cst_53 {dimension_numbers = #tpu.dot_dimension_numbers<[1], [0], [0], [1], [0, 0, 1, 1], [], []>} : vector<32x256xf32>, vector<256x128xf32>, vector<32x128xf32> -> vector<32x128xf32>
    %66 = vector.broadcast %52 : vector<1x128xf32> to vector<32x128xf32>
    %67 = arith.addf %65, %66 : vector<32x128xf32>
    %68 = arith.addf %64, %67 : vector<32x128xf32>
    %cst_54 = arith.constant 0.000000e+00 : f32
    %69 = vector.broadcast %cst_54 : f32 to vector<32x128xf32>
    %70 = arith.maximumf %68, %69 : vector<32x128xf32>
    %71 = tpu.concatenate %70, %70 in 1 : vector<32x128xf32>, vector<32x128xf32> -> vector<32x256xf32>
    %c0_55 = arith.constant 0 : index
    %c0_56 = arith.constant 0 : index
    %c0_57 = arith.constant 0 : index
    %c0_58 = arith.constant 0 : index
    %72 = vector.load %arg21[%c0_55, %c0_56, %c0_57, %c0_58] : memref<2x3x1x256xf32, #tpu.memory_space<vmem>>, vector<1x1x1x256xf32>
    %73 = vector.shape_cast %72 : vector<1x1x1x256xf32> to vector<1x256xf32>
    %c0_59 = arith.constant 0 : index
    %c0_60 = arith.constant 0 : index
    %c0_61 = arith.constant 0 : index
    %c0_62 = arith.constant 0 : index
    %74 = vector.load %arg22[%c0_59, %c0_60, %c0_61, %c0_62] : memref<2x3x1x256xf32, #tpu.memory_space<vmem>>, vector<1x1x1x256xf32>
    %75 = vector.shape_cast %74 : vector<1x1x1x256xf32> to vector<1x256xf32>
    %c0_63 = arith.constant 0 : index
    %c0_64 = arith.constant 0 : index
    %c0_65 = arith.constant 0 : index
    %c0_66 = arith.constant 0 : index
    %76 = vector.load %arg23[%c0_63, %c0_64, %c0_65, %c0_66] : memref<2x3x256x256xf32, #tpu.memory_space<vmem>>, vector<1x1x256x256xf32>
    %77 = vector.shape_cast %76 : vector<1x1x256x256xf32> to vector<256x256xf32>
    %c0_67 = arith.constant 0 : index
    %c0_68 = arith.constant 0 : index
    %c0_69 = arith.constant 0 : index
    %c0_70 = arith.constant 0 : index
    %78 = vector.load %arg24[%c0_67, %c0_68, %c0_69, %c0_70] : memref<2x3x1x256xf32, #tpu.memory_space<vmem>>, vector<1x1x1x256xf32>
    %79 = vector.shape_cast %78 : vector<1x1x1x256xf32> to vector<1x256xf32>
    %c0_71 = arith.constant 0 : index
    %c0_72 = arith.constant 0 : index
    %c0_73 = arith.constant 0 : index
    %c0_74 = arith.constant 0 : index
    %80 = vector.load %arg25[%c0_71, %c0_72, %c0_73, %c0_74] : memref<2x3x256x256xf32, #tpu.memory_space<vmem>>, vector<1x1x256x256xf32>
    %81 = vector.shape_cast %80 : vector<1x1x256x256xf32> to vector<256x256xf32>
    %82 = vector.broadcast %73 : vector<1x256xf32> to vector<32x256xf32>
    %83 = arith.mulf %71, %82 : vector<32x256xf32>
    %84 = vector.broadcast %75 : vector<1x256xf32> to vector<32x256xf32>
    %85 = arith.addf %83, %84 : vector<32x256xf32>
    %cst_75 = arith.constant 0.000000e+00 : f32
    %86 = vector.broadcast %cst_75 : f32 to vector<32x256xf32>
    %87 = arith.maximumf %85, %86 : vector<32x256xf32>
    %cst_76 = arith.constant dense<0.000000e+00> : vector<32x256xf32>
    %88 = tpu.matmul %87, %77, %cst_76 {dimension_numbers = #tpu.dot_dimension_numbers<[1], [0], [0], [1], [0, 0, 1, 1], [], []>} : vector<32x256xf32>, vector<256x256xf32>, vector<32x256xf32> -> vector<32x256xf32>
    %89 = vector.broadcast %79 : vector<1x256xf32> to vector<32x256xf32>
    %90 = arith.addf %88, %89 : vector<32x256xf32>
    %cst_77 = arith.constant 0.000000e+00 : f32
    %91 = vector.broadcast %cst_77 : f32 to vector<32x256xf32>
    %92 = arith.maximumf %90, %91 : vector<32x256xf32>
    %cst_78 = arith.constant dense<0.000000e+00> : vector<32x256xf32>
    %93 = tpu.matmul %92, %81, %cst_78 {dimension_numbers = #tpu.dot_dimension_numbers<[1], [0], [0], [1], [0, 0, 1, 1], [], []>} : vector<32x256xf32>, vector<256x256xf32>, vector<32x256xf32> -> vector<32x256xf32>
    %94 = arith.addf %93, %71 : vector<32x256xf32>
    %cst_79 = arith.constant 0.000000e+00 : f32
    %95 = vector.broadcast %cst_79 : f32 to vector<32x256xf32>
    %96 = arith.maximumf %94, %95 : vector<32x256xf32>
    %c0_80 = arith.constant 0 : index
    %c1 = arith.constant 1 : index
    %c0_81 = arith.constant 0 : index
    %c0_82 = arith.constant 0 : index
    %97 = vector.load %arg21[%c0_80, %c1, %c0_81, %c0_82] : memref<2x3x1x256xf32, #tpu.memory_space<vmem>>, vector<1x1x1x256xf32>
    %98 = vector.shape_cast %97 : vector<1x1x1x256xf32> to vector<1x256xf32>
    %c0_83 = arith.constant 0 : index
    %c1_84 = arith.constant 1 : index
    %c0_85 = arith.constant 0 : index
    %c0_86 = arith.constant 0 : index
    %99 = vector.load %arg22[%c0_83, %c1_84, %c0_85, %c0_86] : memref<2x3x1x256xf32, #tpu.memory_space<vmem>>, vector<1x1x1x256xf32>
    %100 = vector.shape_cast %99 : vector<1x1x1x256xf32> to vector<1x256xf32>
    %c0_87 = arith.constant 0 : index
    %c1_88 = arith.constant 1 : index
    %c0_89 = arith.constant 0 : index
    %c0_90 = arith.constant 0 : index
    %101 = vector.load %arg23[%c0_87, %c1_88, %c0_89, %c0_90] : memref<2x3x256x256xf32, #tpu.memory_space<vmem>>, vector<1x1x256x256xf32>
    %102 = vector.shape_cast %101 : vector<1x1x256x256xf32> to vector<256x256xf32>
    %c0_91 = arith.constant 0 : index
    %c1_92 = arith.constant 1 : index
    %c0_93 = arith.constant 0 : index
    %c0_94 = arith.constant 0 : index
    %103 = vector.load %arg24[%c0_91, %c1_92, %c0_93, %c0_94] : memref<2x3x1x256xf32, #tpu.memory_space<vmem>>, vector<1x1x1x256xf32>
    %104 = vector.shape_cast %103 : vector<1x1x1x256xf32> to vector<1x256xf32>
    %c0_95 = arith.constant 0 : index
    %c1_96 = arith.constant 1 : index
    %c0_97 = arith.constant 0 : index
    %c0_98 = arith.constant 0 : index
    %105 = vector.load %arg25[%c0_95, %c1_96, %c0_97, %c0_98] : memref<2x3x256x256xf32, #tpu.memory_space<vmem>>, vector<1x1x256x256xf32>
    %106 = vector.shape_cast %105 : vector<1x1x256x256xf32> to vector<256x256xf32>
    %107 = vector.broadcast %98 : vector<1x256xf32> to vector<32x256xf32>
    %108 = arith.mulf %96, %107 : vector<32x256xf32>
    %109 = vector.broadcast %100 : vector<1x256xf32> to vector<32x256xf32>
    %110 = arith.addf %108, %109 : vector<32x256xf32>
    %cst_99 = arith.constant 0.000000e+00 : f32
    %111 = vector.broadcast %cst_99 : f32 to vector<32x256xf32>
    %112 = arith.maximumf %110, %111 : vector<32x256xf32>
    %cst_100 = arith.constant dense<0.000000e+00> : vector<32x256xf32>
    %113 = tpu.matmul %112, %102, %cst_100 {dimension_numbers = #tpu.dot_dimension_numbers<[1], [0], [0], [1], [0, 0, 1, 1], [], []>} : vector<32x256xf32>, vector<256x256xf32>, vector<32x256xf32> -> vector<32x256xf32>
    %114 = vector.broadcast %104 : vector<1x256xf32> to vector<32x256xf32>
    %115 = arith.addf %113, %114 : vector<32x256xf32>
    %cst_101 = arith.constant 0.000000e+00 : f32
    %116 = vector.broadcast %cst_101 : f32 to vector<32x256xf32>
    %117 = arith.maximumf %115, %116 : vector<32x256xf32>
    %cst_102 = arith.constant dense<0.000000e+00> : vector<32x256xf32>
    %118 = tpu.matmul %117, %106, %cst_102 {dimension_numbers = #tpu.dot_dimension_numbers<[1], [0], [0], [1], [0, 0, 1, 1], [], []>} : vector<32x256xf32>, vector<256x256xf32>, vector<32x256xf32> -> vector<32x256xf32>
    %119 = arith.addf %118, %96 : vector<32x256xf32>
    %cst_103 = arith.constant 0.000000e+00 : f32
    %120 = vector.broadcast %cst_103 : f32 to vector<32x256xf32>
    %121 = arith.maximumf %119, %120 : vector<32x256xf32>
    %c0_104 = arith.constant 0 : index
    %c2 = arith.constant 2 : index
    %c0_105 = arith.constant 0 : index
    %c0_106 = arith.constant 0 : index
    %122 = vector.load %arg21[%c0_104, %c2, %c0_105, %c0_106] : memref<2x3x1x256xf32, #tpu.memory_space<vmem>>, vector<1x1x1x256xf32>
    %123 = vector.shape_cast %122 : vector<1x1x1x256xf32> to vector<1x256xf32>
    %c0_107 = arith.constant 0 : index
    %c2_108 = arith.constant 2 : index
    %c0_109 = arith.constant 0 : index
    %c0_110 = arith.constant 0 : index
    %124 = vector.load %arg22[%c0_107, %c2_108, %c0_109, %c0_110] : memref<2x3x1x256xf32, #tpu.memory_space<vmem>>, vector<1x1x1x256xf32>
    %125 = vector.shape_cast %124 : vector<1x1x1x256xf32> to vector<1x256xf32>
    %c0_111 = arith.constant 0 : index
    %c2_112 = arith.constant 2 : index
    %c0_113 = arith.constant 0 : index
    %c0_114 = arith.constant 0 : index
    %126 = vector.load %arg23[%c0_111, %c2_112, %c0_113, %c0_114] : memref<2x3x256x256xf32, #tpu.memory_space<vmem>>, vector<1x1x256x256xf32>
    %127 = vector.shape_cast %126 : vector<1x1x256x256xf32> to vector<256x256xf32>
    %c0_115 = arith.constant 0 : index
    %c2_116 = arith.constant 2 : index
    %c0_117 = arith.constant 0 : index
    %c0_118 = arith.constant 0 : index
    %128 = vector.load %arg24[%c0_115, %c2_116, %c0_117, %c0_118] : memref<2x3x1x256xf32, #tpu.memory_space<vmem>>, vector<1x1x1x256xf32>
    %129 = vector.shape_cast %128 : vector<1x1x1x256xf32> to vector<1x256xf32>
    %c0_119 = arith.constant 0 : index
    %c2_120 = arith.constant 2 : index
    %c0_121 = arith.constant 0 : index
    %c0_122 = arith.constant 0 : index
    %130 = vector.load %arg25[%c0_119, %c2_120, %c0_121, %c0_122] : memref<2x3x256x256xf32, #tpu.memory_space<vmem>>, vector<1x1x256x256xf32>
    %131 = vector.shape_cast %130 : vector<1x1x256x256xf32> to vector<256x256xf32>
    %132 = vector.broadcast %123 : vector<1x256xf32> to vector<32x256xf32>
    %133 = arith.mulf %121, %132 : vector<32x256xf32>
    %134 = vector.broadcast %125 : vector<1x256xf32> to vector<32x256xf32>
    %135 = arith.addf %133, %134 : vector<32x256xf32>
    %cst_123 = arith.constant 0.000000e+00 : f32
    %136 = vector.broadcast %cst_123 : f32 to vector<32x256xf32>
    %137 = arith.maximumf %135, %136 : vector<32x256xf32>
    %cst_124 = arith.constant dense<0.000000e+00> : vector<32x256xf32>
    %138 = tpu.matmul %137, %127, %cst_124 {dimension_numbers = #tpu.dot_dimension_numbers<[1], [0], [0], [1], [0, 0, 1, 1], [], []>} : vector<32x256xf32>, vector<256x256xf32>, vector<32x256xf32> -> vector<32x256xf32>
    %139 = vector.broadcast %129 : vector<1x256xf32> to vector<32x256xf32>
    %140 = arith.addf %138, %139 : vector<32x256xf32>
    %cst_125 = arith.constant 0.000000e+00 : f32
    %141 = vector.broadcast %cst_125 : f32 to vector<32x256xf32>
    %142 = arith.maximumf %140, %141 : vector<32x256xf32>
    %cst_126 = arith.constant dense<0.000000e+00> : vector<32x256xf32>
    %143 = tpu.matmul %142, %131, %cst_126 {dimension_numbers = #tpu.dot_dimension_numbers<[1], [0], [0], [1], [0, 0, 1, 1], [], []>} : vector<32x256xf32>, vector<256x256xf32>, vector<32x256xf32> -> vector<32x256xf32>
    %144 = arith.addf %143, %121 : vector<32x256xf32>
    %cst_127 = arith.constant 0.000000e+00 : f32
    %145 = vector.broadcast %cst_127 : f32 to vector<32x256xf32>
    %146 = arith.maximumf %144, %145 : vector<32x256xf32>
    %c0_128 = arith.constant 0 : index
    %c0_129 = arith.constant 0 : index
    %c0_130 = arith.constant 0 : index
    %147 = vector.load %arg26[%c0_128, %c0_129, %c0_130] : memref<2x1x256xf32, #tpu.memory_space<vmem>>, vector<1x1x256xf32>
    %148 = vector.shape_cast %147 : vector<1x1x256xf32> to vector<1x256xf32>
    %149 = vector.broadcast %148 : vector<1x256xf32> to vector<32x256xf32>
    %150 = arith.mulf %146, %149 : vector<32x256xf32>
    %c0_131 = arith.constant 0 : index
    %c0_132 = arith.constant 0 : index
    %c0_133 = arith.constant 0 : index
    %151 = vector.load %arg27[%c0_131, %c0_132, %c0_133] : memref<2x1x256xf32, #tpu.memory_space<vmem>>, vector<1x1x256xf32>
    %152 = vector.shape_cast %151 : vector<1x1x256xf32> to vector<1x256xf32>
    %153 = vector.broadcast %152 : vector<1x256xf32> to vector<32x256xf32>
    %154 = arith.addf %150, %153 : vector<32x256xf32>
    %cst_134 = arith.constant 0.000000e+00 : f32
    %155 = vector.broadcast %cst_134 : f32 to vector<32x256xf32>
    %156 = arith.maximumf %154, %155 : vector<32x256xf32>
    %c0_135 = arith.constant 0 : index
    %c0_136 = arith.constant 0 : index
    %c0_137 = arith.constant 0 : index
    %157 = vector.load %arg28[%c0_135, %c0_136, %c0_137] : memref<2x256x128xf32, #tpu.memory_space<vmem>>, vector<1x256x128xf32>
    %158 = vector.shape_cast %157 : vector<1x256x128xf32> to vector<256x128xf32>
    %cst_138 = arith.constant dense<0.000000e+00> : vector<32x128xf32>
    %159 = tpu.matmul %156, %158, %cst_138 {dimension_numbers = #tpu.dot_dimension_numbers<[1], [0], [0], [1], [0, 0, 1, 1], [], []>} : vector<32x256xf32>, vector<256x128xf32>, vector<32x128xf32> -> vector<32x128xf32>
    %c0_139 = arith.constant 0 : index
    %c0_140 = arith.constant 0 : index
    %c0_141 = arith.constant 0 : index
    %160 = vector.load %arg29[%c0_139, %c0_140, %c0_141] : memref<2x1x128xf32, #tpu.memory_space<vmem>>, vector<1x1x128xf32>
    %161 = vector.shape_cast %160 : vector<1x1x128xf32> to vector<1x128xf32>
    %162 = vector.broadcast %161 : vector<1x128xf32> to vector<32x128xf32>
    %163 = arith.addf %159, %162 : vector<32x128xf32>
    %cst_142 = arith.constant 0.000000e+00 : f32
    %164 = vector.broadcast %cst_142 : f32 to vector<32x128xf32>
    %165 = arith.maximumf %163, %164 : vector<32x128xf32>
    %c0_143 = arith.constant 0 : index
    %c0_144 = arith.constant 0 : index
    %c0_145 = arith.constant 0 : index
    %166 = vector.load %arg30[%c0_143, %c0_144, %c0_145] : memref<2x1x128xf32, #tpu.memory_space<vmem>>, vector<1x1x128xf32>
    %167 = vector.shape_cast %166 : vector<1x1x128xf32> to vector<1x128xf32>
    %168 = vector.broadcast %167 : vector<1x128xf32> to vector<32x128xf32>
    %169 = arith.mulf %165, %168 : vector<32x128xf32>
    %c0_146 = arith.constant 0 : index
    %c0_147 = arith.constant 0 : index
    %c0_148 = arith.constant 0 : index
    %170 = vector.load %arg31[%c0_146, %c0_147, %c0_148] : memref<2x256x128xf32, #tpu.memory_space<vmem>>, vector<1x256x128xf32>
    %171 = vector.shape_cast %170 : vector<1x256x128xf32> to vector<256x128xf32>
    %cst_149 = arith.constant dense<0.000000e+00> : vector<32x128xf32>
    %172 = tpu.matmul %146, %171, %cst_149 {dimension_numbers = #tpu.dot_dimension_numbers<[1], [0], [0], [1], [0, 0, 1, 1], [], []>} : vector<32x256xf32>, vector<256x128xf32>, vector<32x128xf32> -> vector<32x128xf32>
    %c0_150 = arith.constant 0 : index
    %c0_151 = arith.constant 0 : index
    %c0_152 = arith.constant 0 : index
    %173 = vector.load %arg32[%c0_150, %c0_151, %c0_152] : memref<2x1x128xf32, #tpu.memory_space<vmem>>, vector<1x1x128xf32>
    %174 = vector.shape_cast %173 : vector<1x1x128xf32> to vector<1x128xf32>
    %175 = vector.broadcast %174 : vector<1x128xf32> to vector<32x128xf32>
    %176 = arith.addf %172, %175 : vector<32x128xf32>
    %177 = arith.addf %169, %176 : vector<32x128xf32>
    %c1_153 = arith.constant 1 : index
    %c0_154 = arith.constant 0 : index
    %c0_155 = arith.constant 0 : index
    %c0_156 = arith.constant 0 : index
    %178 = vector.load %arg21[%c1_153, %c0_154, %c0_155, %c0_156] : memref<2x3x1x256xf32, #tpu.memory_space<vmem>>, vector<1x1x1x256xf32>
    %179 = vector.shape_cast %178 : vector<1x1x1x256xf32> to vector<1x256xf32>
    %c1_157 = arith.constant 1 : index
    %c0_158 = arith.constant 0 : index
    %c0_159 = arith.constant 0 : index
    %c0_160 = arith.constant 0 : index
    %180 = vector.load %arg22[%c1_157, %c0_158, %c0_159, %c0_160] : memref<2x3x1x256xf32, #tpu.memory_space<vmem>>, vector<1x1x1x256xf32>
    %181 = vector.shape_cast %180 : vector<1x1x1x256xf32> to vector<1x256xf32>
    %c1_161 = arith.constant 1 : index
    %c0_162 = arith.constant 0 : index
    %c0_163 = arith.constant 0 : index
    %c0_164 = arith.constant 0 : index
    %182 = vector.load %arg23[%c1_161, %c0_162, %c0_163, %c0_164] : memref<2x3x256x256xf32, #tpu.memory_space<vmem>>, vector<1x1x256x256xf32>
    %183 = vector.shape_cast %182 : vector<1x1x256x256xf32> to vector<256x256xf32>
    %c1_165 = arith.constant 1 : index
    %c0_166 = arith.constant 0 : index
    %c0_167 = arith.constant 0 : index
    %c0_168 = arith.constant 0 : index
    %184 = vector.load %arg24[%c1_165, %c0_166, %c0_167, %c0_168] : memref<2x3x1x256xf32, #tpu.memory_space<vmem>>, vector<1x1x1x256xf32>
    %185 = vector.shape_cast %184 : vector<1x1x1x256xf32> to vector<1x256xf32>
    %c1_169 = arith.constant 1 : index
    %c0_170 = arith.constant 0 : index
    %c0_171 = arith.constant 0 : index
    %c0_172 = arith.constant 0 : index
    %186 = vector.load %arg25[%c1_169, %c0_170, %c0_171, %c0_172] : memref<2x3x256x256xf32, #tpu.memory_space<vmem>>, vector<1x1x256x256xf32>
    %187 = vector.shape_cast %186 : vector<1x1x256x256xf32> to vector<256x256xf32>
    %188 = vector.broadcast %179 : vector<1x256xf32> to vector<32x256xf32>
    %189 = arith.mulf %71, %188 : vector<32x256xf32>
    %190 = vector.broadcast %181 : vector<1x256xf32> to vector<32x256xf32>
    %191 = arith.addf %189, %190 : vector<32x256xf32>
    %cst_173 = arith.constant 0.000000e+00 : f32
    %192 = vector.broadcast %cst_173 : f32 to vector<32x256xf32>
    %193 = arith.maximumf %191, %192 : vector<32x256xf32>
    %cst_174 = arith.constant dense<0.000000e+00> : vector<32x256xf32>
    %194 = tpu.matmul %193, %183, %cst_174 {dimension_numbers = #tpu.dot_dimension_numbers<[1], [0], [0], [1], [0, 0, 1, 1], [], []>} : vector<32x256xf32>, vector<256x256xf32>, vector<32x256xf32> -> vector<32x256xf32>
    %195 = vector.broadcast %185 : vector<1x256xf32> to vector<32x256xf32>
    %196 = arith.addf %194, %195 : vector<32x256xf32>
    %cst_175 = arith.constant 0.000000e+00 : f32
    %197 = vector.broadcast %cst_175 : f32 to vector<32x256xf32>
    %198 = arith.maximumf %196, %197 : vector<32x256xf32>
    %cst_176 = arith.constant dense<0.000000e+00> : vector<32x256xf32>
    %199 = tpu.matmul %198, %187, %cst_176 {dimension_numbers = #tpu.dot_dimension_numbers<[1], [0], [0], [1], [0, 0, 1, 1], [], []>} : vector<32x256xf32>, vector<256x256xf32>, vector<32x256xf32> -> vector<32x256xf32>
    %200 = arith.addf %199, %71 : vector<32x256xf32>
    %cst_177 = arith.constant 0.000000e+00 : f32
    %201 = vector.broadcast %cst_177 : f32 to vector<32x256xf32>
    %202 = arith.maximumf %200, %201 : vector<32x256xf32>
    %c1_178 = arith.constant 1 : index
    %c1_179 = arith.constant 1 : index
    %c0_180 = arith.constant 0 : index
    %c0_181 = arith.constant 0 : index
    %203 = vector.load %arg21[%c1_178, %c1_179, %c0_180, %c0_181] : memref<2x3x1x256xf32, #tpu.memory_space<vmem>>, vector<1x1x1x256xf32>
    %204 = vector.shape_cast %203 : vector<1x1x1x256xf32> to vector<1x256xf32>
    %c1_182 = arith.constant 1 : index
    %c1_183 = arith.constant 1 : index
    %c0_184 = arith.constant 0 : index
    %c0_185 = arith.constant 0 : index
    %205 = vector.load %arg22[%c1_182, %c1_183, %c0_184, %c0_185] : memref<2x3x1x256xf32, #tpu.memory_space<vmem>>, vector<1x1x1x256xf32>
    %206 = vector.shape_cast %205 : vector<1x1x1x256xf32> to vector<1x256xf32>
    %c1_186 = arith.constant 1 : index
    %c1_187 = arith.constant 1 : index
    %c0_188 = arith.constant 0 : index
    %c0_189 = arith.constant 0 : index
    %207 = vector.load %arg23[%c1_186, %c1_187, %c0_188, %c0_189] : memref<2x3x256x256xf32, #tpu.memory_space<vmem>>, vector<1x1x256x256xf32>
    %208 = vector.shape_cast %207 : vector<1x1x256x256xf32> to vector<256x256xf32>
    %c1_190 = arith.constant 1 : index
    %c1_191 = arith.constant 1 : index
    %c0_192 = arith.constant 0 : index
    %c0_193 = arith.constant 0 : index
    %209 = vector.load %arg24[%c1_190, %c1_191, %c0_192, %c0_193] : memref<2x3x1x256xf32, #tpu.memory_space<vmem>>, vector<1x1x1x256xf32>
    %210 = vector.shape_cast %209 : vector<1x1x1x256xf32> to vector<1x256xf32>
    %c1_194 = arith.constant 1 : index
    %c1_195 = arith.constant 1 : index
    %c0_196 = arith.constant 0 : index
    %c0_197 = arith.constant 0 : index
    %211 = vector.load %arg25[%c1_194, %c1_195, %c0_196, %c0_197] : memref<2x3x256x256xf32, #tpu.memory_space<vmem>>, vector<1x1x256x256xf32>
    %212 = vector.shape_cast %211 : vector<1x1x256x256xf32> to vector<256x256xf32>
    %213 = vector.broadcast %204 : vector<1x256xf32> to vector<32x256xf32>
    %214 = arith.mulf %202, %213 : vector<32x256xf32>
    %215 = vector.broadcast %206 : vector<1x256xf32> to vector<32x256xf32>
    %216 = arith.addf %214, %215 : vector<32x256xf32>
    %cst_198 = arith.constant 0.000000e+00 : f32
    %217 = vector.broadcast %cst_198 : f32 to vector<32x256xf32>
    %218 = arith.maximumf %216, %217 : vector<32x256xf32>
    %cst_199 = arith.constant dense<0.000000e+00> : vector<32x256xf32>
    %219 = tpu.matmul %218, %208, %cst_199 {dimension_numbers = #tpu.dot_dimension_numbers<[1], [0], [0], [1], [0, 0, 1, 1], [], []>} : vector<32x256xf32>, vector<256x256xf32>, vector<32x256xf32> -> vector<32x256xf32>
    %220 = vector.broadcast %210 : vector<1x256xf32> to vector<32x256xf32>
    %221 = arith.addf %219, %220 : vector<32x256xf32>
    %cst_200 = arith.constant 0.000000e+00 : f32
    %222 = vector.broadcast %cst_200 : f32 to vector<32x256xf32>
    %223 = arith.maximumf %221, %222 : vector<32x256xf32>
    %cst_201 = arith.constant dense<0.000000e+00> : vector<32x256xf32>
    %224 = tpu.matmul %223, %212, %cst_201 {dimension_numbers = #tpu.dot_dimension_numbers<[1], [0], [0], [1], [0, 0, 1, 1], [], []>} : vector<32x256xf32>, vector<256x256xf32>, vector<32x256xf32> -> vector<32x256xf32>
    %225 = arith.addf %224, %202 : vector<32x256xf32>
    %cst_202 = arith.constant 0.000000e+00 : f32
    %226 = vector.broadcast %cst_202 : f32 to vector<32x256xf32>
    %227 = arith.maximumf %225, %226 : vector<32x256xf32>
    %c1_203 = arith.constant 1 : index
    %c2_204 = arith.constant 2 : index
    %c0_205 = arith.constant 0 : index
    %c0_206 = arith.constant 0 : index
    %228 = vector.load %arg21[%c1_203, %c2_204, %c0_205, %c0_206] : memref<2x3x1x256xf32, #tpu.memory_space<vmem>>, vector<1x1x1x256xf32>
    %229 = vector.shape_cast %228 : vector<1x1x1x256xf32> to vector<1x256xf32>
    %c1_207 = arith.constant 1 : index
    %c2_208 = arith.constant 2 : index
    %c0_209 = arith.constant 0 : index
    %c0_210 = arith.constant 0 : index
    %230 = vector.load %arg22[%c1_207, %c2_208, %c0_209, %c0_210] : memref<2x3x1x256xf32, #tpu.memory_space<vmem>>, vector<1x1x1x256xf32>
    %231 = vector.shape_cast %230 : vector<1x1x1x256xf32> to vector<1x256xf32>
    %c1_211 = arith.constant 1 : index
    %c2_212 = arith.constant 2 : index
    %c0_213 = arith.constant 0 : index
    %c0_214 = arith.constant 0 : index
    %232 = vector.load %arg23[%c1_211, %c2_212, %c0_213, %c0_214] : memref<2x3x256x256xf32, #tpu.memory_space<vmem>>, vector<1x1x256x256xf32>
    %233 = vector.shape_cast %232 : vector<1x1x256x256xf32> to vector<256x256xf32>
    %c1_215 = arith.constant 1 : index
    %c2_216 = arith.constant 2 : index
    %c0_217 = arith.constant 0 : index
    %c0_218 = arith.constant 0 : index
    %234 = vector.load %arg24[%c1_215, %c2_216, %c0_217, %c0_218] : memref<2x3x1x256xf32, #tpu.memory_space<vmem>>, vector<1x1x1x256xf32>
    %235 = vector.shape_cast %234 : vector<1x1x1x256xf32> to vector<1x256xf32>
    %c1_219 = arith.constant 1 : index
    %c2_220 = arith.constant 2 : index
    %c0_221 = arith.constant 0 : index
    %c0_222 = arith.constant 0 : index
    %236 = vector.load %arg25[%c1_219, %c2_220, %c0_221, %c0_222] : memref<2x3x256x256xf32, #tpu.memory_space<vmem>>, vector<1x1x256x256xf32>
    %237 = vector.shape_cast %236 : vector<1x1x256x256xf32> to vector<256x256xf32>
    %238 = vector.broadcast %229 : vector<1x256xf32> to vector<32x256xf32>
    %239 = arith.mulf %227, %238 : vector<32x256xf32>
    %240 = vector.broadcast %231 : vector<1x256xf32> to vector<32x256xf32>
    %241 = arith.addf %239, %240 : vector<32x256xf32>
    %cst_223 = arith.constant 0.000000e+00 : f32
    %242 = vector.broadcast %cst_223 : f32 to vector<32x256xf32>
    %243 = arith.maximumf %241, %242 : vector<32x256xf32>
    %cst_224 = arith.constant dense<0.000000e+00> : vector<32x256xf32>
    %244 = tpu.matmul %243, %233, %cst_224 {dimension_numbers = #tpu.dot_dimension_numbers<[1], [0], [0], [1], [0, 0, 1, 1], [], []>} : vector<32x256xf32>, vector<256x256xf32>, vector<32x256xf32> -> vector<32x256xf32>
    %245 = vector.broadcast %235 : vector<1x256xf32> to vector<32x256xf32>
    %246 = arith.addf %244, %245 : vector<32x256xf32>
    %cst_225 = arith.constant 0.000000e+00 : f32
    %247 = vector.broadcast %cst_225 : f32 to vector<32x256xf32>
    %248 = arith.maximumf %246, %247 : vector<32x256xf32>
    %cst_226 = arith.constant dense<0.000000e+00> : vector<32x256xf32>
    %249 = tpu.matmul %248, %237, %cst_226 {dimension_numbers = #tpu.dot_dimension_numbers<[1], [0], [0], [1], [0, 0, 1, 1], [], []>} : vector<32x256xf32>, vector<256x256xf32>, vector<32x256xf32> -> vector<32x256xf32>
    %250 = arith.addf %249, %227 : vector<32x256xf32>
    %cst_227 = arith.constant 0.000000e+00 : f32
    %251 = vector.broadcast %cst_227 : f32 to vector<32x256xf32>
    %252 = arith.maximumf %250, %251 : vector<32x256xf32>
    %c1_228 = arith.constant 1 : index
    %c0_229 = arith.constant 0 : index
    %c0_230 = arith.constant 0 : index
    %253 = vector.load %arg26[%c1_228, %c0_229, %c0_230] : memref<2x1x256xf32, #tpu.memory_space<vmem>>, vector<1x1x256xf32>
    %254 = vector.shape_cast %253 : vector<1x1x256xf32> to vector<1x256xf32>
    %255 = vector.broadcast %254 : vector<1x256xf32> to vector<32x256xf32>
    %256 = arith.mulf %252, %255 : vector<32x256xf32>
    %c1_231 = arith.constant 1 : index
    %c0_232 = arith.constant 0 : index
    %c0_233 = arith.constant 0 : index
    %257 = vector.load %arg27[%c1_231, %c0_232, %c0_233] : memref<2x1x256xf32, #tpu.memory_space<vmem>>, vector<1x1x256xf32>
    %258 = vector.shape_cast %257 : vector<1x1x256xf32> to vector<1x256xf32>
    %259 = vector.broadcast %258 : vector<1x256xf32> to vector<32x256xf32>
    %260 = arith.addf %256, %259 : vector<32x256xf32>
    %cst_234 = arith.constant 0.000000e+00 : f32
    %261 = vector.broadcast %cst_234 : f32 to vector<32x256xf32>
    %262 = arith.maximumf %260, %261 : vector<32x256xf32>
    %c1_235 = arith.constant 1 : index
    %c0_236 = arith.constant 0 : index
    %c0_237 = arith.constant 0 : index
    %263 = vector.load %arg28[%c1_235, %c0_236, %c0_237] : memref<2x256x128xf32, #tpu.memory_space<vmem>>, vector<1x256x128xf32>
    %264 = vector.shape_cast %263 : vector<1x256x128xf32> to vector<256x128xf32>
    %cst_238 = arith.constant dense<0.000000e+00> : vector<32x128xf32>
    %265 = tpu.matmul %262, %264, %cst_238 {dimension_numbers = #tpu.dot_dimension_numbers<[1], [0], [0], [1], [0, 0, 1, 1], [], []>} : vector<32x256xf32>, vector<256x128xf32>, vector<32x128xf32> -> vector<32x128xf32>
    %c1_239 = arith.constant 1 : index
    %c0_240 = arith.constant 0 : index
    %c0_241 = arith.constant 0 : index
    %266 = vector.load %arg29[%c1_239, %c0_240, %c0_241] : memref<2x1x128xf32, #tpu.memory_space<vmem>>, vector<1x1x128xf32>
    %267 = vector.shape_cast %266 : vector<1x1x128xf32> to vector<1x128xf32>
    %268 = vector.broadcast %267 : vector<1x128xf32> to vector<32x128xf32>
    %269 = arith.addf %265, %268 : vector<32x128xf32>
    %cst_242 = arith.constant 0.000000e+00 : f32
    %270 = vector.broadcast %cst_242 : f32 to vector<32x128xf32>
    %271 = arith.maximumf %269, %270 : vector<32x128xf32>
    %c1_243 = arith.constant 1 : index
    %c0_244 = arith.constant 0 : index
    %c0_245 = arith.constant 0 : index
    %272 = vector.load %arg30[%c1_243, %c0_244, %c0_245] : memref<2x1x128xf32, #tpu.memory_space<vmem>>, vector<1x1x128xf32>
    %273 = vector.shape_cast %272 : vector<1x1x128xf32> to vector<1x128xf32>
    %274 = vector.broadcast %273 : vector<1x128xf32> to vector<32x128xf32>
    %275 = arith.mulf %271, %274 : vector<32x128xf32>
    %c1_246 = arith.constant 1 : index
    %c0_247 = arith.constant 0 : index
    %c0_248 = arith.constant 0 : index
    %276 = vector.load %arg31[%c1_246, %c0_247, %c0_248] : memref<2x256x128xf32, #tpu.memory_space<vmem>>, vector<1x256x128xf32>
    %277 = vector.shape_cast %276 : vector<1x256x128xf32> to vector<256x128xf32>
    %cst_249 = arith.constant dense<0.000000e+00> : vector<32x128xf32>
    %278 = tpu.matmul %252, %277, %cst_249 {dimension_numbers = #tpu.dot_dimension_numbers<[1], [0], [0], [1], [0, 0, 1, 1], [], []>} : vector<32x256xf32>, vector<256x128xf32>, vector<32x128xf32> -> vector<32x128xf32>
    %c1_250 = arith.constant 1 : index
    %c0_251 = arith.constant 0 : index
    %c0_252 = arith.constant 0 : index
    %279 = vector.load %arg32[%c1_250, %c0_251, %c0_252] : memref<2x1x128xf32, #tpu.memory_space<vmem>>, vector<1x1x128xf32>
    %280 = vector.shape_cast %279 : vector<1x1x128xf32> to vector<1x128xf32>
    %281 = vector.broadcast %280 : vector<1x128xf32> to vector<32x128xf32>
    %282 = arith.addf %278, %281 : vector<32x128xf32>
    %283 = arith.addf %275, %282 : vector<32x128xf32>
    %284 = arith.addf %177, %283 : vector<32x128xf32>
    %c0_253 = arith.constant 0 : index
    %c0_254 = arith.constant 0 : index
    %285 = vector.load %arg33[%c0_253, %c0_254] : memref<32x128xf32, #tpu.memory_space<vmem>>, vector<32x128xf32>
    tpu.vector_store %arg33[%c0_253, %c0_254], %284 {strides = array<i32>} : memref<32x128xf32, #tpu.memory_space<vmem>>, vector<32x128xf32>,
    return
  }
  func.func @transform_0(%arg0: i32) -> (i32, i32) {
    %c0_i32 = arith.constant 0 : i32
    %c0_i32_0 = arith.constant 0 : i32
    return %arg0, %c0_i32 : i32, i32
  }
  func.func @transform_1(%arg0: i32) -> (i32, i32) {
    %c0_i32 = arith.constant 0 : i32
    %c0_i32_0 = arith.constant 0 : i32
    %c0_i32_1 = arith.constant 0 : i32
    return %c0_i32, %c0_i32_0 : i32, i32
  }
  func.func @transform_2(%arg0: i32) -> (i32, i32) {
    %c0_i32 = arith.constant 0 : i32
    %c0_i32_0 = arith.constant 0 : i32
    %c0_i32_1 = arith.constant 0 : i32
    return %c0_i32, %c0_i32_0 : i32, i32
  }
  func.func @transform_3(%arg0: i32) -> (i32, i32) {
    %c0_i32 = arith.constant 0 : i32
    %c0_i32_0 = arith.constant 0 : i32
    %c0_i32_1 = arith.constant 0 : i32
    return %c0_i32, %c0_i32_0 : i32, i32
  }
  func.func @transform_4(%arg0: i32) -> (i32, i32) {
    %c0_i32 = arith.constant 0 : i32
    %c0_i32_0 = arith.constant 0 : i32
    %c0_i32_1 = arith.constant 0 : i32
    return %c0_i32, %c0_i32_0 : i32, i32
  }
  func.func @transform_5(%arg0: i32) -> (i32, i32) {
    %c0_i32 = arith.constant 0 : i32
    %c0_i32_0 = arith.constant 0 : i32
    %c0_i32_1 = arith.constant 0 : i32
    return %c0_i32, %c0_i32_0 : i32, i32
  }
  func.func @transform_6(%arg0: i32) -> (i32, i32) {
    %c0_i32 = arith.constant 0 : i32
    %c0_i32_0 = arith.constant 0 : i32
    %c0_i32_1 = arith.constant 0 : i32
    return %c0_i32, %c0_i32_0 : i32, i32
  }
  func.func @transform_7(%arg0: i32) -> (i32, i32) {
    %c0_i32 = arith.constant 0 : i32
    %c0_i32_0 = arith.constant 0 : i32
    %c0_i32_1 = arith.constant 0 : i32
    return %c0_i32, %c0_i32_0 : i32, i32
  }
  func.func @transform_8(%arg0: i32) -> (i32, i32) {
    %c0_i32 = arith.constant 0 : i32
    %c0_i32_0 = arith.constant 0 : i32
    %c0_i32_1 = arith.constant 0 : i32
    return %c0_i32, %c0_i32_0 : i32, i32
  }
  func.func @transform_9(%arg0: i32) -> (i32, i32) {
    %c0_i32 = arith.constant 0 : i32
    %c0_i32_0 = arith.constant 0 : i32
    %c0_i32_1 = arith.constant 0 : i32
    return %c0_i32, %c0_i32_0 : i32, i32
  }
  func.func @transform_10(%arg0: i32) -> (i32, i32) {
    %c0_i32 = arith.constant 0 : i32
    %c0_i32_0 = arith.constant 0 : i32
    %c0_i32_1 = arith.constant 0 : i32
    return %c0_i32, %c0_i32_0 : i32, i32
  }
  func.func @transform_11(%arg0: i32) -> (i32, i32) {
    %c0_i32 = arith.constant 0 : i32
    %c0_i32_0 = arith.constant 0 : i32
    %c0_i32_1 = arith.constant 0 : i32
    return %c0_i32, %c0_i32_0 : i32, i32
  }
  func.func @transform_12(%arg0: i32) -> (i32, i32) {
    %c0_i32 = arith.constant 0 : i32
    %c0_i32_0 = arith.constant 0 : i32
    %c0_i32_1 = arith.constant 0 : i32
    return %c0_i32, %c0_i32_0 : i32, i32
  }
  func.func @transform_13(%arg0: i32) -> (i32, i32) {
    %c0_i32 = arith.constant 0 : i32
    %c0_i32_0 = arith.constant 0 : i32
    %c0_i32_1 = arith.constant 0 : i32
    return %c0_i32, %c0_i32_0 : i32, i32
  }
  func.func @transform_14(%arg0: i32) -> (i32, i32) {
    %c0_i32 = arith.constant 0 : i32
    %c0_i32_0 = arith.constant 0 : i32
    %c0_i32_1 = arith.constant 0 : i32
    return %c0_i32, %c0_i32_0 : i32, i32
  }
  func.func @transform_15(%arg0: i32) -> (i32, i32) {
    %c0_i32 = arith.constant 0 : i32
    %c0_i32_0 = arith.constant 0 : i32
    %c0_i32_1 = arith.constant 0 : i32
    return %c0_i32, %c0_i32_0 : i32, i32
  }
  func.func @transform_16(%arg0: i32) -> (i32, i32) {
    %c0_i32 = arith.constant 0 : i32
    %c0_i32_0 = arith.constant 0 : i32
    %c0_i32_1 = arith.constant 0 : i32
    return %c0_i32, %c0_i32_0 : i32, i32
  }
  func.func @transform_17(%arg0: i32) -> (i32, i32) {
    %c0_i32 = arith.constant 0 : i32
    %c0_i32_0 = arith.constant 0 : i32
    %c0_i32_1 = arith.constant 0 : i32
    return %c0_i32, %c0_i32_0 : i32, i32
  }
  func.func @transform_18(%arg0: i32) -> (i32, i32) {
    %c0_i32 = arith.constant 0 : i32
    %c0_i32_0 = arith.constant 0 : i32
    %c0_i32_1 = arith.constant 0 : i32
    return %c0_i32, %c0_i32_0 : i32, i32
  }
  func.func @transform_19(%arg0: i32) -> (i32, i32) {
    %c0_i32 = arith.constant 0 : i32
    %c0_i32_0 = arith.constant 0 : i32
    %c0_i32_1 = arith.constant 0 : i32
    return %c0_i32, %c0_i32_0 : i32, i32
  }
  func.func @transform_20(%arg0: i32) -> (i32, i32, i32, i32) {
    %c0_i32 = arith.constant 0 : i32
    %c0_i32_0 = arith.constant 0 : i32
    %c0_i32_1 = arith.constant 0 : i32
    %c0_i32_2 = arith.constant 0 : i32
    %c0_i32_3 = arith.constant 0 : i32
    return %c0_i32, %c0_i32_0, %c0_i32_1, %c0_i32_2 : i32, i32, i32, i32
  }
  func.func @transform_21(%arg0: i32) -> (i32, i32, i32, i32) {
    %c0_i32 = arith.constant 0 : i32
    %c0_i32_0 = arith.constant 0 : i32
    %c0_i32_1 = arith.constant 0 : i32
    %c0_i32_2 = arith.constant 0 : i32
    %c0_i32_3 = arith.constant 0 : i32
    return %c0_i32, %c0_i32_0, %c0_i32_1, %c0_i32_2 : i32, i32, i32, i32
  }
  func.func @transform_22(%arg0: i32) -> (i32, i32, i32, i32) {
    %c0_i32 = arith.constant 0 : i32
    %c0_i32_0 = arith.constant 0 : i32
    %c0_i32_1 = arith.constant 0 : i32
    %c0_i32_2 = arith.constant 0 : i32
    %c0_i32_3 = arith.constant 0 : i32
    return %c0_i32, %c0_i32_0, %c0_i32_1, %c0_i32_2 : i32, i32, i32, i32
  }
  func.func @transform_23(%arg0: i32) -> (i32, i32, i32, i32) {
    %c0_i32 = arith.constant 0 : i32
    %c0_i32_0 = arith.constant 0 : i32
    %c0_i32_1 = arith.constant 0 : i32
    %c0_i32_2 = arith.constant 0 : i32
    %c0_i32_3 = arith.constant 0 : i32
    return %c0_i32, %c0_i32_0, %c0_i32_1, %c0_i32_2 : i32, i32, i32, i32
  }
  func.func @transform_24(%arg0: i32) -> (i32, i32, i32, i32) {
    %c0_i32 = arith.constant 0 : i32
    %c0_i32_0 = arith.constant 0 : i32
    %c0_i32_1 = arith.constant 0 : i32
    %c0_i32_2 = arith.constant 0 : i32
    %c0_i32_3 = arith.constant 0 : i32
    return %c0_i32, %c0_i32_0, %c0_i32_1, %c0_i32_2 : i32, i32, i32, i32
  }
  func.func @transform_25(%arg0: i32) -> (i32, i32, i32) {
    %c0_i32 = arith.constant 0 : i32
    %c0_i32_0 = arith.constant 0 : i32
    %c0_i32_1 = arith.constant 0 : i32
    %c0_i32_2 = arith.constant 0 : i32
    return %c0_i32, %c0_i32_0, %c0_i32_1 : i32, i32, i32
  }
  func.func @transform_26(%arg0: i32) -> (i32, i32, i32) {
    %c0_i32 = arith.constant 0 : i32
    %c0_i32_0 = arith.constant 0 : i32
    %c0_i32_1 = arith.constant 0 : i32
    %c0_i32_2 = arith.constant 0 : i32
    return %c0_i32, %c0_i32_0, %c0_i32_1 : i32, i32, i32
  }
  func.func @transform_27(%arg0: i32) -> (i32, i32, i32) {
    %c0_i32 = arith.constant 0 : i32
    %c0_i32_0 = arith.constant 0 : i32
    %c0_i32_1 = arith.constant 0 : i32
    %c0_i32_2 = arith.constant 0 : i32
    return %c0_i32, %c0_i32_0, %c0_i32_1 : i32, i32, i32
  }
  func.func @transform_28(%arg0: i32) -> (i32, i32, i32) {
    %c0_i32 = arith.constant 0 : i32
    %c0_i32_0 = arith.constant 0 : i32
    %c0_i32_1 = arith.constant 0 : i32
    %c0_i32_2 = arith.constant 0 : i32
    return %c0_i32, %c0_i32_0, %c0_i32_1 : i32, i32, i32
  }
  func.func @transform_29(%arg0: i32) -> (i32, i32, i32) {
    %c0_i32 = arith.constant 0 : i32
    %c0_i32_0 = arith.constant 0 : i32
    %c0_i32_1 = arith.constant 0 : i32
    %c0_i32_2 = arith.constant 0 : i32
    return %c0_i32, %c0_i32_0, %c0_i32_1 : i32, i32, i32
  }
  func.func @transform_30(%arg0: i32) -> (i32, i32, i32) {
    %c0_i32 = arith.constant 0 : i32
    %c0_i32_0 = arith.constant 0 : i32
    %c0_i32_1 = arith.constant 0 : i32
    %c0_i32_2 = arith.constant 0 : i32
    return %c0_i32, %c0_i32_0, %c0_i32_1 : i32, i32, i32
  }
  func.func @transform_31(%arg0: i32) -> (i32, i32, i32) {
    %c0_i32 = arith.constant 0 : i32
    %c0_i32_0 = arith.constant 0 : i32
    %c0_i32_1 = arith.constant 0 : i32
    %c0_i32_2 = arith.constant 0 : i32
    return %c0_i32, %c0_i32_0, %c0_i32_1 : i32, i32, i32
  }
  func.func @transform_32(%arg0: i32) -> (i32, i32) {
    %c0_i32 = arith.constant 0 : i32
    %c0_i32_0 = arith.constant 0 : i32
    return %arg0, %c0_i32 : i32, i32
  }
}

</mosaic_0001>

<llo_original>
// kernel: tpu_custom_call.1
$region0: #{tpu_custom_call.1}
  #allocation0 [shape = 'u32[]', space=smem, size = 0x4, offset = 0x4, fixed_abs, tag = 'smem constant byte address 0x4 - core index']
  #allocation1 [shape = 'u32[72,128]{1,0:T(1,128)}', space=vmem, size = 0x9000, scoped, tag = 'internal scratch']
  %s0 = inlined_call_operand.smem [shape: u32[33], index: -1, kind: input, shape index: {}]
  %s1 = sld [smem:[%s0]]
  %s2 = scalar_lea.smem %s0, 1
  %s3 = sld [smem:[%s2]]
  %s4 = scalar_lea.smem %s0, 2
  %s5 = sld [smem:[%s4]]
  %s6 = scalar_lea.smem %s0, 3
  %s7 = sld [smem:[%s6]]
  %s8 = scalar_lea.smem %s0, 4
  %s9 = sld [smem:[%s8]]
  %s10 = scalar_lea.smem %s0, 5
  %s11 = sld [smem:[%s10]]
  %s12 = scalar_lea.smem %s0, 6
  %s13 = sld [smem:[%s12]]
  %s14 = scalar_lea.smem %s0, 7
  %s15 = sld [smem:[%s14]]
  %s16 = scalar_lea.smem %s0, 8
  %s17 = sld [smem:[%s16]]
  %s18 = scalar_lea.smem %s0, 9
  %s19 = sld [smem:[%s18]]
  %s20 = scalar_lea.smem %s0, 10
  %s21 = sld [smem:[%s20]]
  %s22 = scalar_lea.smem %s0, 11
  %s23 = sld [smem:[%s22]]
  %s24 = scalar_lea.smem %s0, 12
  %s25 = sld [smem:[%s24]]
  %s26 = scalar_lea.smem %s0, 13
  %s27 = sld [smem:[%s26]]
  %s28 = scalar_lea.smem %s0, 14
  %s29 = sld [smem:[%s28]]
  %s30 = scalar_lea.smem %s0, 15
  %s31 = sld [smem:[%s30]]
  %s32 = scalar_lea.smem %s0, 16
  %s33 = sld [smem:[%s32]]
  %s34 = scalar_lea.smem %s0, 17
  %s35 = sld [smem:[%s34]]
  %s36 = scalar_lea.smem %s0, 18
  %s37 = sld [smem:[%s36]]
  %s38 = scalar_lea.smem %s0, 19
  %s39 = sld [smem:[%s38]]
  %s40 = scalar_lea.smem %s0, 20
  %s41 = sld [smem:[%s40]]
  %s42 = scalar_lea.smem %s0, 21
  %s43 = sld [smem:[%s42]]
  %s44 = scalar_lea.smem %s0, 22
  %s45 = sld [smem:[%s44]]
  %s46 = scalar_lea.smem %s0, 23
  %s47 = sld [smem:[%s46]]
  %s48 = scalar_lea.smem %s0, 24
  %s49 = sld [smem:[%s48]]
  %s50 = scalar_lea.smem %s0, 25
  %s51 = sld [smem:[%s50]]
  %s52 = scalar_lea.smem %s0, 26
  %s53 = sld [smem:[%s52]]
  %s54 = scalar_lea.smem %s0, 27
  %s55 = sld [smem:[%s54]]
  %s56 = scalar_lea.smem %s0, 28
  %s57 = sld [smem:[%s56]]
  %s58 = scalar_lea.smem %s0, 29
  %s59 = sld [smem:[%s58]]
  %s60 = scalar_lea.smem %s0, 30
  %s61 = sld [smem:[%s60]]
  %s62 = scalar_lea.smem %s0, 31
  %s63 = sld [smem:[%s62]]
  %s64 = scalar_lea.smem %s0, 32
  %s65 = sld [smem:[%s64]]
  %s66 = sld [smem:[#allocation0]]
  $region285: #{tpu_custom_call.1} parent=0
    _
  %s68 = ssub.s32 1, %s66
  %s69 = scalar_select 0, %s68, %s66
  $region1: #{tpu_custom_call.1} parent=0
    #allocation2 [shape = 'u8[512]{0}', space=vmem, size = 0x400, scoped, tag = 'input window, operand 1, single buffered']
    #allocation3 [shape = 's32[2]{0}', space=sflag, size = 0x8, scoped, tag = 'scoped memory for tpu_custom_call.1']
    #allocation4 [shape = 's32[2]{0}', space=sflag, size = 0x8, scoped, tag = 'scoped memory for tpu_custom_call.1']
    #allocation5 [shape = 'u8[512]{0}', space=vmem, size = 0x400, scoped, tag = 'input window, operand 2, single buffered']
    #allocation6 [shape = 's32[1]{0}', space=sflag, size = 0x4, scoped, tag = 'scoped memory for tpu_custom_call.1']
    #allocation7 [shape = 'u8[32768]{0}', space=vmem, size = 0x8000, scoped, tag = 'input window, operand 3, single buffered']
    #allocation8 [shape = 'u8[1024]{0}', space=vmem, size = 0x400, scoped, tag = 'input window, operand 4, single buffered']
    #allocation9 [shape = 's32[1]{0}', space=sflag, size = 0x4, scoped, tag = 'scoped memory for tpu_custom_call.1']
    #allocation10 [shape = 'u8[262144]{0}', space=vmem, size = 0x40000, scoped, tag = 'input window, operand 5, single buffered']
    #allocation11 [shape = 'u8[32768]{0}', space=vmem, size = 0x8000, scoped, tag = 'input window, operand 6, single buffered']
    #allocation12 [shape = 's32[1]{0}', space=sflag, size = 0x4, scoped, tag = 'scoped memory for tpu_custom_call.1']
    #allocation13 [shape = 'u8[1024]{0}', space=vmem, size = 0x400, scoped, tag = 'input window, operand 7, single buffered']
    #allocation14 [shape = 'u8[1024]{0}', space=vmem, size = 0x400, scoped, tag = 'input window, operand 8, single buffered']
    #allocation15 [shape = 's32[1]{0}', space=sflag, size = 0x4, scoped, tag = 'scoped memory for tpu_custom_call.1']
    #allocation16 [shape = 'u8[1024]{0}', space=vmem, size = 0x400, scoped, tag = 'input window, operand 9, single buffered']
    #allocation17 [shape = 'u8[262144]{0}', space=vmem, size = 0x40000, scoped, tag = 'input window, operand 10, single buffered']
    #allocation18 [shape = 's32[1]{0}', space=sflag, size = 0x4, scoped, tag = 'scoped memory for tpu_custom_call.1']
    #allocation19 [shape = 'u8[1024]{0}', space=vmem, size = 0x400, scoped, tag = 'input window, operand 11, single buffered']
    #allocation20 [shape = 'u8[262144]{0}', space=vmem, size = 0x40000, scoped, tag = 'input window, operand 12, single buffered']
    #allocation21 [shape = 's32[1]{0}', space=sflag, size = 0x4, scoped, tag = 'scoped memory for tpu_custom_call.1']
    #allocation22 [shape = 'u8[1024]{0}', space=vmem, size = 0x400, scoped, tag = 'input window, operand 13, single buffered']
    #allocation23 [shape = 'u8[1024]{0}', space=vmem, size = 0x400, scoped, tag = 'input window, operand 14, single buffered']
    #allocation24 [shape = 's32[1]{0}', space=sflag, size = 0x4, scoped, tag = 'scoped memory for tpu_custom_call.1']
    #allocation25 [shape = 'u8[131072]{0}', space=vmem, size = 0x20000, scoped, tag = 'input window, operand 15, single buffered']
    #allocation26 [shape = 'u8[512]{0}', space=vmem, size = 0x400, scoped, tag = 'input window, operand 16, single buffered']
    #allocation27 [shape = 's32[1]{0}', space=sflag, size = 0x4, scoped, tag = 'scoped memory for tpu_custom_call.1']
    #allocation28 [shape = 'u8[65536]{0}', space=vmem, size = 0x10000, scoped, tag = 'input window, operand 17, single buffered']
    #allocation29 [shape = 'u8[131072]{0}', space=vmem, size = 0x20000, scoped, tag = 'input window, operand 18, single buffered']
    #allocation30 [shape = 's32[1]{0}', space=sflag, size = 0x4, scoped, tag = 'scoped memory for tpu_custom_call.1']
    #allocation31 [shape = 'u8[512]{0}', space=vmem, size = 0x400, scoped, tag = 'input window, operand 19, single buffered']
    #allocation32 [shape = 'u8[6144]{0}', space=vmem, size = 0x1800, scoped, tag = 'input window, operand 20, single buffered']
    #allocation33 [shape = 's32[1]{0}', space=sflag, size = 0x4, scoped, tag = 'scoped memory for tpu_custom_call.1']
    #allocation34 [shape = 'u8[6144]{0}', space=vmem, size = 0x1800, scoped, tag = 'input window, operand 21, single buffered']
    #allocation35 [shape = 'u8[1572864]{0}', space=vmem, size = 0x180000, scoped, tag = 'input window, operand 22, single buffered']
    #allocation36 [shape = 's32[1]{0}', space=sflag, size = 0x4, scoped, tag = 'scoped memory for tpu_custom_call.1']
    #allocation37 [shape = 'u8[6144]{0}', space=vmem, size = 0x1800, scoped, tag = 'input window, operand 23, single buffered']
    #allocation38 [shape = 'u8[1572864]{0}', space=vmem, size = 0x180000, scoped, tag = 'input window, operand 24, single buffered']
    #allocation39 [shape = 's32[1]{0}', space=sflag, size = 0x4, scoped, tag = 'scoped memory for tpu_custom_call.1']
    #allocation40 [shape = 'u8[2048]{0}', space=vmem, size = 0x800, scoped, tag = 'input window, operand 25, single buffered']
    #allocation41 [shape = 'u8[2048]{0}', space=vmem, size = 0x800, scoped, tag = 'input window, operand 26, single buffered']
    #allocation42 [shape = 's32[1]{0}', space=sflag, size = 0x4, scoped, tag = 'scoped memory for tpu_custom_call.1']
    #allocation43 [shape = 'u8[262144]{0}', space=vmem, size = 0x40000, scoped, tag = 'input window, operand 27, single buffered']
    #allocation44 [shape = 'u8[1024]{0}', space=vmem, size = 0x400, scoped, tag = 'input window, operand 28, single buffered']
    #allocation45 [shape = 's32[1]{0}', space=sflag, size = 0x4, scoped, tag = 'scoped memory for tpu_custom_call.1']
    #allocation46 [shape = 'u8[1024]{0}', space=vmem, size = 0x400, scoped, tag = 'input window, operand 29, single buffered']
    #allocation47 [shape = 'u8[262144]{0}', space=vmem, size = 0x40000, scoped, tag = 'input window, operand 30, single buffered']
    #allocation48 [shape = 's32[1]{0}', space=sflag, size = 0x4, scoped, tag = 'scoped memory for tpu_custom_call.1']
    #allocation49 [shape = 'u8[1024]{0}', space=vmem, size = 0x400, scoped, tag = 'input window, operand 31, single buffered']
    #allocation50 [shape = 'u8[32768]{0}', space=vmem, size = 0x8000, scoped, tag = 'output window, operand 0']
    %70 = vsyncpa [#allocation3], 0
    %71 = vsyncpa [#allocation6], 0
    %72 = vsyncpa [#allocation9], 0
    %73 = vsyncpa [#allocation12], 0
    %74 = vsyncpa [#allocation15], 0
    %75 = vsyncpa [#allocation18], 0
    %76 = vsyncpa [#allocation21], 0
    %77 = vsyncpa [#allocation24], 0
    %78 = vsyncpa [#allocation27], 0
    %79 = vsyncpa [#allocation30], 0
    %80 = vsyncpa [#allocation33], 0
    %81 = vsyncpa [#allocation36], 0
    %82 = vsyncpa [#allocation39], 0
    %83 = vsyncpa [#allocation42], 0
    %84 = vsyncpa [#allocation45], 0
    %85 = vsyncpa [#allocation48], 0
    %86 = vsyncpa [#allocation4], 0
    %s87 = scalar_lea.sflag [#allocation4], 1
    %88 = vsyncpa %s87, 0
    loop: start=0, step=1, limit=4
    $region2: #{tpu_custom_call.1} parent=1 // loop_pre_header
      _
    $region3: #{tpu_custom_call.1} parent=1 // loop_header
      %s90 = sphi 0, %s94
      %p91 = scmp.ge.s32.totalorder %s90, 4
      %s100 = sphi 0, %s102
      %s103 = sphi 0, %s100
      %s104 = sphi 0, %s103
      %s120 = sphi 0, %s104
      %s124 = sphi 0, %s124
      %s126 = sphi 0, %s124
      %s127 = sphi 0, %s126
      %s141 = sphi 0, %s127
      %s145 = sphi 0, %s145
      %s147 = sphi 0, %s145
      %s148 = sphi 0, %s147
      %s162 = sphi 0, %s148
      %s166 = sphi 0, %s166
      %s168 = sphi 0, %s166
      %s169 = sphi 0, %s168
      %s183 = sphi 0, %s169
      %s187 = sphi 0, %s187
      %s189 = sphi 0, %s187
      %s190 = sphi 0, %s189
      %s204 = sphi 0, %s190
      %s208 = sphi 0, %s208
      %s210 = sphi 0, %s208
      %s211 = sphi 0, %s210
      %s225 = sphi 0, %s211
      %s229 = sphi 0, %s229
      %s231 = sphi 0, %s229
      %s232 = sphi 0, %s231
      %s246 = sphi 0, %s232
      %s250 = sphi 0, %s250
      %s252 = sphi 0, %s250
      %s253 = sphi 0, %s252
      %s267 = sphi 0, %s253
      %s271 = sphi 0, %s271
      %s273 = sphi 0, %s271
      %s274 = sphi 0, %s273
      %s288 = sphi 0, %s274
      %s292 = sphi 0, %s292
      %s294 = sphi 0, %s292
      %s295 = sphi 0, %s294
      %s309 = sphi 0, %s295
      %s313 = sphi 0, %s313
      %s315 = sphi 0, %s313
      %s316 = sphi 0, %s315
      %s330 = sphi 0, %s316
      %s334 = sphi 0, %s334
      %s336 = sphi 0, %s334
      %s337 = sphi 0, %s336
      %s351 = sphi 0, %s337
      %s355 = sphi 0, %s355
      %s357 = sphi 0, %s355
      %s358 = sphi 0, %s357
      %s372 = sphi 0, %s358
      %s376 = sphi 0, %s376
      %s378 = sphi 0, %s376
      %s379 = sphi 0, %s378
      %s393 = sphi 0, %s379
      %s397 = sphi 0, %s397
      %s399 = sphi 0, %s397
      %s400 = sphi 0, %s399
      %s414 = sphi 0, %s400
      %s418 = sphi 0, %s418
      %s420 = sphi 0, %s418
      %s421 = sphi 0, %s420
      %s435 = sphi 0, %s421
      %s439 = sphi 0, %s439
      %s441 = sphi 0, %s439
      %s442 = sphi 0, %s441
      %s456 = sphi 0, %s442
      %s460 = sphi 0, %s460
      %s462 = sphi 0, %s460
      %s463 = sphi 0, %s462
      %s477 = sphi 0, %s463
      %s481 = sphi 0, %s481
      %s483 = sphi 0, %s481
      %s484 = sphi 0, %s483
      %s498 = sphi 0, %s484
      %s502 = sphi 0, %s502
      %s504 = sphi 0, %s502
      %s505 = sphi 0, %s504
      %s519 = sphi 0, %s505
      %s523 = sphi 0, %s523
      %s525 = sphi 0, %s523
      %s526 = sphi 0, %s525
      %s540 = sphi 0, %s526
      %s544 = sphi 0, %s544
      %s546 = sphi 0, %s544
      %s547 = sphi 0, %s546
      %s561 = sphi 0, %s547
      %s565 = sphi 0, %s565
      %s567 = sphi 0, %s565
      %s568 = sphi 0, %s567
      %s582 = sphi 0, %s568
      %s586 = sphi 0, %s586
      %s588 = sphi 0, %s586
      %s589 = sphi 0, %s588
      %s603 = sphi 0, %s589
      %s607 = sphi 0, %s607
      %s609 = sphi 0, %s607
      %s610 = sphi 0, %s609
      %s624 = sphi 0, %s610
      %s628 = sphi 0, %s628
      %s630 = sphi 0, %s628
      %s631 = sphi 0, %s630
      %s645 = sphi 0, %s631
      %s649 = sphi 0, %s649
      %s651 = sphi 0, %s649
      %s652 = sphi 0, %s651
      %s666 = sphi 0, %s652
      %s670 = sphi 0, %s670
      %s672 = sphi 0, %s670
      %s673 = sphi 0, %s672
      %s687 = sphi 0, %s673
      %s691 = sphi 0, %s691
      %s693 = sphi 0, %s691
      %s694 = sphi 0, %s693
      %s708 = sphi 0, %s694
      %s712 = sphi 0, %s712
      %s714 = sphi 0, %s712
      %s715 = sphi 0, %s714
      %s729 = sphi 0, %s715
      %s733 = sphi 0, %s733
      %s735 = sphi 0, %s733
      %s736 = sphi 0, %s735
      %s750 = sphi 0, %s736
      %s754 = sphi 0, %s754
      %s756 = sphi 0, %s754
      %s757 = sphi 0, %s756
      %s771 = sphi 0, %s757
      %s777 = sphi 0, %s779
      %s780 = sphi 0, %s777
      %s781 = sphi 0, %s780
      %s797 = sphi 0, %s781
    $region4: #{tpu_custom_call.1} parent=1 // loop_header_branch
      %93 = sbr.rel (%p91) target = $region8
    $region5: #{tpu_custom_call.1} parent=1 // loop_body
      %s95 = ssub.s32 %s90, 1
      %s96 = ssub.s32 %s90, 2
      %s97 = sadd.s32 %s90, 1
      %s98 = ssub.s32 %s90, %s97
      %p99 = scmp.eq.s32.totalorder %s98, 0
      %s101 = sadd.s32 %s100, 1
      %s102 = scalar_select %p99, %s100, %s101
      %p105 = pneg %p99
      %p106 = scmp.eq.s32.totalorder %s90, 1
      %p107 = por %p105, %p106
      %p108 = scmp.ne.s32.totalorder %s100, %s103
      %p109 = scmp.eq.s32.totalorder %s90, 0
      %p110 = por %p108, %p109
      %p111 = scmp.ne.s32.totalorder %s100, %s103
      %p112 = scmp.eq.s32.totalorder %s95, 1
      %p113 = por %p111, %p112
      %p114 = scmp.ne.s32.totalorder %s103, %s104
      %p115 = scmp.eq.s32.totalorder %s95, 0
      %p116 = por %p114, %p115
      %p117 = scmp.ne.s32.totalorder %s103, %s104
      %p118 = scmp.eq.s32.totalorder %s96, 1
      %p119 = por %p117, %p118
      %p121 = scmp.ne.s32.totalorder %s104, %s120
      %p122 = scmp.eq.s32.totalorder %s96, 0
      %p123 = por %p121, %p122
      %s125 = sadd.s32 %s124, 1
      %p128 = scmp.eq.s32.totalorder %s90, 1
      %p129 = scmp.ne.s32.totalorder %s124, %s126
      %p130 = scmp.eq.s32.totalorder %s90, 0
      %p131 = por %p129, %p130
      %p132 = scmp.ne.s32.totalorder %s124, %s126
      %p133 = scmp.eq.s32.totalorder %s95, 1
      %p134 = por %p132, %p133
      %p135 = scmp.ne.s32.totalorder %s126, %s127
      %p136 = scmp.eq.s32.totalorder %s95, 0
      %p137 = por %p135, %p136
      %p138 = scmp.ne.s32.totalorder %s126, %s127
      %p139 = scmp.eq.s32.totalorder %s96, 1
      %p140 = por %p138, %p139
      %p142 = scmp.ne.s32.totalorder %s127, %s141
      %p143 = scmp.eq.s32.totalorder %s96, 0
      %p144 = por %p142, %p143
      %s146 = sadd.s32 %s145, 1
      %p149 = scmp.eq.s32.totalorder %s90, 1
      %p150 = scmp.ne.s32.totalorder %s145, %s147
      %p151 = scmp.eq.s32.totalorder %s90, 0
      %p152 = por %p150, %p151
      %p153 = scmp.ne.s32.totalorder %s145, %s147
      %p154 = scmp.eq.s32.totalorder %s95, 1
      %p155 = por %p153, %p154
      %p156 = scmp.ne.s32.totalorder %s147, %s148
      %p157 = scmp.eq.s32.totalorder %s95, 0
      %p158 = por %p156, %p157
      %p159 = scmp.ne.s32.totalorder %s147, %s148
      %p160 = scmp.eq.s32.totalorder %s96, 1
      %p161 = por %p159, %p160
      %p163 = scmp.ne.s32.totalorder %s148, %s162
      %p164 = scmp.eq.s32.totalorder %s96, 0
      %p165 = por %p163, %p164
      %s167 = sadd.s32 %s166, 1
      %p170 = scmp.eq.s32.totalorder %s90, 1
      %p171 = scmp.ne.s32.totalorder %s166, %s168
      %p172 = scmp.eq.s32.totalorder %s90, 0
      %p173 = por %p171, %p172
      %p174 = scmp.ne.s32.totalorder %s166, %s168
      %p175 = scmp.eq.s32.totalorder %s95, 1
      %p176 = por %p174, %p175
      %p177 = scmp.ne.s32.totalorder %s168, %s169
      %p178 = scmp.eq.s32.totalorder %s95, 0
      %p179 = por %p177, %p178
      %p180 = scmp.ne.s32.totalorder %s168, %s169
      %p181 = scmp.eq.s32.totalorder %s96, 1
      %p182 = por %p180, %p181
      %p184 = scmp.ne.s32.totalorder %s169, %s183
      %p185 = scmp.eq.s32.totalorder %s96, 0
      %p186 = por %p184, %p185
      %s188 = sadd.s32 %s187, 1
      %p191 = scmp.eq.s32.totalorder %s90, 1
      %p192 = scmp.ne.s32.totalorder %s187, %s189
      %p193 = scmp.eq.s32.totalorder %s90, 0
      %p194 = por %p192, %p193
      %p195 = scmp.ne.s32.totalorder %s187, %s189
      %p196 = scmp.eq.s32.totalorder %s95, 1
      %p197 = por %p195, %p196
      %p198 = scmp.ne.s32.totalorder %s189, %s190
      %p199 = scmp.eq.s32.totalorder %s95, 0
      %p200 = por %p198, %p199
      %p201 = scmp.ne.s32.totalorder %s189, %s190
      %p202 = scmp.eq.s32.totalorder %s96, 1
      %p203 = por %p201, %p202
      %p205 = scmp.ne.s32.totalorder %s190, %s204
      %p206 = scmp.eq.s32.totalorder %s96, 0
      %p207 = por %p205, %p206
      %s209 = sadd.s32 %s208, 1
      %p212 = scmp.eq.s32.totalorder %s90, 1
      %p213 = scmp.ne.s32.totalorder %s208, %s210
      %p214 = scmp.eq.s32.totalorder %s90, 0
      %p215 = por %p213, %p214
      %p216 = scmp.ne.s32.totalorder %s208, %s210
      %p217 = scmp.eq.s32.totalorder %s95, 1
      %p218 = por %p216, %p217
      %p219 = scmp.ne.s32.totalorder %s210, %s211
      %p220 = scmp.eq.s32.totalorder %s95, 0
      %p221 = por %p219, %p220
      %p222 = scmp.ne.s32.totalorder %s210, %s211
      %p223 = scmp.eq.s32.totalorder %s96, 1
      %p224 = por %p222, %p223
      %p226 = scmp.ne.s32.totalorder %s211, %s225
      %p227 = scmp.eq.s32.totalorder %s96, 0
      %p228 = por %p226, %p227
      %s230 = sadd.s32 %s229, 1
      %p233 = scmp.eq.s32.totalorder %s90, 1
      %p234 = scmp.ne.s32.totalorder %s229, %s231
      %p235 = scmp.eq.s32.totalorder %s90, 0
      %p236 = por %p234, %p235
      %p237 = scmp.ne.s32.totalorder %s229, %s231
      %p238 = scmp.eq.s32.totalorder %s95, 1
      %p239 = por %p237, %p238
      %p240 = scmp.ne.s32.totalorder %s231, %s232
      %p241 = scmp.eq.s32.totalorder %s95, 0
      %p242 = por %p240, %p241
      %p243 = scmp.ne.s32.totalorder %s231, %s232
      %p244 = scmp.eq.s32.totalorder %s96, 1
      %p245 = por %p243, %p244
      %p247 = scmp.ne.s32.totalorder %s232, %s246
      %p248 = scmp.eq.s32.totalorder %s96, 0
      %p249 = por %p247, %p248
      %s251 = sadd.s32 %s250, 1
      %p254 = scmp.eq.s32.totalorder %s90, 1
      %p255 = scmp.ne.s32.totalorder %s250, %s252
      %p256 = scmp.eq.s32.totalorder %s90, 0
      %p257 = por %p255, %p256
      %p258 = scmp.ne.s32.totalorder %s250, %s252
      %p259 = scmp.eq.s32.totalorder %s95, 1
      %p260 = por %p258, %p259
      %p261 = scmp.ne.s32.totalorder %s252, %s253
      %p262 = scmp.eq.s32.totalorder %s95, 0
      %p263 = por %p261, %p262
      %p264 = scmp.ne.s32.totalorder %s252, %s253
      %p265 = scmp.eq.s32.totalorder %s96, 1
      %p266 = por %p264, %p265
      %p268 = scmp.ne.s32.totalorder %s253, %s267
      %p269 = scmp.eq.s32.totalorder %s96, 0
      %p270 = por %p268, %p269
      %s272 = sadd.s32 %s271, 1
      %p275 = scmp.eq.s32.totalorder %s90, 1
      %p276 = scmp.ne.s32.totalorder %s271, %s273
      %p277 = scmp.eq.s32.totalorder %s90, 0
      %p278 = por %p276, %p277
      %p279 = scmp.ne.s32.totalorder %s271, %s273
      %p280 = scmp.eq.s32.totalorder %s95, 1
      %p281 = por %p279, %p280
      %p282 = scmp.ne.s32.totalorder %s273, %s274
      %p283 = scmp.eq.s32.totalorder %s95, 0
      %p284 = por %p282, %p283
      %p285 = scmp.ne.s32.totalorder %s273, %s274
      %p286 = scmp.eq.s32.totalorder %s96, 1
      %p287 = por %p285, %p286
      %p289 = scmp.ne.s32.totalorder %s274, %s288
      %p290 = scmp.eq.s32.totalorder %s96, 0
      %p291 = por %p289, %p290
      %s293 = sadd.s32 %s292, 1
      %p296 = scmp.eq.s32.totalorder %s90, 1
      %p297 = scmp.ne.s32.totalorder %s292, %s294
      %p298 = scmp.eq.s32.totalorder %s90, 0
      %p299 = por %p297, %p298
      %p300 = scmp.ne.s32.totalorder %s292, %s294
      %p301 = scmp.eq.s32.totalorder %s95, 1
      %p302 = por %p300, %p301
      %p303 = scmp.ne.s32.totalorder %s294, %s295
      %p304 = scmp.eq.s32.totalorder %s95, 0
      %p305 = por %p303, %p304
      %p306 = scmp.ne.s32.totalorder %s294, %s295
      %p307 = scmp.eq.s32.totalorder %s96, 1
      %p308 = por %p306, %p307
      %p310 = scmp.ne.s32.totalorder %s295, %s309
      %p311 = scmp.eq.s32.totalorder %s96, 0
      %p312 = por %p310, %p311
      %s314 = sadd.s32 %s313, 1
      %p317 = scmp.eq.s32.totalorder %s90, 1
      %p318 = scmp.ne.s32.totalorder %s313, %s315
      %p319 = scmp.eq.s32.totalorder %s90, 0
      %p320 = por %p318, %p319
      %p321 = scmp.ne.s32.totalorder %s313, %s315
      %p322 = scmp.eq.s32.totalorder %s95, 1
      %p323 = por %p321, %p322
      %p324 = scmp.ne.s32.totalorder %s315, %s316
      %p325 = scmp.eq.s32.totalorder %s95, 0
      %p326 = por %p324, %p325
      %p327 = scmp.ne.s32.totalorder %s315, %s316
      %p328 = scmp.eq.s32.totalorder %s96, 1
      %p329 = por %p327, %p328
      %p331 = scmp.ne.s32.totalorder %s316, %s330
      %p332 = scmp.eq.s32.totalorder %s96, 0
      %p333 = por %p331, %p332
      %s335 = sadd.s32 %s334, 1
      %p338 = scmp.eq.s32.totalorder %s90, 1
      %p339 = scmp.ne.s32.totalorder %s334, %s336
      %p340 = scmp.eq.s32.totalorder %s90, 0
      %p341 = por %p339, %p340
      %p342 = scmp.ne.s32.totalorder %s334, %s336
      %p343 = scmp.eq.s32.totalorder %s95, 1
      %p344 = por %p342, %p343
      %p345 = scmp.ne.s32.totalorder %s336, %s337
      %p346 = scmp.eq.s32.totalorder %s95, 0
      %p347 = por %p345, %p346
      %p348 = scmp.ne.s32.totalorder %s336, %s337
      %p349 = scmp.eq.s32.totalorder %s96, 1
      %p350 = por %p348, %p349
      %p352 = scmp.ne.s32.totalorder %s337, %s351
      %p353 = scmp.eq.s32.totalorder %s96, 0
      %p354 = por %p352, %p353
      %s356 = sadd.s32 %s355, 1
      %p359 = scmp.eq.s32.totalorder %s90, 1
      %p360 = scmp.ne.s32.totalorder %s355, %s357
      %p361 = scmp.eq.s32.totalorder %s90, 0
      %p362 = por %p360, %p361
      %p363 = scmp.ne.s32.totalorder %s355, %s357
      %p364 = scmp.eq.s32.totalorder %s95, 1
      %p365 = por %p363, %p364
      %p366 = scmp.ne.s32.totalorder %s357, %s358
      %p367 = scmp.eq.s32.totalorder %s95, 0
      %p368 = por %p366, %p367
      %p369 = scmp.ne.s32.totalorder %s357, %s358
      %p370 = scmp.eq.s32.totalorder %s96, 1
      %p371 = por %p369, %p370
      %p373 = scmp.ne.s32.totalorder %s358, %s372
      %p374 = scmp.eq.s32.totalorder %s96, 0
      %p375 = por %p373, %p374
      %s377 = sadd.s32 %s376, 1
      %p380 = scmp.eq.s32.totalorder %s90, 1
      %p381 = scmp.ne.s32.totalorder %s376, %s378
      %p382 = scmp.eq.s32.totalorder %s90, 0
      %p383 = por %p381, %p382
      %p384 = scmp.ne.s32.totalorder %s376, %s378
      %p385 = scmp.eq.s32.totalorder %s95, 1
      %p386 = por %p384, %p385
      %p387 = scmp.ne.s32.totalorder %s378, %s379
      %p388 = scmp.eq.s32.totalorder %s95, 0
      %p389 = por %p387, %p388
      %p390 = scmp.ne.s32.totalorder %s378, %s379
      %p391 = scmp.eq.s32.totalorder %s96, 1
      %p392 = por %p390, %p391
      %p394 = scmp.ne.s32.totalorder %s379, %s393
      %p395 = scmp.eq.s32.totalorder %s96, 0
      %p396 = por %p394, %p395
      %s398 = sadd.s32 %s397, 1
      %p401 = scmp.eq.s32.totalorder %s90, 1
      %p402 = scmp.ne.s32.totalorder %s397, %s399
      %p403 = scmp.eq.s32.totalorder %s90, 0
      %p404 = por %p402, %p403
      %p405 = scmp.ne.s32.totalorder %s397, %s399
      %p406 = scmp.eq.s32.totalorder %s95, 1
      %p407 = por %p405, %p406
      %p408 = scmp.ne.s32.totalorder %s399, %s400
      %p409 = scmp.eq.s32.totalorder %s95, 0
      %p410 = por %p408, %p409
      %p411 = scmp.ne.s32.totalorder %s399, %s400
      %p412 = scmp.eq.s32.totalorder %s96, 1
      %p413 = por %p411, %p412
      %p415 = scmp.ne.s32.totalorder %s400, %s414
      %p416 = scmp.eq.s32.totalorder %s96, 0
      %p417 = por %p415, %p416
      %s419 = sadd.s32 %s418, 1
      %p422 = scmp.eq.s32.totalorder %s90, 1
      %p423 = scmp.ne.s32.totalorder %s418, %s420
      %p424 = scmp.eq.s32.totalorder %s90, 0
      %p425 = por %p423, %p424
      %p426 = scmp.ne.s32.totalorder %s418, %s420
      %p427 = scmp.eq.s32.totalorder %s95, 1
      %p428 = por %p426, %p427
      %p429 = scmp.ne.s32.totalorder %s420, %s421
      %p430 = scmp.eq.s32.totalorder %s95, 0
      %p431 = por %p429, %p430
      %p432 = scmp.ne.s32.totalorder %s420, %s421
      %p433 = scmp.eq.s32.totalorder %s96, 1
      %p434 = por %p432, %p433
      %p436 = scmp.ne.s32.totalorder %s421, %s435
      %p437 = scmp.eq.s32.totalorder %s96, 0
      %p438 = por %p436, %p437
      %s440 = sadd.s32 %s439, 1
      %p443 = scmp.eq.s32.totalorder %s90, 1
      %p444 = scmp.ne.s32.totalorder %s439, %s441
      %p445 = scmp.eq.s32.totalorder %s90, 0
      %p446 = por %p444, %p445
      %p447 = scmp.ne.s32.totalorder %s439, %s441
      %p448 = scmp.eq.s32.totalorder %s95, 1
      %p449 = por %p447, %p448
      %p450 = scmp.ne.s32.totalorder %s441, %s442
      %p451 = scmp.eq.s32.totalorder %s95, 0
      %p452 = por %p450, %p451
      %p453 = scmp.ne.s32.totalorder %s441, %s442
      %p454 = scmp.eq.s32.totalorder %s96, 1
      %p455 = por %p453, %p454
      %p457 = scmp.ne.s32.totalorder %s442, %s456
      %p458 = scmp.eq.s32.totalorder %s96, 0
      %p459 = por %p457, %p458
      %s461 = sadd.s32 %s460, 1
      %p464 = scmp.eq.s32.totalorder %s90, 1
      %p465 = scmp.ne.s32.totalorder %s460, %s462
      %p466 = scmp.eq.s32.totalorder %s90, 0
      %p467 = por %p465, %p466
      %p468 = scmp.ne.s32.totalorder %s460, %s462
      %p469 = scmp.eq.s32.totalorder %s95, 1
      %p470 = por %p468, %p469
      %p471 = scmp.ne.s32.totalorder %s462, %s463
      %p472 = scmp.eq.s32.totalorder %s95, 0
      %p473 = por %p471, %p472
      %p474 = scmp.ne.s32.totalorder %s462, %s463
      %p475 = scmp.eq.s32.totalorder %s96, 1
      %p476 = por %p474, %p475
      %p478 = scmp.ne.s32.totalorder %s463, %s477
      %p479 = scmp.eq.s32.totalorder %s96, 0
      %p480 = por %p478, %p479
      %s482 = sadd.s32 %s481, 1
      %p485 = scmp.eq.s32.totalorder %s90, 1
      %p486 = scmp.ne.s32.totalorder %s481, %s483
      %p487 = scmp.eq.s32.totalorder %s90, 0
      %p488 = por %p486, %p487
      %p489 = scmp.ne.s32.totalorder %s481, %s483
      %p490 = scmp.eq.s32.totalorder %s95, 1
      %p491 = por %p489, %p490
      %p492 = scmp.ne.s32.totalorder %s483, %s484
      %p493 = scmp.eq.s32.totalorder %s95, 0
      %p494 = por %p492, %p493
      %p495 = scmp.ne.s32.totalorder %s483, %s484
      %p496 = scmp.eq.s32.totalorder %s96, 1
      %p497 = por %p495, %p496
      %p499 = scmp.ne.s32.totalorder %s484, %s498
      %p500 = scmp.eq.s32.totalorder %s96, 0
      %p501 = por %p499, %p500
      %s503 = sadd.s32 %s502, 1
      %p506 = scmp.eq.s32.totalorder %s90, 1
      %p507 = scmp.ne.s32.totalorder %s502, %s504
      %p508 = scmp.eq.s32.totalorder %s90, 0
      %p509 = por %p507, %p508
      %p510 = scmp.ne.s32.totalorder %s502, %s504
      %p511 = scmp.eq.s32.totalorder %s95, 1
      %p512 = por %p510, %p511
      %p513 = scmp.ne.s32.totalorder %s504, %s505
      %p514 = scmp.eq.s32.totalorder %s95, 0
      %p515 = por %p513, %p514
      %p516 = scmp.ne.s32.totalorder %s504, %s505
      %p517 = scmp.eq.s32.totalorder %s96, 1
      %p518 = por %p516, %p517
      %p520 = scmp.ne.s32.totalorder %s505, %s519
      %p521 = scmp.eq.s32.totalorder %s96, 0
      %p522 = por %p520, %p521
      %s524 = sadd.s32 %s523, 1
      %p527 = scmp.eq.s32.totalorder %s90, 1
      %p528 = scmp.ne.s32.totalorder %s523, %s525
      %p529 = scmp.eq.s32.totalorder %s90, 0
      %p530 = por %p528, %p529
      %p531 = scmp.ne.s32.totalorder %s523, %s525
      %p532 = scmp.eq.s32.totalorder %s95, 1
      %p533 = por %p531, %p532
      %p534 = scmp.ne.s32.totalorder %s525, %s526
      %p535 = scmp.eq.s32.totalorder %s95, 0
      %p536 = por %p534, %p535
      %p537 = scmp.ne.s32.totalorder %s525, %s526
      %p538 = scmp.eq.s32.totalorder %s96, 1
      %p539 = por %p537, %p538
      %p541 = scmp.ne.s32.totalorder %s526, %s540
      %p542 = scmp.eq.s32.totalorder %s96, 0
      %p543 = por %p541, %p542
      %s545 = sadd.s32 %s544, 1
      %p548 = scmp.eq.s32.totalorder %s90, 1
      %p549 = scmp.ne.s32.totalorder %s544, %s546
      %p550 = scmp.eq.s32.totalorder %s90, 0
      %p551 = por %p549, %p550
      %p552 = scmp.ne.s32.totalorder %s544, %s546
      %p553 = scmp.eq.s32.totalorder %s95, 1
      %p554 = por %p552, %p553
      %p555 = scmp.ne.s32.totalorder %s546, %s547
      %p556 = scmp.eq.s32.totalorder %s95, 0
      %p557 = por %p555, %p556
      %p558 = scmp.ne.s32.totalorder %s546, %s547
      %p559 = scmp.eq.s32.totalorder %s96, 1
      %p560 = por %p558, %p559
      %p562 = scmp.ne.s32.totalorder %s547, %s561
      %p563 = scmp.eq.s32.totalorder %s96, 0
      %p564 = por %p562, %p563
      %s566 = sadd.s32 %s565, 1
      %p569 = scmp.eq.s32.totalorder %s90, 1
      %p570 = scmp.ne.s32.totalorder %s565, %s567
      %p571 = scmp.eq.s32.totalorder %s90, 0
      %p572 = por %p570, %p571
      %p573 = scmp.ne.s32.totalorder %s565, %s567
      %p574 = scmp.eq.s32.totalorder %s95, 1
      %p575 = por %p573, %p574
      %p576 = scmp.ne.s32.totalorder %s567, %s568
      %p577 = scmp.eq.s32.totalorder %s95, 0
      %p578 = por %p576, %p577
      %p579 = scmp.ne.s32.totalorder %s567, %s568
      %p580 = scmp.eq.s32.totalorder %s96, 1
      %p581 = por %p579, %p580
      %p583 = scmp.ne.s32.totalorder %s568, %s582
      %p584 = scmp.eq.s32.totalorder %s96, 0
      %p585 = por %p583, %p584
      %s587 = sadd.s32 %s586, 1
      %p590 = scmp.eq.s32.totalorder %s90, 1
      %p591 = scmp.ne.s32.totalorder %s586, %s588
      %p592 = scmp.eq.s32.totalorder %s90, 0
      %p593 = por %p591, %p592
      %p594 = scmp.ne.s32.totalorder %s586, %s588
      %p595 = scmp.eq.s32.totalorder %s95, 1
      %p596 = por %p594, %p595
      %p597 = scmp.ne.s32.totalorder %s588, %s589
      %p598 = scmp.eq.s32.totalorder %s95, 0
      %p599 = por %p597, %p598
      %p600 = scmp.ne.s32.totalorder %s588, %s589
      %p601 = scmp.eq.s32.totalorder %s96, 1
      %p602 = por %p600, %p601
      %p604 = scmp.ne.s32.totalorder %s589, %s603
      %p605 = scmp.eq.s32.totalorder %s96, 0
      %p606 = por %p604, %p605
      %s608 = sadd.s32 %s607, 1
      %p611 = scmp.eq.s32.totalorder %s90, 1
      %p612 = scmp.ne.s32.totalorder %s607, %s609
      %p613 = scmp.eq.s32.totalorder %s90, 0
      %p614 = por %p612, %p613
      %p615 = scmp.ne.s32.totalorder %s607, %s609
      %p616 = scmp.eq.s32.totalorder %s95, 1
      %p617 = por %p615, %p616
      %p618 = scmp.ne.s32.totalorder %s609, %s610
      %p619 = scmp.eq.s32.totalorder %s95, 0
      %p620 = por %p618, %p619
      %p621 = scmp.ne.s32.totalorder %s609, %s610
      %p622 = scmp.eq.s32.totalorder %s96, 1
      %p623 = por %p621, %p622
      %p625 = scmp.ne.s32.totalorder %s610, %s624
      %p626 = scmp.eq.s32.totalorder %s96, 0
      %p627 = por %p625, %p626
      %s629 = sadd.s32 %s628, 1
      %p632 = scmp.eq.s32.totalorder %s90, 1
      %p633 = scmp.ne.s32.totalorder %s628, %s630
      %p634 = scmp.eq.s32.totalorder %s90, 0
      %p635 = por %p633, %p634
      %p636 = scmp.ne.s32.totalorder %s628, %s630
      %p637 = scmp.eq.s32.totalorder %s95, 1
      %p638 = por %p636, %p637
      %p639 = scmp.ne.s32.totalorder %s630, %s631
      %p640 = scmp.eq.s32.totalorder %s95, 0
      %p641 = por %p639, %p640
      %p642 = scmp.ne.s32.totalorder %s630, %s631
      %p643 = scmp.eq.s32.totalorder %s96, 1
      %p644 = por %p642, %p643
      %p646 = scmp.ne.s32.totalorder %s631, %s645
      %p647 = scmp.eq.s32.totalorder %s96, 0
      %p648 = por %p646, %p647
      %s650 = sadd.s32 %s649, 1
      %p653 = scmp.eq.s32.totalorder %s90, 1
      %p654 = scmp.ne.s32.totalorder %s649, %s651
      %p655 = scmp.eq.s32.totalorder %s90, 0
      %p656 = por %p654, %p655
      %p657 = scmp.ne.s32.totalorder %s649, %s651
      %p658 = scmp.eq.s32.totalorder %s95, 1
      %p659 = por %p657, %p658
      %p660 = scmp.ne.s32.totalorder %s651, %s652
      %p661 = scmp.eq.s32.totalorder %s95, 0
      %p662 = por %p660, %p661
      %p663 = scmp.ne.s32.totalorder %s651, %s652
      %p664 = scmp.eq.s32.totalorder %s96, 1
      %p665 = por %p663, %p664
      %p667 = scmp.ne.s32.totalorder %s652, %s666
      %p668 = scmp.eq.s32.totalorder %s96, 0
      %p669 = por %p667, %p668
      %s671 = sadd.s32 %s670, 1
      %p674 = scmp.eq.s32.totalorder %s90, 1
      %p675 = scmp.ne.s32.totalorder %s670, %s672
      %p676 = scmp.eq.s32.totalorder %s90, 0
      %p677 = por %p675, %p676
      %p678 = scmp.ne.s32.totalorder %s670, %s672
      %p679 = scmp.eq.s32.totalorder %s95, 1
      %p680 = por %p678, %p679
      %p681 = scmp.ne.s32.totalorder %s672, %s673
      %p682 = scmp.eq.s32.totalorder %s95, 0
      %p683 = por %p681, %p682
      %p684 = scmp.ne.s32.totalorder %s672, %s673
      %p685 = scmp.eq.s32.totalorder %s96, 1
      %p686 = por %p684, %p685
      %p688 = scmp.ne.s32.totalorder %s673, %s687
      %p689 = scmp.eq.s32.totalorder %s96, 0
      %p690 = por %p688, %p689
      %s692 = sadd.s32 %s691, 1
      %p695 = scmp.eq.s32.totalorder %s90, 1
      %p696 = scmp.ne.s32.totalorder %s691, %s693
      %p697 = scmp.eq.s32.totalorder %s90, 0
      %p698 = por %p696, %p697
      %p699 = scmp.ne.s32.totalorder %s691, %s693
      %p700 = scmp.eq.s32.totalorder %s95, 1
      %p701 = por %p699, %p700
      %p702 = scmp.ne.s32.totalorder %s693, %s694
      %p703 = scmp.eq.s32.totalorder %s95, 0
      %p704 = por %p702, %p703
      %p705 = scmp.ne.s32.totalorder %s693, %s694
      %p706 = scmp.eq.s32.totalorder %s96, 1
      %p707 = por %p705, %p706
      %p709 = scmp.ne.s32.totalorder %s694, %s708
      %p710 = scmp.eq.s32.totalorder %s96, 0
      %p711 = por %p709, %p710
      %s713 = sadd.s32 %s712, 1
      %p716 = scmp.eq.s32.totalorder %s90, 1
      %p717 = scmp.ne.s32.totalorder %s712, %s714
      %p718 = scmp.eq.s32.totalorder %s90, 0
      %p719 = por %p717, %p718
      %p720 = scmp.ne.s32.totalorder %s712, %s714
      %p721 = scmp.eq.s32.totalorder %s95, 1
      %p722 = por %p720, %p721
      %p723 = scmp.ne.s32.totalorder %s714, %s715
      %p724 = scmp.eq.s32.totalorder %s95, 0
      %p725 = por %p723, %p724
      %p726 = scmp.ne.s32.totalorder %s714, %s715
      %p727 = scmp.eq.s32.totalorder %s96, 1
      %p728 = por %p726, %p727
      %p730 = scmp.ne.s32.totalorder %s715, %s729
      %p731 = scmp.eq.s32.totalorder %s96, 0
      %p732 = por %p730, %p731
      %s734 = sadd.s32 %s733, 1
      %p737 = scmp.eq.s32.totalorder %s90, 1
      %p738 = scmp.ne.s32.totalorder %s733, %s735
      %p739 = scmp.eq.s32.totalorder %s90, 0
      %p740 = por %p738, %p739
      %p741 = scmp.ne.s32.totalorder %s733, %s735
      %p742 = scmp.eq.s32.totalorder %s95, 1
      %p743 = por %p741, %p742
      %p744 = scmp.ne.s32.totalorder %s735, %s736
      %p745 = scmp.eq.s32.totalorder %s95, 0
      %p746 = por %p744, %p745
      %p747 = scmp.ne.s32.totalorder %s735, %s736
      %p748 = scmp.eq.s32.totalorder %s96, 1
      %p749 = por %p747, %p748
      %p751 = scmp.ne.s32.totalorder %s736, %s750
      %p752 = scmp.eq.s32.totalorder %s96, 0
      %p753 = por %p751, %p752
      %s755 = sadd.s32 %s754, 1
      %p758 = scmp.eq.s32.totalorder %s90, 1
      %p759 = scmp.ne.s32.totalorder %s754, %s756
      %p760 = scmp.eq.s32.totalorder %s90, 0
      %p761 = por %p759, %p760
      %p762 = scmp.ne.s32.totalorder %s754, %s756
      %p763 = scmp.eq.s32.totalorder %s95, 1
      %p764 = por %p762, %p763
      %p765 = scmp.ne.s32.totalorder %s756, %s757
      %p766 = scmp.eq.s32.totalorder %s95, 0
      %p767 = por %p765, %p766
      %p768 = scmp.ne.s32.totalorder %s756, %s757
      %p769 = scmp.eq.s32.totalorder %s96, 1
      %p770 = por %p768, %p769
      %p772 = scmp.ne.s32.totalorder %s757, %s771
      %p773 = scmp.eq.s32.totalorder %s96, 0
      %p774 = por %p772, %p773
      %s775 = ssub.s32 %s90, %s97
      %p776 = scmp.eq.s32.totalorder %s775, 0
      %s778 = sadd.s32 %s777, 1
      %s779 = scalar_select %p776, %s777, %s778
      %p782 = pneg %p776
      %p783 = scmp.eq.s32.totalorder %s90, 1
      %p784 = por %p782, %p783
      %p785 = scmp.ne.s32.totalorder %s777, %s780
      %p786 = scmp.eq.s32.totalorder %s90, 0
      %p787 = por %p785, %p786
      %p788 = scmp.ne.s32.totalorder %s777, %s780
      %p789 = scmp.eq.s32.totalorder %s95, 1
      %p790 = por %p788, %p789
      %p791 = scmp.ne.s32.totalorder %s780, %s781
      %p792 = scmp.eq.s32.totalorder %s95, 0
      %p793 = por %p791, %p792
      %p794 = scmp.ne.s32.totalorder %s780, %s781
      %p795 = scmp.eq.s32.totalorder %s96, 1
      %p796 = por %p794, %p795
      %p798 = scmp.ne.s32.totalorder %s781, %s797
      %p799 = scmp.eq.s32.totalorder %s96, 0
      %p800 = por %p798, %p799
      %p801 = scmp.le.s32.totalorder 1, %s90
      %p802 = scmp.lt.s32.totalorder %s90, 3
      %p803 = pnand %p801, %p802
      %p804 = pneg %p803
      // Predicated region
      $region9: #{tpu_custom_call.1} parent=5 // pred_check
        _
      $region10: #{tpu_custom_call.1} parent=5 // pred_check_branch
        %806 = sbr.rel (%p803) target = $region12
      $region11: #{tpu_custom_call.1} parent=5 // pred_region
        %s807 = ssub.s32 %s90, 1
        // Predicated region
        $region13: #{tpu_custom_call.1} parent=11 // pred_check
          %p808 = pneg %p137
        $region14: #{tpu_custom_call.1} parent=11 // pred_check_branch
          %810 = sbr.rel (%p808) target = $region16
        $region15: #{tpu_custom_call.1} parent=11 // pred_region
          %812 = vsyncadd [#allocation3], 0
          %s814 = sshll.u32 %s3, 4
          %s815 = int_to_ptr.hbm [resolvable:$true] %s814
          %s816 = sshll.u32 [#allocation2], 4
          %s817 = int_to_ptr.vmem [resolvable:$true] %s816
          %819 = dma.hbm_to_vmem [thread:$0]  %s815, 16, %s817, [#allocation3]
        $region16: #{tpu_custom_call.1} parent=11 // pred_fallthru
          _
        // Predicated region
        $region17: #{tpu_custom_call.1} parent=11 // pred_check
          %p820 = pneg %p158
        $region18: #{tpu_custom_call.1} parent=11 // pred_check_branch
          %822 = sbr.rel (%p820) target = $region20
        $region19: #{tpu_custom_call.1} parent=11 // pred_region
          %824 = vsyncadd [#allocation6], 0
          %s826 = sshll.u32 %s5, 4
          %s827 = int_to_ptr.hbm [resolvable:$true] %s826
          %s828 = sshll.u32 [#allocation5], 4
          %s829 = int_to_ptr.vmem [resolvable:$true] %s828
          %831 = dma.hbm_to_vmem [thread:$0]  %s827, 16, %s829, [#allocation6]
        $region20: #{tpu_custom_call.1} parent=11 // pred_fallthru
          _
        // Predicated region
        $region21: #{tpu_custom_call.1} parent=11 // pred_check
          %p832 = pneg %p179
        $region22: #{tpu_custom_call.1} parent=11 // pred_check_branch
          %834 = sbr.rel (%p832) target = $region24
        $region23: #{tpu_custom_call.1} parent=11 // pred_region
          %836 = vsyncadd [#allocation6], 0
          %s837 = sshll.u32 %s7, 4
          %s838 = int_to_ptr.hbm [resolvable:$true] %s837
          %s839 = sshll.u32 [#allocation7], 4
          %s840 = int_to_ptr.vmem [resolvable:$true] %s839
          %845 = dma.hbm_to_vmem [thread:$0]  %s838, 1024, %s840, [#allocation6], 256, 256, 16
        $region24: #{tpu_custom_call.1} parent=11 // pred_fallthru
          _
        // Predicated region
        $region25: #{tpu_custom_call.1} parent=11 // pred_check
          %p846 = pneg %p200
        $region26: #{tpu_custom_call.1} parent=11 // pred_check_branch
          %848 = sbr.rel (%p846) target = $region28
        $region27: #{tpu_custom_call.1} parent=11 // pred_region
          %850 = vsyncadd [#allocation9], 0
          %s852 = sshll.u32 %s9, 4
          %s853 = int_to_ptr.hbm [resolvable:$true] %s852
          %s854 = sshll.u32 [#allocation8], 4
          %s855 = int_to_ptr.vmem [resolvable:$true] %s854
          %857 = dma.hbm_to_vmem [thread:$0]  %s853, 32, %s855, [#allocation9]
        $region28: #{tpu_custom_call.1} parent=11 // pred_fallthru
          _
        // Predicated region
        $region29: #{tpu_custom_call.1} parent=11 // pred_check
          %p858 = pneg %p221
        $region30: #{tpu_custom_call.1} parent=11 // pred_check_branch
          %860 = sbr.rel (%p858) target = $region32
        $region31: #{tpu_custom_call.1} parent=11 // pred_region
          %862 = vsyncadd [#allocation9], 0
          %s863 = sshll.u32 %s11, 4
          %s864 = int_to_ptr.hbm [resolvable:$true] %s863
          %s865 = sshll.u32 [#allocation10], 4
          %s866 = int_to_ptr.vmem [resolvable:$true] %s865
          %871 = dma.hbm_to_vmem [thread:$0]  %s864, 8192, %s866, [#allocation9], 256, 256, 16
        $region32: #{tpu_custom_call.1} parent=11 // pred_fallthru
          _
        // Predicated region
        $region33: #{tpu_custom_call.1} parent=11 // pred_check
          %p872 = pneg %p242
        $region34: #{tpu_custom_call.1} parent=11 // pred_check_branch
          %874 = sbr.rel (%p872) target = $region36
        $region35: #{tpu_custom_call.1} parent=11 // pred_region
          %876 = vsyncadd [#allocation12], 0
          %s877 = sshll.u32 %s13, 4
          %s878 = int_to_ptr.hbm [resolvable:$true] %s877
          %s879 = sshll.u32 [#allocation11], 4
          %s880 = int_to_ptr.vmem [resolvable:$true] %s879
          %885 = dma.hbm_to_vmem [thread:$0]  %s878, 1024, %s880, [#allocation12], 256, 256, 16
        $region36: #{tpu_custom_call.1} parent=11 // pred_fallthru
          _
        // Predicated region
        $region37: #{tpu_custom_call.1} parent=11 // pred_check
          %p886 = pneg %p263
        $region38: #{tpu_custom_call.1} parent=11 // pred_check_branch
          %888 = sbr.rel (%p886) target = $region40
        $region39: #{tpu_custom_call.1} parent=11 // pred_region
          %890 = vsyncadd [#allocation12], 0
          %s892 = sshll.u32 %s15, 4
          %s893 = int_to_ptr.hbm [resolvable:$true] %s892
          %s894 = sshll.u32 [#allocation13], 4
          %s895 = int_to_ptr.vmem [resolvable:$true] %s894
          %897 = dma.hbm_to_vmem [thread:$0]  %s893, 32, %s895, [#allocation12]
        $region40: #{tpu_custom_call.1} parent=11 // pred_fallthru
          _
        // Predicated region
        $region41: #{tpu_custom_call.1} parent=11 // pred_check
          %p898 = pneg %p284
        $region42: #{tpu_custom_call.1} parent=11 // pred_check_branch
          %900 = sbr.rel (%p898) target = $region44
        $region43: #{tpu_custom_call.1} parent=11 // pred_region
          %902 = vsyncadd [#allocation15], 0
          %s904 = sshll.u32 %s17, 4
          %s905 = int_to_ptr.hbm [resolvable:$true] %s904
          %s906 = sshll.u32 [#allocation14], 4
          %s907 = int_to_ptr.vmem [resolvable:$true] %s906
          %909 = dma.hbm_to_vmem [thread:$0]  %s905, 32, %s907, [#allocation15]
        $region44: #{tpu_custom_call.1} parent=11 // pred_fallthru
          _
        // Predicated region
        $region45: #{tpu_custom_call.1} parent=11 // pred_check
          %p910 = pneg %p305
        $region46: #{tpu_custom_call.1} parent=11 // pred_check_branch
          %912 = sbr.rel (%p910) target = $region48
        $region47: #{tpu_custom_call.1} parent=11 // pred_region
          %914 = vsyncadd [#allocation15], 0
          %s916 = sshll.u32 %s19, 4
          %s917 = int_to_ptr.hbm [resolvable:$true] %s916
          %s918 = sshll.u32 [#allocation16], 4
          %s919 = int_to_ptr.vmem [resolvable:$true] %s918
          %921 = dma.hbm_to_vmem [thread:$0]  %s917, 32, %s919, [#allocation15]
        $region48: #{tpu_custom_call.1} parent=11 // pred_fallthru
          _
        // Predicated region
        $region49: #{tpu_custom_call.1} parent=11 // pred_check
          %p922 = pneg %p326
        $region50: #{tpu_custom_call.1} parent=11 // pred_check_branch
          %924 = sbr.rel (%p922) target = $region52
        $region51: #{tpu_custom_call.1} parent=11 // pred_region
          %926 = vsyncadd [#allocation18], 0
          %s927 = sshll.u32 %s21, 4
          %s928 = int_to_ptr.hbm [resolvable:$true] %s927
          %s929 = sshll.u32 [#allocation17], 4
          %s930 = int_to_ptr.vmem [resolvable:$true] %s929
          %935 = dma.hbm_to_vmem [thread:$0]  %s928, 8192, %s930, [#allocation18], 256, 256, 16
        $region52: #{tpu_custom_call.1} parent=11 // pred_fallthru
          _
        // Predicated region
        $region53: #{tpu_custom_call.1} parent=11 // pred_check
          %p936 = pneg %p347
        $region54: #{tpu_custom_call.1} parent=11 // pred_check_branch
          %938 = sbr.rel (%p936) target = $region56
        $region55: #{tpu_custom_call.1} parent=11 // pred_region
          %940 = vsyncadd [#allocation18], 0
          %s942 = sshll.u32 %s23, 4
          %s943 = int_to_ptr.hbm [resolvable:$true] %s942
          %s944 = sshll.u32 [#allocation19], 4
          %s945 = int_to_ptr.vmem [resolvable:$true] %s944
          %947 = dma.hbm_to_vmem [thread:$0]  %s943, 32, %s945, [#allocation18]
        $region56: #{tpu_custom_call.1} parent=11 // pred_fallthru
          _
        // Predicated region
        $region57: #{tpu_custom_call.1} parent=11 // pred_check
          %p948 = pneg %p368
        $region58: #{tpu_custom_call.1} parent=11 // pred_check_branch
          %950 = sbr.rel (%p948) target = $region60
        $region59: #{tpu_custom_call.1} parent=11 // pred_region
          %952 = vsyncadd [#allocation21], 0
          %s953 = sshll.u32 %s25, 4
          %s954 = int_to_ptr.hbm [resolvable:$true] %s953
          %s955 = sshll.u32 [#allocation20], 4
          %s956 = int_to_ptr.vmem [resolvable:$true] %s955
          %961 = dma.hbm_to_vmem [thread:$0]  %s954, 8192, %s956, [#allocation21], 256, 256, 16
        $region60: #{tpu_custom_call.1} parent=11 // pred_fallthru
          _
        // Predicated region
        $region61: #{tpu_custom_call.1} parent=11 // pred_check
          %p962 = pneg %p389
        $region62: #{tpu_custom_call.1} parent=11 // pred_check_branch
          %964 = sbr.rel (%p962) target = $region64
        $region63: #{tpu_custom_call.1} parent=11 // pred_region
          %966 = vsyncadd [#allocation21], 0
          %s968 = sshll.u32 %s27, 4
          %s969 = int_to_ptr.hbm [resolvable:$true] %s968
          %s970 = sshll.u32 [#allocation22], 4
          %s971 = int_to_ptr.vmem [resolvable:$true] %s970
          %973 = dma.hbm_to_vmem [thread:$0]  %s969, 32, %s971, [#allocation21]
        $region64: #{tpu_custom_call.1} parent=11 // pred_fallthru
          _
        // Predicated region
        $region65: #{tpu_custom_call.1} parent=11 // pred_check
          %p974 = pneg %p410
        $region66: #{tpu_custom_call.1} parent=11 // pred_check_branch
          %976 = sbr.rel (%p974) target = $region68
        $region67: #{tpu_custom_call.1} parent=11 // pred_region
          %978 = vsyncadd [#allocation24], 0
          %s980 = sshll.u32 %s29, 4
          %s981 = int_to_ptr.hbm [resolvable:$true] %s980
          %s982 = sshll.u32 [#allocation23], 4
          %s983 = int_to_ptr.vmem [resolvable:$true] %s982
          %985 = dma.hbm_to_vmem [thread:$0]  %s981, 32, %s983, [#allocation24]
        $region68: #{tpu_custom_call.1} parent=11 // pred_fallthru
          _
        // Predicated region
        $region69: #{tpu_custom_call.1} parent=11 // pred_check
          %p986 = pneg %p431
        $region70: #{tpu_custom_call.1} parent=11 // pred_check_branch
          %988 = sbr.rel (%p986) target = $region72
        $region71: #{tpu_custom_call.1} parent=11 // pred_region
          %990 = vsyncadd [#allocation24], 0
          %s991 = sshll.u32 %s31, 4
          %s992 = int_to_ptr.hbm [resolvable:$true] %s991
          %s993 = sshll.u32 [#allocation25], 4
          %s994 = int_to_ptr.vmem [resolvable:$true] %s993
          %999 = dma.hbm_to_vmem [thread:$0]  %s992, 4096, %s994, [#allocation24], 128, 128, 8
        $region72: #{tpu_custom_call.1} parent=11 // pred_fallthru
          _
        // Predicated region
        $region73: #{tpu_custom_call.1} parent=11 // pred_check
          %p1000 = pneg %p452
        $region74: #{tpu_custom_call.1} parent=11 // pred_check_branch
          %1002 = sbr.rel (%p1000) target = $region76
        $region75: #{tpu_custom_call.1} parent=11 // pred_region
          %1004 = vsyncadd [#allocation27], 0
          %s1006 = sshll.u32 %s33, 4
          %s1007 = int_to_ptr.hbm [resolvable:$true] %s1006
          %s1008 = sshll.u32 [#allocation26], 4
          %s1009 = int_to_ptr.vmem [resolvable:$true] %s1008
          %1011 = dma.hbm_to_vmem [thread:$0]  %s1007, 16, %s1009, [#allocation27]
        $region76: #{tpu_custom_call.1} parent=11 // pred_fallthru
          _
        // Predicated region
        $region77: #{tpu_custom_call.1} parent=11 // pred_check
          %p1012 = pneg %p473
        $region78: #{tpu_custom_call.1} parent=11 // pred_check_branch
          %1014 = sbr.rel (%p1012) target = $region80
        $region79: #{tpu_custom_call.1} parent=11 // pred_region
          %1016 = vsyncadd [#allocation27], 0
          %s1017 = sshll.u32 %s35, 4
          %s1018 = int_to_ptr.hbm [resolvable:$true] %s1017
          %s1019 = sshll.u32 [#allocation28], 4
          %s1020 = int_to_ptr.vmem [resolvable:$true] %s1019
          %1025 = dma.hbm_to_vmem [thread:$0]  %s1018, 2048, %s1020, [#allocation27], 128, 128, 8
        $region80: #{tpu_custom_call.1} parent=11 // pred_fallthru
          _
        // Predicated region
        $region81: #{tpu_custom_call.1} parent=11 // pred_check
          %p1026 = pneg %p494
        $region82: #{tpu_custom_call.1} parent=11 // pred_check_branch
          %1028 = sbr.rel (%p1026) target = $region84
        $region83: #{tpu_custom_call.1} parent=11 // pred_region
          %1030 = vsyncadd [#allocation30], 0
          %s1031 = sshll.u32 %s37, 4
          %s1032 = int_to_ptr.hbm [resolvable:$true] %s1031
          %s1033 = sshll.u32 [#allocation29], 4
          %s1034 = int_to_ptr.vmem [resolvable:$true] %s1033
          %1039 = dma.hbm_to_vmem [thread:$0]  %s1032, 4096, %s1034, [#allocation30], 128, 128, 8
        $region84: #{tpu_custom_call.1} parent=11 // pred_fallthru
          _
        // Predicated region
        $region85: #{tpu_custom_call.1} parent=11 // pred_check
          %p1040 = pneg %p515
        $region86: #{tpu_custom_call.1} parent=11 // pred_check_branch
          %1042 = sbr.rel (%p1040) target = $region88
        $region87: #{tpu_custom_call.1} parent=11 // pred_region
          %1044 = vsyncadd [#allocation30], 0
          %s1046 = sshll.u32 %s39, 4
          %s1047 = int_to_ptr.hbm [resolvable:$true] %s1046
          %s1048 = sshll.u32 [#allocation31], 4
          %s1049 = int_to_ptr.vmem [resolvable:$true] %s1048
          %1051 = dma.hbm_to_vmem [thread:$0]  %s1047, 16, %s1049, [#allocation30]
        $region88: #{tpu_custom_call.1} parent=11 // pred_fallthru
          _
        // Predicated region
        $region89: #{tpu_custom_call.1} parent=11 // pred_check
          %p1052 = pneg %p536
        $region90: #{tpu_custom_call.1} parent=11 // pred_check_branch
          %1054 = sbr.rel (%p1052) target = $region92
        $region91: #{tpu_custom_call.1} parent=11 // pred_region
          %1056 = vsyncadd [#allocation33], 0
          %s1057 = sshll.u32 %s41, 4
          %s1058 = int_to_ptr.hbm [resolvable:$true] %s1057
          %s1059 = sshll.u32 [#allocation32], 4
          %s1060 = int_to_ptr.vmem [resolvable:$true] %s1059
          %1065 = dma.hbm_to_vmem [thread:$0]  %s1058, 192, %s1060, [#allocation33], 32, 32, 2
        $region92: #{tpu_custom_call.1} parent=11 // pred_fallthru
          _
        // Predicated region
        $region93: #{tpu_custom_call.1} parent=11 // pred_check
          %p1066 = pneg %p557
        $region94: #{tpu_custom_call.1} parent=11 // pred_check_branch
          %1068 = sbr.rel (%p1066) target = $region96
        $region95: #{tpu_custom_call.1} parent=11 // pred_region
          %1070 = vsyncadd [#allocation33], 0
          %s1071 = sshll.u32 %s43, 4
          %s1072 = int_to_ptr.hbm [resolvable:$true] %s1071
          %s1073 = sshll.u32 [#allocation34], 4
          %s1074 = int_to_ptr.vmem [resolvable:$true] %s1073
          %1079 = dma.hbm_to_vmem [thread:$0]  %s1072, 192, %s1074, [#allocation33], 32, 32, 2
        $region96: #{tpu_custom_call.1} parent=11 // pred_fallthru
          _
        // Predicated region
        $region97: #{tpu_custom_call.1} parent=11 // pred_check
          %p1080 = pneg %p578
        $region98: #{tpu_custom_call.1} parent=11 // pred_check_branch
          %1082 = sbr.rel (%p1080) target = $region100
        $region99: #{tpu_custom_call.1} parent=11 // pred_region
          %1084 = vsyncadd [#allocation36], 0
          %s1085 = sshll.u32 %s45, 4
          %s1086 = int_to_ptr.hbm [resolvable:$true] %s1085
          %s1087 = sshll.u32 [#allocation35], 4
          %s1088 = int_to_ptr.vmem [resolvable:$true] %s1087
          %1093 = dma.hbm_to_vmem [thread:$0]  %s1086, 49152, %s1088, [#allocation36], 256, 256, 16
        $region100: #{tpu_custom_call.1} parent=11 // pred_fallthru
          _
        // Predicated region
        $region101: #{tpu_custom_call.1} parent=11 // pred_check
          %p1094 = pneg %p599
        $region102: #{tpu_custom_call.1} parent=11 // pred_check_branch
          %1096 = sbr.rel (%p1094) target = $region104
        $region103: #{tpu_custom_call.1} parent=11 // pred_region
          %1098 = vsyncadd [#allocation36], 0
          %s1099 = sshll.u32 %s47, 4
          %s1100 = int_to_ptr.hbm [resolvable:$true] %s1099
          %s1101 = sshll.u32 [#allocation37], 4
          %s1102 = int_to_ptr.vmem [resolvable:$true] %s1101
          %1107 = dma.hbm_to_vmem [thread:$0]  %s1100, 192, %s1102, [#allocation36], 32, 32, 2
        $region104: #{tpu_custom_call.1} parent=11 // pred_fallthru
          _
        // Predicated region
        $region105: #{tpu_custom_call.1} parent=11 // pred_check
          %p1108 = pneg %p620
        $region106: #{tpu_custom_call.1} parent=11 // pred_check_branch
          %1110 = sbr.rel (%p1108) target = $region108
        $region107: #{tpu_custom_call.1} parent=11 // pred_region
          %1112 = vsyncadd [#allocation39], 0
          %s1113 = sshll.u32 %s49, 4
          %s1114 = int_to_ptr.hbm [resolvable:$true] %s1113
          %s1115 = sshll.u32 [#allocation38], 4
          %s1116 = int_to_ptr.vmem [resolvable:$true] %s1115
          %1121 = dma.hbm_to_vmem [thread:$0]  %s1114, 49152, %s1116, [#allocation39], 256, 256, 16
        $region108: #{tpu_custom_call.1} parent=11 // pred_fallthru
          _
        // Predicated region
        $region109: #{tpu_custom_call.1} parent=11 // pred_check
          %p1122 = pneg %p641
        $region110: #{tpu_custom_call.1} parent=11 // pred_check_branch
          %1124 = sbr.rel (%p1122) target = $region112
        $region111: #{tpu_custom_call.1} parent=11 // pred_region
          %1126 = vsyncadd [#allocation39], 0
          %s1127 = sshll.u32 %s51, 4
          %s1128 = int_to_ptr.hbm [resolvable:$true] %s1127
          %s1129 = sshll.u32 [#allocation40], 4
          %s1130 = int_to_ptr.vmem [resolvable:$true] %s1129
          %1135 = dma.hbm_to_vmem [thread:$0]  %s1128, 64, %s1130, [#allocation39], 32, 32, 2
        $region112: #{tpu_custom_call.1} parent=11 // pred_fallthru
          _
        // Predicated region
        $region113: #{tpu_custom_call.1} parent=11 // pred_check
          %p1136 = pneg %p662
        $region114: #{tpu_custom_call.1} parent=11 // pred_check_branch
          %1138 = sbr.rel (%p1136) target = $region116
        $region115: #{tpu_custom_call.1} parent=11 // pred_region
          %1140 = vsyncadd [#allocation42], 0
          %s1141 = sshll.u32 %s53, 4
          %s1142 = int_to_ptr.hbm [resolvable:$true] %s1141
          %s1143 = sshll.u32 [#allocation41], 4
          %s1144 = int_to_ptr.vmem [resolvable:$true] %s1143
          %1149 = dma.hbm_to_vmem [thread:$0]  %s1142, 64, %s1144, [#allocation42], 32, 32, 2
        $region116: #{tpu_custom_call.1} parent=11 // pred_fallthru
          _
        // Predicated region
        $region117: #{tpu_custom_call.1} parent=11 // pred_check
          %p1150 = pneg %p683
        $region118: #{tpu_custom_call.1} parent=11 // pred_check_branch
          %1152 = sbr.rel (%p1150) target = $region120
        $region119: #{tpu_custom_call.1} parent=11 // pred_region
          %1154 = vsyncadd [#allocation42], 0
          %s1155 = sshll.u32 %s55, 4
          %s1156 = int_to_ptr.hbm [resolvable:$true] %s1155
          %s1157 = sshll.u32 [#allocation43], 4
          %s1158 = int_to_ptr.vmem [resolvable:$true] %s1157
          %1163 = dma.hbm_to_vmem [thread:$0]  %s1156, 8192, %s1158, [#allocation42], 128, 128, 8
        $region120: #{tpu_custom_call.1} parent=11 // pred_fallthru
          _
        // Predicated region
        $region121: #{tpu_custom_call.1} parent=11 // pred_check
          %p1164 = pneg %p704
        $region122: #{tpu_custom_call.1} parent=11 // pred_check_branch
          %1166 = sbr.rel (%p1164) target = $region124
        $region123: #{tpu_custom_call.1} parent=11 // pred_region
          %1168 = vsyncadd [#allocation45], 0
          %s1169 = sshll.u32 %s57, 4
          %s1170 = int_to_ptr.hbm [resolvable:$true] %s1169
          %s1171 = sshll.u32 [#allocation44], 4
          %s1172 = int_to_ptr.vmem [resolvable:$true] %s1171
          %1177 = dma.hbm_to_vmem [thread:$0]  %s1170, 32, %s1172, [#allocation45], 16, 16, 1
        $region124: #{tpu_custom_call.1} parent=11 // pred_fallthru
          _
        // Predicated region
        $region125: #{tpu_custom_call.1} parent=11 // pred_check
          %p1178 = pneg %p725
        $region126: #{tpu_custom_call.1} parent=11 // pred_check_branch
          %1180 = sbr.rel (%p1178) target = $region128
        $region127: #{tpu_custom_call.1} parent=11 // pred_region
          %1182 = vsyncadd [#allocation45], 0
          %s1183 = sshll.u32 %s59, 4
          %s1184 = int_to_ptr.hbm [resolvable:$true] %s1183
          %s1185 = sshll.u32 [#allocation46], 4
          %s1186 = int_to_ptr.vmem [resolvable:$true] %s1185
          %1191 = dma.hbm_to_vmem [thread:$0]  %s1184, 32, %s1186, [#allocation45], 16, 16, 1
        $region128: #{tpu_custom_call.1} parent=11 // pred_fallthru
          _
        // Predicated region
        $region129: #{tpu_custom_call.1} parent=11 // pred_check
          %p1192 = pneg %p746
        $region130: #{tpu_custom_call.1} parent=11 // pred_check_branch
          %1194 = sbr.rel (%p1192) target = $region132
        $region131: #{tpu_custom_call.1} parent=11 // pred_region
          %1196 = vsyncadd [#allocation48], 0
          %s1197 = sshll.u32 %s61, 4
          %s1198 = int_to_ptr.hbm [resolvable:$true] %s1197
          %s1199 = sshll.u32 [#allocation47], 4
          %s1200 = int_to_ptr.vmem [resolvable:$true] %s1199
          %1205 = dma.hbm_to_vmem [thread:$0]  %s1198, 8192, %s1200, [#allocation48], 128, 128, 8
        $region132: #{tpu_custom_call.1} parent=11 // pred_fallthru
          _
        // Predicated region
        $region133: #{tpu_custom_call.1} parent=11 // pred_check
          %p1206 = pneg %p767
        $region134: #{tpu_custom_call.1} parent=11 // pred_check_branch
          %1208 = sbr.rel (%p1206) target = $region136
        $region135: #{tpu_custom_call.1} parent=11 // pred_region
          %1210 = vsyncadd [#allocation48], 0
          %s1211 = sshll.u32 %s63, 4
          %s1212 = int_to_ptr.hbm [resolvable:$true] %s1211
          %s1213 = sshll.u32 [#allocation49], 4
          %s1214 = int_to_ptr.vmem [resolvable:$true] %s1213
          %1219 = dma.hbm_to_vmem [thread:$0]  %s1212, 32, %s1214, [#allocation48], 16, 16, 1
        $region136: #{tpu_custom_call.1} parent=11 // pred_fallthru
          _
      $region12: #{tpu_custom_call.1} parent=5 // pred_fallthru
        _
      %p1220 = scmp.lt.s32.totalorder %s90, 2
      // Predicated region
      $region137: #{tpu_custom_call.1} parent=5 // pred_check
        %p1221 = pneg %p1220
      $region138: #{tpu_custom_call.1} parent=5 // pred_check_branch
        %1223 = sbr.rel (%p1221) target = $region140
      $region139: #{tpu_custom_call.1} parent=5 // pred_region
        // Predicated region
        $region141: #{tpu_custom_call.1} parent=139 // pred_check
          %p1224 = pneg %p110
        $region142: #{tpu_custom_call.1} parent=139 // pred_check_branch
          %1226 = sbr.rel (%p1224) target = $region144
        $region143: #{tpu_custom_call.1} parent=139 // pred_region
          %s1227 = smul.u32 4, %s90
          %p1228 = scmp.lt.s32.totalorder %s1227, 7
          %s1229 = scalar_select %p1228, %s1227, 7
          %s1230 = smul.addr %s1229, 8
          %s1231 = scalar_lea.vmem %s1, %s1230
          %s1232 = smul.u32 4, %s90
        $region144: #{tpu_custom_call.1} parent=139 // pred_fallthru
          _
      $region140: #{tpu_custom_call.1} parent=5 // pred_fallthru
        _
      %p1233 = scmp.le.s32.totalorder 1, %s90
      %p1234 = scmp.lt.s32.totalorder %s90, 3
      %p1235 = pnand %p1233, %p1234
      %p1236 = pneg %p1235
      // Predicated region
      $region145: #{tpu_custom_call.1} parent=5 // pred_check
        _
      $region146: #{tpu_custom_call.1} parent=5 // pred_check_branch
        %1238 = sbr.rel (%p1235) target = $region148
      $region147: #{tpu_custom_call.1} parent=5 // pred_region
        %s1239 = ssub.s32 %s90, 1
        // Predicated region
        $region149: #{tpu_custom_call.1} parent=147 // pred_check
          %p1240 = pneg %p137
        $region150: #{tpu_custom_call.1} parent=147 // pred_check_branch
          %1242 = sbr.rel (%p1240) target = $region152
        $region151: #{tpu_custom_call.1} parent=147 // pred_region
          %1244 = dma.done [#allocation3], 16
        $region152: #{tpu_custom_call.1} parent=147 // pred_fallthru
          _
        // Predicated region
        $region153: #{tpu_custom_call.1} parent=147 // pred_check
          %p1245 = pneg %p158
        $region154: #{tpu_custom_call.1} parent=147 // pred_check_branch
          %1247 = sbr.rel (%p1245) target = $region156
        $region155: #{tpu_custom_call.1} parent=147 // pred_region
          %1249 = dma.done [#allocation6], 16
        $region156: #{tpu_custom_call.1} parent=147 // pred_fallthru
          _
        // Predicated region
        $region157: #{tpu_custom_call.1} parent=147 // pred_check
          %p1250 = pneg %p179
        $region158: #{tpu_custom_call.1} parent=147 // pred_check_branch
          %1252 = sbr.rel (%p1250) target = $region160
        $region159: #{tpu_custom_call.1} parent=147 // pred_region
          %1254 = dma.done [#allocation6], 1024
        $region160: #{tpu_custom_call.1} parent=147 // pred_fallthru
          _
        // Predicated region
        $region161: #{tpu_custom_call.1} parent=147 // pred_check
          %p1255 = pneg %p200
        $region162: #{tpu_custom_call.1} parent=147 // pred_check_branch
          %1257 = sbr.rel (%p1255) target = $region164
        $region163: #{tpu_custom_call.1} parent=147 // pred_region
          %1259 = dma.done [#allocation9], 32
        $region164: #{tpu_custom_call.1} parent=147 // pred_fallthru
          _
        // Predicated region
        $region165: #{tpu_custom_call.1} parent=147 // pred_check
          %p1260 = pneg %p221
        $region166: #{tpu_custom_call.1} parent=147 // pred_check_branch
          %1262 = sbr.rel (%p1260) target = $region168
        $region167: #{tpu_custom_call.1} parent=147 // pred_region
          %1264 = dma.done [#allocation9], 8192
        $region168: #{tpu_custom_call.1} parent=147 // pred_fallthru
          _
        // Predicated region
        $region169: #{tpu_custom_call.1} parent=147 // pred_check
          %p1265 = pneg %p242
        $region170: #{tpu_custom_call.1} parent=147 // pred_check_branch
          %1267 = sbr.rel (%p1265) target = $region172
        $region171: #{tpu_custom_call.1} parent=147 // pred_region
          %1269 = dma.done [#allocation12], 1024
        $region172: #{tpu_custom_call.1} parent=147 // pred_fallthru
          _
        // Predicated region
        $region173: #{tpu_custom_call.1} parent=147 // pred_check
          %p1270 = pneg %p263
        $region174: #{tpu_custom_call.1} parent=147 // pred_check_branch
          %1272 = sbr.rel (%p1270) target = $region176
        $region175: #{tpu_custom_call.1} parent=147 // pred_region
          %1274 = dma.done [#allocation12], 32
        $region176: #{tpu_custom_call.1} parent=147 // pred_fallthru
          _
        // Predicated region
        $region177: #{tpu_custom_call.1} parent=147 // pred_check
          %p1275 = pneg %p284
        $region178: #{tpu_custom_call.1} parent=147 // pred_check_branch
          %1277 = sbr.rel (%p1275) target = $region180
        $region179: #{tpu_custom_call.1} parent=147 // pred_region
          %1279 = dma.done [#allocation15], 32
        $region180: #{tpu_custom_call.1} parent=147 // pred_fallthru
          _
        // Predicated region
        $region181: #{tpu_custom_call.1} parent=147 // pred_check
          %p1280 = pneg %p305
        $region182: #{tpu_custom_call.1} parent=147 // pred_check_branch
          %1282 = sbr.rel (%p1280) target = $region184
        $region183: #{tpu_custom_call.1} parent=147 // pred_region
          %1284 = dma.done [#allocation15], 32
        $region184: #{tpu_custom_call.1} parent=147 // pred_fallthru
          _
        // Predicated region
        $region185: #{tpu_custom_call.1} parent=147 // pred_check
          %p1285 = pneg %p326
        $region186: #{tpu_custom_call.1} parent=147 // pred_check_branch
          %1287 = sbr.rel (%p1285) target = $region188
        $region187: #{tpu_custom_call.1} parent=147 // pred_region
          %1289 = dma.done [#allocation18], 8192
        $region188: #{tpu_custom_call.1} parent=147 // pred_fallthru
          _
        // Predicated region
        $region189: #{tpu_custom_call.1} parent=147 // pred_check
          %p1290 = pneg %p347
        $region190: #{tpu_custom_call.1} parent=147 // pred_check_branch
          %1292 = sbr.rel (%p1290) target = $region192
        $region191: #{tpu_custom_call.1} parent=147 // pred_region
          %1294 = dma.done [#allocation18], 32
        $region192: #{tpu_custom_call.1} parent=147 // pred_fallthru
          _
        // Predicated region
        $region193: #{tpu_custom_call.1} parent=147 // pred_check
          %p1295 = pneg %p368
        $region194: #{tpu_custom_call.1} parent=147 // pred_check_branch
          %1297 = sbr.rel (%p1295) target = $region196
        $region195: #{tpu_custom_call.1} parent=147 // pred_region
          %1299 = dma.done [#allocation21], 8192
        $region196: #{tpu_custom_call.1} parent=147 // pred_fallthru
          _
        // Predicated region
        $region197: #{tpu_custom_call.1} parent=147 // pred_check
          %p1300 = pneg %p389
        $region198: #{tpu_custom_call.1} parent=147 // pred_check_branch
          %1302 = sbr.rel (%p1300) target = $region200
        $region199: #{tpu_custom_call.1} parent=147 // pred_region
          %1304 = dma.done [#allocation21], 32
        $region200: #{tpu_custom_call.1} parent=147 // pred_fallthru
          _
        // Predicated region
        $region201: #{tpu_custom_call.1} parent=147 // pred_check
          %p1305 = pneg %p410
        $region202: #{tpu_custom_call.1} parent=147 // pred_check_branch
          %1307 = sbr.rel (%p1305) target = $region204
        $region203: #{tpu_custom_call.1} parent=147 // pred_region
          %1309 = dma.done [#allocation24], 32
        $region204: #{tpu_custom_call.1} parent=147 // pred_fallthru
          _
        // Predicated region
        $region205: #{tpu_custom_call.1} parent=147 // pred_check
          %p1310 = pneg %p431
        $region206: #{tpu_custom_call.1} parent=147 // pred_check_branch
          %1312 = sbr.rel (%p1310) target = $region208
        $region207: #{tpu_custom_call.1} parent=147 // pred_region
          %1314 = dma.done [#allocation24], 4096
        $region208: #{tpu_custom_call.1} parent=147 // pred_fallthru
          _
        // Predicated region
        $region209: #{tpu_custom_call.1} parent=147 // pred_check
          %p1315 = pneg %p452
        $region210: #{tpu_custom_call.1} parent=147 // pred_check_branch
          %1317 = sbr.rel (%p1315) target = $region212
        $region211: #{tpu_custom_call.1} parent=147 // pred_region
          %1319 = dma.done [#allocation27], 16
        $region212: #{tpu_custom_call.1} parent=147 // pred_fallthru
          _
        // Predicated region
        $region213: #{tpu_custom_call.1} parent=147 // pred_check
          %p1320 = pneg %p473
        $region214: #{tpu_custom_call.1} parent=147 // pred_check_branch
          %1322 = sbr.rel (%p1320) target = $region216
        $region215: #{tpu_custom_call.1} parent=147 // pred_region
          %1324 = dma.done [#allocation27], 2048
        $region216: #{tpu_custom_call.1} parent=147 // pred_fallthru
          _
        // Predicated region
        $region217: #{tpu_custom_call.1} parent=147 // pred_check
          %p1325 = pneg %p494
        $region218: #{tpu_custom_call.1} parent=147 // pred_check_branch
          %1327 = sbr.rel (%p1325) target = $region220
        $region219: #{tpu_custom_call.1} parent=147 // pred_region
          %1329 = dma.done [#allocation30], 4096
        $region220: #{tpu_custom_call.1} parent=147 // pred_fallthru
          _
        // Predicated region
        $region221: #{tpu_custom_call.1} parent=147 // pred_check
          %p1330 = pneg %p515
        $region222: #{tpu_custom_call.1} parent=147 // pred_check_branch
          %1332 = sbr.rel (%p1330) target = $region224
        $region223: #{tpu_custom_call.1} parent=147 // pred_region
          %1334 = dma.done [#allocation30], 16
        $region224: #{tpu_custom_call.1} parent=147 // pred_fallthru
          _
        // Predicated region
        $region225: #{tpu_custom_call.1} parent=147 // pred_check
          %p1335 = pneg %p536
        $region226: #{tpu_custom_call.1} parent=147 // pred_check_branch
          %1337 = sbr.rel (%p1335) target = $region228
        $region227: #{tpu_custom_call.1} parent=147 // pred_region
          %1339 = dma.done [#allocation33], 192
        $region228: #{tpu_custom_call.1} parent=147 // pred_fallthru
          _
        // Predicated region
        $region229: #{tpu_custom_call.1} parent=147 // pred_check
          %p1340 = pneg %p557
        $region230: #{tpu_custom_call.1} parent=147 // pred_check_branch
          %1342 = sbr.rel (%p1340) target = $region232
        $region231: #{tpu_custom_call.1} parent=147 // pred_region
          %1344 = dma.done [#allocation33], 192
        $region232: #{tpu_custom_call.1} parent=147 // pred_fallthru
          _
        // Predicated region
        $region233: #{tpu_custom_call.1} parent=147 // pred_check
          %p1345 = pneg %p578
        $region234: #{tpu_custom_call.1} parent=147 // pred_check_branch
          %1347 = sbr.rel (%p1345) target = $region236
        $region235: #{tpu_custom_call.1} parent=147 // pred_region
          %1349 = dma.done [#allocation36], 49152
        $region236: #{tpu_custom_call.1} parent=147 // pred_fallthru
          _
        // Predicated region
        $region237: #{tpu_custom_call.1} parent=147 // pred_check
          %p1350 = pneg %p599
        $region238: #{tpu_custom_call.1} parent=147 // pred_check_branch
          %1352 = sbr.rel (%p1350) target = $region240
        $region239: #{tpu_custom_call.1} parent=147 // pred_region
          %1354 = dma.done [#allocation36], 192
        $region240: #{tpu_custom_call.1} parent=147 // pred_fallthru
          _
        // Predicated region
        $region241: #{tpu_custom_call.1} parent=147 // pred_check
          %p1355 = pneg %p620
        $region242: #{tpu_custom_call.1} parent=147 // pred_check_branch
          %1357 = sbr.rel (%p1355) target = $region244
        $region243: #{tpu_custom_call.1} parent=147 // pred_region
          %1359 = dma.done [#allocation39], 49152
        $region244: #{tpu_custom_call.1} parent=147 // pred_fallthru
          _
        // Predicated region
        $region245: #{tpu_custom_call.1} parent=147 // pred_check
          %p1360 = pneg %p641
        $region246: #{tpu_custom_call.1} parent=147 // pred_check_branch
          %1362 = sbr.rel (%p1360) target = $region248
        $region247: #{tpu_custom_call.1} parent=147 // pred_region
          %1364 = dma.done [#allocation39], 64
        $region248: #{tpu_custom_call.1} parent=147 // pred_fallthru
          _
        // Predicated region
        $region249: #{tpu_custom_call.1} parent=147 // pred_check
          %p1365 = pneg %p662
        $region250: #{tpu_custom_call.1} parent=147 // pred_check_branch
          %1367 = sbr.rel (%p1365) target = $region252
        $region251: #{tpu_custom_call.1} parent=147 // pred_region
          %1369 = dma.done [#allocation42], 64
        $region252: #{tpu_custom_call.1} parent=147 // pred_fallthru
          _
        // Predicated region
        $region253: #{tpu_custom_call.1} parent=147 // pred_check
          %p1370 = pneg %p683
        $region254: #{tpu_custom_call.1} parent=147 // pred_check_branch
          %1372 = sbr.rel (%p1370) target = $region256
        $region255: #{tpu_custom_call.1} parent=147 // pred_region
          %1374 = dma.done [#allocation42], 8192
        $region256: #{tpu_custom_call.1} parent=147 // pred_fallthru
          _
        // Predicated region
        $region257: #{tpu_custom_call.1} parent=147 // pred_check
          %p1375 = pneg %p704
        $region258: #{tpu_custom_call.1} parent=147 // pred_check_branch
          %1377 = sbr.rel (%p1375) target = $region260
        $region259: #{tpu_custom_call.1} parent=147 // pred_region
          %1379 = dma.done [#allocation45], 32
        $region260: #{tpu_custom_call.1} parent=147 // pred_fallthru
          _
        // Predicated region
        $region261: #{tpu_custom_call.1} parent=147 // pred_check
          %p1380 = pneg %p725
        $region262: #{tpu_custom_call.1} parent=147 // pred_check_branch
          %1382 = sbr.rel (%p1380) target = $region264
        $region263: #{tpu_custom_call.1} parent=147 // pred_region
          %1384 = dma.done [#allocation45], 32
        $region264: #{tpu_custom_call.1} parent=147 // pred_fallthru
          _
        // Predicated region
        $region265: #{tpu_custom_call.1} parent=147 // pred_check
          %p1385 = pneg %p746
        $region266: #{tpu_custom_call.1} parent=147 // pred_check_branch
          %1387 = sbr.rel (%p1385) target = $region268
        $region267: #{tpu_custom_call.1} parent=147 // pred_region
          %1389 = dma.done [#allocation48], 8192
        $region268: #{tpu_custom_call.1} parent=147 // pred_fallthru
          _
        // Predicated region
        $region269: #{tpu_custom_call.1} parent=147 // pred_check
          %p1390 = pneg %p767
        $region270: #{tpu_custom_call.1} parent=147 // pred_check_branch
          %1392 = sbr.rel (%p1390) target = $region272
        $region271: #{tpu_custom_call.1} parent=147 // pred_region
          %1394 = dma.done [#allocation48], 32
        $region272: #{tpu_custom_call.1} parent=147 // pred_fallthru
          _
        %s1395 = smul.u32 4, %s95
        %p1396 = scmp.lt.s32.totalorder %s1395, 7
        %s1397 = scalar_select %p1396, %s1395, 7
        %s1398 = smul.addr %s1397, 8
        %s1399 = scalar_lea.vmem %s1, %s1398
        %p1400 = pneg %p116
        %p1401 = pneg %p113
        %p1402 = pneg %p137
        %p1403 = pneg %p134
        %p1404 = pneg %p158
        %p1405 = pneg %p155
        %p1406 = pneg %p179
        %p1407 = pneg %p176
        %p1408 = pneg %p200
        %p1409 = pneg %p197
        %p1410 = pneg %p221
        %p1411 = pneg %p218
        %p1412 = pneg %p242
        %p1413 = pneg %p239
        %p1414 = pneg %p263
        %p1415 = pneg %p260
        %p1416 = pneg %p284
        %p1417 = pneg %p281
        %p1418 = pneg %p305
        %p1419 = pneg %p302
        %p1420 = pneg %p326
        %p1421 = pneg %p323
        %p1422 = pneg %p347
        %p1423 = pneg %p344
        %p1424 = pneg %p368
        %p1425 = pneg %p365
        %p1426 = pneg %p389
        %p1427 = pneg %p386
        %p1428 = pneg %p410
        %p1429 = pneg %p407
        %p1430 = pneg %p431
        %p1431 = pneg %p428
        %p1432 = pneg %p452
        %p1433 = pneg %p449
        %p1434 = pneg %p473
        %p1435 = pneg %p470
        %p1436 = pneg %p494
        %p1437 = pneg %p491
        %p1438 = pneg %p515
        %p1439 = pneg %p512
        %p1440 = pneg %p536
        %p1441 = pneg %p533
        %p1442 = pneg %p557
        %p1443 = pneg %p554
        %p1444 = pneg %p578
        %p1445 = pneg %p575
        %p1446 = pneg %p599
        %p1447 = pneg %p596
        %p1448 = pneg %p620
        %p1449 = pneg %p617
        %p1450 = pneg %p641
        %p1451 = pneg %p638
        %p1452 = pneg %p662
        %p1453 = pneg %p659
        %p1454 = pneg %p683
        %p1455 = pneg %p680
        %p1456 = pneg %p704
        %p1457 = pneg %p701
        %p1458 = pneg %p725
        %p1459 = pneg %p722
        %p1460 = pneg %p746
        %p1461 = pneg %p743
        %p1462 = pneg %p767
        %p1463 = pneg %p764
        %p1464 = pneg %p793
        %p1465 = pneg %p790
        %s1466 = sand.u32 %s780, 1
        %s1467 = scalar_lea.sflag [#allocation4], %s1466
        %s1468 = sand.u32 %s780, 1
        %s1469 = smul.addr %s1468, 32
        %s1470 = scalar_lea.vmem [#allocation50], %s1469
        %s1471 = smul.u32 4, %s95
        %p1472 = scmp.lt.s32.totalorder %s1471, 7
        %s1473 = scalar_select %p1472, %s1471, 7
        %s1474 = smul.addr %s1473, 8
        %s1475 = scalar_lea.vmem %s1, %s1474
        %s1476 = smul.u32 4, %s95
        %s1477 = smul.u32 4, %s95
        %v1478 = vld [vmem:[%s1475] sm:$0xff]
        %v1479 = vld [vmem:[%s1475 + $0x8] sm:$0xff]
        %v1480 = vld [vmem:[%s1475 + $0x10] sm:$0xff]
        %v1481 = vld [vmem:[%s1475 + $0x18] sm:$0xff]
        %v1482 = vld [vmem:[#allocation2] sm:$0x1]
        %v1483 = vld [vmem:[#allocation5] sm:$0x1]
        %v1484 = vld [vmem:[#allocation7] sm:$0xff]
        %v1485 = vld [vmem:[#allocation7 + $0x8] sm:$0xff]
        %v1486 = vld [vmem:[#allocation7 + $0x10] sm:$0xff]
        %v1487 = vld [vmem:[#allocation7 + $0x18] sm:$0xff]
        %v1488 = vld [vmem:[#allocation7 + $0x20] sm:$0xff]
        %v1489 = vld [vmem:[#allocation7 + $0x28] sm:$0xff]
        %v1490 = vld [vmem:[#allocation7 + $0x30] sm:$0xff]
        %v1491 = vld [vmem:[#allocation7 + $0x38] sm:$0xff]
        %v1492 = vld [vmem:[#allocation8] sm:$0x3]
        %v1493 = vld [vmem:[#allocation10] sm:$0xff]
        %v1494 = vld [vmem:[#allocation10 + $0x8] sm:$0xff]
        %v1495 = vld [vmem:[#allocation10 + $0x10] sm:$0xff]
        %v1496 = vld [vmem:[#allocation10 + $0x18] sm:$0xff]
        %v1497 = vld [vmem:[#allocation10 + $0x20] sm:$0xff]
        %v1498 = vld [vmem:[#allocation10 + $0x28] sm:$0xff]
        %v1499 = vld [vmem:[#allocation10 + $0x30] sm:$0xff]
        %v1500 = vld [vmem:[#allocation10 + $0x38] sm:$0xff]
        %v1501 = vld [vmem:[#allocation10 + $0x40] sm:$0xff]
        %v1502 = vld [vmem:[#allocation10 + $0x48] sm:$0xff]
        %v1503 = vld [vmem:[#allocation10 + $0x50] sm:$0xff]
        %v1504 = vld [vmem:[#allocation10 + $0x58] sm:$0xff]
        %v1505 = vld [vmem:[#allocation10 + $0x60] sm:$0xff]
        %v1506 = vld [vmem:[#allocation10 + $0x68] sm:$0xff]
        %v1507 = vld [vmem:[#allocation10 + $0x70] sm:$0xff]
        %v1508 = vld [vmem:[#allocation10 + $0x78] sm:$0xff]
        %v1509 = vld [vmem:[#allocation10 + $0x80] sm:$0xff]
        %v1510 = vld [vmem:[#allocation10 + $0x88] sm:$0xff]
        %v1511 = vld [vmem:[#allocation10 + $0x90] sm:$0xff]
        %v1512 = vld [vmem:[#allocation10 + $0x98] sm:$0xff]
        %v1513 = vld [vmem:[#allocation10 + $0xa0] sm:$0xff]
        %v1514 = vld [vmem:[#allocation10 + $0xa8] sm:$0xff]
        %v1515 = vld [vmem:[#allocation10 + $0xb0] sm:$0xff]
        %v1516 = vld [vmem:[#allocation10 + $0xb8] sm:$0xff]
        %v1517 = vld [vmem:[#allocation10 + $0xc0] sm:$0xff]
        %v1518 = vld [vmem:[#allocation10 + $0xc8] sm:$0xff]
        %v1519 = vld [vmem:[#allocation10 + $0xd0] sm:$0xff]
        %v1520 = vld [vmem:[#allocation10 + $0xd8] sm:$0xff]
        %v1521 = vld [vmem:[#allocation10 + $0xe0] sm:$0xff]
        %v1522 = vld [vmem:[#allocation10 + $0xe8] sm:$0xff]
        %v1523 = vld [vmem:[#allocation10 + $0xf0] sm:$0xff]
        %v1524 = vld [vmem:[#allocation10 + $0xf8] sm:$0xff]
        %v1525 = vld [vmem:[#allocation10 + $0x100] sm:$0xff]
        %v1526 = vld [vmem:[#allocation10 + $0x108] sm:$0xff]
        %v1527 = vld [vmem:[#allocation10 + $0x110] sm:$0xff]
        %v1528 = vld [vmem:[#allocation10 + $0x118] sm:$0xff]
        %v1529 = vld [vmem:[#allocation10 + $0x120] sm:$0xff]
        %v1530 = vld [vmem:[#allocation10 + $0x128] sm:$0xff]
        %v1531 = vld [vmem:[#allocation10 + $0x130] sm:$0xff]
        %v1532 = vld [vmem:[#allocation10 + $0x138] sm:$0xff]
        %v1533 = vld [vmem:[#allocation10 + $0x140] sm:$0xff]
        %v1534 = vld [vmem:[#allocation10 + $0x148] sm:$0xff]
        %v1535 = vld [vmem:[#allocation10 + $0x150] sm:$0xff]
        %v1536 = vld [vmem:[#allocation10 + $0x158] sm:$0xff]
        %v1537 = vld [vmem:[#allocation10 + $0x160] sm:$0xff]
        %v1538 = vld [vmem:[#allocation10 + $0x168] sm:$0xff]
        %v1539 = vld [vmem:[#allocation10 + $0x170] sm:$0xff]
        %v1540 = vld [vmem:[#allocation10 + $0x178] sm:$0xff]
        %v1541 = vld [vmem:[#allocation10 + $0x180] sm:$0xff]
        %v1542 = vld [vmem:[#allocation10 + $0x188] sm:$0xff]
        %v1543 = vld [vmem:[#allocation10 + $0x190] sm:$0xff]
        %v1544 = vld [vmem:[#allocation10 + $0x198] sm:$0xff]
        %v1545 = vld [vmem:[#allocation10 + $0x1a0] sm:$0xff]
        %v1546 = vld [vmem:[#allocation10 + $0x1a8] sm:$0xff]
        %v1547 = vld [vmem:[#allocation10 + $0x1b0] sm:$0xff]
        %v1548 = vld [vmem:[#allocation10 + $0x1b8] sm:$0xff]
        %v1549 = vld [vmem:[#allocation10 + $0x1c0] sm:$0xff]
        %v1550 = vld [vmem:[#allocation10 + $0x1c8] sm:$0xff]
        %v1551 = vld [vmem:[#allocation10 + $0x1d0] sm:$0xff]
        %v1552 = vld [vmem:[#allocation10 + $0x1d8] sm:$0xff]
        %v1553 = vld [vmem:[#allocation10 + $0x1e0] sm:$0xff]
        %v1554 = vld [vmem:[#allocation10 + $0x1e8] sm:$0xff]
        %v1555 = vld [vmem:[#allocation10 + $0x1f0] sm:$0xff]
        %v1556 = vld [vmem:[#allocation10 + $0x1f8] sm:$0xff]
        %v1557 = vld [vmem:[#allocation11] sm:$0xff]
        %v1558 = vld [vmem:[#allocation11 + $0x8] sm:$0xff]
        %v1559 = vld [vmem:[#allocation11 + $0x10] sm:$0xff]
        %v1560 = vld [vmem:[#allocation11 + $0x18] sm:$0xff]
        %v1561 = vld [vmem:[#allocation11 + $0x20] sm:$0xff]
        %v1562 = vld [vmem:[#allocation11 + $0x28] sm:$0xff]
        %v1563 = vld [vmem:[#allocation11 + $0x30] sm:$0xff]
        %v1564 = vld [vmem:[#allocation11 + $0x38] sm:$0xff]
        %v1565 = vld [vmem:[#allocation13] sm:$0x3]
        %v1567 = vperm.slane %v1482, 0
        %v1569 = vmul.f32 %v1478, %v1567
        %v1570 = vmul.f32 %v1479, %v1567
        %v1571 = vmul.f32 %v1480, %v1567
        %v1572 = vmul.f32 %v1481, %v1567
        %v1574 = vperm.slane %v1483, 0
        %v1576 = vadd.f32 %v1569, %v1574
        %v1577 = vadd.f32 %v1570, %v1574
        %v1578 = vadd.f32 %v1571, %v1574
        %v1579 = vadd.f32 %v1572, %v1574
        %v1580 = vmax.f32 %v1576, 0.0
        %v1581 = vmax.f32 %v1577, 0.0
        %v1582 = vmax.f32 %v1578, 0.0
        %v1583 = vmax.f32 %v1579, 0.0
        %v1585 = vperm.slane %v1492, 0
        %v1586 = vperm.slane %v1492, 1
        %vm1589 = vcmask 261120
        %v1591 = vsel %vm1589, %v1580, 0
        %v1594 = vsel %vm1589, %v1581, 0
        %v1597 = vsel %vm1589, %v1582, 0
        %v1600 = vsel %vm1589, %v1583, 0
        %1602 = vmatpush.msra.mxu0 0.0
        %1603 = vmatpush.msra.mxu0 0.0
        %1604 = vmatpush.msra.mxu0 0.0
        %1605 = vmatpush.msra.mxu0 0.0
        %1606 = vmatpush.msra.mxu0 0.0
        %1607 = vmatpush.msra.mxu0 0.0
        %1608 = vmatpush.msra.mxu0 0.0
        %1609 = vmatpush.msra.mxu0 0.0
        %1610 = vmatpush.msra.mxu0 0.0
        %1611 = vmatpush.msra.mxu0 0.0
        %1612 = vmatpush.msra.mxu0 0.0
        %1613 = vmatpush.msra.mxu0 0.0
        %1614 = vmatpush.msra.mxu0 %v1490
        %1615 = vmatpush.msra.mxu0 %v1488
        %1616 = vmatpush.msra.mxu0 %v1486
        %1617 = vmatpush.msra.mxu0 %v1484
        %1618 = vmatmul.f32.gmra.mxu0 %v1591
        %v1619 = vpop.f32.mrf.mxu0
        %v1620 = vadd.f32 %v1585, %v1619
        %1621 = vmatmul.f32.gmra.mxu0 %v1594
        %v1622 = vpop.f32.mrf.mxu0
        %v1623 = vadd.f32 %v1585, %v1622
        %1624 = vmatmul.f32.gmra.mxu0 %v1597
        %v1625 = vpop.f32.mrf.mxu0
        %v1626 = vadd.f32 %v1585, %v1625
        %1627 = vmatmul.f32.gmra.mxu0 %v1600
        %v1628 = vpop.f32.mrf.mxu0
        %v1629 = vadd.f32 %v1585, %v1628
        %1630 = vdwg.mxu0
        %1631 = vmatpush.msra.mxu0 0.0
        %1632 = vmatpush.msra.mxu0 0.0
        %1633 = vmatpush.msra.mxu0 0.0
        %1634 = vmatpush.msra.mxu0 0.0
        %1635 = vmatpush.msra.mxu0 0.0
        %1636 = vmatpush.msra.mxu0 0.0
        %1637 = vmatpush.msra.mxu0 0.0
        %1638 = vmatpush.msra.mxu0 0.0
        %1639 = vmatpush.msra.mxu0 0.0
        %1640 = vmatpush.msra.mxu0 0.0
        %1641 = vmatpush.msra.mxu0 0.0
        %1642 = vmatpush.msra.mxu0 0.0
        %1643 = vmatpush.msra.mxu0 %v1491
        %1644 = vmatpush.msra.mxu0 %v1489
        %1645 = vmatpush.msra.mxu0 %v1487
        %1646 = vmatpush.msra.mxu0 %v1485
        %1647 = vmatmul.f32.gmra.mxu0 %v1591
        %v1648 = vpop.f32.mrf.mxu0
        %v1649 = vadd.f32 %v1586, %v1648
        %1650 = vmatmul.f32.gmra.mxu0 %v1594
        %v1651 = vpop.f32.mrf.mxu0
        %v1652 = vadd.f32 %v1586, %v1651
        %1653 = vmatmul.f32.gmra.mxu0 %v1597
        %v1654 = vpop.f32.mrf.mxu0
        %v1655 = vadd.f32 %v1586, %v1654
        %1656 = vmatmul.f32.gmra.mxu0 %v1600
        %v1657 = vpop.f32.mrf.mxu0
        %v1658 = vadd.f32 %v1586, %v1657
        %1659 = vdwg.mxu0
        %v1660 = vmax.f32 %v1620, 0.0
        %v1661 = vmax.f32 %v1649, 0.0
        %v1662 = vmax.f32 %v1623, 0.0
        %v1663 = vmax.f32 %v1652, 0.0
        %v1664 = vmax.f32 %v1626, 0.0
        %v1665 = vmax.f32 %v1655, 0.0
        %v1666 = vmax.f32 %v1629, 0.0
        %v1667 = vmax.f32 %v1658, 0.0
        %v1669 = vperm.slane %v1565, 0
        %v1670 = vperm.slane %v1565, 1
        %v1674 = vsel %vm1589, %v1478, 0
        %v1677 = vsel %vm1589, %v1479, 0
        %v1680 = vsel %vm1589, %v1480, 0
        %v1683 = vsel %vm1589, %v1481, 0
        %1685 = vmatpush.msra.mxu0 0.0
        %1686 = vmatpush.msra.mxu0 0.0
        %1687 = vmatpush.msra.mxu0 0.0
        %1688 = vmatpush.msra.mxu0 0.0
        %1689 = vmatpush.msra.mxu0 0.0
        %1690 = vmatpush.msra.mxu0 0.0
        %1691 = vmatpush.msra.mxu0 0.0
        %1692 = vmatpush.msra.mxu0 0.0
        %1693 = vmatpush.msra.mxu0 0.0
        %1694 = vmatpush.msra.mxu0 0.0
        %1695 = vmatpush.msra.mxu0 0.0
        %1696 = vmatpush.msra.mxu0 0.0
        %1697 = vmatpush.msra.mxu0 %v1563
        %1698 = vmatpush.msra.mxu0 %v1561
        %1699 = vmatpush.msra.mxu0 %v1559
        %1700 = vmatpush.msra.mxu0 %v1557
        %1701 = vmatmul.f32.gmra.mxu0 %v1674
        %v1702 = vpop.f32.mrf.mxu0
        %v1703 = vadd.f32 %v1669, %v1702
        %1704 = vmatmul.f32.gmra.mxu0 %v1677
        %v1705 = vpop.f32.mrf.mxu0
        %v1706 = vadd.f32 %v1669, %v1705
        %1707 = vmatmul.f32.gmra.mxu0 %v1680
        %v1708 = vpop.f32.mrf.mxu0
        %v1709 = vadd.f32 %v1669, %v1708
        %1710 = vmatmul.f32.gmra.mxu0 %v1683
        %v1711 = vpop.f32.mrf.mxu0
        %v1712 = vadd.f32 %v1669, %v1711
        %1713 = vdwg.mxu0
        %1714 = vmatpush.msra.mxu0 0.0
        %1715 = vmatpush.msra.mxu0 0.0
        %1716 = vmatpush.msra.mxu0 0.0
        %1717 = vmatpush.msra.mxu0 0.0
        %1718 = vmatpush.msra.mxu0 0.0
        %1719 = vmatpush.msra.mxu0 0.0
        %1720 = vmatpush.msra.mxu0 0.0
        %1721 = vmatpush.msra.mxu0 0.0
        %1722 = vmatpush.msra.mxu0 0.0
        %1723 = vmatpush.msra.mxu0 0.0
        %1724 = vmatpush.msra.mxu0 0.0
        %1725 = vmatpush.msra.mxu0 0.0
        %1726 = vmatpush.msra.mxu0 %v1564
        %1727 = vmatpush.msra.mxu0 %v1562
        %1728 = vmatpush.msra.mxu0 %v1560
        %1729 = vmatpush.msra.mxu0 %v1558
        %1730 = vmatmul.f32.gmra.mxu0 %v1674
        %v1731 = vpop.f32.mrf.mxu0
        %v1732 = vadd.f32 %v1670, %v1731
        %1733 = vmatmul.f32.gmra.mxu0 %v1677
        %v1734 = vpop.f32.mrf.mxu0
        %v1735 = vadd.f32 %v1670, %v1734
        %1736 = vmatmul.f32.gmra.mxu0 %v1680
        %v1737 = vpop.f32.mrf.mxu0
        %v1738 = vadd.f32 %v1670, %v1737
        %1739 = vmatmul.f32.gmra.mxu0 %v1683
        %v1740 = vpop.f32.mrf.mxu0
        %v1741 = vadd.f32 %v1670, %v1740
        %1742 = vdwg.mxu0
        %1743 = vmatpush.msra.mxu0 %v1523
        %1744 = vmatpush.msra.mxu0 %v1521
        %1745 = vmatpush.msra.mxu0 %v1519
        %1746 = vmatpush.msra.mxu0 %v1517
        %1747 = vmatpush.msra.mxu0 %v1515
        %1748 = vmatpush.msra.mxu0 %v1513
        %1749 = vmatpush.msra.mxu0 %v1511
        %1750 = vmatpush.msra.mxu0 %v1509
        %1751 = vmatpush.msra.mxu0 %v1507
        %1752 = vmatpush.msra.mxu0 %v1505
        %1753 = vmatpush.msra.mxu0 %v1503
        %1754 = vmatpush.msra.mxu0 %v1501
        %1755 = vmatpush.msra.mxu0 %v1499
        %1756 = vmatpush.msra.mxu0 %v1497
        %1757 = vmatpush.msra.mxu0 %v1495
        %1758 = vmatpush.msra.mxu0 %v1493
        %1759 = vmatmul.f32.gmra.mxu0 %v1660
        %v1760 = vpop.f32.mrf.mxu0
        %v1761 = vadd.f32 %v1703, %v1760
        %1762 = vmatmul.f32.gmra.mxu0 %v1662
        %v1763 = vpop.f32.mrf.mxu0
        %v1764 = vadd.f32 %v1706, %v1763
        %1765 = vmatmul.f32.gmra.mxu0 %v1664
        %v1766 = vpop.f32.mrf.mxu0
        %v1767 = vadd.f32 %v1709, %v1766
        %1768 = vmatmul.f32.gmra.mxu0 %v1666
        %v1769 = vpop.f32.mrf.mxu0
        %v1770 = vadd.f32 %v1712, %v1769
        %1771 = vdwg.mxu0
        %1772 = vmatpush.msra.mxu0 %v1555
        %1773 = vmatpush.msra.mxu0 %v1553
        %1774 = vmatpush.msra.mxu0 %v1551
        %1775 = vmatpush.msra.mxu0 %v1549
        %1776 = vmatpush.msra.mxu0 %v1547
        %1777 = vmatpush.msra.mxu0 %v1545
        %1778 = vmatpush.msra.mxu0 %v1543
        %1779 = vmatpush.msra.mxu0 %v1541
        %1780 = vmatpush.msra.mxu0 %v1539
        %1781 = vmatpush.msra.mxu0 %v1537
        %1782 = vmatpush.msra.mxu0 %v1535
        %1783 = vmatpush.msra.mxu0 %v1533
        %1784 = vmatpush.msra.mxu0 %v1531
        %1785 = vmatpush.msra.mxu0 %v1529
        %1786 = vmatpush.msra.mxu0 %v1527
        %1787 = vmatpush.msra.mxu0 %v1525
        %1788 = vmatmul.f32.gmra.mxu0 %v1661
        %v1789 = vpop.f32.mrf.mxu0
        %v1790 = vadd.f32 %v1761, %v1789
        %1791 = vmatmul.f32.gmra.mxu0 %v1663
        %v1792 = vpop.f32.mrf.mxu0
        %v1793 = vadd.f32 %v1764, %v1792
        %1794 = vmatmul.f32.gmra.mxu0 %v1665
        %v1795 = vpop.f32.mrf.mxu0
        %v1796 = vadd.f32 %v1767, %v1795
        %1797 = vmatmul.f32.gmra.mxu0 %v1667
        %v1798 = vpop.f32.mrf.mxu0
        %v1799 = vadd.f32 %v1770, %v1798
        %1800 = vdwg.mxu0
        %1801 = vmatpush.msra.mxu0 %v1524
        %1802 = vmatpush.msra.mxu0 %v1522
        %1803 = vmatpush.msra.mxu0 %v1520
        %1804 = vmatpush.msra.mxu0 %v1518
        %1805 = vmatpush.msra.mxu0 %v1516
        %1806 = vmatpush.msra.mxu0 %v1514
        %1807 = vmatpush.msra.mxu0 %v1512
        %1808 = vmatpush.msra.mxu0 %v1510
        %1809 = vmatpush.msra.mxu0 %v1508
        %1810 = vmatpush.msra.mxu0 %v1506
        %1811 = vmatpush.msra.mxu0 %v1504
        %1812 = vmatpush.msra.mxu0 %v1502
        %1813 = vmatpush.msra.mxu0 %v1500
        %1814 = vmatpush.msra.mxu0 %v1498
        %1815 = vmatpush.msra.mxu0 %v1496
        %1816 = vmatpush.msra.mxu0 %v1494
        %1817 = vmatmul.f32.gmra.mxu0 %v1660
        %v1818 = vpop.f32.mrf.mxu0
        %v1819 = vadd.f32 %v1732, %v1818
        %1820 = vmatmul.f32.gmra.mxu0 %v1662
        %v1821 = vpop.f32.mrf.mxu0
        %v1822 = vadd.f32 %v1735, %v1821
        %1823 = vmatmul.f32.gmra.mxu0 %v1664
        %v1824 = vpop.f32.mrf.mxu0
        %v1825 = vadd.f32 %v1738, %v1824
        %1826 = vmatmul.f32.gmra.mxu0 %v1666
        %v1827 = vpop.f32.mrf.mxu0
        %v1828 = vadd.f32 %v1741, %v1827
        %1829 = vdwg.mxu0
        %1830 = vmatpush.msra.mxu0 %v1556
        %1831 = vmatpush.msra.mxu0 %v1554
        %1832 = vmatpush.msra.mxu0 %v1552
        %1833 = vmatpush.msra.mxu0 %v1550
        %1834 = vmatpush.msra.mxu0 %v1548
        %1835 = vmatpush.msra.mxu0 %v1546
        %1836 = vmatpush.msra.mxu0 %v1544
        %1837 = vmatpush.msra.mxu0 %v1542
        %1838 = vmatpush.msra.mxu0 %v1540
        %1839 = vmatpush.msra.mxu0 %v1538
        %1840 = vmatpush.msra.mxu0 %v1536
        %1841 = vmatpush.msra.mxu0 %v1534
        %1842 = vmatpush.msra.mxu0 %v1532
        %1843 = vmatpush.msra.mxu0 %v1530
        %1844 = vmatpush.msra.mxu0 %v1528
        %1845 = vmatpush.msra.mxu0 %v1526
        %1846 = vmatmul.f32.gmra.mxu0 %v1661
        %v1847 = vpop.f32.mrf.mxu0
        %v1848 = vadd.f32 %v1819, %v1847
        %1849 = vmatmul.f32.gmra.mxu0 %v1663
        %v1850 = vpop.f32.mrf.mxu0
        %v1851 = vadd.f32 %v1822, %v1850
        %1852 = vmatmul.f32.gmra.mxu0 %v1665
        %v1853 = vpop.f32.mrf.mxu0
        %v1854 = vadd.f32 %v1825, %v1853
        %1855 = vmatmul.f32.gmra.mxu0 %v1667
        %v1856 = vpop.f32.mrf.mxu0
        %v1857 = vadd.f32 %v1828, %v1856
        %1858 = vdwg.mxu0
        %v1859 = vmax.f32 %v1790, 0.0
        %v1860 = vmax.f32 %v1848, 0.0
        %v1861 = vmax.f32 %v1793, 0.0
        %v1862 = vmax.f32 %v1851, 0.0
        %v1863 = vmax.f32 %v1796, 0.0
        %v1864 = vmax.f32 %v1854, 0.0
        %v1865 = vmax.f32 %v1799, 0.0
        %v1866 = vmax.f32 %v1857, 0.0
        %v1867 = vld [vmem:[#allocation14] sm:$0x3]
        %v1868 = vld [vmem:[#allocation16] sm:$0x3]
        %v1869 = vld [vmem:[#allocation17] sm:$0xff]
        %v1870 = vld [vmem:[#allocation17 + $0x8] sm:$0xff]
        %v1871 = vld [vmem:[#allocation17 + $0x10] sm:$0xff]
        %v1872 = vld [vmem:[#allocation17 + $0x18] sm:$0xff]
        %v1873 = vld [vmem:[#allocation17 + $0x20] sm:$0xff]
        %v1874 = vld [vmem:[#allocation17 + $0x28] sm:$0xff]
        %v1875 = vld [vmem:[#allocation17 + $0x30] sm:$0xff]
        %v1876 = vld [vmem:[#allocation17 + $0x38] sm:$0xff]
        %v1877 = vld [vmem:[#allocation17 + $0x40] sm:$0xff]
        %v1878 = vld [vmem:[#allocation17 + $0x48] sm:$0xff]
        %v1879 = vld [vmem:[#allocation17 + $0x50] sm:$0xff]
        %v1880 = vld [vmem:[#allocation17 + $0x58] sm:$0xff]
        %v1881 = vld [vmem:[#allocation17 + $0x60] sm:$0xff]
        %v1882 = vld [vmem:[#allocation17 + $0x68] sm:$0xff]
        %v1883 = vld [vmem:[#allocation17 + $0x70] sm:$0xff]
        %v1884 = vld [vmem:[#allocation17 + $0x78] sm:$0xff]
        %v1885 = vld [vmem:[#allocation17 + $0x80] sm:$0xff]
        %v1886 = vld [vmem:[#allocation17 + $0x88] sm:$0xff]
        %v1887 = vld [vmem:[#allocation17 + $0x90] sm:$0xff]
        %v1888 = vld [vmem:[#allocation17 + $0x98] sm:$0xff]
        %v1889 = vld [vmem:[#allocation17 + $0xa0] sm:$0xff]
        %v1890 = vld [vmem:[#allocation17 + $0xa8] sm:$0xff]
        %v1891 = vld [vmem:[#allocation17 + $0xb0] sm:$0xff]
        %v1892 = vld [vmem:[#allocation17 + $0xb8] sm:$0xff]
        %v1893 = vld [vmem:[#allocation17 + $0xc0] sm:$0xff]
        %v1894 = vld [vmem:[#allocation17 + $0xc8] sm:$0xff]
        %v1895 = vld [vmem:[#allocation17 + $0xd0] sm:$0xff]
        %v1896 = vld [vmem:[#allocation17 + $0xd8] sm:$0xff]
        %v1897 = vld [vmem:[#allocation17 + $0xe0] sm:$0xff]
        %v1898 = vld [vmem:[#allocation17 + $0xe8] sm:$0xff]
        %v1899 = vld [vmem:[#allocation17 + $0xf0] sm:$0xff]
        %v1900 = vld [vmem:[#allocation17 + $0xf8] sm:$0xff]
        %v1901 = vld [vmem:[#allocation17 + $0x100] sm:$0xff]
        %v1902 = vld [vmem:[#allocation17 + $0x108] sm:$0xff]
        %v1903 = vld [vmem:[#allocation17 + $0x110] sm:$0xff]
        %v1904 = vld [vmem:[#allocation17 + $0x118] sm:$0xff]
        %v1905 = vld [vmem:[#allocation17 + $0x120] sm:$0xff]
        %v1906 = vld [vmem:[#allocation17 + $0x128] sm:$0xff]
        %v1907 = vld [vmem:[#allocation17 + $0x130] sm:$0xff]
        %v1908 = vld [vmem:[#allocation17 + $0x138] sm:$0xff]
        %v1909 = vld [vmem:[#allocation17 + $0x140] sm:$0xff]
        %v1910 = vld [vmem:[#allocation17 + $0x148] sm:$0xff]
        %v1911 = vld [vmem:[#allocation17 + $0x150] sm:$0xff]
        %v1912 = vld [vmem:[#allocation17 + $0x158] sm:$0xff]
        %v1913 = vld [vmem:[#allocation17 + $0x160] sm:$0xff]
        %v1914 = vld [vmem:[#allocation17 + $0x168] sm:$0xff]
        %v1915 = vld [vmem:[#allocation17 + $0x170] sm:$0xff]
        %v1916 = vld [vmem:[#allocation17 + $0x178] sm:$0xff]
        %v1917 = vld [vmem:[#allocation17 + $0x180] sm:$0xff]
        %v1918 = vld [vmem:[#allocation17 + $0x188] sm:$0xff]
        %v1919 = vld [vmem:[#allocation17 + $0x190] sm:$0xff]
        %v1920 = vld [vmem:[#allocation17 + $0x198] sm:$0xff]
        %v1921 = vld [vmem:[#allocation17 + $0x1a0] sm:$0xff]
        %v1922 = vld [vmem:[#allocation17 + $0x1a8] sm:$0xff]
        %v1923 = vld [vmem:[#allocation17 + $0x1b0] sm:$0xff]
        %v1924 = vld [vmem:[#allocation17 + $0x1b8] sm:$0xff]
        %v1925 = vld [vmem:[#allocation17 + $0x1c0] sm:$0xff]
        %v1926 = vld [vmem:[#allocation17 + $0x1c8] sm:$0xff]
        %v1927 = vld [vmem:[#allocation17 + $0x1d0] sm:$0xff]
        %v1928 = vld [vmem:[#allocation17 + $0x1d8] sm:$0xff]
        %v1929 = vld [vmem:[#allocation17 + $0x1e0] sm:$0xff]
        %v1930 = vld [vmem:[#allocation17 + $0x1e8] sm:$0xff]
        %v1931 = vld [vmem:[#allocation17 + $0x1f0] sm:$0xff]
        %v1932 = vld [vmem:[#allocation17 + $0x1f8] sm:$0xff]
        %v1933 = vld [vmem:[#allocation19] sm:$0x3]
        %v1934 = vld [vmem:[#allocation20] sm:$0xff]
        %v1935 = vld [vmem:[#allocation20 + $0x8] sm:$0xff]
        %v1936 = vld [vmem:[#allocation20 + $0x10] sm:$0xff]
        %v1937 = vld [vmem:[#allocation20 + $0x18] sm:$0xff]
        %v1938 = vld [vmem:[#allocation20 + $0x20] sm:$0xff]
        %v1939 = vld [vmem:[#allocation20 + $0x28] sm:$0xff]
        %v1940 = vld [vmem:[#allocation20 + $0x30] sm:$0xff]
        %v1941 = vld [vmem:[#allocation20 + $0x38] sm:$0xff]
        %v1942 = vld [vmem:[#allocation20 + $0x40] sm:$0xff]
        %v1943 = vld [vmem:[#allocation20 + $0x48] sm:$0xff]
        %v1944 = vld [vmem:[#allocation20 + $0x50] sm:$0xff]
        %v1945 = vld [vmem:[#allocation20 + $0x58] sm:$0xff]
        %v1946 = vld [vmem:[#allocation20 + $0x60] sm:$0xff]
        %v1947 = vld [vmem:[#allocation20 + $0x68] sm:$0xff]
        %v1948 = vld [vmem:[#allocation20 + $0x70] sm:$0xff]
        %v1949 = vld [vmem:[#allocation20 + $0x78] sm:$0xff]
        %v1950 = vld [vmem:[#allocation20 + $0x80] sm:$0xff]
        %v1951 = vld [vmem:[#allocation20 + $0x88] sm:$0xff]
        %v1952 = vld [vmem:[#allocation20 + $0x90] sm:$0xff]
        %v1953 = vld [vmem:[#allocation20 + $0x98] sm:$0xff]
        %v1954 = vld [vmem:[#allocation20 + $0xa0] sm:$0xff]
        %v1955 = vld [vmem:[#allocation20 + $0xa8] sm:$0xff]
        %v1956 = vld [vmem:[#allocation20 + $0xb0] sm:$0xff]
        %v1957 = vld [vmem:[#allocation20 + $0xb8] sm:$0xff]
        %v1958 = vld [vmem:[#allocation20 + $0xc0] sm:$0xff]
        %v1959 = vld [vmem:[#allocation20 + $0xc8] sm:$0xff]
        %v1960 = vld [vmem:[#allocation20 + $0xd0] sm:$0xff]
        %v1961 = vld [vmem:[#allocation20 + $0xd8] sm:$0xff]
        %v1962 = vld [vmem:[#allocation20 + $0xe0] sm:$0xff]
        %v1963 = vld [vmem:[#allocation20 + $0xe8] sm:$0xff]
        %v1964 = vld [vmem:[#allocation20 + $0xf0] sm:$0xff]
        %v1965 = vld [vmem:[#allocation20 + $0xf8] sm:$0xff]
        %v1966 = vld [vmem:[#allocation20 + $0x100] sm:$0xff]
        %v1967 = vld [vmem:[#allocation20 + $0x108] sm:$0xff]
        %v1968 = vld [vmem:[#allocation20 + $0x110] sm:$0xff]
        %v1969 = vld [vmem:[#allocation20 + $0x118] sm:$0xff]
        %v1970 = vld [vmem:[#allocation20 + $0x120] sm:$0xff]
        %v1971 = vld [vmem:[#allocation20 + $0x128] sm:$0xff]
        %v1972 = vld [vmem:[#allocation20 + $0x130] sm:$0xff]
        %v1973 = vld [vmem:[#allocation20 + $0x138] sm:$0xff]
        %v1974 = vld [vmem:[#allocation20 + $0x140] sm:$0xff]
        %v1975 = vld [vmem:[#allocation20 + $0x148] sm:$0xff]
        %v1976 = vld [vmem:[#allocation20 + $0x150] sm:$0xff]
        %v1977 = vld [vmem:[#allocation20 + $0x158] sm:$0xff]
        %v1978 = vld [vmem:[#allocation20 + $0x160] sm:$0xff]
        %v1979 = vld [vmem:[#allocation20 + $0x168] sm:$0xff]
        %v1980 = vld [vmem:[#allocation20 + $0x170] sm:$0xff]
        %v1981 = vld [vmem:[#allocation20 + $0x178] sm:$0xff]
        %v1982 = vld [vmem:[#allocation20 + $0x180] sm:$0xff]
        %v1983 = vld [vmem:[#allocation20 + $0x188] sm:$0xff]
        %v1984 = vld [vmem:[#allocation20 + $0x190] sm:$0xff]
        %v1985 = vld [vmem:[#allocation20 + $0x198] sm:$0xff]
        %v1986 = vld [vmem:[#allocation20 + $0x1a0] sm:$0xff]
        %v1987 = vld [vmem:[#allocation20 + $0x1a8] sm:$0xff]
        %v1988 = vld [vmem:[#allocation20 + $0x1b0] sm:$0xff]
        %v1989 = vld [vmem:[#allocation20 + $0x1b8] sm:$0xff]
        %v1990 = vld [vmem:[#allocation20 + $0x1c0] sm:$0xff]
        %v1991 = vld [vmem:[#allocation20 + $0x1c8] sm:$0xff]
        %v1992 = vld [vmem:[#allocation20 + $0x1d0] sm:$0xff]
        %v1993 = vld [vmem:[#allocation20 + $0x1d8] sm:$0xff]
        %v1994 = vld [vmem:[#allocation20 + $0x1e0] sm:$0xff]
        %v1995 = vld [vmem:[#allocation20 + $0x1e8] sm:$0xff]
        %v1996 = vld [vmem:[#allocation20 + $0x1f0] sm:$0xff]
        %v1997 = vld [vmem:[#allocation20 + $0x1f8] sm:$0xff]
        %v1999 = vperm.slane %v1867, 0
        %v2000 = vperm.slane %v1867, 1
        %v2003 = vmul.f32 %v1859, %v1999
        %v2004 = vmul.f32 %v1860, %v2000
        %v2005 = vmul.f32 %v1861, %v1999
        %v2006 = vmul.f32 %v1862, %v2000
        %v2007 = vmul.f32 %v1863, %v1999
        %v2008 = vmul.f32 %v1864, %v2000
        %v2009 = vmul.f32 %v1865, %v1999
        %v2010 = vmul.f32 %v1866, %v2000
        %v2012 = vperm.slane %v1868, 0
        %v2013 = vperm.slane %v1868, 1
        %v2016 = vadd.f32 %v2003, %v2012
        %v2017 = vadd.f32 %v2004, %v2013
        %v2018 = vadd.f32 %v2005, %v2012
        %v2019 = vadd.f32 %v2006, %v2013
        %v2020 = vadd.f32 %v2007, %v2012
        %v2021 = vadd.f32 %v2008, %v2013
        %v2022 = vadd.f32 %v2009, %v2012
        %v2023 = vadd.f32 %v2010, %v2013
        %v2024 = vmax.f32 %v2016, 0.0
        %v2025 = vmax.f32 %v2017, 0.0
        %v2026 = vmax.f32 %v2018, 0.0
        %v2027 = vmax.f32 %v2019, 0.0
        %v2028 = vmax.f32 %v2020, 0.0
        %v2029 = vmax.f32 %v2021, 0.0
        %v2030 = vmax.f32 %v2022, 0.0
        %v2031 = vmax.f32 %v2023, 0.0
        %v2033 = vperm.slane %v1933, 0
        %v2034 = vperm.slane %v1933, 1
        %2037 = vmatpush.msra.mxu0 %v1899
        %2038 = vmatpush.msra.mxu0 %v1897
        %2039 = vmatpush.msra.mxu0 %v1895
        %2040 = vmatpush.msra.mxu0 %v1893
        %2041 = vmatpush.msra.mxu0 %v1891
        %2042 = vmatpush.msra.mxu0 %v1889
        %2043 = vmatpush.msra.mxu0 %v1887
        %2044 = vmatpush.msra.mxu0 %v1885
        %2045 = vmatpush.msra.mxu0 %v1883
        %2046 = vmatpush.msra.mxu0 %v1881
        %2047 = vmatpush.msra.mxu0 %v1879
        %2048 = vmatpush.msra.mxu0 %v1877
        %2049 = vmatpush.msra.mxu0 %v1875
        %2050 = vmatpush.msra.mxu0 %v1873
        %2051 = vmatpush.msra.mxu0 %v1871
        %2052 = vmatpush.msra.mxu0 %v1869
        %2053 = vmatmul.f32.gmra.mxu0 %v2024
        %v2054 = vpop.f32.mrf.mxu0
        %v2055 = vadd.f32 %v2033, %v2054
        %2056 = vmatmul.f32.gmra.mxu0 %v2026
        %v2057 = vpop.f32.mrf.mxu0
        %v2058 = vadd.f32 %v2033, %v2057
        %2059 = vmatmul.f32.gmra.mxu0 %v2028
        %v2060 = vpop.f32.mrf.mxu0
        %v2061 = vadd.f32 %v2033, %v2060
        %2062 = vmatmul.f32.gmra.mxu0 %v2030
        %v2063 = vpop.f32.mrf.mxu0
        %v2064 = vadd.f32 %v2033, %v2063
        %2065 = vdwg.mxu0
        %2066 = vmatpush.msra.mxu0 %v1931
        %2067 = vmatpush.msra.mxu0 %v1929
        %2068 = vmatpush.msra.mxu0 %v1927
        %2069 = vmatpush.msra.mxu0 %v1925
        %2070 = vmatpush.msra.mxu0 %v1923
        %2071 = vmatpush.msra.mxu0 %v1921
        %2072 = vmatpush.msra.mxu0 %v1919
        %2073 = vmatpush.msra.mxu0 %v1917
        %2074 = vmatpush.msra.mxu0 %v1915
        %2075 = vmatpush.msra.mxu0 %v1913
        %2076 = vmatpush.msra.mxu0 %v1911
        %2077 = vmatpush.msra.mxu0 %v1909
        %2078 = vmatpush.msra.mxu0 %v1907
        %2079 = vmatpush.msra.mxu0 %v1905
        %2080 = vmatpush.msra.mxu0 %v1903
        %2081 = vmatpush.msra.mxu0 %v1901
        %2082 = vmatmul.f32.gmra.mxu0 %v2025
        %v2083 = vpop.f32.mrf.mxu0
        %v2084 = vadd.f32 %v2055, %v2083
        %2085 = vmatmul.f32.gmra.mxu0 %v2027
        %v2086 = vpop.f32.mrf.mxu0
        %v2087 = vadd.f32 %v2058, %v2086
        %2088 = vmatmul.f32.gmra.mxu0 %v2029
        %v2089 = vpop.f32.mrf.mxu0
        %v2090 = vadd.f32 %v2061, %v2089
        %2091 = vmatmul.f32.gmra.mxu0 %v2031
        %v2092 = vpop.f32.mrf.mxu0
        %v2093 = vadd.f32 %v2064, %v2092
        %2094 = vdwg.mxu0
        %2095 = vmatpush.msra.mxu0 %v1900
        %2096 = vmatpush.msra.mxu0 %v1898
        %2097 = vmatpush.msra.mxu0 %v1896
        %2098 = vmatpush.msra.mxu0 %v1894
        %2099 = vmatpush.msra.mxu0 %v1892
        %2100 = vmatpush.msra.mxu0 %v1890
        %2101 = vmatpush.msra.mxu0 %v1888
        %2102 = vmatpush.msra.mxu0 %v1886
        %2103 = vmatpush.msra.mxu0 %v1884
        %2104 = vmatpush.msra.mxu0 %v1882
        %2105 = vmatpush.msra.mxu0 %v1880
        %2106 = vmatpush.msra.mxu0 %v1878
        %2107 = vmatpush.msra.mxu0 %v1876
        %2108 = vmatpush.msra.mxu0 %v1874
        %2109 = vmatpush.msra.mxu0 %v1872
        %2110 = vmatpush.msra.mxu0 %v1870
        %2111 = vmatmul.f32.gmra.mxu0 %v2024
        %v2112 = vpop.f32.mrf.mxu0
        %v2113 = vadd.f32 %v2034, %v2112
        %2114 = vmatmul.f32.gmra.mxu0 %v2026
        %v2115 = vpop.f32.mrf.mxu0
        %v2116 = vadd.f32 %v2034, %v2115
        %2117 = vmatmul.f32.gmra.mxu0 %v2028
        %v2118 = vpop.f32.mrf.mxu0
        %v2119 = vadd.f32 %v2034, %v2118
        %2120 = vmatmul.f32.gmra.mxu0 %v2030
        %v2121 = vpop.f32.mrf.mxu0
        %v2122 = vadd.f32 %v2034, %v2121
        %2123 = vdwg.mxu0
        %2124 = vmatpush.msra.mxu0 %v1932
        %2125 = vmatpush.msra.mxu0 %v1930
        %2126 = vmatpush.msra.mxu0 %v1928
        %2127 = vmatpush.msra.mxu0 %v1926
        %2128 = vmatpush.msra.mxu0 %v1924
        %2129 = vmatpush.msra.mxu0 %v1922
        %2130 = vmatpush.msra.mxu0 %v1920
        %2131 = vmatpush.msra.mxu0 %v1918
        %2132 = vmatpush.msra.mxu0 %v1916
        %2133 = vmatpush.msra.mxu0 %v1914
        %2134 = vmatpush.msra.mxu0 %v1912
        %2135 = vmatpush.msra.mxu0 %v1910
        %2136 = vmatpush.msra.mxu0 %v1908
        %2137 = vmatpush.msra.mxu0 %v1906
        %2138 = vmatpush.msra.mxu0 %v1904
        %2139 = vmatpush.msra.mxu0 %v1902
        %2140 = vmatmul.f32.gmra.mxu0 %v2025
        %v2141 = vpop.f32.mrf.mxu0
        %v2142 = vadd.f32 %v2113, %v2141
        %2143 = vmatmul.f32.gmra.mxu0 %v2027
        %v2144 = vpop.f32.mrf.mxu0
        %v2145 = vadd.f32 %v2116, %v2144
        %2146 = vmatmul.f32.gmra.mxu0 %v2029
        %v2147 = vpop.f32.mrf.mxu0
        %v2148 = vadd.f32 %v2119, %v2147
        %2149 = vmatmul.f32.gmra.mxu0 %v2031
        %v2150 = vpop.f32.mrf.mxu0
        %v2151 = vadd.f32 %v2122, %v2150
        %2152 = vdwg.mxu0
        %v2153 = vmax.f32 %v2084, 0.0
        %v2154 = vmax.f32 %v2142, 0.0
        %v2155 = vmax.f32 %v2087, 0.0
        %v2156 = vmax.f32 %v2145, 0.0
        %v2157 = vmax.f32 %v2090, 0.0
        %v2158 = vmax.f32 %v2148, 0.0
        %v2159 = vmax.f32 %v2093, 0.0
        %v2160 = vmax.f32 %v2151, 0.0
        %2161 = vmatpush.msra.mxu0 %v1964
        %2162 = vmatpush.msra.mxu0 %v1962
        %2163 = vmatpush.msra.mxu0 %v1960
        %2164 = vmatpush.msra.mxu0 %v1958
        %2165 = vmatpush.msra.mxu0 %v1956
        %2166 = vmatpush.msra.mxu0 %v1954
        %2167 = vmatpush.msra.mxu0 %v1952
        %2168 = vmatpush.msra.mxu0 %v1950
        %2169 = vmatpush.msra.mxu0 %v1948
        %2170 = vmatpush.msra.mxu0 %v1946
        %2171 = vmatpush.msra.mxu0 %v1944
        %2172 = vmatpush.msra.mxu0 %v1942
        %2173 = vmatpush.msra.mxu0 %v1940
        %2174 = vmatpush.msra.mxu0 %v1938
        %2175 = vmatpush.msra.mxu0 %v1936
        %2176 = vmatpush.msra.mxu0 %v1934
        %2177 = vmatmul.f32.gmra.mxu0 %v2153
        %v2178 = vpop.f32.mrf.mxu0
        %v2179 = vadd.f32 %v1859, %v2178
        %2180 = vmatmul.f32.gmra.mxu0 %v2155
        %v2181 = vpop.f32.mrf.mxu0
        %v2182 = vadd.f32 %v1861, %v2181
        %2183 = vmatmul.f32.gmra.mxu0 %v2157
        %v2184 = vpop.f32.mrf.mxu0
        %v2185 = vadd.f32 %v1863, %v2184
        %2186 = vmatmul.f32.gmra.mxu0 %v2159
        %v2187 = vpop.f32.mrf.mxu0
        %v2188 = vadd.f32 %v1865, %v2187
        %2189 = vdwg.mxu0
        %2190 = vmatpush.msra.mxu0 %v1996
        %2191 = vmatpush.msra.mxu0 %v1994
        %2192 = vmatpush.msra.mxu0 %v1992
        %2193 = vmatpush.msra.mxu0 %v1990
        %2194 = vmatpush.msra.mxu0 %v1988
        %2195 = vmatpush.msra.mxu0 %v1986
        %2196 = vmatpush.msra.mxu0 %v1984
        %2197 = vmatpush.msra.mxu0 %v1982
        %2198 = vmatpush.msra.mxu0 %v1980
        %2199 = vmatpush.msra.mxu0 %v1978
        %2200 = vmatpush.msra.mxu0 %v1976
        %2201 = vmatpush.msra.mxu0 %v1974
        %2202 = vmatpush.msra.mxu0 %v1972
        %2203 = vmatpush.msra.mxu0 %v1970
        %2204 = vmatpush.msra.mxu0 %v1968
        %2205 = vmatpush.msra.mxu0 %v1966
        %2206 = vmatmul.f32.gmra.mxu0 %v2154
        %v2207 = vpop.f32.mrf.mxu0
        %v2208 = vadd.f32 %v2179, %v2207
        %2209 = vmatmul.f32.gmra.mxu0 %v2156
        %v2210 = vpop.f32.mrf.mxu0
        %v2211 = vadd.f32 %v2182, %v2210
        %2212 = vmatmul.f32.gmra.mxu0 %v2158
        %v2213 = vpop.f32.mrf.mxu0
        %v2214 = vadd.f32 %v2185, %v2213
        %2215 = vmatmul.f32.gmra.mxu0 %v2160
        %v2216 = vpop.f32.mrf.mxu0
        %v2217 = vadd.f32 %v2188, %v2216
        %2218 = vdwg.mxu0
        %2219 = vmatpush.msra.mxu0 %v1965
        %2220 = vmatpush.msra.mxu0 %v1963
        %2221 = vmatpush.msra.mxu0 %v1961
        %2222 = vmatpush.msra.mxu0 %v1959
        %2223 = vmatpush.msra.mxu0 %v1957
        %2224 = vmatpush.msra.mxu0 %v1955
        %2225 = vmatpush.msra.mxu0 %v1953
        %2226 = vmatpush.msra.mxu0 %v1951
        %2227 = vmatpush.msra.mxu0 %v1949
        %2228 = vmatpush.msra.mxu0 %v1947
        %2229 = vmatpush.msra.mxu0 %v1945
        %2230 = vmatpush.msra.mxu0 %v1943
        %2231 = vmatpush.msra.mxu0 %v1941
        %2232 = vmatpush.msra.mxu0 %v1939
        %2233 = vmatpush.msra.mxu0 %v1937
        %2234 = vmatpush.msra.mxu0 %v1935
        %2235 = vmatmul.f32.gmra.mxu0 %v2153
        %v2236 = vpop.f32.mrf.mxu0
        %v2237 = vadd.f32 %v1860, %v2236
        %2238 = vmatmul.f32.gmra.mxu0 %v2155
        %v2239 = vpop.f32.mrf.mxu0
        %v2240 = vadd.f32 %v1862, %v2239
        %2241 = vmatmul.f32.gmra.mxu0 %v2157
        %v2242 = vpop.f32.mrf.mxu0
        %v2243 = vadd.f32 %v1864, %v2242
        %2244 = vmatmul.f32.gmra.mxu0 %v2159
        %v2245 = vpop.f32.mrf.mxu0
        %v2246 = vadd.f32 %v1866, %v2245
        %2247 = vdwg.mxu0
        %2248 = vmatpush.msra.mxu0 %v1997
        %2249 = vmatpush.msra.mxu0 %v1995
        %2250 = vmatpush.msra.mxu0 %v1993
        %2251 = vmatpush.msra.mxu0 %v1991
        %2252 = vmatpush.msra.mxu0 %v1989
        %2253 = vmatpush.msra.mxu0 %v1987
        %2254 = vmatpush.msra.mxu0 %v1985
        %2255 = vmatpush.msra.mxu0 %v1983
        %2256 = vmatpush.msra.mxu0 %v1981
        %2257 = vmatpush.msra.mxu0 %v1979
        %2258 = vmatpush.msra.mxu0 %v1977
        %2259 = vmatpush.msra.mxu0 %v1975
        %2260 = vmatpush.msra.mxu0 %v1973
        %2261 = vmatpush.msra.mxu0 %v1971
        %2262 = vmatpush.msra.mxu0 %v1969
        %2263 = vmatpush.msra.mxu0 %v1967
        %2264 = vmatmul.f32.gmra.mxu0 %v2154
        %v2265 = vpop.f32.mrf.mxu0
        %v2266 = vadd.f32 %v2237, %v2265
        %2267 = vmatmul.f32.gmra.mxu0 %v2156
        %v2268 = vpop.f32.mrf.mxu0
        %v2269 = vadd.f32 %v2240, %v2268
        %2270 = vmatmul.f32.gmra.mxu0 %v2158
        %v2271 = vpop.f32.mrf.mxu0
        %v2272 = vadd.f32 %v2243, %v2271
        %2273 = vmatmul.f32.gmra.mxu0 %v2160
        %v2274 = vpop.f32.mrf.mxu0
        %v2275 = vadd.f32 %v2246, %v2274
        %2276 = vdwg.mxu0
        %v2277 = vmax.f32 %v2208, 0.0
        %v2278 = vmax.f32 %v2266, 0.0
        %v2279 = vmax.f32 %v2211, 0.0
        %v2280 = vmax.f32 %v2269, 0.0
        %v2281 = vmax.f32 %v2214, 0.0
        %v2282 = vmax.f32 %v2272, 0.0
        %v2283 = vmax.f32 %v2217, 0.0
        %v2284 = vmax.f32 %v2275, 0.0
        %v2285 = vld [vmem:[#allocation22] sm:$0x3]
        %v2286 = vld [vmem:[#allocation23] sm:$0x3]
        %v2287 = vld [vmem:[#allocation25] sm:$0xff]
        %v2288 = vld [vmem:[#allocation25 + $0x8] sm:$0xff]
        %v2289 = vld [vmem:[#allocation25 + $0x10] sm:$0xff]
        %v2290 = vld [vmem:[#allocation25 + $0x18] sm:$0xff]
        %v2291 = vld [vmem:[#allocation25 + $0x20] sm:$0xff]
        %v2292 = vld [vmem:[#allocation25 + $0x28] sm:$0xff]
        %v2293 = vld [vmem:[#allocation25 + $0x30] sm:$0xff]
        %v2294 = vld [vmem:[#allocation25 + $0x38] sm:$0xff]
        %v2295 = vld [vmem:[#allocation25 + $0x40] sm:$0xff]
        %v2296 = vld [vmem:[#allocation25 + $0x48] sm:$0xff]
        %v2297 = vld [vmem:[#allocation25 + $0x50] sm:$0xff]
        %v2298 = vld [vmem:[#allocation25 + $0x58] sm:$0xff]
        %v2299 = vld [vmem:[#allocation25 + $0x60] sm:$0xff]
        %v2300 = vld [vmem:[#allocation25 + $0x68] sm:$0xff]
        %v2301 = vld [vmem:[#allocation25 + $0x70] sm:$0xff]
        %v2302 = vld [vmem:[#allocation25 + $0x78] sm:$0xff]
        %v2303 = vld [vmem:[#allocation25 + $0x80] sm:$0xff]
        %v2304 = vld [vmem:[#allocation25 + $0x88] sm:$0xff]
        %v2305 = vld [vmem:[#allocation25 + $0x90] sm:$0xff]
        %v2306 = vld [vmem:[#allocation25 + $0x98] sm:$0xff]
        %v2307 = vld [vmem:[#allocation25 + $0xa0] sm:$0xff]
        %v2308 = vld [vmem:[#allocation25 + $0xa8] sm:$0xff]
        %v2309 = vld [vmem:[#allocation25 + $0xb0] sm:$0xff]
        %v2310 = vld [vmem:[#allocation25 + $0xb8] sm:$0xff]
        %v2311 = vld [vmem:[#allocation25 + $0xc0] sm:$0xff]
        %v2312 = vld [vmem:[#allocation25 + $0xc8] sm:$0xff]
        %v2313 = vld [vmem:[#allocation25 + $0xd0] sm:$0xff]
        %v2314 = vld [vmem:[#allocation25 + $0xd8] sm:$0xff]
        %v2315 = vld [vmem:[#allocation25 + $0xe0] sm:$0xff]
        %v2316 = vld [vmem:[#allocation25 + $0xe8] sm:$0xff]
        %v2317 = vld [vmem:[#allocation25 + $0xf0] sm:$0xff]
        %v2318 = vld [vmem:[#allocation25 + $0xf8] sm:$0xff]
        %v2319 = vld [vmem:[#allocation26] sm:$0x1]
        %v2320 = vld [vmem:[#allocation28] sm:$0xff]
        %v2321 = vld [vmem:[#allocation28 + $0x8] sm:$0xff]
        %v2322 = vld [vmem:[#allocation28 + $0x10] sm:$0xff]
        %v2323 = vld [vmem:[#allocation28 + $0x18] sm:$0xff]
        %v2324 = vld [vmem:[#allocation28 + $0x20] sm:$0xff]
        %v2325 = vld [vmem:[#allocation28 + $0x28] sm:$0xff]
        %v2326 = vld [vmem:[#allocation28 + $0x30] sm:$0xff]
        %v2327 = vld [vmem:[#allocation28 + $0x38] sm:$0xff]
        %v2328 = vld [vmem:[#allocation28 + $0x40] sm:$0xff]
        %v2329 = vld [vmem:[#allocation28 + $0x48] sm:$0xff]
        %v2330 = vld [vmem:[#allocation28 + $0x50] sm:$0xff]
        %v2331 = vld [vmem:[#allocation28 + $0x58] sm:$0xff]
        %v2332 = vld [vmem:[#allocation28 + $0x60] sm:$0xff]
        %v2333 = vld [vmem:[#allocation28 + $0x68] sm:$0xff]
        %v2334 = vld [vmem:[#allocation28 + $0x70] sm:$0xff]
        %v2335 = vld [vmem:[#allocation28 + $0x78] sm:$0xff]
        %v2336 = vld [vmem:[#allocation29] sm:$0xff]
        %v2337 = vld [vmem:[#allocation29 + $0x8] sm:$0xff]
        %v2338 = vld [vmem:[#allocation29 + $0x10] sm:$0xff]
        %v2339 = vld [vmem:[#allocation29 + $0x18] sm:$0xff]
        %v2340 = vld [vmem:[#allocation29 + $0x20] sm:$0xff]
        %v2341 = vld [vmem:[#allocation29 + $0x28] sm:$0xff]
        %v2342 = vld [vmem:[#allocation29 + $0x30] sm:$0xff]
        %v2343 = vld [vmem:[#allocation29 + $0x38] sm:$0xff]
        %v2344 = vld [vmem:[#allocation29 + $0x40] sm:$0xff]
        %v2345 = vld [vmem:[#allocation29 + $0x48] sm:$0xff]
        %v2346 = vld [vmem:[#allocation29 + $0x50] sm:$0xff]
        %v2347 = vld [vmem:[#allocation29 + $0x58] sm:$0xff]
        %v2348 = vld [vmem:[#allocation29 + $0x60] sm:$0xff]
        %v2349 = vld [vmem:[#allocation29 + $0x68] sm:$0xff]
        %v2350 = vld [vmem:[#allocation29 + $0x70] sm:$0xff]
        %v2351 = vld [vmem:[#allocation29 + $0x78] sm:$0xff]
        %v2352 = vld [vmem:[#allocation29 + $0x80] sm:$0xff]
        %v2353 = vld [vmem:[#allocation29 + $0x88] sm:$0xff]
        %v2354 = vld [vmem:[#allocation29 + $0x90] sm:$0xff]
        %v2355 = vld [vmem:[#allocation29 + $0x98] sm:$0xff]
        %v2356 = vld [vmem:[#allocation29 + $0xa0] sm:$0xff]
        %v2357 = vld [vmem:[#allocation29 + $0xa8] sm:$0xff]
        %v2358 = vld [vmem:[#allocation29 + $0xb0] sm:$0xff]
        %v2359 = vld [vmem:[#allocation29 + $0xb8] sm:$0xff]
        %v2360 = vld [vmem:[#allocation29 + $0xc0] sm:$0xff]
        %v2361 = vld [vmem:[#allocation29 + $0xc8] sm:$0xff]
        %v2362 = vld [vmem:[#allocation29 + $0xd0] sm:$0xff]
        %v2363 = vld [vmem:[#allocation29 + $0xd8] sm:$0xff]
        %v2364 = vld [vmem:[#allocation29 + $0xe0] sm:$0xff]
        %v2365 = vld [vmem:[#allocation29 + $0xe8] sm:$0xff]
        %v2366 = vld [vmem:[#allocation29 + $0xf0] sm:$0xff]
        %v2367 = vld [vmem:[#allocation29 + $0xf8] sm:$0xff]
        %v2368 = vld [vmem:[#allocation31] sm:$0x1]
        %v2370 = vperm.slane %v2285, 0
        %v2371 = vperm.slane %v2285, 1
        %v2374 = vmul.f32 %v2277, %v2370
        %v2375 = vmul.f32 %v2278, %v2371
        %v2376 = vmul.f32 %v2279, %v2370
        %v2377 = vmul.f32 %v2280, %v2371
        %v2378 = vmul.f32 %v2281, %v2370
        %v2379 = vmul.f32 %v2282, %v2371
        %v2380 = vmul.f32 %v2283, %v2370
        %v2381 = vmul.f32 %v2284, %v2371
        %v2383 = vperm.slane %v2286, 0
        %v2384 = vperm.slane %v2286, 1
        %v2387 = vadd.f32 %v2374, %v2383
        %v2388 = vadd.f32 %v2375, %v2384
        %v2389 = vadd.f32 %v2376, %v2383
        %v2390 = vadd.f32 %v2377, %v2384
        %v2391 = vadd.f32 %v2378, %v2383
        %v2392 = vadd.f32 %v2379, %v2384
        %v2393 = vadd.f32 %v2380, %v2383
        %v2394 = vadd.f32 %v2381, %v2384
        %v2395 = vmax.f32 %v2387, 0.0
        %v2396 = vmax.f32 %v2388, 0.0
        %v2397 = vmax.f32 %v2389, 0.0
        %v2398 = vmax.f32 %v2390, 0.0
        %v2399 = vmax.f32 %v2391, 0.0
        %v2400 = vmax.f32 %v2392, 0.0
        %v2401 = vmax.f32 %v2393, 0.0
        %v2402 = vmax.f32 %v2394, 0.0
        %v2404 = vperm.slane %v2319, 0
        %2406 = vmatpush.msra.mxu0 %v2302
        %2407 = vmatpush.msra.mxu0 %v2301
        %2408 = vmatpush.msra.mxu0 %v2300
        %2409 = vmatpush.msra.mxu0 %v2299
        %2410 = vmatpush.msra.mxu0 %v2298
        %2411 = vmatpush.msra.mxu0 %v2297
        %2412 = vmatpush.msra.mxu0 %v2296
        %2413 = vmatpush.msra.mxu0 %v2295
        %2414 = vmatpush.msra.mxu0 %v2294
        %2415 = vmatpush.msra.mxu0 %v2293
        %2416 = vmatpush.msra.mxu0 %v2292
        %2417 = vmatpush.msra.mxu0 %v2291
        %2418 = vmatpush.msra.mxu0 %v2290
        %2419 = vmatpush.msra.mxu0 %v2289
        %2420 = vmatpush.msra.mxu0 %v2288
        %2421 = vmatpush.msra.mxu0 %v2287
        %2422 = vmatmul.f32.gmra.mxu0 %v2395
        %v2423 = vpop.f32.mrf.mxu0
        %v2424 = vadd.f32 %v2404, %v2423
        %2425 = vmatmul.f32.gmra.mxu0 %v2397
        %v2426 = vpop.f32.mrf.mxu0
        %v2427 = vadd.f32 %v2404, %v2426
        %2428 = vmatmul.f32.gmra.mxu0 %v2399
        %v2429 = vpop.f32.mrf.mxu0
        %v2430 = vadd.f32 %v2404, %v2429
        %2431 = vmatmul.f32.gmra.mxu0 %v2401
        %v2432 = vpop.f32.mrf.mxu0
        %v2433 = vadd.f32 %v2404, %v2432
        %2434 = vdwg.mxu0
        %2435 = vmatpush.msra.mxu0 %v2318
        %2436 = vmatpush.msra.mxu0 %v2317
        %2437 = vmatpush.msra.mxu0 %v2316
        %2438 = vmatpush.msra.mxu0 %v2315
        %2439 = vmatpush.msra.mxu0 %v2314
        %2440 = vmatpush.msra.mxu0 %v2313
        %2441 = vmatpush.msra.mxu0 %v2312
        %2442 = vmatpush.msra.mxu0 %v2311
        %2443 = vmatpush.msra.mxu0 %v2310
        %2444 = vmatpush.msra.mxu0 %v2309
        %2445 = vmatpush.msra.mxu0 %v2308
        %2446 = vmatpush.msra.mxu0 %v2307
        %2447 = vmatpush.msra.mxu0 %v2306
        %2448 = vmatpush.msra.mxu0 %v2305
        %2449 = vmatpush.msra.mxu0 %v2304
        %2450 = vmatpush.msra.mxu0 %v2303
        %2451 = vmatmul.f32.gmra.mxu0 %v2396
        %v2452 = vpop.f32.mrf.mxu0
        %v2453 = vadd.f32 %v2424, %v2452
        %2454 = vmatmul.f32.gmra.mxu0 %v2398
        %v2455 = vpop.f32.mrf.mxu0
        %v2456 = vadd.f32 %v2427, %v2455
        %2457 = vmatmul.f32.gmra.mxu0 %v2400
        %v2458 = vpop.f32.mrf.mxu0
        %v2459 = vadd.f32 %v2430, %v2458
        %2460 = vmatmul.f32.gmra.mxu0 %v2402
        %v2461 = vpop.f32.mrf.mxu0
        %v2462 = vadd.f32 %v2433, %v2461
        %2463 = vdwg.mxu0
        %v2464 = vmax.f32 %v2453, 0.0
        %v2465 = vmax.f32 %v2456, 0.0
        %v2466 = vmax.f32 %v2459, 0.0
        %v2467 = vmax.f32 %v2462, 0.0
        %v2469 = vperm.slane %v2368, 0
        %2471 = vmatpush.msra.mxu0 %v2351
        %2472 = vmatpush.msra.mxu0 %v2350
        %2473 = vmatpush.msra.mxu0 %v2349
        %2474 = vmatpush.msra.mxu0 %v2348
        %2475 = vmatpush.msra.mxu0 %v2347
        %2476 = vmatpush.msra.mxu0 %v2346
        %2477 = vmatpush.msra.mxu0 %v2345
        %2478 = vmatpush.msra.mxu0 %v2344
        %2479 = vmatpush.msra.mxu0 %v2343
        %2480 = vmatpush.msra.mxu0 %v2342
        %2481 = vmatpush.msra.mxu0 %v2341
        %2482 = vmatpush.msra.mxu0 %v2340
        %2483 = vmatpush.msra.mxu0 %v2339
        %2484 = vmatpush.msra.mxu0 %v2338
        %2485 = vmatpush.msra.mxu0 %v2337
        %2486 = vmatpush.msra.mxu0 %v2336
        %2487 = vmatmul.f32.gmra.mxu0 %v2277
        %v2488 = vpop.f32.mrf.mxu0
        %v2489 = vadd.f32 %v2469, %v2488
        %2490 = vmatmul.f32.gmra.mxu0 %v2279
        %v2491 = vpop.f32.mrf.mxu0
        %v2492 = vadd.f32 %v2469, %v2491
        %2493 = vmatmul.f32.gmra.mxu0 %v2281
        %v2494 = vpop.f32.mrf.mxu0
        %v2495 = vadd.f32 %v2469, %v2494
        %2496 = vmatmul.f32.gmra.mxu0 %v2283
        %v2497 = vpop.f32.mrf.mxu0
        %v2498 = vadd.f32 %v2469, %v2497
        %2499 = vdwg.mxu0
        %2500 = vmatpush.msra.mxu0 %v2367
        %2501 = vmatpush.msra.mxu0 %v2366
        %2502 = vmatpush.msra.mxu0 %v2365
        %2503 = vmatpush.msra.mxu0 %v2364
        %2504 = vmatpush.msra.mxu0 %v2363
        %2505 = vmatpush.msra.mxu0 %v2362
        %2506 = vmatpush.msra.mxu0 %v2361
        %2507 = vmatpush.msra.mxu0 %v2360
        %2508 = vmatpush.msra.mxu0 %v2359
        %2509 = vmatpush.msra.mxu0 %v2358
        %2510 = vmatpush.msra.mxu0 %v2357
        %2511 = vmatpush.msra.mxu0 %v2356
        %2512 = vmatpush.msra.mxu0 %v2355
        %2513 = vmatpush.msra.mxu0 %v2354
        %2514 = vmatpush.msra.mxu0 %v2353
        %2515 = vmatpush.msra.mxu0 %v2352
        %2516 = vmatmul.f32.gmra.mxu0 %v2278
        %v2517 = vpop.f32.mrf.mxu0
        %v2518 = vadd.f32 %v2489, %v2517
        %2519 = vmatmul.f32.gmra.mxu0 %v2280
        %v2520 = vpop.f32.mrf.mxu0
        %v2521 = vadd.f32 %v2492, %v2520
        %2522 = vmatmul.f32.gmra.mxu0 %v2282
        %v2523 = vpop.f32.mrf.mxu0
        %v2524 = vadd.f32 %v2495, %v2523
        %2525 = vmatmul.f32.gmra.mxu0 %v2284
        %v2526 = vpop.f32.mrf.mxu0
        %v2527 = vadd.f32 %v2498, %v2526
        %2528 = vdwg.mxu0
        %2529 = vmatpush.msra.mxu0 %v2335
        %2530 = vmatpush.msra.mxu0 %v2334
        %2531 = vmatpush.msra.mxu0 %v2333
        %2532 = vmatpush.msra.mxu0 %v2332
        %2533 = vmatpush.msra.mxu0 %v2331
        %2534 = vmatpush.msra.mxu0 %v2330
        %2535 = vmatpush.msra.mxu0 %v2329
        %2536 = vmatpush.msra.mxu0 %v2328
        %2537 = vmatpush.msra.mxu0 %v2327
        %2538 = vmatpush.msra.mxu0 %v2326
        %2539 = vmatpush.msra.mxu0 %v2325
        %2540 = vmatpush.msra.mxu0 %v2324
        %2541 = vmatpush.msra.mxu0 %v2323
        %2542 = vmatpush.msra.mxu0 %v2322
        %2543 = vmatpush.msra.mxu0 %v2321
        %2544 = vmatpush.msra.mxu0 %v2320
        %2545 = vmatmul.f32.gmra.mxu0 %v2464
        %v2546 = vpop.f32.mrf.mxu0
        %v2547 = vadd.f32 %v2518, %v2546
        %2548 = vmatmul.f32.gmra.mxu0 %v2465
        %v2549 = vpop.f32.mrf.mxu0
        %v2550 = vadd.f32 %v2521, %v2549
        %2551 = vmatmul.f32.gmra.mxu0 %v2466
        %v2552 = vpop.f32.mrf.mxu0
        %v2553 = vadd.f32 %v2524, %v2552
        %2554 = vmatmul.f32.gmra.mxu0 %v2467
        %v2555 = vpop.f32.mrf.mxu0
        %v2556 = vadd.f32 %v2527, %v2555
        %2557 = vdwg.mxu0
        %v2558 = vmax.f32 %v2547, 0.0
        %v2559 = vmax.f32 %v2550, 0.0
        %v2560 = vmax.f32 %v2553, 0.0
        %v2561 = vmax.f32 %v2556, 0.0
        %v2562 = vld [vmem:[#allocation32] sm:$0x3]
        %v2563 = vld [vmem:[#allocation34] sm:$0x3]
        %v2564 = vld [vmem:[#allocation35] sm:$0xff]
        %v2565 = vld [vmem:[#allocation35 + $0x8] sm:$0xff]
        %v2566 = vld [vmem:[#allocation35 + $0x10] sm:$0xff]
        %v2567 = vld [vmem:[#allocation35 + $0x18] sm:$0xff]
        %v2568 = vld [vmem:[#allocation35 + $0x20] sm:$0xff]
        %v2569 = vld [vmem:[#allocation35 + $0x28] sm:$0xff]
        %v2570 = vld [vmem:[#allocation35 + $0x30] sm:$0xff]
        %v2571 = vld [vmem:[#allocation35 + $0x38] sm:$0xff]
        %v2572 = vld [vmem:[#allocation35 + $0x40] sm:$0xff]
        %v2573 = vld [vmem:[#allocation35 + $0x48] sm:$0xff]
        %v2574 = vld [vmem:[#allocation35 + $0x50] sm:$0xff]
        %v2575 = vld [vmem:[#allocation35 + $0x58] sm:$0xff]
        %v2576 = vld [vmem:[#allocation35 + $0x60] sm:$0xff]
        %v2577 = vld [vmem:[#allocation35 + $0x68] sm:$0xff]
        %v2578 = vld [vmem:[#allocation35 + $0x70] sm:$0xff]
        %v2579 = vld [vmem:[#allocation35 + $0x78] sm:$0xff]
        %v2580 = vld [vmem:[#allocation35 + $0x80] sm:$0xff]
        %v2581 = vld [vmem:[#allocation35 + $0x88] sm:$0xff]
        %v2582 = vld [vmem:[#allocation35 + $0x90] sm:$0xff]
        %v2583 = vld [vmem:[#allocation35 + $0x98] sm:$0xff]
        %v2584 = vld [vmem:[#allocation35 + $0xa0] sm:$0xff]
        %v2585 = vld [vmem:[#allocation35 + $0xa8] sm:$0xff]
        %v2586 = vld [vmem:[#allocation35 + $0xb0] sm:$0xff]
        %v2587 = vld [vmem:[#allocation35 + $0xb8] sm:$0xff]
        %v2588 = vld [vmem:[#allocation35 + $0xc0] sm:$0xff]
        %v2589 = vld [vmem:[#allocation35 + $0xc8] sm:$0xff]
        %v2590 = vld [vmem:[#allocation35 + $0xd0] sm:$0xff]
        %v2591 = vld [vmem:[#allocation35 + $0xd8] sm:$0xff]
        %v2592 = vld [vmem:[#allocation35 + $0xe0] sm:$0xff]
        %v2593 = vld [vmem:[#allocation35 + $0xe8] sm:$0xff]
        %v2594 = vld [vmem:[#allocation35 + $0xf0] sm:$0xff]
        %v2595 = vld [vmem:[#allocation35 + $0xf8] sm:$0xff]
        %v2596 = vld [vmem:[#allocation35 + $0x100] sm:$0xff]
        %v2597 = vld [vmem:[#allocation35 + $0x108] sm:$0xff]
        %v2598 = vld [vmem:[#allocation35 + $0x110] sm:$0xff]
        %v2599 = vld [vmem:[#allocation35 + $0x118] sm:$0xff]
        %v2600 = vld [vmem:[#allocation35 + $0x120] sm:$0xff]
        %v2601 = vld [vmem:[#allocation35 + $0x128] sm:$0xff]
        %v2602 = vld [vmem:[#allocation35 + $0x130] sm:$0xff]
        %v2603 = vld [vmem:[#allocation35 + $0x138] sm:$0xff]
        %v2604 = vld [vmem:[#allocation35 + $0x140] sm:$0xff]
        %v2605 = vld [vmem:[#allocation35 + $0x148] sm:$0xff]
        %v2606 = vld [vmem:[#allocation35 + $0x150] sm:$0xff]
        %v2607 = vld [vmem:[#allocation35 + $0x158] sm:$0xff]
        %v2608 = vld [vmem:[#allocation35 + $0x160] sm:$0xff]
        %v2609 = vld [vmem:[#allocation35 + $0x168] sm:$0xff]
        %v2610 = vld [vmem:[#allocation35 + $0x170] sm:$0xff]
        %v2611 = vld [vmem:[#allocation35 + $0x178] sm:$0xff]
        %v2612 = vld [vmem:[#allocation35 + $0x180] sm:$0xff]
        %v2613 = vld [vmem:[#allocation35 + $0x188] sm:$0xff]
        %v2614 = vld [vmem:[#allocation35 + $0x190] sm:$0xff]
        %v2615 = vld [vmem:[#allocation35 + $0x198] sm:$0xff]
        %v2616 = vld [vmem:[#allocation35 + $0x1a0] sm:$0xff]
        %v2617 = vld [vmem:[#allocation35 + $0x1a8] sm:$0xff]
        %v2618 = vld [vmem:[#allocation35 + $0x1b0] sm:$0xff]
        %v2619 = vld [vmem:[#allocation35 + $0x1b8] sm:$0xff]
        %v2620 = vld [vmem:[#allocation35 + $0x1c0] sm:$0xff]
        %v2621 = vld [vmem:[#allocation35 + $0x1c8] sm:$0xff]
        %v2622 = vld [vmem:[#allocation35 + $0x1d0] sm:$0xff]
        %v2623 = vld [vmem:[#allocation35 + $0x1d8] sm:$0xff]
        %v2624 = vld [vmem:[#allocation35 + $0x1e0] sm:$0xff]
        %v2625 = vld [vmem:[#allocation35 + $0x1e8] sm:$0xff]
        %v2626 = vld [vmem:[#allocation35 + $0x1f0] sm:$0xff]
        %v2627 = vld [vmem:[#allocation35 + $0x1f8] sm:$0xff]
        %v2628 = vld [vmem:[#allocation37] sm:$0x3]
        %v2629 = vld [vmem:[#allocation38] sm:$0xff]
        %v2630 = vld [vmem:[#allocation38 + $0x8] sm:$0xff]
        %v2631 = vld [vmem:[#allocation38 + $0x10] sm:$0xff]
        %v2632 = vld [vmem:[#allocation38 + $0x18] sm:$0xff]
        %v2633 = vld [vmem:[#allocation38 + $0x20] sm:$0xff]
        %v2634 = vld [vmem:[#allocation38 + $0x28] sm:$0xff]
        %v2635 = vld [vmem:[#allocation38 + $0x30] sm:$0xff]
        %v2636 = vld [vmem:[#allocation38 + $0x38] sm:$0xff]
        %v2637 = vld [vmem:[#allocation38 + $0x40] sm:$0xff]
        %v2638 = vld [vmem:[#allocation38 + $0x48] sm:$0xff]
        %v2639 = vld [vmem:[#allocation38 + $0x50] sm:$0xff]
        %v2640 = vld [vmem:[#allocation38 + $0x58] sm:$0xff]
        %v2641 = vld [vmem:[#allocation38 + $0x60] sm:$0xff]
        %v2642 = vld [vmem:[#allocation38 + $0x68] sm:$0xff]
        %v2643 = vld [vmem:[#allocation38 + $0x70] sm:$0xff]
        %v2644 = vld [vmem:[#allocation38 + $0x78] sm:$0xff]
        %v2645 = vld [vmem:[#allocation38 + $0x80] sm:$0xff]
        %v2646 = vld [vmem:[#allocation38 + $0x88] sm:$0xff]
        %v2647 = vld [vmem:[#allocation38 + $0x90] sm:$0xff]
        %v2648 = vld [vmem:[#allocation38 + $0x98] sm:$0xff]
        %v2649 = vld [vmem:[#allocation38 + $0xa0] sm:$0xff]
        %v2650 = vld [vmem:[#allocation38 + $0xa8] sm:$0xff]
        %v2651 = vld [vmem:[#allocation38 + $0xb0] sm:$0xff]
        %v2652 = vld [vmem:[#allocation38 + $0xb8] sm:$0xff]
        %v2653 = vld [vmem:[#allocation38 + $0xc0] sm:$0xff]
        %v2654 = vld [vmem:[#allocation38 + $0xc8] sm:$0xff]
        %v2655 = vld [vmem:[#allocation38 + $0xd0] sm:$0xff]
        %v2656 = vld [vmem:[#allocation38 + $0xd8] sm:$0xff]
        %v2657 = vld [vmem:[#allocation38 + $0xe0] sm:$0xff]
        %v2658 = vld [vmem:[#allocation38 + $0xe8] sm:$0xff]
        %v2659 = vld [vmem:[#allocation38 + $0xf0] sm:$0xff]
        %v2660 = vld [vmem:[#allocation38 + $0xf8] sm:$0xff]
        %v2661 = vld [vmem:[#allocation38 + $0x100] sm:$0xff]
        %v2662 = vld [vmem:[#allocation38 + $0x108] sm:$0xff]
        %v2663 = vld [vmem:[#allocation38 + $0x110] sm:$0xff]
        %v2664 = vld [vmem:[#allocation38 + $0x118] sm:$0xff]
        %v2665 = vld [vmem:[#allocation38 + $0x120] sm:$0xff]
        %v2666 = vld [vmem:[#allocation38 + $0x128] sm:$0xff]
        %v2667 = vld [vmem:[#allocation38 + $0x130] sm:$0xff]
        %v2668 = vld [vmem:[#allocation38 + $0x138] sm:$0xff]
        %v2669 = vld [vmem:[#allocation38 + $0x140] sm:$0xff]
        %v2670 = vld [vmem:[#allocation38 + $0x148] sm:$0xff]
        %v2671 = vld [vmem:[#allocation38 + $0x150] sm:$0xff]
        %v2672 = vld [vmem:[#allocation38 + $0x158] sm:$0xff]
        %v2673 = vld [vmem:[#allocation38 + $0x160] sm:$0xff]
        %v2674 = vld [vmem:[#allocation38 + $0x168] sm:$0xff]
        %v2675 = vld [vmem:[#allocation38 + $0x170] sm:$0xff]
        %v2676 = vld [vmem:[#allocation38 + $0x178] sm:$0xff]
        %v2677 = vld [vmem:[#allocation38 + $0x180] sm:$0xff]
        %v2678 = vld [vmem:[#allocation38 + $0x188] sm:$0xff]
        %v2679 = vld [vmem:[#allocation38 + $0x190] sm:$0xff]
        %v2680 = vld [vmem:[#allocation38 + $0x198] sm:$0xff]
        %v2681 = vld [vmem:[#allocation38 + $0x1a0] sm:$0xff]
        %v2682 = vld [vmem:[#allocation38 + $0x1a8] sm:$0xff]
        %v2683 = vld [vmem:[#allocation38 + $0x1b0] sm:$0xff]
        %v2684 = vld [vmem:[#allocation38 + $0x1b8] sm:$0xff]
        %v2685 = vld [vmem:[#allocation38 + $0x1c0] sm:$0xff]
        %v2686 = vld [vmem:[#allocation38 + $0x1c8] sm:$0xff]
        %v2687 = vld [vmem:[#allocation38 + $0x1d0] sm:$0xff]
        %v2688 = vld [vmem:[#allocation38 + $0x1d8] sm:$0xff]
        %v2689 = vld [vmem:[#allocation38 + $0x1e0] sm:$0xff]
        %v2690 = vld [vmem:[#allocation38 + $0x1e8] sm:$0xff]
        %v2691 = vld [vmem:[#allocation38 + $0x1f0] sm:$0xff]
        %v2692 = vld [vmem:[#allocation38 + $0x1f8] sm:$0xff]
        %v2694 = vperm.slane %v2562, 0
        %v2695 = vperm.slane %v2562, 1
        %v2698 = vmul.f32 %v2558, %v2694
        %v2699 = vmul.f32 %v2558, %v2695
        %v2700 = vmul.f32 %v2559, %v2694
        %v2701 = vmul.f32 %v2559, %v2695
        %v2702 = vmul.f32 %v2560, %v2694
        %v2703 = vmul.f32 %v2560, %v2695
        %v2704 = vmul.f32 %v2561, %v2694
        %v2705 = vmul.f32 %v2561, %v2695
        %v2707 = vperm.slane %v2563, 0
        %v2708 = vperm.slane %v2563, 1
        %v2711 = vadd.f32 %v2698, %v2707
        %v2712 = vadd.f32 %v2699, %v2708
        %v2713 = vadd.f32 %v2700, %v2707
        %v2714 = vadd.f32 %v2701, %v2708
        %v2715 = vadd.f32 %v2702, %v2707
        %v2716 = vadd.f32 %v2703, %v2708
        %v2717 = vadd.f32 %v2704, %v2707
        %v2718 = vadd.f32 %v2705, %v2708
        %v2719 = vmax.f32 %v2711, 0.0
        %v2720 = vmax.f32 %v2712, 0.0
        %v2721 = vmax.f32 %v2713, 0.0
        %v2722 = vmax.f32 %v2714, 0.0
        %v2723 = vmax.f32 %v2715, 0.0
        %v2724 = vmax.f32 %v2716, 0.0
        %v2725 = vmax.f32 %v2717, 0.0
        %v2726 = vmax.f32 %v2718, 0.0
        %v2728 = vperm.slane %v2628, 0
        %v2729 = vperm.slane %v2628, 1
        %2732 = vmatpush.msra.mxu0 %v2594
        %2733 = vmatpush.msra.mxu0 %v2592
        %2734 = vmatpush.msra.mxu0 %v2590
        %2735 = vmatpush.msra.mxu0 %v2588
        %2736 = vmatpush.msra.mxu0 %v2586
        %2737 = vmatpush.msra.mxu0 %v2584
        %2738 = vmatpush.msra.mxu0 %v2582
        %2739 = vmatpush.msra.mxu0 %v2580
        %2740 = vmatpush.msra.mxu0 %v2578
        %2741 = vmatpush.msra.mxu0 %v2576
        %2742 = vmatpush.msra.mxu0 %v2574
        %2743 = vmatpush.msra.mxu0 %v2572
        %2744 = vmatpush.msra.mxu0 %v2570
        %2745 = vmatpush.msra.mxu0 %v2568
        %2746 = vmatpush.msra.mxu0 %v2566
        %2747 = vmatpush.msra.mxu0 %v2564
        %2748 = vmatmul.f32.gmra.mxu0 %v2719
        %v2749 = vpop.f32.mrf.mxu0
        %v2750 = vadd.f32 %v2728, %v2749
        %2751 = vmatmul.f32.gmra.mxu0 %v2721
        %v2752 = vpop.f32.mrf.mxu0
        %v2753 = vadd.f32 %v2728, %v2752
        %2754 = vmatmul.f32.gmra.mxu0 %v2723
        %v2755 = vpop.f32.mrf.mxu0
        %v2756 = vadd.f32 %v2728, %v2755
        %2757 = vmatmul.f32.gmra.mxu0 %v2725
        %v2758 = vpop.f32.mrf.mxu0
        %v2759 = vadd.f32 %v2728, %v2758
        %2760 = vdwg.mxu0
        %2761 = vmatpush.msra.mxu0 %v2626
        %2762 = vmatpush.msra.mxu0 %v2624
        %2763 = vmatpush.msra.mxu0 %v2622
        %2764 = vmatpush.msra.mxu0 %v2620
        %2765 = vmatpush.msra.mxu0 %v2618
        %2766 = vmatpush.msra.mxu0 %v2616
        %2767 = vmatpush.msra.mxu0 %v2614
        %2768 = vmatpush.msra.mxu0 %v2612
        %2769 = vmatpush.msra.mxu0 %v2610
        %2770 = vmatpush.msra.mxu0 %v2608
        %2771 = vmatpush.msra.mxu0 %v2606
        %2772 = vmatpush.msra.mxu0 %v2604
        %2773 = vmatpush.msra.mxu0 %v2602
        %2774 = vmatpush.msra.mxu0 %v2600
        %2775 = vmatpush.msra.mxu0 %v2598
        %2776 = vmatpush.msra.mxu0 %v2596
        %2777 = vmatmul.f32.gmra.mxu0 %v2720
        %v2778 = vpop.f32.mrf.mxu0
        %v2779 = vadd.f32 %v2750, %v2778
        %2780 = vmatmul.f32.gmra.mxu0 %v2722
        %v2781 = vpop.f32.mrf.mxu0
        %v2782 = vadd.f32 %v2753, %v2781
        %2783 = vmatmul.f32.gmra.mxu0 %v2724
        %v2784 = vpop.f32.mrf.mxu0
        %v2785 = vadd.f32 %v2756, %v2784
        %2786 = vmatmul.f32.gmra.mxu0 %v2726
        %v2787 = vpop.f32.mrf.mxu0
        %v2788 = vadd.f32 %v2759, %v2787
        %2789 = vdwg.mxu0
        %2790 = vmatpush.msra.mxu0 %v2595
        %2791 = vmatpush.msra.mxu0 %v2593
        %2792 = vmatpush.msra.mxu0 %v2591
        %2793 = vmatpush.msra.mxu0 %v2589
        %2794 = vmatpush.msra.mxu0 %v2587
        %2795 = vmatpush.msra.mxu0 %v2585
        %2796 = vmatpush.msra.mxu0 %v2583
        %2797 = vmatpush.msra.mxu0 %v2581
        %2798 = vmatpush.msra.mxu0 %v2579
        %2799 = vmatpush.msra.mxu0 %v2577
        %2800 = vmatpush.msra.mxu0 %v2575
        %2801 = vmatpush.msra.mxu0 %v2573
        %2802 = vmatpush.msra.mxu0 %v2571
        %2803 = vmatpush.msra.mxu0 %v2569
        %2804 = vmatpush.msra.mxu0 %v2567
        %2805 = vmatpush.msra.mxu0 %v2565
        %2806 = vmatmul.f32.gmra.mxu0 %v2719
        %v2807 = vpop.f32.mrf.mxu0
        %v2808 = vadd.f32 %v2729, %v2807
        %2809 = vmatmul.f32.gmra.mxu0 %v2721
        %v2810 = vpop.f32.mrf.mxu0
        %v2811 = vadd.f32 %v2729, %v2810
        %2812 = vmatmul.f32.gmra.mxu0 %v2723
        %v2813 = vpop.f32.mrf.mxu0
        %v2814 = vadd.f32 %v2729, %v2813
        %2815 = vmatmul.f32.gmra.mxu0 %v2725
        %v2816 = vpop.f32.mrf.mxu0
        %v2817 = vadd.f32 %v2729, %v2816
        %2818 = vdwg.mxu0
        %2819 = vmatpush.msra.mxu0 %v2627
        %2820 = vmatpush.msra.mxu0 %v2625
        %2821 = vmatpush.msra.mxu0 %v2623
        %2822 = vmatpush.msra.mxu0 %v2621
        %2823 = vmatpush.msra.mxu0 %v2619
        %2824 = vmatpush.msra.mxu0 %v2617
        %2825 = vmatpush.msra.mxu0 %v2615
        %2826 = vmatpush.msra.mxu0 %v2613
        %2827 = vmatpush.msra.mxu0 %v2611
        %2828 = vmatpush.msra.mxu0 %v2609
        %2829 = vmatpush.msra.mxu0 %v2607
        %2830 = vmatpush.msra.mxu0 %v2605
        %2831 = vmatpush.msra.mxu0 %v2603
        %2832 = vmatpush.msra.mxu0 %v2601
        %2833 = vmatpush.msra.mxu0 %v2599
        %2834 = vmatpush.msra.mxu0 %v2597
        %2835 = vmatmul.f32.gmra.mxu0 %v2720
        %v2836 = vpop.f32.mrf.mxu0
        %v2837 = vadd.f32 %v2808, %v2836
        %2838 = vmatmul.f32.gmra.mxu0 %v2722
        %v2839 = vpop.f32.mrf.mxu0
        %v2840 = vadd.f32 %v2811, %v2839
        %2841 = vmatmul.f32.gmra.mxu0 %v2724
        %v2842 = vpop.f32.mrf.mxu0
        %v2843 = vadd.f32 %v2814, %v2842
        %2844 = vmatmul.f32.gmra.mxu0 %v2726
        %v2845 = vpop.f32.mrf.mxu0
        %v2846 = vadd.f32 %v2817, %v2845
        %2847 = vdwg.mxu0
        %v2848 = vmax.f32 %v2779, 0.0
        %v2849 = vmax.f32 %v2837, 0.0
        %v2850 = vmax.f32 %v2782, 0.0
        %v2851 = vmax.f32 %v2840, 0.0
        %v2852 = vmax.f32 %v2785, 0.0
        %v2853 = vmax.f32 %v2843, 0.0
        %v2854 = vmax.f32 %v2788, 0.0
        %v2855 = vmax.f32 %v2846, 0.0
        %2856 = vmatpush.msra.mxu0 %v2659
        %2857 = vmatpush.msra.mxu0 %v2657
        %2858 = vmatpush.msra.mxu0 %v2655
        %2859 = vmatpush.msra.mxu0 %v2653
        %2860 = vmatpush.msra.mxu0 %v2651
        %2861 = vmatpush.msra.mxu0 %v2649
        %2862 = vmatpush.msra.mxu0 %v2647
        %2863 = vmatpush.msra.mxu0 %v2645
        %2864 = vmatpush.msra.mxu0 %v2643
        %2865 = vmatpush.msra.mxu0 %v2641
        %2866 = vmatpush.msra.mxu0 %v2639
        %2867 = vmatpush.msra.mxu0 %v2637
        %2868 = vmatpush.msra.mxu0 %v2635
        %2869 = vmatpush.msra.mxu0 %v2633
        %2870 = vmatpush.msra.mxu0 %v2631
        %2871 = vmatpush.msra.mxu0 %v2629
        %2872 = vmatmul.f32.gmra.mxu0 %v2848
        %v2873 = vpop.f32.mrf.mxu0
        %v2874 = vadd.f32 %v2558, %v2873
        %2875 = vmatmul.f32.gmra.mxu0 %v2850
        %v2876 = vpop.f32.mrf.mxu0
        %v2877 = vadd.f32 %v2559, %v2876
        %2878 = vmatmul.f32.gmra.mxu0 %v2852
        %v2879 = vpop.f32.mrf.mxu0
        %v2880 = vadd.f32 %v2560, %v2879
        %2881 = vmatmul.f32.gmra.mxu0 %v2854
        %v2882 = vpop.f32.mrf.mxu0
        %v2883 = vadd.f32 %v2561, %v2882
        %2884 = vdwg.mxu0
        %2885 = vmatpush.msra.mxu0 %v2691
        %2886 = vmatpush.msra.mxu0 %v2689
        %2887 = vmatpush.msra.mxu0 %v2687
        %2888 = vmatpush.msra.mxu0 %v2685
        %2889 = vmatpush.msra.mxu0 %v2683
        %2890 = vmatpush.msra.mxu0 %v2681
        %2891 = vmatpush.msra.mxu0 %v2679
        %2892 = vmatpush.msra.mxu0 %v2677
        %2893 = vmatpush.msra.mxu0 %v2675
        %2894 = vmatpush.msra.mxu0 %v2673
        %2895 = vmatpush.msra.mxu0 %v2671
        %2896 = vmatpush.msra.mxu0 %v2669
        %2897 = vmatpush.msra.mxu0 %v2667
        %2898 = vmatpush.msra.mxu0 %v2665
        %2899 = vmatpush.msra.mxu0 %v2663
        %2900 = vmatpush.msra.mxu0 %v2661
        %2901 = vmatmul.f32.gmra.mxu0 %v2849
        %v2902 = vpop.f32.mrf.mxu0
        %v2903 = vadd.f32 %v2874, %v2902
        %2904 = vmatmul.f32.gmra.mxu0 %v2851
        %v2905 = vpop.f32.mrf.mxu0
        %v2906 = vadd.f32 %v2877, %v2905
        %2907 = vmatmul.f32.gmra.mxu0 %v2853
        %v2908 = vpop.f32.mrf.mxu0
        %v2909 = vadd.f32 %v2880, %v2908
        %2910 = vmatmul.f32.gmra.mxu0 %v2855
        %v2911 = vpop.f32.mrf.mxu0
        %v2912 = vadd.f32 %v2883, %v2911
        %2913 = vdwg.mxu0
        %2914 = vmatpush.msra.mxu0 %v2660
        %2915 = vmatpush.msra.mxu0 %v2658
        %2916 = vmatpush.msra.mxu0 %v2656
        %2917 = vmatpush.msra.mxu0 %v2654
        %2918 = vmatpush.msra.mxu0 %v2652
        %2919 = vmatpush.msra.mxu0 %v2650
        %2920 = vmatpush.msra.mxu0 %v2648
        %2921 = vmatpush.msra.mxu0 %v2646
        %2922 = vmatpush.msra.mxu0 %v2644
        %2923 = vmatpush.msra.mxu0 %v2642
        %2924 = vmatpush.msra.mxu0 %v2640
        %2925 = vmatpush.msra.mxu0 %v2638
        %2926 = vmatpush.msra.mxu0 %v2636
        %2927 = vmatpush.msra.mxu0 %v2634
        %2928 = vmatpush.msra.mxu0 %v2632
        %2929 = vmatpush.msra.mxu0 %v2630
        %2930 = vmatmul.f32.gmra.mxu0 %v2848
        %v2931 = vpop.f32.mrf.mxu0
        %v2932 = vadd.f32 %v2558, %v2931
        %2933 = vmatmul.f32.gmra.mxu0 %v2850
        %v2934 = vpop.f32.mrf.mxu0
        %v2935 = vadd.f32 %v2559, %v2934
        %2936 = vmatmul.f32.gmra.mxu0 %v2852
        %v2937 = vpop.f32.mrf.mxu0
        %v2938 = vadd.f32 %v2560, %v2937
        %2939 = vmatmul.f32.gmra.mxu0 %v2854
        %v2940 = vpop.f32.mrf.mxu0
        %v2941 = vadd.f32 %v2561, %v2940
        %2942 = vdwg.mxu0
        %2943 = vmatpush.msra.mxu0 %v2692
        %2944 = vmatpush.msra.mxu0 %v2690
        %2945 = vmatpush.msra.mxu0 %v2688
        %2946 = vmatpush.msra.mxu0 %v2686
        %2947 = vmatpush.msra.mxu0 %v2684
        %2948 = vmatpush.msra.mxu0 %v2682
        %2949 = vmatpush.msra.mxu0 %v2680
        %2950 = vmatpush.msra.mxu0 %v2678
        %2951 = vmatpush.msra.mxu0 %v2676
        %2952 = vmatpush.msra.mxu0 %v2674
        %2953 = vmatpush.msra.mxu0 %v2672
        %2954 = vmatpush.msra.mxu0 %v2670
        %2955 = vmatpush.msra.mxu0 %v2668
        %2956 = vmatpush.msra.mxu0 %v2666
        %2957 = vmatpush.msra.mxu0 %v2664
        %2958 = vmatpush.msra.mxu0 %v2662
        %2959 = vmatmul.f32.gmra.mxu0 %v2849
        %v2960 = vpop.f32.mrf.mxu0
        %v2961 = vadd.f32 %v2932, %v2960
        %2962 = vmatmul.f32.gmra.mxu0 %v2851
        %v2963 = vpop.f32.mrf.mxu0
        %v2964 = vadd.f32 %v2935, %v2963
        %2965 = vmatmul.f32.gmra.mxu0 %v2853
        %v2966 = vpop.f32.mrf.mxu0
        %v2967 = vadd.f32 %v2938, %v2966
        %2968 = vmatmul.f32.gmra.mxu0 %v2855
        %v2969 = vpop.f32.mrf.mxu0
        %v2970 = vadd.f32 %v2941, %v2969
        %2971 = vdwg.mxu0
        %v2972 = vmax.f32 %v2903, 0.0
        %v2973 = vmax.f32 %v2961, 0.0
        %v2974 = vmax.f32 %v2906, 0.0
        %v2975 = vmax.f32 %v2964, 0.0
        %v2976 = vmax.f32 %v2909, 0.0
        %v2977 = vmax.f32 %v2967, 0.0
        %v2978 = vmax.f32 %v2912, 0.0
        %v2979 = vmax.f32 %v2970, 0.0
        %s2980 = scalar_lea.vmem [#allocation32], 2
        %v2981 = vld [vmem:[%s2980] sm:$0x3]
        %s2982 = scalar_lea.vmem [#allocation34], 2
        %v2983 = vld [vmem:[%s2982] sm:$0x3]
        %s2984 = scalar_lea.vmem [#allocation35], 512
        %v2985 = vld [vmem:[%s2984] sm:$0xff]
        %v2986 = vld [vmem:[%s2984 + $0x8] sm:$0xff]
        %v2987 = vld [vmem:[%s2984 + $0x10] sm:$0xff]
        %v2988 = vld [vmem:[%s2984 + $0x18] sm:$0xff]
        %v2989 = vld [vmem:[%s2984 + $0x20] sm:$0xff]
        %v2990 = vld [vmem:[%s2984 + $0x28] sm:$0xff]
        %v2991 = vld [vmem:[%s2984 + $0x30] sm:$0xff]
        %v2992 = vld [vmem:[%s2984 + $0x38] sm:$0xff]
        %v2993 = vld [vmem:[%s2984 + $0x40] sm:$0xff]
        %v2994 = vld [vmem:[%s2984 + $0x48] sm:$0xff]
        %v2995 = vld [vmem:[%s2984 + $0x50] sm:$0xff]
        %v2996 = vld [vmem:[%s2984 + $0x58] sm:$0xff]
        %v2997 = vld [vmem:[%s2984 + $0x60] sm:$0xff]
        %v2998 = vld [vmem:[%s2984 + $0x68] sm:$0xff]
        %v2999 = vld [vmem:[%s2984 + $0x70] sm:$0xff]
        %v3000 = vld [vmem:[%s2984 + $0x78] sm:$0xff]
        %v3001 = vld [vmem:[%s2984 + $0x80] sm:$0xff]
        %v3002 = vld [vmem:[%s2984 + $0x88] sm:$0xff]
        %v3003 = vld [vmem:[%s2984 + $0x90] sm:$0xff]
        %v3004 = vld [vmem:[%s2984 + $0x98] sm:$0xff]
        %v3005 = vld [vmem:[%s2984 + $0xa0] sm:$0xff]
        %v3006 = vld [vmem:[%s2984 + $0xa8] sm:$0xff]
        %v3007 = vld [vmem:[%s2984 + $0xb0] sm:$0xff]
        %v3008 = vld [vmem:[%s2984 + $0xb8] sm:$0xff]
        %v3009 = vld [vmem:[%s2984 + $0xc0] sm:$0xff]
        %v3010 = vld [vmem:[%s2984 + $0xc8] sm:$0xff]
        %v3011 = vld [vmem:[%s2984 + $0xd0] sm:$0xff]
        %v3012 = vld [vmem:[%s2984 + $0xd8] sm:$0xff]
        %v3013 = vld [vmem:[%s2984 + $0xe0] sm:$0xff]
        %v3014 = vld [vmem:[%s2984 + $0xe8] sm:$0xff]
        %v3015 = vld [vmem:[%s2984 + $0xf0] sm:$0xff]
        %v3016 = vld [vmem:[%s2984 + $0xf8] sm:$0xff]
        %v3017 = vld [vmem:[%s2984 + $0x100] sm:$0xff]
        %v3018 = vld [vmem:[%s2984 + $0x108] sm:$0xff]
        %v3019 = vld [vmem:[%s2984 + $0x110] sm:$0xff]
        %v3020 = vld [vmem:[%s2984 + $0x118] sm:$0xff]
        %v3021 = vld [vmem:[%s2984 + $0x120] sm:$0xff]
        %v3022 = vld [vmem:[%s2984 + $0x128] sm:$0xff]
        %v3023 = vld [vmem:[%s2984 + $0x130] sm:$0xff]
        %v3024 = vld [vmem:[%s2984 + $0x138] sm:$0xff]
        %v3025 = vld [vmem:[%s2984 + $0x140] sm:$0xff]
        %v3026 = vld [vmem:[%s2984 + $0x148] sm:$0xff]
        %v3027 = vld [vmem:[%s2984 + $0x150] sm:$0xff]
        %v3028 = vld [vmem:[%s2984 + $0x158] sm:$0xff]
        %v3029 = vld [vmem:[%s2984 + $0x160] sm:$0xff]
        %v3030 = vld [vmem:[%s2984 + $0x168] sm:$0xff]
        %v3031 = vld [vmem:[%s2984 + $0x170] sm:$0xff]
        %v3032 = vld [vmem:[%s2984 + $0x178] sm:$0xff]
        %v3033 = vld [vmem:[%s2984 + $0x180] sm:$0xff]
        %v3034 = vld [vmem:[%s2984 + $0x188] sm:$0xff]
        %v3035 = vld [vmem:[%s2984 + $0x190] sm:$0xff]
        %v3036 = vld [vmem:[%s2984 + $0x198] sm:$0xff]
        %v3037 = vld [vmem:[%s2984 + $0x1a0] sm:$0xff]
        %v3038 = vld [vmem:[%s2984 + $0x1a8] sm:$0xff]
        %v3039 = vld [vmem:[%s2984 + $0x1b0] sm:$0xff]
        %v3040 = vld [vmem:[%s2984 + $0x1b8] sm:$0xff]
        %v3041 = vld [vmem:[%s2984 + $0x1c0] sm:$0xff]
        %v3042 = vld [vmem:[%s2984 + $0x1c8] sm:$0xff]
        %v3043 = vld [vmem:[%s2984 + $0x1d0] sm:$0xff]
        %v3044 = vld [vmem:[%s2984 + $0x1d8] sm:$0xff]
        %v3045 = vld [vmem:[%s2984 + $0x1e0] sm:$0xff]
        %v3046 = vld [vmem:[%s2984 + $0x1e8] sm:$0xff]
        %v3047 = vld [vmem:[%s2984 + $0x1f0] sm:$0xff]
        %v3048 = vld [vmem:[%s2984 + $0x1f8] sm:$0xff]
        %s3049 = scalar_lea.vmem [#allocation37], 2
        %v3050 = vld [vmem:[%s3049] sm:$0x3]
        %s3051 = scalar_lea.vmem [#allocation38], 512
        %v3052 = vld [vmem:[%s3051] sm:$0xff]
        %v3053 = vld [vmem:[%s3051 + $0x8] sm:$0xff]
        %v3054 = vld [vmem:[%s3051 + $0x10] sm:$0xff]
        %v3055 = vld [vmem:[%s3051 + $0x18] sm:$0xff]
        %v3056 = vld [vmem:[%s3051 + $0x20] sm:$0xff]
        %v3057 = vld [vmem:[%s3051 + $0x28] sm:$0xff]
        %v3058 = vld [vmem:[%s3051 + $0x30] sm:$0xff]
        %v3059 = vld [vmem:[%s3051 + $0x38] sm:$0xff]
        %v3060 = vld [vmem:[%s3051 + $0x40] sm:$0xff]
        %v3061 = vld [vmem:[%s3051 + $0x48] sm:$0xff]
        %v3062 = vld [vmem:[%s3051 + $0x50] sm:$0xff]
        %v3063 = vld [vmem:[%s3051 + $0x58] sm:$0xff]
        %v3064 = vld [vmem:[%s3051 + $0x60] sm:$0xff]
        %v3065 = vld [vmem:[%s3051 + $0x68] sm:$0xff]
        %v3066 = vld [vmem:[%s3051 + $0x70] sm:$0xff]
        %v3067 = vld [vmem:[%s3051 + $0x78] sm:$0xff]
        %v3068 = vld [vmem:[%s3051 + $0x80] sm:$0xff]
        %v3069 = vld [vmem:[%s3051 + $0x88] sm:$0xff]
        %v3070 = vld [vmem:[%s3051 + $0x90] sm:$0xff]
        %v3071 = vld [vmem:[%s3051 + $0x98] sm:$0xff]
        %v3072 = vld [vmem:[%s3051 + $0xa0] sm:$0xff]
        %v3073 = vld [vmem:[%s3051 + $0xa8] sm:$0xff]
        %v3074 = vld [vmem:[%s3051 + $0xb0] sm:$0xff]
        %v3075 = vld [vmem:[%s3051 + $0xb8] sm:$0xff]
        %v3076 = vld [vmem:[%s3051 + $0xc0] sm:$0xff]
        %v3077 = vld [vmem:[%s3051 + $0xc8] sm:$0xff]
        %v3078 = vld [vmem:[%s3051 + $0xd0] sm:$0xff]
        %v3079 = vld [vmem:[%s3051 + $0xd8] sm:$0xff]
        %v3080 = vld [vmem:[%s3051 + $0xe0] sm:$0xff]
        %v3081 = vld [vmem:[%s3051 + $0xe8] sm:$0xff]
        %v3082 = vld [vmem:[%s3051 + $0xf0] sm:$0xff]
        %v3083 = vld [vmem:[%s3051 + $0xf8] sm:$0xff]
        %v3084 = vld [vmem:[%s3051 + $0x100] sm:$0xff]
        %v3085 = vld [vmem:[%s3051 + $0x108] sm:$0xff]
        %v3086 = vld [vmem:[%s3051 + $0x110] sm:$0xff]
        %v3087 = vld [vmem:[%s3051 + $0x118] sm:$0xff]
        %v3088 = vld [vmem:[%s3051 + $0x120] sm:$0xff]
        %v3089 = vld [vmem:[%s3051 + $0x128] sm:$0xff]
        %v3090 = vld [vmem:[%s3051 + $0x130] sm:$0xff]
        %v3091 = vld [vmem:[%s3051 + $0x138] sm:$0xff]
        %v3092 = vld [vmem:[%s3051 + $0x140] sm:$0xff]
        %v3093 = vld [vmem:[%s3051 + $0x148] sm:$0xff]
        %v3094 = vld [vmem:[%s3051 + $0x150] sm:$0xff]
        %v3095 = vld [vmem:[%s3051 + $0x158] sm:$0xff]
        %v3096 = vld [vmem:[%s3051 + $0x160] sm:$0xff]
        %v3097 = vld [vmem:[%s3051 + $0x168] sm:$0xff]
        %v3098 = vld [vmem:[%s3051 + $0x170] sm:$0xff]
        %v3099 = vld [vmem:[%s3051 + $0x178] sm:$0xff]
        %v3100 = vld [vmem:[%s3051 + $0x180] sm:$0xff]
        %v3101 = vld [vmem:[%s3051 + $0x188] sm:$0xff]
        %v3102 = vld [vmem:[%s3051 + $0x190] sm:$0xff]
        %v3103 = vld [vmem:[%s3051 + $0x198] sm:$0xff]
        %v3104 = vld [vmem:[%s3051 + $0x1a0] sm:$0xff]
        %v3105 = vld [vmem:[%s3051 + $0x1a8] sm:$0xff]
        %v3106 = vld [vmem:[%s3051 + $0x1b0] sm:$0xff]
        %v3107 = vld [vmem:[%s3051 + $0x1b8] sm:$0xff]
        %v3108 = vld [vmem:[%s3051 + $0x1c0] sm:$0xff]
        %v3109 = vld [vmem:[%s3051 + $0x1c8] sm:$0xff]
        %v3110 = vld [vmem:[%s3051 + $0x1d0] sm:$0xff]
        %v3111 = vld [vmem:[%s3051 + $0x1d8] sm:$0xff]
        %v3112 = vld [vmem:[%s3051 + $0x1e0] sm:$0xff]
        %v3113 = vld [vmem:[%s3051 + $0x1e8] sm:$0xff]
        %v3114 = vld [vmem:[%s3051 + $0x1f0] sm:$0xff]
        %v3115 = vld [vmem:[%s3051 + $0x1f8] sm:$0xff]
        %v3117 = vperm.slane %v2981, 0
        %v3118 = vperm.slane %v2981, 1
        %v3121 = vmul.f32 %v2972, %v3117
        %v3122 = vmul.f32 %v2973, %v3118
        %v3123 = vmul.f32 %v2974, %v3117
        %v3124 = vmul.f32 %v2975, %v3118
        %v3125 = vmul.f32 %v2976, %v3117
        %v3126 = vmul.f32 %v2977, %v3118
        %v3127 = vmul.f32 %v2978, %v3117
        %v3128 = vmul.f32 %v2979, %v3118
        %v3130 = vperm.slane %v2983, 0
        %v3131 = vperm.slane %v2983, 1
        %v3134 = vadd.f32 %v3121, %v3130
        %v3135 = vadd.f32 %v3122, %v3131
        %v3136 = vadd.f32 %v3123, %v3130
        %v3137 = vadd.f32 %v3124, %v3131
        %v3138 = vadd.f32 %v3125, %v3130
        %v3139 = vadd.f32 %v3126, %v3131
        %v3140 = vadd.f32 %v3127, %v3130
        %v3141 = vadd.f32 %v3128, %v3131
        %v3142 = vmax.f32 %v3134, 0.0
        %v3143 = vmax.f32 %v3135, 0.0
        %v3144 = vmax.f32 %v3136, 0.0
        %v3145 = vmax.f32 %v3137, 0.0
        %v3146 = vmax.f32 %v3138, 0.0
        %v3147 = vmax.f32 %v3139, 0.0
        %v3148 = vmax.f32 %v3140, 0.0
        %v3149 = vmax.f32 %v3141, 0.0
        %v3151 = vperm.slane %v3050, 0
        %v3152 = vperm.slane %v3050, 1
        %3155 = vmatpush.msra.mxu0 %v3015
        %3156 = vmatpush.msra.mxu0 %v3013
        %3157 = vmatpush.msra.mxu0 %v3011
        %3158 = vmatpush.msra.mxu0 %v3009
        %3159 = vmatpush.msra.mxu0 %v3007
        %3160 = vmatpush.msra.mxu0 %v3005
        %3161 = vmatpush.msra.mxu0 %v3003
        %3162 = vmatpush.msra.mxu0 %v3001
        %3163 = vmatpush.msra.mxu0 %v2999
        %3164 = vmatpush.msra.mxu0 %v2997
        %3165 = vmatpush.msra.mxu0 %v2995
        %3166 = vmatpush.msra.mxu0 %v2993
        %3167 = vmatpush.msra.mxu0 %v2991
        %3168 = vmatpush.msra.mxu0 %v2989
        %3169 = vmatpush.msra.mxu0 %v2987
        %3170 = vmatpush.msra.mxu0 %v2985
        %3171 = vmatmul.f32.gmra.mxu0 %v3142
        %v3172 = vpop.f32.mrf.mxu0
        %v3173 = vadd.f32 %v3151, %v3172
        %3174 = vmatmul.f32.gmra.mxu0 %v3144
        %v3175 = vpop.f32.mrf.mxu0
        %v3176 = vadd.f32 %v3151, %v3175
        %3177 = vmatmul.f32.gmra.mxu0 %v3146
        %v3178 = vpop.f32.mrf.mxu0
        %v3179 = vadd.f32 %v3151, %v3178
        %3180 = vmatmul.f32.gmra.mxu0 %v3148
        %v3181 = vpop.f32.mrf.mxu0
        %v3182 = vadd.f32 %v3151, %v3181
        %3183 = vdwg.mxu0
        %3184 = vmatpush.msra.mxu0 %v3047
        %3185 = vmatpush.msra.mxu0 %v3045
        %3186 = vmatpush.msra.mxu0 %v3043
        %3187 = vmatpush.msra.mxu0 %v3041
        %3188 = vmatpush.msra.mxu0 %v3039
        %3189 = vmatpush.msra.mxu0 %v3037
        %3190 = vmatpush.msra.mxu0 %v3035
        %3191 = vmatpush.msra.mxu0 %v3033
        %3192 = vmatpush.msra.mxu0 %v3031
        %3193 = vmatpush.msra.mxu0 %v3029
        %3194 = vmatpush.msra.mxu0 %v3027
        %3195 = vmatpush.msra.mxu0 %v3025
        %3196 = vmatpush.msra.mxu0 %v3023
        %3197 = vmatpush.msra.mxu0 %v3021
        %3198 = vmatpush.msra.mxu0 %v3019
        %3199 = vmatpush.msra.mxu0 %v3017
        %3200 = vmatmul.f32.gmra.mxu0 %v3143
        %v3201 = vpop.f32.mrf.mxu0
        %v3202 = vadd.f32 %v3173, %v3201
        %3203 = vmatmul.f32.gmra.mxu0 %v3145
        %v3204 = vpop.f32.mrf.mxu0
        %v3205 = vadd.f32 %v3176, %v3204
        %3206 = vmatmul.f32.gmra.mxu0 %v3147
        %v3207 = vpop.f32.mrf.mxu0
        %v3208 = vadd.f32 %v3179, %v3207
        %3209 = vmatmul.f32.gmra.mxu0 %v3149
        %v3210 = vpop.f32.mrf.mxu0
        %v3211 = vadd.f32 %v3182, %v3210
        %3212 = vdwg.mxu0
        %3213 = vmatpush.msra.mxu0 %v3016
        %3214 = vmatpush.msra.mxu0 %v3014
        %3215 = vmatpush.msra.mxu0 %v3012
        %3216 = vmatpush.msra.mxu0 %v3010
        %3217 = vmatpush.msra.mxu0 %v3008
        %3218 = vmatpush.msra.mxu0 %v3006
        %3219 = vmatpush.msra.mxu0 %v3004
        %3220 = vmatpush.msra.mxu0 %v3002
        %3221 = vmatpush.msra.mxu0 %v3000
        %3222 = vmatpush.msra.mxu0 %v2998
        %3223 = vmatpush.msra.mxu0 %v2996
        %3224 = vmatpush.msra.mxu0 %v2994
        %3225 = vmatpush.msra.mxu0 %v2992
        %3226 = vmatpush.msra.mxu0 %v2990
        %3227 = vmatpush.msra.mxu0 %v2988
        %3228 = vmatpush.msra.mxu0 %v2986
        %3229 = vmatmul.f32.gmra.mxu0 %v3142
        %v3230 = vpop.f32.mrf.mxu0
        %v3231 = vadd.f32 %v3152, %v3230
        %3232 = vmatmul.f32.gmra.mxu0 %v3144
        %v3233 = vpop.f32.mrf.mxu0
        %v3234 = vadd.f32 %v3152, %v3233
        %3235 = vmatmul.f32.gmra.mxu0 %v3146
        %v3236 = vpop.f32.mrf.mxu0
        %v3237 = vadd.f32 %v3152, %v3236
        %3238 = vmatmul.f32.gmra.mxu0 %v3148
        %v3239 = vpop.f32.mrf.mxu0
        %v3240 = vadd.f32 %v3152, %v3239
        %3241 = vdwg.mxu0
        %3242 = vmatpush.msra.mxu0 %v3048
        %3243 = vmatpush.msra.mxu0 %v3046
        %3244 = vmatpush.msra.mxu0 %v3044
        %3245 = vmatpush.msra.mxu0 %v3042
        %3246 = vmatpush.msra.mxu0 %v3040
        %3247 = vmatpush.msra.mxu0 %v3038
        %3248 = vmatpush.msra.mxu0 %v3036
        %3249 = vmatpush.msra.mxu0 %v3034
        %3250 = vmatpush.msra.mxu0 %v3032
        %3251 = vmatpush.msra.mxu0 %v3030
        %3252 = vmatpush.msra.mxu0 %v3028
        %3253 = vmatpush.msra.mxu0 %v3026
        %3254 = vmatpush.msra.mxu0 %v3024
        %3255 = vmatpush.msra.mxu0 %v3022
        %3256 = vmatpush.msra.mxu0 %v3020
        %3257 = vmatpush.msra.mxu0 %v3018
        %3258 = vmatmul.f32.gmra.mxu0 %v3143
        %v3259 = vpop.f32.mrf.mxu0
        %v3260 = vadd.f32 %v3231, %v3259
        %3261 = vmatmul.f32.gmra.mxu0 %v3145
        %v3262 = vpop.f32.mrf.mxu0
        %v3263 = vadd.f32 %v3234, %v3262
        %3264 = vmatmul.f32.gmra.mxu0 %v3147
        %v3265 = vpop.f32.mrf.mxu0
        %v3266 = vadd.f32 %v3237, %v3265
        %3267 = vmatmul.f32.gmra.mxu0 %v3149
        %v3268 = vpop.f32.mrf.mxu0
        %v3269 = vadd.f32 %v3240, %v3268
        %3270 = vdwg.mxu0
        %v3271 = vmax.f32 %v3202, 0.0
        %v3272 = vmax.f32 %v3260, 0.0
        %v3273 = vmax.f32 %v3205, 0.0
        %v3274 = vmax.f32 %v3263, 0.0
        %v3275 = vmax.f32 %v3208, 0.0
        %v3276 = vmax.f32 %v3266, 0.0
        %v3277 = vmax.f32 %v3211, 0.0
        %v3278 = vmax.f32 %v3269, 0.0
        %3279 = vmatpush.msra.mxu0 %v3082
        %3280 = vmatpush.msra.mxu0 %v3080
        %3281 = vmatpush.msra.mxu0 %v3078
        %3282 = vmatpush.msra.mxu0 %v3076
        %3283 = vmatpush.msra.mxu0 %v3074
        %3284 = vmatpush.msra.mxu0 %v3072
        %3285 = vmatpush.msra.mxu0 %v3070
        %3286 = vmatpush.msra.mxu0 %v3068
        %3287 = vmatpush.msra.mxu0 %v3066
        %3288 = vmatpush.msra.mxu0 %v3064
        %3289 = vmatpush.msra.mxu0 %v3062
        %3290 = vmatpush.msra.mxu0 %v3060
        %3291 = vmatpush.msra.mxu0 %v3058
        %3292 = vmatpush.msra.mxu0 %v3056
        %3293 = vmatpush.msra.mxu0 %v3054
        %3294 = vmatpush.msra.mxu0 %v3052
        %3295 = vmatmul.f32.gmra.mxu0 %v3271
        %v3296 = vpop.f32.mrf.mxu0
        %v3297 = vadd.f32 %v2972, %v3296
        %3298 = vmatmul.f32.gmra.mxu0 %v3273
        %v3299 = vpop.f32.mrf.mxu0
        %v3300 = vadd.f32 %v2974, %v3299
        %3301 = vmatmul.f32.gmra.mxu0 %v3275
        %v3302 = vpop.f32.mrf.mxu0
        %v3303 = vadd.f32 %v2976, %v3302
        %3304 = vmatmul.f32.gmra.mxu0 %v3277
        %v3305 = vpop.f32.mrf.mxu0
        %v3306 = vadd.f32 %v2978, %v3305
        %3307 = vdwg.mxu0
        %3308 = vmatpush.msra.mxu0 %v3114
        %3309 = vmatpush.msra.mxu0 %v3112
        %3310 = vmatpush.msra.mxu0 %v3110
        %3311 = vmatpush.msra.mxu0 %v3108
        %3312 = vmatpush.msra.mxu0 %v3106
        %3313 = vmatpush.msra.mxu0 %v3104
        %3314 = vmatpush.msra.mxu0 %v3102
        %3315 = vmatpush.msra.mxu0 %v3100
        %3316 = vmatpush.msra.mxu0 %v3098
        %3317 = vmatpush.msra.mxu0 %v3096
        %3318 = vmatpush.msra.mxu0 %v3094
        %3319 = vmatpush.msra.mxu0 %v3092
        %3320 = vmatpush.msra.mxu0 %v3090
        %3321 = vmatpush.msra.mxu0 %v3088
        %3322 = vmatpush.msra.mxu0 %v3086
        %3323 = vmatpush.msra.mxu0 %v3084
        %3324 = vmatmul.f32.gmra.mxu0 %v3272
        %v3325 = vpop.f32.mrf.mxu0
        %v3326 = vadd.f32 %v3297, %v3325
        %3327 = vmatmul.f32.gmra.mxu0 %v3274
        %v3328 = vpop.f32.mrf.mxu0
        %v3329 = vadd.f32 %v3300, %v3328
        %3330 = vmatmul.f32.gmra.mxu0 %v3276
        %v3331 = vpop.f32.mrf.mxu0
        %v3332 = vadd.f32 %v3303, %v3331
        %3333 = vmatmul.f32.gmra.mxu0 %v3278
        %v3334 = vpop.f32.mrf.mxu0
        %v3335 = vadd.f32 %v3306, %v3334
        %3336 = vdwg.mxu0
        %3337 = vmatpush.msra.mxu0 %v3083
        %3338 = vmatpush.msra.mxu0 %v3081
        %3339 = vmatpush.msra.mxu0 %v3079
        %3340 = vmatpush.msra.mxu0 %v3077
        %3341 = vmatpush.msra.mxu0 %v3075
        %3342 = vmatpush.msra.mxu0 %v3073
        %3343 = vmatpush.msra.mxu0 %v3071
        %3344 = vmatpush.msra.mxu0 %v3069
        %3345 = vmatpush.msra.mxu0 %v3067
        %3346 = vmatpush.msra.mxu0 %v3065
        %3347 = vmatpush.msra.mxu0 %v3063
        %3348 = vmatpush.msra.mxu0 %v3061
        %3349 = vmatpush.msra.mxu0 %v3059
        %3350 = vmatpush.msra.mxu0 %v3057
        %3351 = vmatpush.msra.mxu0 %v3055
        %3352 = vmatpush.msra.mxu0 %v3053
        %3353 = vmatmul.f32.gmra.mxu0 %v3271
        %v3354 = vpop.f32.mrf.mxu0
        %v3355 = vadd.f32 %v2973, %v3354
        %3356 = vmatmul.f32.gmra.mxu0 %v3273
        %v3357 = vpop.f32.mrf.mxu0
        %v3358 = vadd.f32 %v2975, %v3357
        %3359 = vmatmul.f32.gmra.mxu0 %v3275
        %v3360 = vpop.f32.mrf.mxu0
        %v3361 = vadd.f32 %v2977, %v3360
        %3362 = vmatmul.f32.gmra.mxu0 %v3277
        %v3363 = vpop.f32.mrf.mxu0
        %v3364 = vadd.f32 %v2979, %v3363
        %3365 = vdwg.mxu0
        %3366 = vmatpush.msra.mxu0 %v3115
        %3367 = vmatpush.msra.mxu0 %v3113
        %3368 = vmatpush.msra.mxu0 %v3111
        %3369 = vmatpush.msra.mxu0 %v3109
        %3370 = vmatpush.msra.mxu0 %v3107
        %3371 = vmatpush.msra.mxu0 %v3105
        %3372 = vmatpush.msra.mxu0 %v3103
        %3373 = vmatpush.msra.mxu0 %v3101
        %3374 = vmatpush.msra.mxu0 %v3099
        %3375 = vmatpush.msra.mxu0 %v3097
        %3376 = vmatpush.msra.mxu0 %v3095
        %3377 = vmatpush.msra.mxu0 %v3093
        %3378 = vmatpush.msra.mxu0 %v3091
        %3379 = vmatpush.msra.mxu0 %v3089
        %3380 = vmatpush.msra.mxu0 %v3087
        %3381 = vmatpush.msra.mxu0 %v3085
        %3382 = vmatmul.f32.gmra.mxu0 %v3272
        %v3383 = vpop.f32.mrf.mxu0
        %v3384 = vadd.f32 %v3355, %v3383
        %3385 = vmatmul.f32.gmra.mxu0 %v3274
        %v3386 = vpop.f32.mrf.mxu0
        %v3387 = vadd.f32 %v3358, %v3386
        %3388 = vmatmul.f32.gmra.mxu0 %v3276
        %v3389 = vpop.f32.mrf.mxu0
        %v3390 = vadd.f32 %v3361, %v3389
        %3391 = vmatmul.f32.gmra.mxu0 %v3278
        %v3392 = vpop.f32.mrf.mxu0
        %v3393 = vadd.f32 %v3364, %v3392
        %3394 = vdwg.mxu0
        %v3395 = vmax.f32 %v3326, 0.0
        %v3396 = vmax.f32 %v3384, 0.0
        %v3397 = vmax.f32 %v3329, 0.0
        %v3398 = vmax.f32 %v3387, 0.0
        %v3399 = vmax.f32 %v3332, 0.0
        %v3400 = vmax.f32 %v3390, 0.0
        %v3401 = vmax.f32 %v3335, 0.0
        %v3402 = vmax.f32 %v3393, 0.0
        %s3403 = scalar_lea.vmem [#allocation32], 4
        %v3404 = vld [vmem:[%s3403] sm:$0x3]
        %s3405 = scalar_lea.vmem [#allocation34], 4
        %v3406 = vld [vmem:[%s3405] sm:$0x3]
        %s3407 = scalar_lea.vmem [#allocation35], 1024
        %v3408 = vld [vmem:[%s3407] sm:$0xff]
        %v3409 = vld [vmem:[%s3407 + $0x8] sm:$0xff]
        %v3410 = vld [vmem:[%s3407 + $0x10] sm:$0xff]
        %v3411 = vld [vmem:[%s3407 + $0x18] sm:$0xff]
        %v3412 = vld [vmem:[%s3407 + $0x20] sm:$0xff]
        %v3413 = vld [vmem:[%s3407 + $0x28] sm:$0xff]
        %v3414 = vld [vmem:[%s3407 + $0x30] sm:$0xff]
        %v3415 = vld [vmem:[%s3407 + $0x38] sm:$0xff]
        %v3416 = vld [vmem:[%s3407 + $0x40] sm:$0xff]
        %v3417 = vld [vmem:[%s3407 + $0x48] sm:$0xff]
        %v3418 = vld [vmem:[%s3407 + $0x50] sm:$0xff]
        %v3419 = vld [vmem:[%s3407 + $0x58] sm:$0xff]
        %v3420 = vld [vmem:[%s3407 + $0x60] sm:$0xff]
        %v3421 = vld [vmem:[%s3407 + $0x68] sm:$0xff]
        %v3422 = vld [vmem:[%s3407 + $0x70] sm:$0xff]
        %v3423 = vld [vmem:[%s3407 + $0x78] sm:$0xff]
        %v3424 = vld [vmem:[%s3407 + $0x80] sm:$0xff]
        %v3425 = vld [vmem:[%s3407 + $0x88] sm:$0xff]
        %v3426 = vld [vmem:[%s3407 + $0x90] sm:$0xff]
        %v3427 = vld [vmem:[%s3407 + $0x98] sm:$0xff]
        %v3428 = vld [vmem:[%s3407 + $0xa0] sm:$0xff]
        %v3429 = vld [vmem:[%s3407 + $0xa8] sm:$0xff]
        %v3430 = vld [vmem:[%s3407 + $0xb0] sm:$0xff]
        %v3431 = vld [vmem:[%s3407 + $0xb8] sm:$0xff]
        %v3432 = vld [vmem:[%s3407 + $0xc0] sm:$0xff]
        %v3433 = vld [vmem:[%s3407 + $0xc8] sm:$0xff]
        %v3434 = vld [vmem:[%s3407 + $0xd0] sm:$0xff]
        %v3435 = vld [vmem:[%s3407 + $0xd8] sm:$0xff]
        %v3436 = vld [vmem:[%s3407 + $0xe0] sm:$0xff]
        %v3437 = vld [vmem:[%s3407 + $0xe8] sm:$0xff]
        %v3438 = vld [vmem:[%s3407 + $0xf0] sm:$0xff]
        %v3439 = vld [vmem:[%s3407 + $0xf8] sm:$0xff]
        %v3440 = vld [vmem:[%s3407 + $0x100] sm:$0xff]
        %v3441 = vld [vmem:[%s3407 + $0x108] sm:$0xff]
        %v3442 = vld [vmem:[%s3407 + $0x110] sm:$0xff]
        %v3443 = vld [vmem:[%s3407 + $0x118] sm:$0xff]
        %v3444 = vld [vmem:[%s3407 + $0x120] sm:$0xff]
        %v3445 = vld [vmem:[%s3407 + $0x128] sm:$0xff]
        %v3446 = vld [vmem:[%s3407 + $0x130] sm:$0xff]
        %v3447 = vld [vmem:[%s3407 + $0x138] sm:$0xff]
        %v3448 = vld [vmem:[%s3407 + $0x140] sm:$0xff]
        %v3449 = vld [vmem:[%s3407 + $0x148] sm:$0xff]
        %v3450 = vld [vmem:[%s3407 + $0x150] sm:$0xff]
        %v3451 = vld [vmem:[%s3407 + $0x158] sm:$0xff]
        %v3452 = vld [vmem:[%s3407 + $0x160] sm:$0xff]
        %v3453 = vld [vmem:[%s3407 + $0x168] sm:$0xff]
        %v3454 = vld [vmem:[%s3407 + $0x170] sm:$0xff]
        %v3455 = vld [vmem:[%s3407 + $0x178] sm:$0xff]
        %v3456 = vld [vmem:[%s3407 + $0x180] sm:$0xff]
        %v3457 = vld [vmem:[%s3407 + $0x188] sm:$0xff]
        %v3458 = vld [vmem:[%s3407 + $0x190] sm:$0xff]
        %v3459 = vld [vmem:[%s3407 + $0x198] sm:$0xff]
        %v3460 = vld [vmem:[%s3407 + $0x1a0] sm:$0xff]
        %v3461 = vld [vmem:[%s3407 + $0x1a8] sm:$0xff]
        %v3462 = vld [vmem:[%s3407 + $0x1b0] sm:$0xff]
        %v3463 = vld [vmem:[%s3407 + $0x1b8] sm:$0xff]
        %v3464 = vld [vmem:[%s3407 + $0x1c0] sm:$0xff]
        %v3465 = vld [vmem:[%s3407 + $0x1c8] sm:$0xff]
        %v3466 = vld [vmem:[%s3407 + $0x1d0] sm:$0xff]
        %v3467 = vld [vmem:[%s3407 + $0x1d8] sm:$0xff]
        %v3468 = vld [vmem:[%s3407 + $0x1e0] sm:$0xff]
        %v3469 = vld [vmem:[%s3407 + $0x1e8] sm:$0xff]
        %v3470 = vld [vmem:[%s3407 + $0x1f0] sm:$0xff]
        %v3471 = vld [vmem:[%s3407 + $0x1f8] sm:$0xff]
        %s3472 = scalar_lea.vmem [#allocation37], 4
        %v3473 = vld [vmem:[%s3472] sm:$0x3]
        %s3474 = scalar_lea.vmem [#allocation38], 1024
        %v3475 = vld [vmem:[%s3474] sm:$0xff]
        %v3476 = vld [vmem:[%s3474 + $0x8] sm:$0xff]
        %v3477 = vld [vmem:[%s3474 + $0x10] sm:$0xff]
        %v3478 = vld [vmem:[%s3474 + $0x18] sm:$0xff]
        %v3479 = vld [vmem:[%s3474 + $0x20] sm:$0xff]
        %v3480 = vld [vmem:[%s3474 + $0x28] sm:$0xff]
        %v3481 = vld [vmem:[%s3474 + $0x30] sm:$0xff]
        %v3482 = vld [vmem:[%s3474 + $0x38] sm:$0xff]
        %v3483 = vld [vmem:[%s3474 + $0x40] sm:$0xff]
        %v3484 = vld [vmem:[%s3474 + $0x48] sm:$0xff]
        %v3485 = vld [vmem:[%s3474 + $0x50] sm:$0xff]
        %v3486 = vld [vmem:[%s3474 + $0x58] sm:$0xff]
        %v3487 = vld [vmem:[%s3474 + $0x60] sm:$0xff]
        %v3488 = vld [vmem:[%s3474 + $0x68] sm:$0xff]
        %v3489 = vld [vmem:[%s3474 + $0x70] sm:$0xff]
        %v3490 = vld [vmem:[%s3474 + $0x78] sm:$0xff]
        %v3491 = vld [vmem:[%s3474 + $0x80] sm:$0xff]
        %v3492 = vld [vmem:[%s3474 + $0x88] sm:$0xff]
        %v3493 = vld [vmem:[%s3474 + $0x90] sm:$0xff]
        %v3494 = vld [vmem:[%s3474 + $0x98] sm:$0xff]
        %v3495 = vld [vmem:[%s3474 + $0xa0] sm:$0xff]
        %v3496 = vld [vmem:[%s3474 + $0xa8] sm:$0xff]
        %v3497 = vld [vmem:[%s3474 + $0xb0] sm:$0xff]
        %v3498 = vld [vmem:[%s3474 + $0xb8] sm:$0xff]
        %v3499 = vld [vmem:[%s3474 + $0xc0] sm:$0xff]
        %v3500 = vld [vmem:[%s3474 + $0xc8] sm:$0xff]
        %v3501 = vld [vmem:[%s3474 + $0xd0] sm:$0xff]
        %v3502 = vld [vmem:[%s3474 + $0xd8] sm:$0xff]
        %v3503 = vld [vmem:[%s3474 + $0xe0] sm:$0xff]
        %v3504 = vld [vmem:[%s3474 + $0xe8] sm:$0xff]
        %v3505 = vld [vmem:[%s3474 + $0xf0] sm:$0xff]
        %v3506 = vld [vmem:[%s3474 + $0xf8] sm:$0xff]
        %v3507 = vld [vmem:[%s3474 + $0x100] sm:$0xff]
        %v3508 = vld [vmem:[%s3474 + $0x108] sm:$0xff]
        %v3509 = vld [vmem:[%s3474 + $0x110] sm:$0xff]
        %v3510 = vld [vmem:[%s3474 + $0x118] sm:$0xff]
        %v3511 = vld [vmem:[%s3474 + $0x120] sm:$0xff]
        %v3512 = vld [vmem:[%s3474 + $0x128] sm:$0xff]
        %v3513 = vld [vmem:[%s3474 + $0x130] sm:$0xff]
        %v3514 = vld [vmem:[%s3474 + $0x138] sm:$0xff]
        %v3515 = vld [vmem:[%s3474 + $0x140] sm:$0xff]
        %v3516 = vld [vmem:[%s3474 + $0x148] sm:$0xff]
        %v3517 = vld [vmem:[%s3474 + $0x150] sm:$0xff]
        %v3518 = vld [vmem:[%s3474 + $0x158] sm:$0xff]
        %v3519 = vld [vmem:[%s3474 + $0x160] sm:$0xff]
        %v3520 = vld [vmem:[%s3474 + $0x168] sm:$0xff]
        %v3521 = vld [vmem:[%s3474 + $0x170] sm:$0xff]
        %v3522 = vld [vmem:[%s3474 + $0x178] sm:$0xff]
        %v3523 = vld [vmem:[%s3474 + $0x180] sm:$0xff]
        %v3524 = vld [vmem:[%s3474 + $0x188] sm:$0xff]
        %v3525 = vld [vmem:[%s3474 + $0x190] sm:$0xff]
        %v3526 = vld [vmem:[%s3474 + $0x198] sm:$0xff]
        %v3527 = vld [vmem:[%s3474 + $0x1a0] sm:$0xff]
        %v3528 = vld [vmem:[%s3474 + $0x1a8] sm:$0xff]
        %v3529 = vld [vmem:[%s3474 + $0x1b0] sm:$0xff]
        %v3530 = vld [vmem:[%s3474 + $0x1b8] sm:$0xff]
        %v3531 = vld [vmem:[%s3474 + $0x1c0] sm:$0xff]
        %v3532 = vld [vmem:[%s3474 + $0x1c8] sm:$0xff]
        %v3533 = vld [vmem:[%s3474 + $0x1d0] sm:$0xff]
        %v3534 = vld [vmem:[%s3474 + $0x1d8] sm:$0xff]
        %v3535 = vld [vmem:[%s3474 + $0x1e0] sm:$0xff]
        %v3536 = vld [vmem:[%s3474 + $0x1e8] sm:$0xff]
        %v3537 = vld [vmem:[%s3474 + $0x1f0] sm:$0xff]
        %v3538 = vld [vmem:[%s3474 + $0x1f8] sm:$0xff]
        %v3540 = vperm.slane %v3404, 0
        %v3541 = vperm.slane %v3404, 1
        %v3544 = vmul.f32 %v3395, %v3540
        %v3545 = vmul.f32 %v3396, %v3541
        %v3546 = vmul.f32 %v3397, %v3540
        %v3547 = vmul.f32 %v3398, %v3541
        %v3548 = vmul.f32 %v3399, %v3540
        %v3549 = vmul.f32 %v3400, %v3541
        %v3550 = vmul.f32 %v3401, %v3540
        %v3551 = vmul.f32 %v3402, %v3541
        %v3553 = vperm.slane %v3406, 0
        %v3554 = vperm.slane %v3406, 1
        %v3557 = vadd.f32 %v3544, %v3553
        %v3558 = vadd.f32 %v3545, %v3554
        %v3559 = vadd.f32 %v3546, %v3553
        %v3560 = vadd.f32 %v3547, %v3554
        %v3561 = vadd.f32 %v3548, %v3553
        %v3562 = vadd.f32 %v3549, %v3554
        %v3563 = vadd.f32 %v3550, %v3553
        %v3564 = vadd.f32 %v3551, %v3554
        %v3565 = vmax.f32 %v3557, 0.0
        %v3566 = vmax.f32 %v3558, 0.0
        %v3567 = vmax.f32 %v3559, 0.0
        %v3568 = vmax.f32 %v3560, 0.0
        %v3569 = vmax.f32 %v3561, 0.0
        %v3570 = vmax.f32 %v3562, 0.0
        %v3571 = vmax.f32 %v3563, 0.0
        %v3572 = vmax.f32 %v3564, 0.0
        %v3574 = vperm.slane %v3473, 0
        %v3575 = vperm.slane %v3473, 1
        %3578 = vmatpush.msra.mxu0 %v3438
        %3579 = vmatpush.msra.mxu0 %v3436
        %3580 = vmatpush.msra.mxu0 %v3434
        %3581 = vmatpush.msra.mxu0 %v3432
        %3582 = vmatpush.msra.mxu0 %v3430
        %3583 = vmatpush.msra.mxu0 %v3428
        %3584 = vmatpush.msra.mxu0 %v3426
        %3585 = vmatpush.msra.mxu0 %v3424
        %3586 = vmatpush.msra.mxu0 %v3422
        %3587 = vmatpush.msra.mxu0 %v3420
        %3588 = vmatpush.msra.mxu0 %v3418
        %3589 = vmatpush.msra.mxu0 %v3416
        %3590 = vmatpush.msra.mxu0 %v3414
        %3591 = vmatpush.msra.mxu0 %v3412
        %3592 = vmatpush.msra.mxu0 %v3410
        %3593 = vmatpush.msra.mxu0 %v3408
        %3594 = vmatmul.f32.gmra.mxu0 %v3565
        %v3595 = vpop.f32.mrf.mxu0
        %v3596 = vadd.f32 %v3574, %v3595
        %3597 = vmatmul.f32.gmra.mxu0 %v3567
        %v3598 = vpop.f32.mrf.mxu0
        %v3599 = vadd.f32 %v3574, %v3598
        %3600 = vmatmul.f32.gmra.mxu0 %v3569
        %v3601 = vpop.f32.mrf.mxu0
        %v3602 = vadd.f32 %v3574, %v3601
        %3603 = vmatmul.f32.gmra.mxu0 %v3571
        %v3604 = vpop.f32.mrf.mxu0
        %v3605 = vadd.f32 %v3574, %v3604
        %3606 = vdwg.mxu0
        %3607 = vmatpush.msra.mxu0 %v3470
        %3608 = vmatpush.msra.mxu0 %v3468
        %3609 = vmatpush.msra.mxu0 %v3466
        %3610 = vmatpush.msra.mxu0 %v3464
        %3611 = vmatpush.msra.mxu0 %v3462
        %3612 = vmatpush.msra.mxu0 %v3460
        %3613 = vmatpush.msra.mxu0 %v3458
        %3614 = vmatpush.msra.mxu0 %v3456
        %3615 = vmatpush.msra.mxu0 %v3454
        %3616 = vmatpush.msra.mxu0 %v3452
        %3617 = vmatpush.msra.mxu0 %v3450
        %3618 = vmatpush.msra.mxu0 %v3448
        %3619 = vmatpush.msra.mxu0 %v3446
        %3620 = vmatpush.msra.mxu0 %v3444
        %3621 = vmatpush.msra.mxu0 %v3442
        %3622 = vmatpush.msra.mxu0 %v3440
        %3623 = vmatmul.f32.gmra.mxu0 %v3566
        %v3624 = vpop.f32.mrf.mxu0
        %v3625 = vadd.f32 %v3596, %v3624
        %3626 = vmatmul.f32.gmra.mxu0 %v3568
        %v3627 = vpop.f32.mrf.mxu0
        %v3628 = vadd.f32 %v3599, %v3627
        %3629 = vmatmul.f32.gmra.mxu0 %v3570
        %v3630 = vpop.f32.mrf.mxu0
        %v3631 = vadd.f32 %v3602, %v3630
        %3632 = vmatmul.f32.gmra.mxu0 %v3572
        %v3633 = vpop.f32.mrf.mxu0
        %v3634 = vadd.f32 %v3605, %v3633
        %3635 = vdwg.mxu0
        %3636 = vmatpush.msra.mxu0 %v3439
        %3637 = vmatpush.msra.mxu0 %v3437
        %3638 = vmatpush.msra.mxu0 %v3435
        %3639 = vmatpush.msra.mxu0 %v3433
        %3640 = vmatpush.msra.mxu0 %v3431
        %3641 = vmatpush.msra.mxu0 %v3429
        %3642 = vmatpush.msra.mxu0 %v3427
        %3643 = vmatpush.msra.mxu0 %v3425
        %3644 = vmatpush.msra.mxu0 %v3423
        %3645 = vmatpush.msra.mxu0 %v3421
        %3646 = vmatpush.msra.mxu0 %v3419
        %3647 = vmatpush.msra.mxu0 %v3417
        %3648 = vmatpush.msra.mxu0 %v3415
        %3649 = vmatpush.msra.mxu0 %v3413
        %3650 = vmatpush.msra.mxu0 %v3411
        %3651 = vmatpush.msra.mxu0 %v3409
        %3652 = vmatmul.f32.gmra.mxu0 %v3565
        %v3653 = vpop.f32.mrf.mxu0
        %v3654 = vadd.f32 %v3575, %v3653
        %3655 = vmatmul.f32.gmra.mxu0 %v3567
        %v3656 = vpop.f32.mrf.mxu0
        %v3657 = vadd.f32 %v3575, %v3656
        %3658 = vmatmul.f32.gmra.mxu0 %v3569
        %v3659 = vpop.f32.mrf.mxu0
        %v3660 = vadd.f32 %v3575, %v3659
        %3661 = vmatmul.f32.gmra.mxu0 %v3571
        %v3662 = vpop.f32.mrf.mxu0
        %v3663 = vadd.f32 %v3575, %v3662
        %3664 = vdwg.mxu0
        %3665 = vmatpush.msra.mxu0 %v3471
        %3666 = vmatpush.msra.mxu0 %v3469
        %3667 = vmatpush.msra.mxu0 %v3467
        %3668 = vmatpush.msra.mxu0 %v3465
        %3669 = vmatpush.msra.mxu0 %v3463
        %3670 = vmatpush.msra.mxu0 %v3461
        %3671 = vmatpush.msra.mxu0 %v3459
        %3672 = vmatpush.msra.mxu0 %v3457
        %3673 = vmatpush.msra.mxu0 %v3455
        %3674 = vmatpush.msra.mxu0 %v3453
        %3675 = vmatpush.msra.mxu0 %v3451
        %3676 = vmatpush.msra.mxu0 %v3449
        %3677 = vmatpush.msra.mxu0 %v3447
        %3678 = vmatpush.msra.mxu0 %v3445
        %3679 = vmatpush.msra.mxu0 %v3443
        %3680 = vmatpush.msra.mxu0 %v3441
        %3681 = vmatmul.f32.gmra.mxu0 %v3566
        %v3682 = vpop.f32.mrf.mxu0
        %v3683 = vadd.f32 %v3654, %v3682
        %3684 = vmatmul.f32.gmra.mxu0 %v3568
        %v3685 = vpop.f32.mrf.mxu0
        %v3686 = vadd.f32 %v3657, %v3685
        %3687 = vmatmul.f32.gmra.mxu0 %v3570
        %v3688 = vpop.f32.mrf.mxu0
        %v3689 = vadd.f32 %v3660, %v3688
        %3690 = vmatmul.f32.gmra.mxu0 %v3572
        %v3691 = vpop.f32.mrf.mxu0
        %v3692 = vadd.f32 %v3663, %v3691
        %3693 = vdwg.mxu0
        %v3694 = vmax.f32 %v3625, 0.0
        %v3695 = vmax.f32 %v3683, 0.0
        %v3696 = vmax.f32 %v3628, 0.0
        %v3697 = vmax.f32 %v3686, 0.0
        %v3698 = vmax.f32 %v3631, 0.0
        %v3699 = vmax.f32 %v3689, 0.0
        %v3700 = vmax.f32 %v3634, 0.0
        %v3701 = vmax.f32 %v3692, 0.0
        %3702 = vmatpush.msra.mxu0 %v3505
        %3703 = vmatpush.msra.mxu0 %v3503
        %3704 = vmatpush.msra.mxu0 %v3501
        %3705 = vmatpush.msra.mxu0 %v3499
        %3706 = vmatpush.msra.mxu0 %v3497
        %3707 = vmatpush.msra.mxu0 %v3495
        %3708 = vmatpush.msra.mxu0 %v3493
        %3709 = vmatpush.msra.mxu0 %v3491
        %3710 = vmatpush.msra.mxu0 %v3489
        %3711 = vmatpush.msra.mxu0 %v3487
        %3712 = vmatpush.msra.mxu0 %v3485
        %3713 = vmatpush.msra.mxu0 %v3483
        %3714 = vmatpush.msra.mxu0 %v3481
        %3715 = vmatpush.msra.mxu0 %v3479
        %3716 = vmatpush.msra.mxu0 %v3477
        %3717 = vmatpush.msra.mxu0 %v3475
        %3718 = vmatmul.f32.gmra.mxu0 %v3694
        %v3719 = vpop.f32.mrf.mxu0
        %v3720 = vadd.f32 %v3395, %v3719
        %3721 = vmatmul.f32.gmra.mxu0 %v3696
        %v3722 = vpop.f32.mrf.mxu0
        %v3723 = vadd.f32 %v3397, %v3722
        %3724 = vmatmul.f32.gmra.mxu0 %v3698
        %v3725 = vpop.f32.mrf.mxu0
        %v3726 = vadd.f32 %v3399, %v3725
        %3727 = vmatmul.f32.gmra.mxu0 %v3700
        %v3728 = vpop.f32.mrf.mxu0
        %v3729 = vadd.f32 %v3401, %v3728
        %3730 = vdwg.mxu0
        %3731 = vmatpush.msra.mxu0 %v3537
        %3732 = vmatpush.msra.mxu0 %v3535
        %3733 = vmatpush.msra.mxu0 %v3533
        %3734 = vmatpush.msra.mxu0 %v3531
        %3735 = vmatpush.msra.mxu0 %v3529
        %3736 = vmatpush.msra.mxu0 %v3527
        %3737 = vmatpush.msra.mxu0 %v3525
        %3738 = vmatpush.msra.mxu0 %v3523
        %3739 = vmatpush.msra.mxu0 %v3521
        %3740 = vmatpush.msra.mxu0 %v3519
        %3741 = vmatpush.msra.mxu0 %v3517
        %3742 = vmatpush.msra.mxu0 %v3515
        %3743 = vmatpush.msra.mxu0 %v3513
        %3744 = vmatpush.msra.mxu0 %v3511
        %3745 = vmatpush.msra.mxu0 %v3509
        %3746 = vmatpush.msra.mxu0 %v3507
        %3747 = vmatmul.f32.gmra.mxu0 %v3695
        %v3748 = vpop.f32.mrf.mxu0
        %v3749 = vadd.f32 %v3720, %v3748
        %3750 = vmatmul.f32.gmra.mxu0 %v3697
        %v3751 = vpop.f32.mrf.mxu0
        %v3752 = vadd.f32 %v3723, %v3751
        %3753 = vmatmul.f32.gmra.mxu0 %v3699
        %v3754 = vpop.f32.mrf.mxu0
        %v3755 = vadd.f32 %v3726, %v3754
        %3756 = vmatmul.f32.gmra.mxu0 %v3701
        %v3757 = vpop.f32.mrf.mxu0
        %v3758 = vadd.f32 %v3729, %v3757
        %3759 = vdwg.mxu0
        %3760 = vmatpush.msra.mxu0 %v3506
        %3761 = vmatpush.msra.mxu0 %v3504
        %3762 = vmatpush.msra.mxu0 %v3502
        %3763 = vmatpush.msra.mxu0 %v3500
        %3764 = vmatpush.msra.mxu0 %v3498
        %3765 = vmatpush.msra.mxu0 %v3496
        %3766 = vmatpush.msra.mxu0 %v3494
        %3767 = vmatpush.msra.mxu0 %v3492
        %3768 = vmatpush.msra.mxu0 %v3490
        %3769 = vmatpush.msra.mxu0 %v3488
        %3770 = vmatpush.msra.mxu0 %v3486
        %3771 = vmatpush.msra.mxu0 %v3484
        %3772 = vmatpush.msra.mxu0 %v3482
        %3773 = vmatpush.msra.mxu0 %v3480
        %3774 = vmatpush.msra.mxu0 %v3478
        %3775 = vmatpush.msra.mxu0 %v3476
        %3776 = vmatmul.f32.gmra.mxu0 %v3694
        %v3777 = vpop.f32.mrf.mxu0
        %v3778 = vadd.f32 %v3396, %v3777
        %3779 = vmatmul.f32.gmra.mxu0 %v3696
        %v3780 = vpop.f32.mrf.mxu0
        %v3781 = vadd.f32 %v3398, %v3780
        %3782 = vmatmul.f32.gmra.mxu0 %v3698
        %v3783 = vpop.f32.mrf.mxu0
        %v3784 = vadd.f32 %v3400, %v3783
        %3785 = vmatmul.f32.gmra.mxu0 %v3700
        %v3786 = vpop.f32.mrf.mxu0
        %v3787 = vadd.f32 %v3402, %v3786
        %3788 = vdwg.mxu0
        %3789 = vmatpush.msra.mxu0 %v3538
        %3790 = vmatpush.msra.mxu0 %v3536
        %3791 = vmatpush.msra.mxu0 %v3534
        %3792 = vmatpush.msra.mxu0 %v3532
        %3793 = vmatpush.msra.mxu0 %v3530
        %3794 = vmatpush.msra.mxu0 %v3528
        %3795 = vmatpush.msra.mxu0 %v3526
        %3796 = vmatpush.msra.mxu0 %v3524
        %3797 = vmatpush.msra.mxu0 %v3522
        %3798 = vmatpush.msra.mxu0 %v3520
        %3799 = vmatpush.msra.mxu0 %v3518
        %3800 = vmatpush.msra.mxu0 %v3516
        %3801 = vmatpush.msra.mxu0 %v3514
        %3802 = vmatpush.msra.mxu0 %v3512
        %3803 = vmatpush.msra.mxu0 %v3510
        %3804 = vmatpush.msra.mxu0 %v3508
        %3805 = vmatmul.f32.gmra.mxu0 %v3695
        %v3806 = vpop.f32.mrf.mxu0
        %v3807 = vadd.f32 %v3778, %v3806
        %3808 = vmatmul.f32.gmra.mxu0 %v3697
        %v3809 = vpop.f32.mrf.mxu0
        %v3810 = vadd.f32 %v3781, %v3809
        %3811 = vmatmul.f32.gmra.mxu0 %v3699
        %v3812 = vpop.f32.mrf.mxu0
        %v3813 = vadd.f32 %v3784, %v3812
        %3814 = vmatmul.f32.gmra.mxu0 %v3701
        %v3815 = vpop.f32.mrf.mxu0
        %v3816 = vadd.f32 %v3787, %v3815
        %3817 = vdwg.mxu0
        %v3818 = vmax.f32 %v3749, 0.0
        %v3819 = vmax.f32 %v3807, 0.0
        %v3820 = vmax.f32 %v3752, 0.0
        %v3821 = vmax.f32 %v3810, 0.0
        %v3822 = vmax.f32 %v3755, 0.0
        %v3823 = vmax.f32 %v3813, 0.0
        %v3824 = vmax.f32 %v3758, 0.0
        %v3825 = vmax.f32 %v3816, 0.0
        %v3826 = vld [vmem:[#allocation40] sm:$0x3]
        %v3828 = vperm.slane %v3826, 0
        %v3829 = vperm.slane %v3826, 1
        %v3832 = vmul.f32 %v3818, %v3828
        %v3833 = vmul.f32 %v3819, %v3829
        %v3834 = vmul.f32 %v3820, %v3828
        %v3835 = vmul.f32 %v3821, %v3829
        %v3836 = vmul.f32 %v3822, %v3828
        %v3837 = vmul.f32 %v3823, %v3829
        %v3838 = vmul.f32 %v3824, %v3828
        %v3839 = vmul.f32 %v3825, %v3829
        %v3840 = vld [vmem:[#allocation41] sm:$0x3]
        %v3842 = vperm.slane %v3840, 0
        %v3843 = vperm.slane %v3840, 1
        %v3846 = vadd.f32 %v3832, %v3842
        %v3847 = vadd.f32 %v3833, %v3843
        %v3848 = vadd.f32 %v3834, %v3842
        %v3849 = vadd.f32 %v3835, %v3843
        %v3850 = vadd.f32 %v3836, %v3842
        %v3851 = vadd.f32 %v3837, %v3843
        %v3852 = vadd.f32 %v3838, %v3842
        %v3853 = vadd.f32 %v3839, %v3843
        %v3854 = vmax.f32 %v3846, 0.0
        %v3855 = vmax.f32 %v3847, 0.0
        %v3856 = vmax.f32 %v3848, 0.0
        %v3857 = vmax.f32 %v3849, 0.0
        %v3858 = vmax.f32 %v3850, 0.0
        %v3859 = vmax.f32 %v3851, 0.0
        %v3860 = vmax.f32 %v3852, 0.0
        %v3861 = vmax.f32 %v3853, 0.0
        %v3862 = vld [vmem:[#allocation43] sm:$0xff]
        %v3863 = vld [vmem:[#allocation43 + $0x8] sm:$0xff]
        %v3864 = vld [vmem:[#allocation43 + $0x10] sm:$0xff]
        %v3865 = vld [vmem:[#allocation43 + $0x18] sm:$0xff]
        %v3866 = vld [vmem:[#allocation43 + $0x20] sm:$0xff]
        %v3867 = vld [vmem:[#allocation43 + $0x28] sm:$0xff]
        %v3868 = vld [vmem:[#allocation43 + $0x30] sm:$0xff]
        %v3869 = vld [vmem:[#allocation43 + $0x38] sm:$0xff]
        %v3870 = vld [vmem:[#allocation43 + $0x40] sm:$0xff]
        %v3871 = vld [vmem:[#allocation43 + $0x48] sm:$0xff]
        %v3872 = vld [vmem:[#allocation43 + $0x50] sm:$0xff]
        %v3873 = vld [vmem:[#allocation43 + $0x58] sm:$0xff]
        %v3874 = vld [vmem:[#allocation43 + $0x60] sm:$0xff]
        %v3875 = vld [vmem:[#allocation43 + $0x68] sm:$0xff]
        %v3876 = vld [vmem:[#allocation43 + $0x70] sm:$0xff]
        %v3877 = vld [vmem:[#allocation43 + $0x78] sm:$0xff]
        %v3878 = vld [vmem:[#allocation43 + $0x80] sm:$0xff]
        %v3879 = vld [vmem:[#allocation43 + $0x88] sm:$0xff]
        %v3880 = vld [vmem:[#allocation43 + $0x90] sm:$0xff]
        %v3881 = vld [vmem:[#allocation43 + $0x98] sm:$0xff]
        %v3882 = vld [vmem:[#allocation43 + $0xa0] sm:$0xff]
        %v3883 = vld [vmem:[#allocation43 + $0xa8] sm:$0xff]
        %v3884 = vld [vmem:[#allocation43 + $0xb0] sm:$0xff]
        %v3885 = vld [vmem:[#allocation43 + $0xb8] sm:$0xff]
        %v3886 = vld [vmem:[#allocation43 + $0xc0] sm:$0xff]
        %v3887 = vld [vmem:[#allocation43 + $0xc8] sm:$0xff]
        %v3888 = vld [vmem:[#allocation43 + $0xd0] sm:$0xff]
        %v3889 = vld [vmem:[#allocation43 + $0xd8] sm:$0xff]
        %v3890 = vld [vmem:[#allocation43 + $0xe0] sm:$0xff]
        %v3891 = vld [vmem:[#allocation43 + $0xe8] sm:$0xff]
        %v3892 = vld [vmem:[#allocation43 + $0xf0] sm:$0xff]
        %v3893 = vld [vmem:[#allocation43 + $0xf8] sm:$0xff]
        %v3894 = vld [vmem:[#allocation44] sm:$0x1]
        %v3896 = vperm.slane %v3894, 0
        %3898 = vmatpush.msra.mxu0 %v3877
        %3899 = vmatpush.msra.mxu0 %v3876
        %3900 = vmatpush.msra.mxu0 %v3875
        %3901 = vmatpush.msra.mxu0 %v3874
        %3902 = vmatpush.msra.mxu0 %v3873
        %3903 = vmatpush.msra.mxu0 %v3872
        %3904 = vmatpush.msra.mxu0 %v3871
        %3905 = vmatpush.msra.mxu0 %v3870
        %3906 = vmatpush.msra.mxu0 %v3869
        %3907 = vmatpush.msra.mxu0 %v3868
        %3908 = vmatpush.msra.mxu0 %v3867
        %3909 = vmatpush.msra.mxu0 %v3866
        %3910 = vmatpush.msra.mxu0 %v3865
        %3911 = vmatpush.msra.mxu0 %v3864
        %3912 = vmatpush.msra.mxu0 %v3863
        %3913 = vmatpush.msra.mxu0 %v3862
        %3914 = vmatmul.f32.gmra.mxu0 %v3854
        %v3915 = vpop.f32.mrf.mxu0
        %v3916 = vadd.f32 %v3896, %v3915
        %3917 = vmatmul.f32.gmra.mxu0 %v3856
        %v3918 = vpop.f32.mrf.mxu0
        %v3919 = vadd.f32 %v3896, %v3918
        %3920 = vmatmul.f32.gmra.mxu0 %v3858
        %v3921 = vpop.f32.mrf.mxu0
        %v3922 = vadd.f32 %v3896, %v3921
        %3923 = vmatmul.f32.gmra.mxu0 %v3860
        %v3924 = vpop.f32.mrf.mxu0
        %v3925 = vadd.f32 %v3896, %v3924
        %3926 = vdwg.mxu0
        %3927 = vmatpush.msra.mxu0 %v3893
        %3928 = vmatpush.msra.mxu0 %v3892
        %3929 = vmatpush.msra.mxu0 %v3891
        %3930 = vmatpush.msra.mxu0 %v3890
        %3931 = vmatpush.msra.mxu0 %v3889
        %3932 = vmatpush.msra.mxu0 %v3888
        %3933 = vmatpush.msra.mxu0 %v3887
        %3934 = vmatpush.msra.mxu0 %v3886
        %3935 = vmatpush.msra.mxu0 %v3885
        %3936 = vmatpush.msra.mxu0 %v3884
        %3937 = vmatpush.msra.mxu0 %v3883
        %3938 = vmatpush.msra.mxu0 %v3882
        %3939 = vmatpush.msra.mxu0 %v3881
        %3940 = vmatpush.msra.mxu0 %v3880
        %3941 = vmatpush.msra.mxu0 %v3879
        %3942 = vmatpush.msra.mxu0 %v3878
        %3943 = vmatmul.f32.gmra.mxu0 %v3855
        %v3944 = vpop.f32.mrf.mxu0
        %v3945 = vadd.f32 %v3916, %v3944
        %3946 = vmatmul.f32.gmra.mxu0 %v3857
        %v3947 = vpop.f32.mrf.mxu0
        %v3948 = vadd.f32 %v3919, %v3947
        %3949 = vmatmul.f32.gmra.mxu0 %v3859
        %v3950 = vpop.f32.mrf.mxu0
        %v3951 = vadd.f32 %v3922, %v3950
        %3952 = vmatmul.f32.gmra.mxu0 %v3861
        %v3953 = vpop.f32.mrf.mxu0
        %v3954 = vadd.f32 %v3925, %v3953
        %3955 = vdwg.mxu0
        %v3956 = vmax.f32 %v3945, 0.0
        %v3957 = vmax.f32 %v3948, 0.0
        %v3958 = vmax.f32 %v3951, 0.0
        %v3959 = vmax.f32 %v3954, 0.0
        %v3960 = vld [vmem:[#allocation46] sm:$0x1]
        %v3962 = vperm.slane %v3960, 0
        %v3964 = vmul.f32 %v3956, %v3962
        %v3965 = vmul.f32 %v3957, %v3962
        %v3966 = vmul.f32 %v3958, %v3962
        %v3967 = vmul.f32 %v3959, %v3962
        %v3968 = vld [vmem:[#allocation47] sm:$0xff]
        %v3969 = vld [vmem:[#allocation47 + $0x8] sm:$0xff]
        %v3970 = vld [vmem:[#allocation47 + $0x10] sm:$0xff]
        %v3971 = vld [vmem:[#allocation47 + $0x18] sm:$0xff]
        %v3972 = vld [vmem:[#allocation47 + $0x20] sm:$0xff]
        %v3973 = vld [vmem:[#allocation47 + $0x28] sm:$0xff]
        %v3974 = vld [vmem:[#allocation47 + $0x30] sm:$0xff]
        %v3975 = vld [vmem:[#allocation47 + $0x38] sm:$0xff]
        %v3976 = vld [vmem:[#allocation47 + $0x40] sm:$0xff]
        %v3977 = vld [vmem:[#allocation47 + $0x48] sm:$0xff]
        %v3978 = vld [vmem:[#allocation47 + $0x50] sm:$0xff]
        %v3979 = vld [vmem:[#allocation47 + $0x58] sm:$0xff]
        %v3980 = vld [vmem:[#allocation47 + $0x60] sm:$0xff]
        %v3981 = vld [vmem:[#allocation47 + $0x68] sm:$0xff]
        %v3982 = vld [vmem:[#allocation47 + $0x70] sm:$0xff]
        %v3983 = vld [vmem:[#allocation47 + $0x78] sm:$0xff]
        %v3984 = vld [vmem:[#allocation47 + $0x80] sm:$0xff]
        %v3985 = vld [vmem:[#allocation47 + $0x88] sm:$0xff]
        %v3986 = vld [vmem:[#allocation47 + $0x90] sm:$0xff]
        %v3987 = vld [vmem:[#allocation47 + $0x98] sm:$0xff]
        %v3988 = vld [vmem:[#allocation47 + $0xa0] sm:$0xff]
        %v3989 = vld [vmem:[#allocation47 + $0xa8] sm:$0xff]
        %v3990 = vld [vmem:[#allocation47 + $0xb0] sm:$0xff]
        %v3991 = vld [vmem:[#allocation47 + $0xb8] sm:$0xff]
        %v3992 = vld [vmem:[#allocation47 + $0xc0] sm:$0xff]
        %v3993 = vld [vmem:[#allocation47 + $0xc8] sm:$0xff]
        %v3994 = vld [vmem:[#allocation47 + $0xd0] sm:$0xff]
        %v3995 = vld [vmem:[#allocation47 + $0xd8] sm:$0xff]
        %v3996 = vld [vmem:[#allocation47 + $0xe0] sm:$0xff]
        %v3997 = vld [vmem:[#allocation47 + $0xe8] sm:$0xff]
        %v3998 = vld [vmem:[#allocation47 + $0xf0] sm:$0xff]
        %v3999 = vld [vmem:[#allocation47 + $0xf8] sm:$0xff]
        %v4000 = vld [vmem:[#allocation49] sm:$0x1]
        %v4002 = vperm.slane %v4000, 0
        %4004 = vmatpush.msra.mxu0 %v3983
        %4005 = vmatpush.msra.mxu0 %v3982
        %4006 = vmatpush.msra.mxu0 %v3981
        %4007 = vmatpush.msra.mxu0 %v3980
        %4008 = vmatpush.msra.mxu0 %v3979
        %4009 = vmatpush.msra.mxu0 %v3978
        %4010 = vmatpush.msra.mxu0 %v3977
        %4011 = vmatpush.msra.mxu0 %v3976
        %4012 = vmatpush.msra.mxu0 %v3975
        %4013 = vmatpush.msra.mxu0 %v3974
        %4014 = vmatpush.msra.mxu0 %v3973
        %4015 = vmatpush.msra.mxu0 %v3972
        %4016 = vmatpush.msra.mxu0 %v3971
        %4017 = vmatpush.msra.mxu0 %v3970
        %4018 = vmatpush.msra.mxu0 %v3969
        %4019 = vmatpush.msra.mxu0 %v3968
        %4020 = vmatmul.f32.gmra.mxu0 %v3818
        %v4021 = vpop.f32.mrf.mxu0
        %v4022 = vadd.f32 %v4002, %v4021
        %4023 = vmatmul.f32.gmra.mxu0 %v3820
        %v4024 = vpop.f32.mrf.mxu0
        %v4025 = vadd.f32 %v4002, %v4024
        %4026 = vmatmul.f32.gmra.mxu0 %v3822
        %v4027 = vpop.f32.mrf.mxu0
        %v4028 = vadd.f32 %v4002, %v4027
        %4029 = vmatmul.f32.gmra.mxu0 %v3824
        %v4030 = vpop.f32.mrf.mxu0
        %v4031 = vadd.f32 %v4002, %v4030
        %4032 = vdwg.mxu0
        %4033 = vmatpush.msra.mxu0 %v3999
        %4034 = vmatpush.msra.mxu0 %v3998
        %4035 = vmatpush.msra.mxu0 %v3997
        %4036 = vmatpush.msra.mxu0 %v3996
        %4037 = vmatpush.msra.mxu0 %v3995
        %4038 = vmatpush.msra.mxu0 %v3994
        %4039 = vmatpush.msra.mxu0 %v3993
        %4040 = vmatpush.msra.mxu0 %v3992
        %4041 = vmatpush.msra.mxu0 %v3991
        %4042 = vmatpush.msra.mxu0 %v3990
        %4043 = vmatpush.msra.mxu0 %v3989
        %4044 = vmatpush.msra.mxu0 %v3988
        %4045 = vmatpush.msra.mxu0 %v3987
        %4046 = vmatpush.msra.mxu0 %v3986
        %4047 = vmatpush.msra.mxu0 %v3985
        %4048 = vmatpush.msra.mxu0 %v3984
        %4049 = vmatmul.f32.gmra.mxu0 %v3819
        %v4050 = vpop.f32.mrf.mxu0
        %v4051 = vadd.f32 %v4022, %v4050
        %4052 = vmatmul.f32.gmra.mxu0 %v3821
        %v4053 = vpop.f32.mrf.mxu0
        %v4054 = vadd.f32 %v4025, %v4053
        %4055 = vmatmul.f32.gmra.mxu0 %v3823
        %v4056 = vpop.f32.mrf.mxu0
        %v4057 = vadd.f32 %v4028, %v4056
        %4058 = vmatmul.f32.gmra.mxu0 %v3825
        %v4059 = vpop.f32.mrf.mxu0
        %v4060 = vadd.f32 %v4031, %v4059
        %4061 = vdwg.mxu0
        %v4062 = vadd.f32 %v3964, %v4051
        %v4063 = vadd.f32 %v3965, %v4054
        %v4064 = vadd.f32 %v3966, %v4057
        %v4065 = vadd.f32 %v3967, %v4060
        %s4066 = scalar_lea.vmem [#allocation32], 6
        %v4067 = vld [vmem:[%s4066] sm:$0x3]
        %s4068 = scalar_lea.vmem [#allocation34], 6
        %v4069 = vld [vmem:[%s4068] sm:$0x3]
        %s4070 = scalar_lea.vmem [#allocation35], 1536
        %v4071 = vld [vmem:[%s4070] sm:$0xff]
        %v4072 = vld [vmem:[%s4070 + $0x8] sm:$0xff]
        %v4073 = vld [vmem:[%s4070 + $0x10] sm:$0xff]
        %v4074 = vld [vmem:[%s4070 + $0x18] sm:$0xff]
        %v4075 = vld [vmem:[%s4070 + $0x20] sm:$0xff]
        %v4076 = vld [vmem:[%s4070 + $0x28] sm:$0xff]
        %v4077 = vld [vmem:[%s4070 + $0x30] sm:$0xff]
        %v4078 = vld [vmem:[%s4070 + $0x38] sm:$0xff]
        %v4079 = vld [vmem:[%s4070 + $0x40] sm:$0xff]
        %v4080 = vld [vmem:[%s4070 + $0x48] sm:$0xff]
        %v4081 = vld [vmem:[%s4070 + $0x50] sm:$0xff]
        %v4082 = vld [vmem:[%s4070 + $0x58] sm:$0xff]
        %v4083 = vld [vmem:[%s4070 + $0x60] sm:$0xff]
        %v4084 = vld [vmem:[%s4070 + $0x68] sm:$0xff]
        %v4085 = vld [vmem:[%s4070 + $0x70] sm:$0xff]
        %v4086 = vld [vmem:[%s4070 + $0x78] sm:$0xff]
        %v4087 = vld [vmem:[%s4070 + $0x80] sm:$0xff]
        %v4088 = vld [vmem:[%s4070 + $0x88] sm:$0xff]
        %v4089 = vld [vmem:[%s4070 + $0x90] sm:$0xff]
        %v4090 = vld [vmem:[%s4070 + $0x98] sm:$0xff]
        %v4091 = vld [vmem:[%s4070 + $0xa0] sm:$0xff]
        %v4092 = vld [vmem:[%s4070 + $0xa8] sm:$0xff]
        %v4093 = vld [vmem:[%s4070 + $0xb0] sm:$0xff]
        %v4094 = vld [vmem:[%s4070 + $0xb8] sm:$0xff]
        %v4095 = vld [vmem:[%s4070 + $0xc0] sm:$0xff]
        %v4096 = vld [vmem:[%s4070 + $0xc8] sm:$0xff]
        %v4097 = vld [vmem:[%s4070 + $0xd0] sm:$0xff]
        %v4098 = vld [vmem:[%s4070 + $0xd8] sm:$0xff]
        %v4099 = vld [vmem:[%s4070 + $0xe0] sm:$0xff]
        %v4100 = vld [vmem:[%s4070 + $0xe8] sm:$0xff]
        %v4101 = vld [vmem:[%s4070 + $0xf0] sm:$0xff]
        %v4102 = vld [vmem:[%s4070 + $0xf8] sm:$0xff]
        %v4103 = vld [vmem:[%s4070 + $0x100] sm:$0xff]
        %v4104 = vld [vmem:[%s4070 + $0x108] sm:$0xff]
        %v4105 = vld [vmem:[%s4070 + $0x110] sm:$0xff]
        %v4106 = vld [vmem:[%s4070 + $0x118] sm:$0xff]
        %v4107 = vld [vmem:[%s4070 + $0x120] sm:$0xff]
        %v4108 = vld [vmem:[%s4070 + $0x128] sm:$0xff]
        %v4109 = vld [vmem:[%s4070 + $0x130] sm:$0xff]
        %v4110 = vld [vmem:[%s4070 + $0x138] sm:$0xff]
        %v4111 = vld [vmem:[%s4070 + $0x140] sm:$0xff]
        %v4112 = vld [vmem:[%s4070 + $0x148] sm:$0xff]
        %v4113 = vld [vmem:[%s4070 + $0x150] sm:$0xff]
        %v4114 = vld [vmem:[%s4070 + $0x158] sm:$0xff]
        %v4115 = vld [vmem:[%s4070 + $0x160] sm:$0xff]
        %v4116 = vld [vmem:[%s4070 + $0x168] sm:$0xff]
        %v4117 = vld [vmem:[%s4070 + $0x170] sm:$0xff]
        %v4118 = vld [vmem:[%s4070 + $0x178] sm:$0xff]
        %v4119 = vld [vmem:[%s4070 + $0x180] sm:$0xff]
        %v4120 = vld [vmem:[%s4070 + $0x188] sm:$0xff]
        %v4121 = vld [vmem:[%s4070 + $0x190] sm:$0xff]
        %v4122 = vld [vmem:[%s4070 + $0x198] sm:$0xff]
        %v4123 = vld [vmem:[%s4070 + $0x1a0] sm:$0xff]
        %v4124 = vld [vmem:[%s4070 + $0x1a8] sm:$0xff]
        %v4125 = vld [vmem:[%s4070 + $0x1b0] sm:$0xff]
        %v4126 = vld [vmem:[%s4070 + $0x1b8] sm:$0xff]
        %v4127 = vld [vmem:[%s4070 + $0x1c0] sm:$0xff]
        %v4128 = vld [vmem:[%s4070 + $0x1c8] sm:$0xff]
        %v4129 = vld [vmem:[%s4070 + $0x1d0] sm:$0xff]
        %v4130 = vld [vmem:[%s4070 + $0x1d8] sm:$0xff]
        %v4131 = vld [vmem:[%s4070 + $0x1e0] sm:$0xff]
        %v4132 = vld [vmem:[%s4070 + $0x1e8] sm:$0xff]
        %v4133 = vld [vmem:[%s4070 + $0x1f0] sm:$0xff]
        %v4134 = vld [vmem:[%s4070 + $0x1f8] sm:$0xff]
        %s4135 = scalar_lea.vmem [#allocation37], 6
        %v4136 = vld [vmem:[%s4135] sm:$0x3]
        %s4137 = scalar_lea.vmem [#allocation38], 1536
        %v4138 = vld [vmem:[%s4137] sm:$0xff]
        %v4139 = vld [vmem:[%s4137 + $0x8] sm:$0xff]
        %v4140 = vld [vmem:[%s4137 + $0x10] sm:$0xff]
        %v4141 = vld [vmem:[%s4137 + $0x18] sm:$0xff]
        %v4142 = vld [vmem:[%s4137 + $0x20] sm:$0xff]
        %v4143 = vld [vmem:[%s4137 + $0x28] sm:$0xff]
        %v4144 = vld [vmem:[%s4137 + $0x30] sm:$0xff]
        %v4145 = vld [vmem:[%s4137 + $0x38] sm:$0xff]
        %v4146 = vld [vmem:[%s4137 + $0x40] sm:$0xff]
        %v4147 = vld [vmem:[%s4137 + $0x48] sm:$0xff]
        %v4148 = vld [vmem:[%s4137 + $0x50] sm:$0xff]
        %v4149 = vld [vmem:[%s4137 + $0x58] sm:$0xff]
        %v4150 = vld [vmem:[%s4137 + $0x60] sm:$0xff]
        %v4151 = vld [vmem:[%s4137 + $0x68] sm:$0xff]
        %v4152 = vld [vmem:[%s4137 + $0x70] sm:$0xff]
        %v4153 = vld [vmem:[%s4137 + $0x78] sm:$0xff]
        %v4154 = vld [vmem:[%s4137 + $0x80] sm:$0xff]
        %v4155 = vld [vmem:[%s4137 + $0x88] sm:$0xff]
        %v4156 = vld [vmem:[%s4137 + $0x90] sm:$0xff]
        %v4157 = vld [vmem:[%s4137 + $0x98] sm:$0xff]
        %v4158 = vld [vmem:[%s4137 + $0xa0] sm:$0xff]
        %v4159 = vld [vmem:[%s4137 + $0xa8] sm:$0xff]
        %v4160 = vld [vmem:[%s4137 + $0xb0] sm:$0xff]
        %v4161 = vld [vmem:[%s4137 + $0xb8] sm:$0xff]
        %v4162 = vld [vmem:[%s4137 + $0xc0] sm:$0xff]
        %v4163 = vld [vmem:[%s4137 + $0xc8] sm:$0xff]
        %v4164 = vld [vmem:[%s4137 + $0xd0] sm:$0xff]
        %v4165 = vld [vmem:[%s4137 + $0xd8] sm:$0xff]
        %v4166 = vld [vmem:[%s4137 + $0xe0] sm:$0xff]
        %v4167 = vld [vmem:[%s4137 + $0xe8] sm:$0xff]
        %v4168 = vld [vmem:[%s4137 + $0xf0] sm:$0xff]
        %v4169 = vld [vmem:[%s4137 + $0xf8] sm:$0xff]
        %v4170 = vld [vmem:[%s4137 + $0x100] sm:$0xff]
        %v4171 = vld [vmem:[%s4137 + $0x108] sm:$0xff]
        %v4172 = vld [vmem:[%s4137 + $0x110] sm:$0xff]
        %v4173 = vld [vmem:[%s4137 + $0x118] sm:$0xff]
        %v4174 = vld [vmem:[%s4137 + $0x120] sm:$0xff]
        %v4175 = vld [vmem:[%s4137 + $0x128] sm:$0xff]
        %v4176 = vld [vmem:[%s4137 + $0x130] sm:$0xff]
        %v4177 = vld [vmem:[%s4137 + $0x138] sm:$0xff]
        %v4178 = vld [vmem:[%s4137 + $0x140] sm:$0xff]
        %v4179 = vld [vmem:[%s4137 + $0x148] sm:$0xff]
        %v4180 = vld [vmem:[%s4137 + $0x150] sm:$0xff]
        %v4181 = vld [vmem:[%s4137 + $0x158] sm:$0xff]
        %v4182 = vld [vmem:[%s4137 + $0x160] sm:$0xff]
        %v4183 = vld [vmem:[%s4137 + $0x168] sm:$0xff]
        %v4184 = vld [vmem:[%s4137 + $0x170] sm:$0xff]
        %v4185 = vld [vmem:[%s4137 + $0x178] sm:$0xff]
        %v4186 = vld [vmem:[%s4137 + $0x180] sm:$0xff]
        %v4187 = vld [vmem:[%s4137 + $0x188] sm:$0xff]
        %v4188 = vld [vmem:[%s4137 + $0x190] sm:$0xff]
        %v4189 = vld [vmem:[%s4137 + $0x198] sm:$0xff]
        %v4190 = vld [vmem:[%s4137 + $0x1a0] sm:$0xff]
        %v4191 = vld [vmem:[%s4137 + $0x1a8] sm:$0xff]
        %v4192 = vld [vmem:[%s4137 + $0x1b0] sm:$0xff]
        %v4193 = vld [vmem:[%s4137 + $0x1b8] sm:$0xff]
        %v4194 = vld [vmem:[%s4137 + $0x1c0] sm:$0xff]
        %v4195 = vld [vmem:[%s4137 + $0x1c8] sm:$0xff]
        %v4196 = vld [vmem:[%s4137 + $0x1d0] sm:$0xff]
        %v4197 = vld [vmem:[%s4137 + $0x1d8] sm:$0xff]
        %v4198 = vld [vmem:[%s4137 + $0x1e0] sm:$0xff]
        %v4199 = vld [vmem:[%s4137 + $0x1e8] sm:$0xff]
        %v4200 = vld [vmem:[%s4137 + $0x1f0] sm:$0xff]
        %v4201 = vld [vmem:[%s4137 + $0x1f8] sm:$0xff]
        %v4203 = vperm.slane %v4067, 0
        %v4204 = vperm.slane %v4067, 1
        %v4207 = vmul.f32 %v2558, %v4203
        %v4208 = vmul.f32 %v2558, %v4204
        %v4209 = vmul.f32 %v2559, %v4203
        %v4210 = vmul.f32 %v2559, %v4204
        %v4211 = vmul.f32 %v2560, %v4203
        %v4212 = vmul.f32 %v2560, %v4204
        %v4213 = vmul.f32 %v2561, %v4203
        %v4214 = vmul.f32 %v2561, %v4204
        %v4216 = vperm.slane %v4069, 0
        %v4217 = vperm.slane %v4069, 1
        %v4220 = vadd.f32 %v4207, %v4216
        %v4221 = vadd.f32 %v4208, %v4217
        %v4222 = vadd.f32 %v4209, %v4216
        %v4223 = vadd.f32 %v4210, %v4217
        %v4224 = vadd.f32 %v4211, %v4216
        %v4225 = vadd.f32 %v4212, %v4217
        %v4226 = vadd.f32 %v4213, %v4216
        %v4227 = vadd.f32 %v4214, %v4217
        %v4228 = vmax.f32 %v4220, 0.0
        %v4229 = vmax.f32 %v4221, 0.0
        %v4230 = vmax.f32 %v4222, 0.0
        %v4231 = vmax.f32 %v4223, 0.0
        %v4232 = vmax.f32 %v4224, 0.0
        %v4233 = vmax.f32 %v4225, 0.0
        %v4234 = vmax.f32 %v4226, 0.0
        %v4235 = vmax.f32 %v4227, 0.0
        %v4237 = vperm.slane %v4136, 0
        %v4238 = vperm.slane %v4136, 1
        %4241 = vmatpush.msra.mxu0 %v4101
        %4242 = vmatpush.msra.mxu0 %v4099
        %4243 = vmatpush.msra.mxu0 %v4097
        %4244 = vmatpush.msra.mxu0 %v4095
        %4245 = vmatpush.msra.mxu0 %v4093
        %4246 = vmatpush.msra.mxu0 %v4091
        %4247 = vmatpush.msra.mxu0 %v4089
        %4248 = vmatpush.msra.mxu0 %v4087
        %4249 = vmatpush.msra.mxu0 %v4085
        %4250 = vmatpush.msra.mxu0 %v4083
        %4251 = vmatpush.msra.mxu0 %v4081
        %4252 = vmatpush.msra.mxu0 %v4079
        %4253 = vmatpush.msra.mxu0 %v4077
        %4254 = vmatpush.msra.mxu0 %v4075
        %4255 = vmatpush.msra.mxu0 %v4073
        %4256 = vmatpush.msra.mxu0 %v4071
        %4257 = vmatmul.f32.gmra.mxu0 %v4228
        %v4258 = vpop.f32.mrf.mxu0
        %v4259 = vadd.f32 %v4237, %v4258
        %4260 = vmatmul.f32.gmra.mxu0 %v4230
        %v4261 = vpop.f32.mrf.mxu0
        %v4262 = vadd.f32 %v4237, %v4261
        %4263 = vmatmul.f32.gmra.mxu0 %v4232
        %v4264 = vpop.f32.mrf.mxu0
        %v4265 = vadd.f32 %v4237, %v4264
        %4266 = vmatmul.f32.gmra.mxu0 %v4234
        %v4267 = vpop.f32.mrf.mxu0
        %v4268 = vadd.f32 %v4237, %v4267
        %4269 = vdwg.mxu0
        %4270 = vmatpush.msra.mxu0 %v4133
        %4271 = vmatpush.msra.mxu0 %v4131
        %4272 = vmatpush.msra.mxu0 %v4129
        %4273 = vmatpush.msra.mxu0 %v4127
        %4274 = vmatpush.msra.mxu0 %v4125
        %4275 = vmatpush.msra.mxu0 %v4123
        %4276 = vmatpush.msra.mxu0 %v4121
        %4277 = vmatpush.msra.mxu0 %v4119
        %4278 = vmatpush.msra.mxu0 %v4117
        %4279 = vmatpush.msra.mxu0 %v4115
        %4280 = vmatpush.msra.mxu0 %v4113
        %4281 = vmatpush.msra.mxu0 %v4111
        %4282 = vmatpush.msra.mxu0 %v4109
        %4283 = vmatpush.msra.mxu0 %v4107
        %4284 = vmatpush.msra.mxu0 %v4105
        %4285 = vmatpush.msra.mxu0 %v4103
        %4286 = vmatmul.f32.gmra.mxu0 %v4229
        %v4287 = vpop.f32.mrf.mxu0
        %v4288 = vadd.f32 %v4259, %v4287
        %4289 = vmatmul.f32.gmra.mxu0 %v4231
        %v4290 = vpop.f32.mrf.mxu0
        %v4291 = vadd.f32 %v4262, %v4290
        %4292 = vmatmul.f32.gmra.mxu0 %v4233
        %v4293 = vpop.f32.mrf.mxu0
        %v4294 = vadd.f32 %v4265, %v4293
        %4295 = vmatmul.f32.gmra.mxu0 %v4235
        %v4296 = vpop.f32.mrf.mxu0
        %v4297 = vadd.f32 %v4268, %v4296
        %4298 = vdwg.mxu0
        %4299 = vmatpush.msra.mxu0 %v4102
        %4300 = vmatpush.msra.mxu0 %v4100
        %4301 = vmatpush.msra.mxu0 %v4098
        %4302 = vmatpush.msra.mxu0 %v4096
        %4303 = vmatpush.msra.mxu0 %v4094
        %4304 = vmatpush.msra.mxu0 %v4092
        %4305 = vmatpush.msra.mxu0 %v4090
        %4306 = vmatpush.msra.mxu0 %v4088
        %4307 = vmatpush.msra.mxu0 %v4086
        %4308 = vmatpush.msra.mxu0 %v4084
        %4309 = vmatpush.msra.mxu0 %v4082
        %4310 = vmatpush.msra.mxu0 %v4080
        %4311 = vmatpush.msra.mxu0 %v4078
        %4312 = vmatpush.msra.mxu0 %v4076
        %4313 = vmatpush.msra.mxu0 %v4074
        %4314 = vmatpush.msra.mxu0 %v4072
        %4315 = vmatmul.f32.gmra.mxu0 %v4228
        %v4316 = vpop.f32.mrf.mxu0
        %v4317 = vadd.f32 %v4238, %v4316
        %4318 = vmatmul.f32.gmra.mxu0 %v4230
        %v4319 = vpop.f32.mrf.mxu0
        %v4320 = vadd.f32 %v4238, %v4319
        %4321 = vmatmul.f32.gmra.mxu0 %v4232
        %v4322 = vpop.f32.mrf.mxu0
        %v4323 = vadd.f32 %v4238, %v4322
        %4324 = vmatmul.f32.gmra.mxu0 %v4234
        %v4325 = vpop.f32.mrf.mxu0
        %v4326 = vadd.f32 %v4238, %v4325
        %4327 = vdwg.mxu0
        %4328 = vmatpush.msra.mxu0 %v4134
        %4329 = vmatpush.msra.mxu0 %v4132
        %4330 = vmatpush.msra.mxu0 %v4130
        %4331 = vmatpush.msra.mxu0 %v4128
        %4332 = vmatpush.msra.mxu0 %v4126
        %4333 = vmatpush.msra.mxu0 %v4124
        %4334 = vmatpush.msra.mxu0 %v4122
        %4335 = vmatpush.msra.mxu0 %v4120
        %4336 = vmatpush.msra.mxu0 %v4118
        %4337 = vmatpush.msra.mxu0 %v4116
        %4338 = vmatpush.msra.mxu0 %v4114
        %4339 = vmatpush.msra.mxu0 %v4112
        %4340 = vmatpush.msra.mxu0 %v4110
        %4341 = vmatpush.msra.mxu0 %v4108
        %4342 = vmatpush.msra.mxu0 %v4106
        %4343 = vmatpush.msra.mxu0 %v4104
        %4344 = vmatmul.f32.gmra.mxu0 %v4229
        %v4345 = vpop.f32.mrf.mxu0
        %v4346 = vadd.f32 %v4317, %v4345
        %4347 = vmatmul.f32.gmra.mxu0 %v4231
        %v4348 = vpop.f32.mrf.mxu0
        %v4349 = vadd.f32 %v4320, %v4348
        %4350 = vmatmul.f32.gmra.mxu0 %v4233
        %v4351 = vpop.f32.mrf.mxu0
        %v4352 = vadd.f32 %v4323, %v4351
        %4353 = vmatmul.f32.gmra.mxu0 %v4235
        %v4354 = vpop.f32.mrf.mxu0
        %v4355 = vadd.f32 %v4326, %v4354
        %4356 = vdwg.mxu0
        %v4357 = vmax.f32 %v4288, 0.0
        %v4358 = vmax.f32 %v4346, 0.0
        %v4359 = vmax.f32 %v4291, 0.0
        %v4360 = vmax.f32 %v4349, 0.0
        %v4361 = vmax.f32 %v4294, 0.0
        %v4362 = vmax.f32 %v4352, 0.0
        %v4363 = vmax.f32 %v4297, 0.0
        %v4364 = vmax.f32 %v4355, 0.0
        %4365 = vmatpush.msra.mxu0 %v4168
        %4366 = vmatpush.msra.mxu0 %v4166
        %4367 = vmatpush.msra.mxu0 %v4164
        %4368 = vmatpush.msra.mxu0 %v4162
        %4369 = vmatpush.msra.mxu0 %v4160
        %4370 = vmatpush.msra.mxu0 %v4158
        %4371 = vmatpush.msra.mxu0 %v4156
        %4372 = vmatpush.msra.mxu0 %v4154
        %4373 = vmatpush.msra.mxu0 %v4152
        %4374 = vmatpush.msra.mxu0 %v4150
        %4375 = vmatpush.msra.mxu0 %v4148
        %4376 = vmatpush.msra.mxu0 %v4146
        %4377 = vmatpush.msra.mxu0 %v4144
        %4378 = vmatpush.msra.mxu0 %v4142
        %4379 = vmatpush.msra.mxu0 %v4140
        %4380 = vmatpush.msra.mxu0 %v4138
        %4381 = vmatmul.f32.gmra.mxu0 %v4357
        %v4382 = vpop.f32.mrf.mxu0
        %v4383 = vadd.f32 %v2558, %v4382
        %4384 = vmatmul.f32.gmra.mxu0 %v4359
        %v4385 = vpop.f32.mrf.mxu0
        %v4386 = vadd.f32 %v2559, %v4385
        %4387 = vmatmul.f32.gmra.mxu0 %v4361
        %v4388 = vpop.f32.mrf.mxu0
        %v4389 = vadd.f32 %v2560, %v4388
        %4390 = vmatmul.f32.gmra.mxu0 %v4363
        %v4391 = vpop.f32.mrf.mxu0
        %v4392 = vadd.f32 %v2561, %v4391
        %4393 = vdwg.mxu0
        %4394 = vmatpush.msra.mxu0 %v4200
        %4395 = vmatpush.msra.mxu0 %v4198
        %4396 = vmatpush.msra.mxu0 %v4196
        %4397 = vmatpush.msra.mxu0 %v4194
        %4398 = vmatpush.msra.mxu0 %v4192
        %4399 = vmatpush.msra.mxu0 %v4190
        %4400 = vmatpush.msra.mxu0 %v4188
        %4401 = vmatpush.msra.mxu0 %v4186
        %4402 = vmatpush.msra.mxu0 %v4184
        %4403 = vmatpush.msra.mxu0 %v4182
        %4404 = vmatpush.msra.mxu0 %v4180
        %4405 = vmatpush.msra.mxu0 %v4178
        %4406 = vmatpush.msra.mxu0 %v4176
        %4407 = vmatpush.msra.mxu0 %v4174
        %4408 = vmatpush.msra.mxu0 %v4172
        %4409 = vmatpush.msra.mxu0 %v4170
        %4410 = vmatmul.f32.gmra.mxu0 %v4358
        %v4411 = vpop.f32.mrf.mxu0
        %v4412 = vadd.f32 %v4383, %v4411
        %4413 = vmatmul.f32.gmra.mxu0 %v4360
        %v4414 = vpop.f32.mrf.mxu0
        %v4415 = vadd.f32 %v4386, %v4414
        %4416 = vmatmul.f32.gmra.mxu0 %v4362
        %v4417 = vpop.f32.mrf.mxu0
        %v4418 = vadd.f32 %v4389, %v4417
        %4419 = vmatmul.f32.gmra.mxu0 %v4364
        %v4420 = vpop.f32.mrf.mxu0
        %v4421 = vadd.f32 %v4392, %v4420
        %4422 = vdwg.mxu0
        %4423 = vmatpush.msra.mxu0 %v4169
        %4424 = vmatpush.msra.mxu0 %v4167
        %4425 = vmatpush.msra.mxu0 %v4165
        %4426 = vmatpush.msra.mxu0 %v4163
        %4427 = vmatpush.msra.mxu0 %v4161
        %4428 = vmatpush.msra.mxu0 %v4159
        %4429 = vmatpush.msra.mxu0 %v4157
        %4430 = vmatpush.msra.mxu0 %v4155
        %4431 = vmatpush.msra.mxu0 %v4153
        %4432 = vmatpush.msra.mxu0 %v4151
        %4433 = vmatpush.msra.mxu0 %v4149
        %4434 = vmatpush.msra.mxu0 %v4147
        %4435 = vmatpush.msra.mxu0 %v4145
        %4436 = vmatpush.msra.mxu0 %v4143
        %4437 = vmatpush.msra.mxu0 %v4141
        %4438 = vmatpush.msra.mxu0 %v4139
        %4439 = vmatmul.f32.gmra.mxu0 %v4357
        %v4440 = vpop.f32.mrf.mxu0
        %v4441 = vadd.f32 %v2558, %v4440
        %4442 = vmatmul.f32.gmra.mxu0 %v4359
        %v4443 = vpop.f32.mrf.mxu0
        %v4444 = vadd.f32 %v2559, %v4443
        %4445 = vmatmul.f32.gmra.mxu0 %v4361
        %v4446 = vpop.f32.mrf.mxu0
        %v4447 = vadd.f32 %v2560, %v4446
        %4448 = vmatmul.f32.gmra.mxu0 %v4363
        %v4449 = vpop.f32.mrf.mxu0
        %v4450 = vadd.f32 %v2561, %v4449
        %4451 = vdwg.mxu0
        %4452 = vmatpush.msra.mxu0 %v4201
        %4453 = vmatpush.msra.mxu0 %v4199
        %4454 = vmatpush.msra.mxu0 %v4197
        %4455 = vmatpush.msra.mxu0 %v4195
        %4456 = vmatpush.msra.mxu0 %v4193
        %4457 = vmatpush.msra.mxu0 %v4191
        %4458 = vmatpush.msra.mxu0 %v4189
        %4459 = vmatpush.msra.mxu0 %v4187
        %4460 = vmatpush.msra.mxu0 %v4185
        %4461 = vmatpush.msra.mxu0 %v4183
        %4462 = vmatpush.msra.mxu0 %v4181
        %4463 = vmatpush.msra.mxu0 %v4179
        %4464 = vmatpush.msra.mxu0 %v4177
        %4465 = vmatpush.msra.mxu0 %v4175
        %4466 = vmatpush.msra.mxu0 %v4173
        %4467 = vmatpush.msra.mxu0 %v4171
        %4468 = vmatmul.f32.gmra.mxu0 %v4358
        %v4469 = vpop.f32.mrf.mxu0
        %v4470 = vadd.f32 %v4441, %v4469
        %4471 = vmatmul.f32.gmra.mxu0 %v4360
        %v4472 = vpop.f32.mrf.mxu0
        %v4473 = vadd.f32 %v4444, %v4472
        %4474 = vmatmul.f32.gmra.mxu0 %v4362
        %v4475 = vpop.f32.mrf.mxu0
        %v4476 = vadd.f32 %v4447, %v4475
        %4477 = vmatmul.f32.gmra.mxu0 %v4364
        %v4478 = vpop.f32.mrf.mxu0
        %v4479 = vadd.f32 %v4450, %v4478
        %4480 = vdwg.mxu0
        %v4481 = vmax.f32 %v4412, 0.0
        %v4482 = vmax.f32 %v4470, 0.0
        %v4483 = vmax.f32 %v4415, 0.0
        %v4484 = vmax.f32 %v4473, 0.0
        %v4485 = vmax.f32 %v4418, 0.0
        %v4486 = vmax.f32 %v4476, 0.0
        %v4487 = vmax.f32 %v4421, 0.0
        %v4488 = vmax.f32 %v4479, 0.0
        %s4489 = scalar_lea.vmem [#allocation32], 8
        %v4490 = vld [vmem:[%s4489] sm:$0x3]
        %s4491 = scalar_lea.vmem [#allocation34], 8
        %v4492 = vld [vmem:[%s4491] sm:$0x3]
        %s4493 = scalar_lea.vmem [#allocation35], 2048
        %v4494 = vld [vmem:[%s4493] sm:$0xff]
        %v4495 = vld [vmem:[%s4493 + $0x8] sm:$0xff]
        %v4496 = vld [vmem:[%s4493 + $0x10] sm:$0xff]
        %v4497 = vld [vmem:[%s4493 + $0x18] sm:$0xff]
        %v4498 = vld [vmem:[%s4493 + $0x20] sm:$0xff]
        %v4499 = vld [vmem:[%s4493 + $0x28] sm:$0xff]
        %v4500 = vld [vmem:[%s4493 + $0x30] sm:$0xff]
        %v4501 = vld [vmem:[%s4493 + $0x38] sm:$0xff]
        %v4502 = vld [vmem:[%s4493 + $0x40] sm:$0xff]
        %v4503 = vld [vmem:[%s4493 + $0x48] sm:$0xff]
        %v4504 = vld [vmem:[%s4493 + $0x50] sm:$0xff]
        %v4505 = vld [vmem:[%s4493 + $0x58] sm:$0xff]
        %v4506 = vld [vmem:[%s4493 + $0x60] sm:$0xff]
        %v4507 = vld [vmem:[%s4493 + $0x68] sm:$0xff]
        %v4508 = vld [vmem:[%s4493 + $0x70] sm:$0xff]
        %v4509 = vld [vmem:[%s4493 + $0x78] sm:$0xff]
        %v4510 = vld [vmem:[%s4493 + $0x80] sm:$0xff]
        %v4511 = vld [vmem:[%s4493 + $0x88] sm:$0xff]
        %v4512 = vld [vmem:[%s4493 + $0x90] sm:$0xff]
        %v4513 = vld [vmem:[%s4493 + $0x98] sm:$0xff]
        %v4514 = vld [vmem:[%s4493 + $0xa0] sm:$0xff]
        %v4515 = vld [vmem:[%s4493 + $0xa8] sm:$0xff]
        %v4516 = vld [vmem:[%s4493 + $0xb0] sm:$0xff]
        %v4517 = vld [vmem:[%s4493 + $0xb8] sm:$0xff]
        %v4518 = vld [vmem:[%s4493 + $0xc0] sm:$0xff]
        %v4519 = vld [vmem:[%s4493 + $0xc8] sm:$0xff]
        %v4520 = vld [vmem:[%s4493 + $0xd0] sm:$0xff]
        %v4521 = vld [vmem:[%s4493 + $0xd8] sm:$0xff]
        %v4522 = vld [vmem:[%s4493 + $0xe0] sm:$0xff]
        %v4523 = vld [vmem:[%s4493 + $0xe8] sm:$0xff]
        %v4524 = vld [vmem:[%s4493 + $0xf0] sm:$0xff]
        %v4525 = vld [vmem:[%s4493 + $0xf8] sm:$0xff]
        %v4526 = vld [vmem:[%s4493 + $0x100] sm:$0xff]
        %v4527 = vld [vmem:[%s4493 + $0x108] sm:$0xff]
        %v4528 = vld [vmem:[%s4493 + $0x110] sm:$0xff]
        %v4529 = vld [vmem:[%s4493 + $0x118] sm:$0xff]
        %v4530 = vld [vmem:[%s4493 + $0x120] sm:$0xff]
        %v4531 = vld [vmem:[%s4493 + $0x128] sm:$0xff]
        %v4532 = vld [vmem:[%s4493 + $0x130] sm:$0xff]
        %v4533 = vld [vmem:[%s4493 + $0x138] sm:$0xff]
        %v4534 = vld [vmem:[%s4493 + $0x140] sm:$0xff]
        %v4535 = vld [vmem:[%s4493 + $0x148] sm:$0xff]
        %v4536 = vld [vmem:[%s4493 + $0x150] sm:$0xff]
        %v4537 = vld [vmem:[%s4493 + $0x158] sm:$0xff]
        %v4538 = vld [vmem:[%s4493 + $0x160] sm:$0xff]
        %v4539 = vld [vmem:[%s4493 + $0x168] sm:$0xff]
        %v4540 = vld [vmem:[%s4493 + $0x170] sm:$0xff]
        %v4541 = vld [vmem:[%s4493 + $0x178] sm:$0xff]
        %v4542 = vld [vmem:[%s4493 + $0x180] sm:$0xff]
        %v4543 = vld [vmem:[%s4493 + $0x188] sm:$0xff]
        %v4544 = vld [vmem:[%s4493 + $0x190] sm:$0xff]
        %v4545 = vld [vmem:[%s4493 + $0x198] sm:$0xff]
        %v4546 = vld [vmem:[%s4493 + $0x1a0] sm:$0xff]
        %v4547 = vld [vmem:[%s4493 + $0x1a8] sm:$0xff]
        %v4548 = vld [vmem:[%s4493 + $0x1b0] sm:$0xff]
        %v4549 = vld [vmem:[%s4493 + $0x1b8] sm:$0xff]
        %v4550 = vld [vmem:[%s4493 + $0x1c0] sm:$0xff]
        %v4551 = vld [vmem:[%s4493 + $0x1c8] sm:$0xff]
        %v4552 = vld [vmem:[%s4493 + $0x1d0] sm:$0xff]
        %v4553 = vld [vmem:[%s4493 + $0x1d8] sm:$0xff]
        %v4554 = vld [vmem:[%s4493 + $0x1e0] sm:$0xff]
        %v4555 = vld [vmem:[%s4493 + $0x1e8] sm:$0xff]
        %v4556 = vld [vmem:[%s4493 + $0x1f0] sm:$0xff]
        %v4557 = vld [vmem:[%s4493 + $0x1f8] sm:$0xff]
        %s4558 = scalar_lea.vmem [#allocation37], 8
        %v4559 = vld [vmem:[%s4558] sm:$0x3]
        %s4560 = scalar_lea.vmem [#allocation38], 2048
        %v4561 = vld [vmem:[%s4560] sm:$0xff]
        %v4562 = vld [vmem:[%s4560 + $0x8] sm:$0xff]
        %v4563 = vld [vmem:[%s4560 + $0x10] sm:$0xff]
        %v4564 = vld [vmem:[%s4560 + $0x18] sm:$0xff]
        %v4565 = vld [vmem:[%s4560 + $0x20] sm:$0xff]
        %v4566 = vld [vmem:[%s4560 + $0x28] sm:$0xff]
        %v4567 = vld [vmem:[%s4560 + $0x30] sm:$0xff]
        %v4568 = vld [vmem:[%s4560 + $0x38] sm:$0xff]
        %v4569 = vld [vmem:[%s4560 + $0x40] sm:$0xff]
        %v4570 = vld [vmem:[%s4560 + $0x48] sm:$0xff]
        %v4571 = vld [vmem:[%s4560 + $0x50] sm:$0xff]
        %v4572 = vld [vmem:[%s4560 + $0x58] sm:$0xff]
        %v4573 = vld [vmem:[%s4560 + $0x60] sm:$0xff]
        %v4574 = vld [vmem:[%s4560 + $0x68] sm:$0xff]
        %v4575 = vld [vmem:[%s4560 + $0x70] sm:$0xff]
        %v4576 = vld [vmem:[%s4560 + $0x78] sm:$0xff]
        %v4577 = vld [vmem:[%s4560 + $0x80] sm:$0xff]
        %v4578 = vld [vmem:[%s4560 + $0x88] sm:$0xff]
        %v4579 = vld [vmem:[%s4560 + $0x90] sm:$0xff]
        %v4580 = vld [vmem:[%s4560 + $0x98] sm:$0xff]
        %v4581 = vld [vmem:[%s4560 + $0xa0] sm:$0xff]
        %v4582 = vld [vmem:[%s4560 + $0xa8] sm:$0xff]
        %v4583 = vld [vmem:[%s4560 + $0xb0] sm:$0xff]
        %v4584 = vld [vmem:[%s4560 + $0xb8] sm:$0xff]
        %v4585 = vld [vmem:[%s4560 + $0xc0] sm:$0xff]
        %v4586 = vld [vmem:[%s4560 + $0xc8] sm:$0xff]
        %v4587 = vld [vmem:[%s4560 + $0xd0] sm:$0xff]
        %v4588 = vld [vmem:[%s4560 + $0xd8] sm:$0xff]
        %v4589 = vld [vmem:[%s4560 + $0xe0] sm:$0xff]
        %v4590 = vld [vmem:[%s4560 + $0xe8] sm:$0xff]
        %v4591 = vld [vmem:[%s4560 + $0xf0] sm:$0xff]
        %v4592 = vld [vmem:[%s4560 + $0xf8] sm:$0xff]
        %v4593 = vld [vmem:[%s4560 + $0x100] sm:$0xff]
        %v4594 = vld [vmem:[%s4560 + $0x108] sm:$0xff]
        %v4595 = vld [vmem:[%s4560 + $0x110] sm:$0xff]
        %v4596 = vld [vmem:[%s4560 + $0x118] sm:$0xff]
        %v4597 = vld [vmem:[%s4560 + $0x120] sm:$0xff]
        %v4598 = vld [vmem:[%s4560 + $0x128] sm:$0xff]
        %v4599 = vld [vmem:[%s4560 + $0x130] sm:$0xff]
        %v4600 = vld [vmem:[%s4560 + $0x138] sm:$0xff]
        %v4601 = vld [vmem:[%s4560 + $0x140] sm:$0xff]
        %v4602 = vld [vmem:[%s4560 + $0x148] sm:$0xff]
        %v4603 = vld [vmem:[%s4560 + $0x150] sm:$0xff]
        %v4604 = vld [vmem:[%s4560 + $0x158] sm:$0xff]
        %v4605 = vld [vmem:[%s4560 + $0x160] sm:$0xff]
        %v4606 = vld [vmem:[%s4560 + $0x168] sm:$0xff]
        %v4607 = vld [vmem:[%s4560 + $0x170] sm:$0xff]
        %v4608 = vld [vmem:[%s4560 + $0x178] sm:$0xff]
        %v4609 = vld [vmem:[%s4560 + $0x180] sm:$0xff]
        %v4610 = vld [vmem:[%s4560 + $0x188] sm:$0xff]
        %v4611 = vld [vmem:[%s4560 + $0x190] sm:$0xff]
        %v4612 = vld [vmem:[%s4560 + $0x198] sm:$0xff]
        %v4613 = vld [vmem:[%s4560 + $0x1a0] sm:$0xff]
        %v4614 = vld [vmem:[%s4560 + $0x1a8] sm:$0xff]
        %v4615 = vld [vmem:[%s4560 + $0x1b0] sm:$0xff]
        %v4616 = vld [vmem:[%s4560 + $0x1b8] sm:$0xff]
        %v4617 = vld [vmem:[%s4560 + $0x1c0] sm:$0xff]
        %v4618 = vld [vmem:[%s4560 + $0x1c8] sm:$0xff]
        %v4619 = vld [vmem:[%s4560 + $0x1d0] sm:$0xff]
        %v4620 = vld [vmem:[%s4560 + $0x1d8] sm:$0xff]
        %v4621 = vld [vmem:[%s4560 + $0x1e0] sm:$0xff]
        %v4622 = vld [vmem:[%s4560 + $0x1e8] sm:$0xff]
        %v4623 = vld [vmem:[%s4560 + $0x1f0] sm:$0xff]
        %v4624 = vld [vmem:[%s4560 + $0x1f8] sm:$0xff]
        %v4626 = vperm.slane %v4490, 0
        %v4627 = vperm.slane %v4490, 1
        %v4630 = vmul.f32 %v4481, %v4626
        %v4631 = vmul.f32 %v4482, %v4627
        %v4632 = vmul.f32 %v4483, %v4626
        %v4633 = vmul.f32 %v4484, %v4627
        %v4634 = vmul.f32 %v4485, %v4626
        %v4635 = vmul.f32 %v4486, %v4627
        %v4636 = vmul.f32 %v4487, %v4626
        %v4637 = vmul.f32 %v4488, %v4627
        %v4639 = vperm.slane %v4492, 0
        %v4640 = vperm.slane %v4492, 1
        %v4643 = vadd.f32 %v4630, %v4639
        %v4644 = vadd.f32 %v4631, %v4640
        %v4645 = vadd.f32 %v4632, %v4639
        %v4646 = vadd.f32 %v4633, %v4640
        %v4647 = vadd.f32 %v4634, %v4639
        %v4648 = vadd.f32 %v4635, %v4640
        %v4649 = vadd.f32 %v4636, %v4639
        %v4650 = vadd.f32 %v4637, %v4640
        %v4651 = vmax.f32 %v4643, 0.0
        %v4652 = vmax.f32 %v4644, 0.0
        %v4653 = vmax.f32 %v4645, 0.0
        %v4654 = vmax.f32 %v4646, 0.0
        %v4655 = vmax.f32 %v4647, 0.0
        %v4656 = vmax.f32 %v4648, 0.0
        %v4657 = vmax.f32 %v4649, 0.0
        %v4658 = vmax.f32 %v4650, 0.0
        %v4660 = vperm.slane %v4559, 0
        %v4661 = vperm.slane %v4559, 1
        %4664 = vmatpush.msra.mxu0 %v4524
        %4665 = vmatpush.msra.mxu0 %v4522
        %4666 = vmatpush.msra.mxu0 %v4520
        %4667 = vmatpush.msra.mxu0 %v4518
        %4668 = vmatpush.msra.mxu0 %v4516
        %4669 = vmatpush.msra.mxu0 %v4514
        %4670 = vmatpush.msra.mxu0 %v4512
        %4671 = vmatpush.msra.mxu0 %v4510
        %4672 = vmatpush.msra.mxu0 %v4508
        %4673 = vmatpush.msra.mxu0 %v4506
        %4674 = vmatpush.msra.mxu0 %v4504
        %4675 = vmatpush.msra.mxu0 %v4502
        %4676 = vmatpush.msra.mxu0 %v4500
        %4677 = vmatpush.msra.mxu0 %v4498
        %4678 = vmatpush.msra.mxu0 %v4496
        %4679 = vmatpush.msra.mxu0 %v4494
        %4680 = vmatmul.f32.gmra.mxu0 %v4651
        %v4681 = vpop.f32.mrf.mxu0
        %v4682 = vadd.f32 %v4660, %v4681
        %4683 = vmatmul.f32.gmra.mxu0 %v4653
        %v4684 = vpop.f32.mrf.mxu0
        %v4685 = vadd.f32 %v4660, %v4684
        %4686 = vmatmul.f32.gmra.mxu0 %v4655
        %v4687 = vpop.f32.mrf.mxu0
        %v4688 = vadd.f32 %v4660, %v4687
        %4689 = vmatmul.f32.gmra.mxu0 %v4657
        %v4690 = vpop.f32.mrf.mxu0
        %v4691 = vadd.f32 %v4660, %v4690
        %4692 = vdwg.mxu0
        %4693 = vmatpush.msra.mxu0 %v4556
        %4694 = vmatpush.msra.mxu0 %v4554
        %4695 = vmatpush.msra.mxu0 %v4552
        %4696 = vmatpush.msra.mxu0 %v4550
        %4697 = vmatpush.msra.mxu0 %v4548
        %4698 = vmatpush.msra.mxu0 %v4546
        %4699 = vmatpush.msra.mxu0 %v4544
        %4700 = vmatpush.msra.mxu0 %v4542
        %4701 = vmatpush.msra.mxu0 %v4540
        %4702 = vmatpush.msra.mxu0 %v4538
        %4703 = vmatpush.msra.mxu0 %v4536
        %4704 = vmatpush.msra.mxu0 %v4534
        %4705 = vmatpush.msra.mxu0 %v4532
        %4706 = vmatpush.msra.mxu0 %v4530
        %4707 = vmatpush.msra.mxu0 %v4528
        %4708 = vmatpush.msra.mxu0 %v4526
        %4709 = vmatmul.f32.gmra.mxu0 %v4652
        %v4710 = vpop.f32.mrf.mxu0
        %v4711 = vadd.f32 %v4682, %v4710
        %4712 = vmatmul.f32.gmra.mxu0 %v4654
        %v4713 = vpop.f32.mrf.mxu0
        %v4714 = vadd.f32 %v4685, %v4713
        %4715 = vmatmul.f32.gmra.mxu0 %v4656
        %v4716 = vpop.f32.mrf.mxu0
        %v4717 = vadd.f32 %v4688, %v4716
        %4718 = vmatmul.f32.gmra.mxu0 %v4658
        %v4719 = vpop.f32.mrf.mxu0
        %v4720 = vadd.f32 %v4691, %v4719
        %4721 = vdwg.mxu0
        %4722 = vmatpush.msra.mxu0 %v4525
        %4723 = vmatpush.msra.mxu0 %v4523
        %4724 = vmatpush.msra.mxu0 %v4521
        %4725 = vmatpush.msra.mxu0 %v4519
        %4726 = vmatpush.msra.mxu0 %v4517
        %4727 = vmatpush.msra.mxu0 %v4515
        %4728 = vmatpush.msra.mxu0 %v4513
        %4729 = vmatpush.msra.mxu0 %v4511
        %4730 = vmatpush.msra.mxu0 %v4509
        %4731 = vmatpush.msra.mxu0 %v4507
        %4732 = vmatpush.msra.mxu0 %v4505
        %4733 = vmatpush.msra.mxu0 %v4503
        %4734 = vmatpush.msra.mxu0 %v4501
        %4735 = vmatpush.msra.mxu0 %v4499
        %4736 = vmatpush.msra.mxu0 %v4497
        %4737 = vmatpush.msra.mxu0 %v4495
        %4738 = vmatmul.f32.gmra.mxu0 %v4651
        %v4739 = vpop.f32.mrf.mxu0
        %v4740 = vadd.f32 %v4661, %v4739
        %4741 = vmatmul.f32.gmra.mxu0 %v4653
        %v4742 = vpop.f32.mrf.mxu0
        %v4743 = vadd.f32 %v4661, %v4742
        %4744 = vmatmul.f32.gmra.mxu0 %v4655
        %v4745 = vpop.f32.mrf.mxu0
        %v4746 = vadd.f32 %v4661, %v4745
        %4747 = vmatmul.f32.gmra.mxu0 %v4657
        %v4748 = vpop.f32.mrf.mxu0
        %v4749 = vadd.f32 %v4661, %v4748
        %4750 = vdwg.mxu0
        %4751 = vmatpush.msra.mxu0 %v4557
        %4752 = vmatpush.msra.mxu0 %v4555
        %4753 = vmatpush.msra.mxu0 %v4553
        %4754 = vmatpush.msra.mxu0 %v4551
        %4755 = vmatpush.msra.mxu0 %v4549
        %4756 = vmatpush.msra.mxu0 %v4547
        %4757 = vmatpush.msra.mxu0 %v4545
        %4758 = vmatpush.msra.mxu0 %v4543
        %4759 = vmatpush.msra.mxu0 %v4541
        %4760 = vmatpush.msra.mxu0 %v4539
        %4761 = vmatpush.msra.mxu0 %v4537
        %4762 = vmatpush.msra.mxu0 %v4535
        %4763 = vmatpush.msra.mxu0 %v4533
        %4764 = vmatpush.msra.mxu0 %v4531
        %4765 = vmatpush.msra.mxu0 %v4529
        %4766 = vmatpush.msra.mxu0 %v4527
        %4767 = vmatmul.f32.gmra.mxu0 %v4652
        %v4768 = vpop.f32.mrf.mxu0
        %v4769 = vadd.f32 %v4740, %v4768
        %4770 = vmatmul.f32.gmra.mxu0 %v4654
        %v4771 = vpop.f32.mrf.mxu0
        %v4772 = vadd.f32 %v4743, %v4771
        %4773 = vmatmul.f32.gmra.mxu0 %v4656
        %v4774 = vpop.f32.mrf.mxu0
        %v4775 = vadd.f32 %v4746, %v4774
        %4776 = vmatmul.f32.gmra.mxu0 %v4658
        %v4777 = vpop.f32.mrf.mxu0
        %v4778 = vadd.f32 %v4749, %v4777
        %4779 = vdwg.mxu0
        %v4780 = vmax.f32 %v4711, 0.0
        %v4781 = vmax.f32 %v4769, 0.0
        %v4782 = vmax.f32 %v4714, 0.0
        %v4783 = vmax.f32 %v4772, 0.0
        %v4784 = vmax.f32 %v4717, 0.0
        %v4785 = vmax.f32 %v4775, 0.0
        %v4786 = vmax.f32 %v4720, 0.0
        %v4787 = vmax.f32 %v4778, 0.0
        %4788 = vmatpush.msra.mxu0 %v4591
        %4789 = vmatpush.msra.mxu0 %v4589
        %4790 = vmatpush.msra.mxu0 %v4587
        %4791 = vmatpush.msra.mxu0 %v4585
        %4792 = vmatpush.msra.mxu0 %v4583
        %4793 = vmatpush.msra.mxu0 %v4581
        %4794 = vmatpush.msra.mxu0 %v4579
        %4795 = vmatpush.msra.mxu0 %v4577
        %4796 = vmatpush.msra.mxu0 %v4575
        %4797 = vmatpush.msra.mxu0 %v4573
        %4798 = vmatpush.msra.mxu0 %v4571
        %4799 = vmatpush.msra.mxu0 %v4569
        %4800 = vmatpush.msra.mxu0 %v4567
        %4801 = vmatpush.msra.mxu0 %v4565
        %4802 = vmatpush.msra.mxu0 %v4563
        %4803 = vmatpush.msra.mxu0 %v4561
        %4804 = vmatmul.f32.gmra.mxu0 %v4780
        %v4805 = vpop.f32.mrf.mxu0
        %v4806 = vadd.f32 %v4481, %v4805
        %4807 = vmatmul.f32.gmra.mxu0 %v4782
        %v4808 = vpop.f32.mrf.mxu0
        %v4809 = vadd.f32 %v4483, %v4808
        %4810 = vmatmul.f32.gmra.mxu0 %v4784
        %v4811 = vpop.f32.mrf.mxu0
        %v4812 = vadd.f32 %v4485, %v4811
        %4813 = vmatmul.f32.gmra.mxu0 %v4786
        %v4814 = vpop.f32.mrf.mxu0
        %v4815 = vadd.f32 %v4487, %v4814
        %4816 = vdwg.mxu0
        %4817 = vmatpush.msra.mxu0 %v4623
        %4818 = vmatpush.msra.mxu0 %v4621
        %4819 = vmatpush.msra.mxu0 %v4619
        %4820 = vmatpush.msra.mxu0 %v4617
        %4821 = vmatpush.msra.mxu0 %v4615
        %4822 = vmatpush.msra.mxu0 %v4613
        %4823 = vmatpush.msra.mxu0 %v4611
        %4824 = vmatpush.msra.mxu0 %v4609
        %4825 = vmatpush.msra.mxu0 %v4607
        %4826 = vmatpush.msra.mxu0 %v4605
        %4827 = vmatpush.msra.mxu0 %v4603
        %4828 = vmatpush.msra.mxu0 %v4601
        %4829 = vmatpush.msra.mxu0 %v4599
        %4830 = vmatpush.msra.mxu0 %v4597
        %4831 = vmatpush.msra.mxu0 %v4595
        %4832 = vmatpush.msra.mxu0 %v4593
        %4833 = vmatmul.f32.gmra.mxu0 %v4781
        %v4834 = vpop.f32.mrf.mxu0
        %v4835 = vadd.f32 %v4806, %v4834
        %4836 = vmatmul.f32.gmra.mxu0 %v4783
        %v4837 = vpop.f32.mrf.mxu0
        %v4838 = vadd.f32 %v4809, %v4837
        %4839 = vmatmul.f32.gmra.mxu0 %v4785
        %v4840 = vpop.f32.mrf.mxu0
        %v4841 = vadd.f32 %v4812, %v4840
        %4842 = vmatmul.f32.gmra.mxu0 %v4787
        %v4843 = vpop.f32.mrf.mxu0
        %v4844 = vadd.f32 %v4815, %v4843
        %4845 = vdwg.mxu0
        %4846 = vmatpush.msra.mxu0 %v4592
        %4847 = vmatpush.msra.mxu0 %v4590
        %4848 = vmatpush.msra.mxu0 %v4588
        %4849 = vmatpush.msra.mxu0 %v4586
        %4850 = vmatpush.msra.mxu0 %v4584
        %4851 = vmatpush.msra.mxu0 %v4582
        %4852 = vmatpush.msra.mxu0 %v4580
        %4853 = vmatpush.msra.mxu0 %v4578
        %4854 = vmatpush.msra.mxu0 %v4576
        %4855 = vmatpush.msra.mxu0 %v4574
        %4856 = vmatpush.msra.mxu0 %v4572
        %4857 = vmatpush.msra.mxu0 %v4570
        %4858 = vmatpush.msra.mxu0 %v4568
        %4859 = vmatpush.msra.mxu0 %v4566
        %4860 = vmatpush.msra.mxu0 %v4564
        %4861 = vmatpush.msra.mxu0 %v4562
        %4862 = vmatmul.f32.gmra.mxu0 %v4780
        %v4863 = vpop.f32.mrf.mxu0
        %v4864 = vadd.f32 %v4482, %v4863
        %4865 = vmatmul.f32.gmra.mxu0 %v4782
        %v4866 = vpop.f32.mrf.mxu0
        %v4867 = vadd.f32 %v4484, %v4866
        %4868 = vmatmul.f32.gmra.mxu0 %v4784
        %v4869 = vpop.f32.mrf.mxu0
        %v4870 = vadd.f32 %v4486, %v4869
        %4871 = vmatmul.f32.gmra.mxu0 %v4786
        %v4872 = vpop.f32.mrf.mxu0
        %v4873 = vadd.f32 %v4488, %v4872
        %4874 = vdwg.mxu0
        %4875 = vmatpush.msra.mxu0 %v4624
        %4876 = vmatpush.msra.mxu0 %v4622
        %4877 = vmatpush.msra.mxu0 %v4620
        %4878 = vmatpush.msra.mxu0 %v4618
        %4879 = vmatpush.msra.mxu0 %v4616
        %4880 = vmatpush.msra.mxu0 %v4614
        %4881 = vmatpush.msra.mxu0 %v4612
        %4882 = vmatpush.msra.mxu0 %v4610
        %4883 = vmatpush.msra.mxu0 %v4608
        %4884 = vmatpush.msra.mxu0 %v4606
        %4885 = vmatpush.msra.mxu0 %v4604
        %4886 = vmatpush.msra.mxu0 %v4602
        %4887 = vmatpush.msra.mxu0 %v4600
        %4888 = vmatpush.msra.mxu0 %v4598
        %4889 = vmatpush.msra.mxu0 %v4596
        %4890 = vmatpush.msra.mxu0 %v4594
        %4891 = vmatmul.f32.gmra.mxu0 %v4781
        %v4892 = vpop.f32.mrf.mxu0
        %v4893 = vadd.f32 %v4864, %v4892
        %4894 = vmatmul.f32.gmra.mxu0 %v4783
        %v4895 = vpop.f32.mrf.mxu0
        %v4896 = vadd.f32 %v4867, %v4895
        %4897 = vmatmul.f32.gmra.mxu0 %v4785
        %v4898 = vpop.f32.mrf.mxu0
        %v4899 = vadd.f32 %v4870, %v4898
        %4900 = vmatmul.f32.gmra.mxu0 %v4787
        %v4901 = vpop.f32.mrf.mxu0
        %v4902 = vadd.f32 %v4873, %v4901
        %4903 = vdwg.mxu0
        %v4904 = vmax.f32 %v4835, 0.0
        %v4905 = vmax.f32 %v4893, 0.0
        %v4906 = vmax.f32 %v4838, 0.0
        %v4907 = vmax.f32 %v4896, 0.0
        %v4908 = vmax.f32 %v4841, 0.0
        %v4909 = vmax.f32 %v4899, 0.0
        %v4910 = vmax.f32 %v4844, 0.0
        %v4911 = vmax.f32 %v4902, 0.0
        %s4912 = scalar_lea.vmem [#allocation32], 10
        %v4913 = vld [vmem:[%s4912] sm:$0x3]
        %s4914 = scalar_lea.vmem [#allocation34], 10
        %v4915 = vld [vmem:[%s4914] sm:$0x3]
        %s4916 = scalar_lea.vmem [#allocation35], 2560
        %v4917 = vld [vmem:[%s4916] sm:$0xff]
        %v4918 = vld [vmem:[%s4916 + $0x8] sm:$0xff]
        %v4919 = vld [vmem:[%s4916 + $0x10] sm:$0xff]
        %v4920 = vld [vmem:[%s4916 + $0x18] sm:$0xff]
        %v4921 = vld [vmem:[%s4916 + $0x20] sm:$0xff]
        %v4922 = vld [vmem:[%s4916 + $0x28] sm:$0xff]
        %v4923 = vld [vmem:[%s4916 + $0x30] sm:$0xff]
        %v4924 = vld [vmem:[%s4916 + $0x38] sm:$0xff]
        %v4925 = vld [vmem:[%s4916 + $0x40] sm:$0xff]
        %v4926 = vld [vmem:[%s4916 + $0x48] sm:$0xff]
        %v4927 = vld [vmem:[%s4916 + $0x50] sm:$0xff]
        %v4928 = vld [vmem:[%s4916 + $0x58] sm:$0xff]
        %v4929 = vld [vmem:[%s4916 + $0x60] sm:$0xff]
        %v4930 = vld [vmem:[%s4916 + $0x68] sm:$0xff]
        %v4931 = vld [vmem:[%s4916 + $0x70] sm:$0xff]
        %v4932 = vld [vmem:[%s4916 + $0x78] sm:$0xff]
        %v4933 = vld [vmem:[%s4916 + $0x80] sm:$0xff]
        %v4934 = vld [vmem:[%s4916 + $0x88] sm:$0xff]
        %v4935 = vld [vmem:[%s4916 + $0x90] sm:$0xff]
        %v4936 = vld [vmem:[%s4916 + $0x98] sm:$0xff]
        %v4937 = vld [vmem:[%s4916 + $0xa0] sm:$0xff]
        %v4938 = vld [vmem:[%s4916 + $0xa8] sm:$0xff]
        %v4939 = vld [vmem:[%s4916 + $0xb0] sm:$0xff]
        %v4940 = vld [vmem:[%s4916 + $0xb8] sm:$0xff]
        %v4941 = vld [vmem:[%s4916 + $0xc0] sm:$0xff]
        %v4942 = vld [vmem:[%s4916 + $0xc8] sm:$0xff]
        %v4943 = vld [vmem:[%s4916 + $0xd0] sm:$0xff]
        %v4944 = vld [vmem:[%s4916 + $0xd8] sm:$0xff]
        %v4945 = vld [vmem:[%s4916 + $0xe0] sm:$0xff]
        %v4946 = vld [vmem:[%s4916 + $0xe8] sm:$0xff]
        %v4947 = vld [vmem:[%s4916 + $0xf0] sm:$0xff]
        %v4948 = vld [vmem:[%s4916 + $0xf8] sm:$0xff]
        %v4949 = vld [vmem:[%s4916 + $0x100] sm:$0xff]
        %v4950 = vld [vmem:[%s4916 + $0x108] sm:$0xff]
        %v4951 = vld [vmem:[%s4916 + $0x110] sm:$0xff]
        %v4952 = vld [vmem:[%s4916 + $0x118] sm:$0xff]
        %v4953 = vld [vmem:[%s4916 + $0x120] sm:$0xff]
        %v4954 = vld [vmem:[%s4916 + $0x128] sm:$0xff]
        %v4955 = vld [vmem:[%s4916 + $0x130] sm:$0xff]
        %v4956 = vld [vmem:[%s4916 + $0x138] sm:$0xff]
        %v4957 = vld [vmem:[%s4916 + $0x140] sm:$0xff]
        %v4958 = vld [vmem:[%s4916 + $0x148] sm:$0xff]
        %v4959 = vld [vmem:[%s4916 + $0x150] sm:$0xff]
        %v4960 = vld [vmem:[%s4916 + $0x158] sm:$0xff]
        %v4961 = vld [vmem:[%s4916 + $0x160] sm:$0xff]
        %v4962 = vld [vmem:[%s4916 + $0x168] sm:$0xff]
        %v4963 = vld [vmem:[%s4916 + $0x170] sm:$0xff]
        %v4964 = vld [vmem:[%s4916 + $0x178] sm:$0xff]
        %v4965 = vld [vmem:[%s4916 + $0x180] sm:$0xff]
        %v4966 = vld [vmem:[%s4916 + $0x188] sm:$0xff]
        %v4967 = vld [vmem:[%s4916 + $0x190] sm:$0xff]
        %v4968 = vld [vmem:[%s4916 + $0x198] sm:$0xff]
        %v4969 = vld [vmem:[%s4916 + $0x1a0] sm:$0xff]
        %v4970 = vld [vmem:[%s4916 + $0x1a8] sm:$0xff]
        %v4971 = vld [vmem:[%s4916 + $0x1b0] sm:$0xff]
        %v4972 = vld [vmem:[%s4916 + $0x1b8] sm:$0xff]
        %v4973 = vld [vmem:[%s4916 + $0x1c0] sm:$0xff]
        %v4974 = vld [vmem:[%s4916 + $0x1c8] sm:$0xff]
        %v4975 = vld [vmem:[%s4916 + $0x1d0] sm:$0xff]
        %v4976 = vld [vmem:[%s4916 + $0x1d8] sm:$0xff]
        %v4977 = vld [vmem:[%s4916 + $0x1e0] sm:$0xff]
        %v4978 = vld [vmem:[%s4916 + $0x1e8] sm:$0xff]
        %v4979 = vld [vmem:[%s4916 + $0x1f0] sm:$0xff]
        %v4980 = vld [vmem:[%s4916 + $0x1f8] sm:$0xff]
        %s4981 = scalar_lea.vmem [#allocation37], 10
        %v4982 = vld [vmem:[%s4981] sm:$0x3]
        %s4983 = scalar_lea.vmem [#allocation38], 2560
        %v4984 = vld [vmem:[%s4983] sm:$0xff]
        %v4985 = vld [vmem:[%s4983 + $0x8] sm:$0xff]
        %v4986 = vld [vmem:[%s4983 + $0x10] sm:$0xff]
        %v4987 = vld [vmem:[%s4983 + $0x18] sm:$0xff]
        %v4988 = vld [vmem:[%s4983 + $0x20] sm:$0xff]
        %v4989 = vld [vmem:[%s4983 + $0x28] sm:$0xff]
        %v4990 = vld [vmem:[%s4983 + $0x30] sm:$0xff]
        %v4991 = vld [vmem:[%s4983 + $0x38] sm:$0xff]
        %v4992 = vld [vmem:[%s4983 + $0x40] sm:$0xff]
        %v4993 = vld [vmem:[%s4983 + $0x48] sm:$0xff]
        %v4994 = vld [vmem:[%s4983 + $0x50] sm:$0xff]
        %v4995 = vld [vmem:[%s4983 + $0x58] sm:$0xff]
        %v4996 = vld [vmem:[%s4983 + $0x60] sm:$0xff]
        %v4997 = vld [vmem:[%s4983 + $0x68] sm:$0xff]
        %v4998 = vld [vmem:[%s4983 + $0x70] sm:$0xff]
        %v4999 = vld [vmem:[%s4983 + $0x78] sm:$0xff]
        %v5000 = vld [vmem:[%s4983 + $0x80] sm:$0xff]
        %v5001 = vld [vmem:[%s4983 + $0x88] sm:$0xff]
        %v5002 = vld [vmem:[%s4983 + $0x90] sm:$0xff]
        %v5003 = vld [vmem:[%s4983 + $0x98] sm:$0xff]
        %v5004 = vld [vmem:[%s4983 + $0xa0] sm:$0xff]
        %v5005 = vld [vmem:[%s4983 + $0xa8] sm:$0xff]
        %v5006 = vld [vmem:[%s4983 + $0xb0] sm:$0xff]
        %v5007 = vld [vmem:[%s4983 + $0xb8] sm:$0xff]
        %v5008 = vld [vmem:[%s4983 + $0xc0] sm:$0xff]
        %v5009 = vld [vmem:[%s4983 + $0xc8] sm:$0xff]
        %v5010 = vld [vmem:[%s4983 + $0xd0] sm:$0xff]
        %v5011 = vld [vmem:[%s4983 + $0xd8] sm:$0xff]
        %v5012 = vld [vmem:[%s4983 + $0xe0] sm:$0xff]
        %v5013 = vld [vmem:[%s4983 + $0xe8] sm:$0xff]
        %v5014 = vld [vmem:[%s4983 + $0xf0] sm:$0xff]
        %v5015 = vld [vmem:[%s4983 + $0xf8] sm:$0xff]
        %v5016 = vld [vmem:[%s4983 + $0x100] sm:$0xff]
        %v5017 = vld [vmem:[%s4983 + $0x108] sm:$0xff]
        %v5018 = vld [vmem:[%s4983 + $0x110] sm:$0xff]
        %v5019 = vld [vmem:[%s4983 + $0x118] sm:$0xff]
        %v5020 = vld [vmem:[%s4983 + $0x120] sm:$0xff]
        %v5021 = vld [vmem:[%s4983 + $0x128] sm:$0xff]
        %v5022 = vld [vmem:[%s4983 + $0x130] sm:$0xff]
        %v5023 = vld [vmem:[%s4983 + $0x138] sm:$0xff]
        %v5024 = vld [vmem:[%s4983 + $0x140] sm:$0xff]
        %v5025 = vld [vmem:[%s4983 + $0x148] sm:$0xff]
        %v5026 = vld [vmem:[%s4983 + $0x150] sm:$0xff]
        %v5027 = vld [vmem:[%s4983 + $0x158] sm:$0xff]
        %v5028 = vld [vmem:[%s4983 + $0x160] sm:$0xff]
        %v5029 = vld [vmem:[%s4983 + $0x168] sm:$0xff]
        %v5030 = vld [vmem:[%s4983 + $0x170] sm:$0xff]
        %v5031 = vld [vmem:[%s4983 + $0x178] sm:$0xff]
        %v5032 = vld [vmem:[%s4983 + $0x180] sm:$0xff]
        %v5033 = vld [vmem:[%s4983 + $0x188] sm:$0xff]
        %v5034 = vld [vmem:[%s4983 + $0x190] sm:$0xff]
        %v5035 = vld [vmem:[%s4983 + $0x198] sm:$0xff]
        %v5036 = vld [vmem:[%s4983 + $0x1a0] sm:$0xff]
        %v5037 = vld [vmem:[%s4983 + $0x1a8] sm:$0xff]
        %v5038 = vld [vmem:[%s4983 + $0x1b0] sm:$0xff]
        %v5039 = vld [vmem:[%s4983 + $0x1b8] sm:$0xff]
        %v5040 = vld [vmem:[%s4983 + $0x1c0] sm:$0xff]
        %v5041 = vld [vmem:[%s4983 + $0x1c8] sm:$0xff]
        %v5042 = vld [vmem:[%s4983 + $0x1d0] sm:$0xff]
        %v5043 = vld [vmem:[%s4983 + $0x1d8] sm:$0xff]
        %v5044 = vld [vmem:[%s4983 + $0x1e0] sm:$0xff]
        %v5045 = vld [vmem:[%s4983 + $0x1e8] sm:$0xff]
        %v5046 = vld [vmem:[%s4983 + $0x1f0] sm:$0xff]
        %v5047 = vld [vmem:[%s4983 + $0x1f8] sm:$0xff]
        %v5049 = vperm.slane %v4913, 0
        %v5050 = vperm.slane %v4913, 1
        %v5053 = vmul.f32 %v4904, %v5049
        %v5054 = vmul.f32 %v4905, %v5050
        %v5055 = vmul.f32 %v4906, %v5049
        %v5056 = vmul.f32 %v4907, %v5050
        %v5057 = vmul.f32 %v4908, %v5049
        %v5058 = vmul.f32 %v4909, %v5050
        %v5059 = vmul.f32 %v4910, %v5049
        %v5060 = vmul.f32 %v4911, %v5050
        %v5062 = vperm.slane %v4915, 0
        %v5063 = vperm.slane %v4915, 1
        %v5066 = vadd.f32 %v5053, %v5062
        %v5067 = vadd.f32 %v5054, %v5063
        %v5068 = vadd.f32 %v5055, %v5062
        %v5069 = vadd.f32 %v5056, %v5063
        %v5070 = vadd.f32 %v5057, %v5062
        %v5071 = vadd.f32 %v5058, %v5063
        %v5072 = vadd.f32 %v5059, %v5062
        %v5073 = vadd.f32 %v5060, %v5063
        %v5074 = vmax.f32 %v5066, 0.0
        %v5075 = vmax.f32 %v5067, 0.0
        %v5076 = vmax.f32 %v5068, 0.0
        %v5077 = vmax.f32 %v5069, 0.0
        %v5078 = vmax.f32 %v5070, 0.0
        %v5079 = vmax.f32 %v5071, 0.0
        %v5080 = vmax.f32 %v5072, 0.0
        %v5081 = vmax.f32 %v5073, 0.0
        %v5083 = vperm.slane %v4982, 0
        %v5084 = vperm.slane %v4982, 1
        %5087 = vmatpush.msra.mxu0 %v4947
        %5088 = vmatpush.msra.mxu0 %v4945
        %5089 = vmatpush.msra.mxu0 %v4943
        %5090 = vmatpush.msra.mxu0 %v4941
        %5091 = vmatpush.msra.mxu0 %v4939
        %5092 = vmatpush.msra.mxu0 %v4937
        %5093 = vmatpush.msra.mxu0 %v4935
        %5094 = vmatpush.msra.mxu0 %v4933
        %5095 = vmatpush.msra.mxu0 %v4931
        %5096 = vmatpush.msra.mxu0 %v4929
        %5097 = vmatpush.msra.mxu0 %v4927
        %5098 = vmatpush.msra.mxu0 %v4925
        %5099 = vmatpush.msra.mxu0 %v4923
        %5100 = vmatpush.msra.mxu0 %v4921
        %5101 = vmatpush.msra.mxu0 %v4919
        %5102 = vmatpush.msra.mxu0 %v4917
        %5103 = vmatmul.f32.gmra.mxu0 %v5074
        %v5104 = vpop.f32.mrf.mxu0
        %v5105 = vadd.f32 %v5083, %v5104
        %5106 = vmatmul.f32.gmra.mxu0 %v5076
        %v5107 = vpop.f32.mrf.mxu0
        %v5108 = vadd.f32 %v5083, %v5107
        %5109 = vmatmul.f32.gmra.mxu0 %v5078
        %v5110 = vpop.f32.mrf.mxu0
        %v5111 = vadd.f32 %v5083, %v5110
        %5112 = vmatmul.f32.gmra.mxu0 %v5080
        %v5113 = vpop.f32.mrf.mxu0
        %v5114 = vadd.f32 %v5083, %v5113
        %5115 = vdwg.mxu0
        %5116 = vmatpush.msra.mxu0 %v4979
        %5117 = vmatpush.msra.mxu0 %v4977
        %5118 = vmatpush.msra.mxu0 %v4975
        %5119 = vmatpush.msra.mxu0 %v4973
        %5120 = vmatpush.msra.mxu0 %v4971
        %5121 = vmatpush.msra.mxu0 %v4969
        %5122 = vmatpush.msra.mxu0 %v4967
        %5123 = vmatpush.msra.mxu0 %v4965
        %5124 = vmatpush.msra.mxu0 %v4963
        %5125 = vmatpush.msra.mxu0 %v4961
        %5126 = vmatpush.msra.mxu0 %v4959
        %5127 = vmatpush.msra.mxu0 %v4957
        %5128 = vmatpush.msra.mxu0 %v4955
        %5129 = vmatpush.msra.mxu0 %v4953
        %5130 = vmatpush.msra.mxu0 %v4951
        %5131 = vmatpush.msra.mxu0 %v4949
        %5132 = vmatmul.f32.gmra.mxu0 %v5075
        %v5133 = vpop.f32.mrf.mxu0
        %v5134 = vadd.f32 %v5105, %v5133
        %5135 = vmatmul.f32.gmra.mxu0 %v5077
        %v5136 = vpop.f32.mrf.mxu0
        %v5137 = vadd.f32 %v5108, %v5136
        %5138 = vmatmul.f32.gmra.mxu0 %v5079
        %v5139 = vpop.f32.mrf.mxu0
        %v5140 = vadd.f32 %v5111, %v5139
        %5141 = vmatmul.f32.gmra.mxu0 %v5081
        %v5142 = vpop.f32.mrf.mxu0
        %v5143 = vadd.f32 %v5114, %v5142
        %5144 = vdwg.mxu0
        %5145 = vmatpush.msra.mxu0 %v4948
        %5146 = vmatpush.msra.mxu0 %v4946
        %5147 = vmatpush.msra.mxu0 %v4944
        %5148 = vmatpush.msra.mxu0 %v4942
        %5149 = vmatpush.msra.mxu0 %v4940
        %5150 = vmatpush.msra.mxu0 %v4938
        %5151 = vmatpush.msra.mxu0 %v4936
        %5152 = vmatpush.msra.mxu0 %v4934
        %5153 = vmatpush.msra.mxu0 %v4932
        %5154 = vmatpush.msra.mxu0 %v4930
        %5155 = vmatpush.msra.mxu0 %v4928
        %5156 = vmatpush.msra.mxu0 %v4926
        %5157 = vmatpush.msra.mxu0 %v4924
        %5158 = vmatpush.msra.mxu0 %v4922
        %5159 = vmatpush.msra.mxu0 %v4920
        %5160 = vmatpush.msra.mxu0 %v4918
        %5161 = vmatmul.f32.gmra.mxu0 %v5074
        %v5162 = vpop.f32.mrf.mxu0
        %v5163 = vadd.f32 %v5084, %v5162
        %5164 = vmatmul.f32.gmra.mxu0 %v5076
        %v5165 = vpop.f32.mrf.mxu0
        %v5166 = vadd.f32 %v5084, %v5165
        %5167 = vmatmul.f32.gmra.mxu0 %v5078
        %v5168 = vpop.f32.mrf.mxu0
        %v5169 = vadd.f32 %v5084, %v5168
        %5170 = vmatmul.f32.gmra.mxu0 %v5080
        %v5171 = vpop.f32.mrf.mxu0
        %v5172 = vadd.f32 %v5084, %v5171
        %5173 = vdwg.mxu0
        %5174 = vmatpush.msra.mxu0 %v4980
        %5175 = vmatpush.msra.mxu0 %v4978
        %5176 = vmatpush.msra.mxu0 %v4976
        %5177 = vmatpush.msra.mxu0 %v4974
        %5178 = vmatpush.msra.mxu0 %v4972
        %5179 = vmatpush.msra.mxu0 %v4970
        %5180 = vmatpush.msra.mxu0 %v4968
        %5181 = vmatpush.msra.mxu0 %v4966
        %5182 = vmatpush.msra.mxu0 %v4964
        %5183 = vmatpush.msra.mxu0 %v4962
        %5184 = vmatpush.msra.mxu0 %v4960
        %5185 = vmatpush.msra.mxu0 %v4958
        %5186 = vmatpush.msra.mxu0 %v4956
        %5187 = vmatpush.msra.mxu0 %v4954
        %5188 = vmatpush.msra.mxu0 %v4952
        %5189 = vmatpush.msra.mxu0 %v4950
        %5190 = vmatmul.f32.gmra.mxu0 %v5075
        %v5191 = vpop.f32.mrf.mxu0
        %v5192 = vadd.f32 %v5163, %v5191
        %5193 = vmatmul.f32.gmra.mxu0 %v5077
        %v5194 = vpop.f32.mrf.mxu0
        %v5195 = vadd.f32 %v5166, %v5194
        %5196 = vmatmul.f32.gmra.mxu0 %v5079
        %v5197 = vpop.f32.mrf.mxu0
        %v5198 = vadd.f32 %v5169, %v5197
        %5199 = vmatmul.f32.gmra.mxu0 %v5081
        %v5200 = vpop.f32.mrf.mxu0
        %v5201 = vadd.f32 %v5172, %v5200
        %5202 = vdwg.mxu0
        %v5203 = vmax.f32 %v5134, 0.0
        %v5204 = vmax.f32 %v5192, 0.0
        %v5205 = vmax.f32 %v5137, 0.0
        %v5206 = vmax.f32 %v5195, 0.0
        %v5207 = vmax.f32 %v5140, 0.0
        %v5208 = vmax.f32 %v5198, 0.0
        %v5209 = vmax.f32 %v5143, 0.0
        %v5210 = vmax.f32 %v5201, 0.0
        %5211 = vmatpush.msra.mxu0 %v5014
        %5212 = vmatpush.msra.mxu0 %v5012
        %5213 = vmatpush.msra.mxu0 %v5010
        %5214 = vmatpush.msra.mxu0 %v5008
        %5215 = vmatpush.msra.mxu0 %v5006
        %5216 = vmatpush.msra.mxu0 %v5004
        %5217 = vmatpush.msra.mxu0 %v5002
        %5218 = vmatpush.msra.mxu0 %v5000
        %5219 = vmatpush.msra.mxu0 %v4998
        %5220 = vmatpush.msra.mxu0 %v4996
        %5221 = vmatpush.msra.mxu0 %v4994
        %5222 = vmatpush.msra.mxu0 %v4992
        %5223 = vmatpush.msra.mxu0 %v4990
        %5224 = vmatpush.msra.mxu0 %v4988
        %5225 = vmatpush.msra.mxu0 %v4986
        %5226 = vmatpush.msra.mxu0 %v4984
        %5227 = vmatmul.f32.gmra.mxu0 %v5203
        %v5228 = vpop.f32.mrf.mxu0
        %v5229 = vadd.f32 %v4904, %v5228
        %5230 = vmatmul.f32.gmra.mxu0 %v5205
        %v5231 = vpop.f32.mrf.mxu0
        %v5232 = vadd.f32 %v4906, %v5231
        %5233 = vmatmul.f32.gmra.mxu0 %v5207
        %v5234 = vpop.f32.mrf.mxu0
        %v5235 = vadd.f32 %v4908, %v5234
        %5236 = vmatmul.f32.gmra.mxu0 %v5209
        %v5237 = vpop.f32.mrf.mxu0
        %v5238 = vadd.f32 %v4910, %v5237
        %5239 = vdwg.mxu0
        %5240 = vmatpush.msra.mxu0 %v5046
        %5241 = vmatpush.msra.mxu0 %v5044
        %5242 = vmatpush.msra.mxu0 %v5042
        %5243 = vmatpush.msra.mxu0 %v5040
        %5244 = vmatpush.msra.mxu0 %v5038
        %5245 = vmatpush.msra.mxu0 %v5036
        %5246 = vmatpush.msra.mxu0 %v5034
        %5247 = vmatpush.msra.mxu0 %v5032
        %5248 = vmatpush.msra.mxu0 %v5030
        %5249 = vmatpush.msra.mxu0 %v5028
        %5250 = vmatpush.msra.mxu0 %v5026
        %5251 = vmatpush.msra.mxu0 %v5024
        %5252 = vmatpush.msra.mxu0 %v5022
        %5253 = vmatpush.msra.mxu0 %v5020
        %5254 = vmatpush.msra.mxu0 %v5018
        %5255 = vmatpush.msra.mxu0 %v5016
        %5256 = vmatmul.f32.gmra.mxu0 %v5204
        %v5257 = vpop.f32.mrf.mxu0
        %v5258 = vadd.f32 %v5229, %v5257
        %5259 = vmatmul.f32.gmra.mxu0 %v5206
        %v5260 = vpop.f32.mrf.mxu0
        %v5261 = vadd.f32 %v5232, %v5260
        %5262 = vmatmul.f32.gmra.mxu0 %v5208
        %v5263 = vpop.f32.mrf.mxu0
        %v5264 = vadd.f32 %v5235, %v5263
        %5265 = vmatmul.f32.gmra.mxu0 %v5210
        %v5266 = vpop.f32.mrf.mxu0
        %v5267 = vadd.f32 %v5238, %v5266
        %5268 = vdwg.mxu0
        %5269 = vmatpush.msra.mxu0 %v5015
        %5270 = vmatpush.msra.mxu0 %v5013
        %5271 = vmatpush.msra.mxu0 %v5011
        %5272 = vmatpush.msra.mxu0 %v5009
        %5273 = vmatpush.msra.mxu0 %v5007
        %5274 = vmatpush.msra.mxu0 %v5005
        %5275 = vmatpush.msra.mxu0 %v5003
        %5276 = vmatpush.msra.mxu0 %v5001
        %5277 = vmatpush.msra.mxu0 %v4999
        %5278 = vmatpush.msra.mxu0 %v4997
        %5279 = vmatpush.msra.mxu0 %v4995
        %5280 = vmatpush.msra.mxu0 %v4993
        %5281 = vmatpush.msra.mxu0 %v4991
        %5282 = vmatpush.msra.mxu0 %v4989
        %5283 = vmatpush.msra.mxu0 %v4987
        %5284 = vmatpush.msra.mxu0 %v4985
        %5285 = vmatmul.f32.gmra.mxu0 %v5203
        %v5286 = vpop.f32.mrf.mxu0
        %v5287 = vadd.f32 %v4905, %v5286
        %5288 = vmatmul.f32.gmra.mxu0 %v5205
        %v5289 = vpop.f32.mrf.mxu0
        %v5290 = vadd.f32 %v4907, %v5289
        %5291 = vmatmul.f32.gmra.mxu0 %v5207
        %v5292 = vpop.f32.mrf.mxu0
        %v5293 = vadd.f32 %v4909, %v5292
        %5294 = vmatmul.f32.gmra.mxu0 %v5209
        %v5295 = vpop.f32.mrf.mxu0
        %v5296 = vadd.f32 %v4911, %v5295
        %5297 = vdwg.mxu0
        %5298 = vmatpush.msra.mxu0 %v5047
        %5299 = vmatpush.msra.mxu0 %v5045
        %5300 = vmatpush.msra.mxu0 %v5043
        %5301 = vmatpush.msra.mxu0 %v5041
        %5302 = vmatpush.msra.mxu0 %v5039
        %5303 = vmatpush.msra.mxu0 %v5037
        %5304 = vmatpush.msra.mxu0 %v5035
        %5305 = vmatpush.msra.mxu0 %v5033
        %5306 = vmatpush.msra.mxu0 %v5031
        %5307 = vmatpush.msra.mxu0 %v5029
        %5308 = vmatpush.msra.mxu0 %v5027
        %5309 = vmatpush.msra.mxu0 %v5025
        %5310 = vmatpush.msra.mxu0 %v5023
        %5311 = vmatpush.msra.mxu0 %v5021
        %5312 = vmatpush.msra.mxu0 %v5019
        %5313 = vmatpush.msra.mxu0 %v5017
        %5314 = vmatmul.f32.gmra.mxu0 %v5204
        %v5315 = vpop.f32.mrf.mxu0
        %v5316 = vadd.f32 %v5287, %v5315
        %5317 = vmatmul.f32.gmra.mxu0 %v5206
        %v5318 = vpop.f32.mrf.mxu0
        %v5319 = vadd.f32 %v5290, %v5318
        %5320 = vmatmul.f32.gmra.mxu0 %v5208
        %v5321 = vpop.f32.mrf.mxu0
        %v5322 = vadd.f32 %v5293, %v5321
        %5323 = vmatmul.f32.gmra.mxu0 %v5210
        %v5324 = vpop.f32.mrf.mxu0
        %v5325 = vadd.f32 %v5296, %v5324
        %5326 = vdwg.mxu0
        %v5327 = vmax.f32 %v5258, 0.0
        %v5328 = vmax.f32 %v5316, 0.0
        %v5329 = vmax.f32 %v5261, 0.0
        %v5330 = vmax.f32 %v5319, 0.0
        %v5331 = vmax.f32 %v5264, 0.0
        %v5332 = vmax.f32 %v5322, 0.0
        %v5333 = vmax.f32 %v5267, 0.0
        %v5334 = vmax.f32 %v5325, 0.0
        %s5335 = scalar_lea.vmem [#allocation40], 2
        %v5336 = vld [vmem:[%s5335] sm:$0x3]
        %v5338 = vperm.slane %v5336, 0
        %v5339 = vperm.slane %v5336, 1
        %v5342 = vmul.f32 %v5327, %v5338
        %v5343 = vmul.f32 %v5328, %v5339
        %v5344 = vmul.f32 %v5329, %v5338
        %v5345 = vmul.f32 %v5330, %v5339
        %v5346 = vmul.f32 %v5331, %v5338
        %v5347 = vmul.f32 %v5332, %v5339
        %v5348 = vmul.f32 %v5333, %v5338
        %v5349 = vmul.f32 %v5334, %v5339
        %s5350 = scalar_lea.vmem [#allocation41], 2
        %v5351 = vld [vmem:[%s5350] sm:$0x3]
        %v5353 = vperm.slane %v5351, 0
        %v5354 = vperm.slane %v5351, 1
        %v5357 = vadd.f32 %v5342, %v5353
        %v5358 = vadd.f32 %v5343, %v5354
        %v5359 = vadd.f32 %v5344, %v5353
        %v5360 = vadd.f32 %v5345, %v5354
        %v5361 = vadd.f32 %v5346, %v5353
        %v5362 = vadd.f32 %v5347, %v5354
        %v5363 = vadd.f32 %v5348, %v5353
        %v5364 = vadd.f32 %v5349, %v5354
        %v5365 = vmax.f32 %v5357, 0.0
        %v5366 = vmax.f32 %v5358, 0.0
        %v5367 = vmax.f32 %v5359, 0.0
        %v5368 = vmax.f32 %v5360, 0.0
        %v5369 = vmax.f32 %v5361, 0.0
        %v5370 = vmax.f32 %v5362, 0.0
        %v5371 = vmax.f32 %v5363, 0.0
        %v5372 = vmax.f32 %v5364, 0.0
        %s5373 = scalar_lea.vmem [#allocation43], 256
        %v5374 = vld [vmem:[%s5373] sm:$0xff]
        %v5375 = vld [vmem:[%s5373 + $0x8] sm:$0xff]
        %v5376 = vld [vmem:[%s5373 + $0x10] sm:$0xff]
        %v5377 = vld [vmem:[%s5373 + $0x18] sm:$0xff]
        %v5378 = vld [vmem:[%s5373 + $0x20] sm:$0xff]
        %v5379 = vld [vmem:[%s5373 + $0x28] sm:$0xff]
        %v5380 = vld [vmem:[%s5373 + $0x30] sm:$0xff]
        %v5381 = vld [vmem:[%s5373 + $0x38] sm:$0xff]
        %v5382 = vld [vmem:[%s5373 + $0x40] sm:$0xff]
        %v5383 = vld [vmem:[%s5373 + $0x48] sm:$0xff]
        %v5384 = vld [vmem:[%s5373 + $0x50] sm:$0xff]
        %v5385 = vld [vmem:[%s5373 + $0x58] sm:$0xff]
        %v5386 = vld [vmem:[%s5373 + $0x60] sm:$0xff]
        %v5387 = vld [vmem:[%s5373 + $0x68] sm:$0xff]
        %v5388 = vld [vmem:[%s5373 + $0x70] sm:$0xff]
        %v5389 = vld [vmem:[%s5373 + $0x78] sm:$0xff]
        %v5390 = vld [vmem:[%s5373 + $0x80] sm:$0xff]
        %v5391 = vld [vmem:[%s5373 + $0x88] sm:$0xff]
        %v5392 = vld [vmem:[%s5373 + $0x90] sm:$0xff]
        %v5393 = vld [vmem:[%s5373 + $0x98] sm:$0xff]
        %v5394 = vld [vmem:[%s5373 + $0xa0] sm:$0xff]
        %v5395 = vld [vmem:[%s5373 + $0xa8] sm:$0xff]
        %v5396 = vld [vmem:[%s5373 + $0xb0] sm:$0xff]
        %v5397 = vld [vmem:[%s5373 + $0xb8] sm:$0xff]
        %v5398 = vld [vmem:[%s5373 + $0xc0] sm:$0xff]
        %v5399 = vld [vmem:[%s5373 + $0xc8] sm:$0xff]
        %v5400 = vld [vmem:[%s5373 + $0xd0] sm:$0xff]
        %v5401 = vld [vmem:[%s5373 + $0xd8] sm:$0xff]
        %v5402 = vld [vmem:[%s5373 + $0xe0] sm:$0xff]
        %v5403 = vld [vmem:[%s5373 + $0xe8] sm:$0xff]
        %v5404 = vld [vmem:[%s5373 + $0xf0] sm:$0xff]
        %v5405 = vld [vmem:[%s5373 + $0xf8] sm:$0xff]
        %s5406 = scalar_lea.vmem [#allocation44], 1
        %v5407 = vld [vmem:[%s5406] sm:$0x1]
        %v5409 = vperm.slane %v5407, 0
        %5411 = vmatpush.msra.mxu0 %v5389
        %5412 = vmatpush.msra.mxu0 %v5388
        %5413 = vmatpush.msra.mxu0 %v5387
        %5414 = vmatpush.msra.mxu0 %v5386
        %5415 = vmatpush.msra.mxu0 %v5385
        %5416 = vmatpush.msra.mxu0 %v5384
        %5417 = vmatpush.msra.mxu0 %v5383
        %5418 = vmatpush.msra.mxu0 %v5382
        %5419 = vmatpush.msra.mxu0 %v5381
        %5420 = vmatpush.msra.mxu0 %v5380
        %5421 = vmatpush.msra.mxu0 %v5379
        %5422 = vmatpush.msra.mxu0 %v5378
        %5423 = vmatpush.msra.mxu0 %v5377
        %5424 = vmatpush.msra.mxu0 %v5376
        %5425 = vmatpush.msra.mxu0 %v5375
        %5426 = vmatpush.msra.mxu0 %v5374
        %5427 = vmatmul.f32.gmra.mxu0 %v5365
        %v5428 = vpop.f32.mrf.mxu0
        %v5429 = vadd.f32 %v5409, %v5428
        %5430 = vmatmul.f32.gmra.mxu0 %v5367
        %v5431 = vpop.f32.mrf.mxu0
        %v5432 = vadd.f32 %v5409, %v5431
        %5433 = vmatmul.f32.gmra.mxu0 %v5369
        %v5434 = vpop.f32.mrf.mxu0
        %v5435 = vadd.f32 %v5409, %v5434
        %5436 = vmatmul.f32.gmra.mxu0 %v5371
        %v5437 = vpop.f32.mrf.mxu0
        %v5438 = vadd.f32 %v5409, %v5437
        %5439 = vdwg.mxu0
        %5440 = vmatpush.msra.mxu0 %v5405
        %5441 = vmatpush.msra.mxu0 %v5404
        %5442 = vmatpush.msra.mxu0 %v5403
        %5443 = vmatpush.msra.mxu0 %v5402
        %5444 = vmatpush.msra.mxu0 %v5401
        %5445 = vmatpush.msra.mxu0 %v5400
        %5446 = vmatpush.msra.mxu0 %v5399
        %5447 = vmatpush.msra.mxu0 %v5398
        %5448 = vmatpush.msra.mxu0 %v5397
        %5449 = vmatpush.msra.mxu0 %v5396
        %5450 = vmatpush.msra.mxu0 %v5395
        %5451 = vmatpush.msra.mxu0 %v5394
        %5452 = vmatpush.msra.mxu0 %v5393
        %5453 = vmatpush.msra.mxu0 %v5392
        %5454 = vmatpush.msra.mxu0 %v5391
        %5455 = vmatpush.msra.mxu0 %v5390
        %5456 = vmatmul.f32.gmra.mxu0 %v5366
        %v5457 = vpop.f32.mrf.mxu0
        %v5458 = vadd.f32 %v5429, %v5457
        %5459 = vmatmul.f32.gmra.mxu0 %v5368
        %v5460 = vpop.f32.mrf.mxu0
        %v5461 = vadd.f32 %v5432, %v5460
        %5462 = vmatmul.f32.gmra.mxu0 %v5370
        %v5463 = vpop.f32.mrf.mxu0
        %v5464 = vadd.f32 %v5435, %v5463
        %5465 = vmatmul.f32.gmra.mxu0 %v5372
        %v5466 = vpop.f32.mrf.mxu0
        %v5467 = vadd.f32 %v5438, %v5466
        %5468 = vdwg.mxu0
        %v5469 = vmax.f32 %v5458, 0.0
        %v5470 = vmax.f32 %v5461, 0.0
        %v5471 = vmax.f32 %v5464, 0.0
        %v5472 = vmax.f32 %v5467, 0.0
        %s5473 = scalar_lea.vmem [#allocation46], 1
        %v5474 = vld [vmem:[%s5473] sm:$0x1]
        %v5476 = vperm.slane %v5474, 0
        %v5478 = vmul.f32 %v5469, %v5476
        %v5479 = vmul.f32 %v5470, %v5476
        %v5480 = vmul.f32 %v5471, %v5476
        %v5481 = vmul.f32 %v5472, %v5476
        %s5482 = scalar_lea.vmem [#allocation47], 256
        %v5483 = vld [vmem:[%s5482] sm:$0xff]
        %v5484 = vld [vmem:[%s5482 + $0x8] sm:$0xff]
        %v5485 = vld [vmem:[%s5482 + $0x10] sm:$0xff]
        %v5486 = vld [vmem:[%s5482 + $0x18] sm:$0xff]
        %v5487 = vld [vmem:[%s5482 + $0x20] sm:$0xff]
        %v5488 = vld [vmem:[%s5482 + $0x28] sm:$0xff]
        %v5489 = vld [vmem:[%s5482 + $0x30] sm:$0xff]
        %v5490 = vld [vmem:[%s5482 + $0x38] sm:$0xff]
        %v5491 = vld [vmem:[%s5482 + $0x40] sm:$0xff]
        %v5492 = vld [vmem:[%s5482 + $0x48] sm:$0xff]
        %v5493 = vld [vmem:[%s5482 + $0x50] sm:$0xff]
        %v5494 = vld [vmem:[%s5482 + $0x58] sm:$0xff]
        %v5495 = vld [vmem:[%s5482 + $0x60] sm:$0xff]
        %v5496 = vld [vmem:[%s5482 + $0x68] sm:$0xff]
        %v5497 = vld [vmem:[%s5482 + $0x70] sm:$0xff]
        %v5498 = vld [vmem:[%s5482 + $0x78] sm:$0xff]
        %v5499 = vld [vmem:[%s5482 + $0x80] sm:$0xff]
        %v5500 = vld [vmem:[%s5482 + $0x88] sm:$0xff]
        %v5501 = vld [vmem:[%s5482 + $0x90] sm:$0xff]
        %v5502 = vld [vmem:[%s5482 + $0x98] sm:$0xff]
        %v5503 = vld [vmem:[%s5482 + $0xa0] sm:$0xff]
        %v5504 = vld [vmem:[%s5482 + $0xa8] sm:$0xff]
        %v5505 = vld [vmem:[%s5482 + $0xb0] sm:$0xff]
        %v5506 = vld [vmem:[%s5482 + $0xb8] sm:$0xff]
        %v5507 = vld [vmem:[%s5482 + $0xc0] sm:$0xff]
        %v5508 = vld [vmem:[%s5482 + $0xc8] sm:$0xff]
        %v5509 = vld [vmem:[%s5482 + $0xd0] sm:$0xff]
        %v5510 = vld [vmem:[%s5482 + $0xd8] sm:$0xff]
        %v5511 = vld [vmem:[%s5482 + $0xe0] sm:$0xff]
        %v5512 = vld [vmem:[%s5482 + $0xe8] sm:$0xff]
        %v5513 = vld [vmem:[%s5482 + $0xf0] sm:$0xff]
        %v5514 = vld [vmem:[%s5482 + $0xf8] sm:$0xff]
        %s5515 = scalar_lea.vmem [#allocation49], 1
        %v5516 = vld [vmem:[%s5515] sm:$0x1]
        %v5518 = vperm.slane %v5516, 0
        %5520 = vmatpush.msra.mxu0 %v5498
        %5521 = vmatpush.msra.mxu0 %v5497
        %5522 = vmatpush.msra.mxu0 %v5496
        %5523 = vmatpush.msra.mxu0 %v5495
        %5524 = vmatpush.msra.mxu0 %v5494
        %5525 = vmatpush.msra.mxu0 %v5493
        %5526 = vmatpush.msra.mxu0 %v5492
        %5527 = vmatpush.msra.mxu0 %v5491
        %5528 = vmatpush.msra.mxu0 %v5490
        %5529 = vmatpush.msra.mxu0 %v5489
        %5530 = vmatpush.msra.mxu0 %v5488
        %5531 = vmatpush.msra.mxu0 %v5487
        %5532 = vmatpush.msra.mxu0 %v5486
        %5533 = vmatpush.msra.mxu0 %v5485
        %5534 = vmatpush.msra.mxu0 %v5484
        %5535 = vmatpush.msra.mxu0 %v5483
        %5536 = vmatmul.f32.gmra.mxu0 %v5327
        %v5537 = vpop.f32.mrf.mxu0
        %v5538 = vadd.f32 %v5518, %v5537
        %5539 = vmatmul.f32.gmra.mxu0 %v5329
        %v5540 = vpop.f32.mrf.mxu0
        %v5541 = vadd.f32 %v5518, %v5540
        %5542 = vmatmul.f32.gmra.mxu0 %v5331
        %v5543 = vpop.f32.mrf.mxu0
        %v5544 = vadd.f32 %v5518, %v5543
        %5545 = vmatmul.f32.gmra.mxu0 %v5333
        %v5546 = vpop.f32.mrf.mxu0
        %v5547 = vadd.f32 %v5518, %v5546
        %5548 = vdwg.mxu0
        %5549 = vmatpush.msra.mxu0 %v5514
        %5550 = vmatpush.msra.mxu0 %v5513
        %5551 = vmatpush.msra.mxu0 %v5512
        %5552 = vmatpush.msra.mxu0 %v5511
        %5553 = vmatpush.msra.mxu0 %v5510
        %5554 = vmatpush.msra.mxu0 %v5509
        %5555 = vmatpush.msra.mxu0 %v5508
        %5556 = vmatpush.msra.mxu0 %v5507
        %5557 = vmatpush.msra.mxu0 %v5506
        %5558 = vmatpush.msra.mxu0 %v5505
        %5559 = vmatpush.msra.mxu0 %v5504
        %5560 = vmatpush.msra.mxu0 %v5503
        %5561 = vmatpush.msra.mxu0 %v5502
        %5562 = vmatpush.msra.mxu0 %v5501
        %5563 = vmatpush.msra.mxu0 %v5500
        %5564 = vmatpush.msra.mxu0 %v5499
        %5565 = vmatmul.f32.gmra.mxu0 %v5328
        %v5566 = vpop.f32.mrf.mxu0
        %v5567 = vadd.f32 %v5538, %v5566
        %5568 = vmatmul.f32.gmra.mxu0 %v5330
        %v5569 = vpop.f32.mrf.mxu0
        %v5570 = vadd.f32 %v5541, %v5569
        %5571 = vmatmul.f32.gmra.mxu0 %v5332
        %v5572 = vpop.f32.mrf.mxu0
        %v5573 = vadd.f32 %v5544, %v5572
        %5574 = vmatmul.f32.gmra.mxu0 %v5334
        %v5575 = vpop.f32.mrf.mxu0
        %v5576 = vadd.f32 %v5547, %v5575
        %5577 = vdwg.mxu0
        %v5578 = vadd.f32 %v5478, %v5567
        %v5579 = vadd.f32 %v5479, %v5570
        %v5580 = vadd.f32 %v5480, %v5573
        %v5581 = vadd.f32 %v5481, %v5576
        %v5582 = vadd.f32 %v4062, %v5578
        %v5583 = vadd.f32 %v4063, %v5579
        %v5584 = vadd.f32 %v4064, %v5580
        %v5585 = vadd.f32 %v4065, %v5581
        %5586 = vst [vmem:[%s1470] sm:$0xff] %v5582
        %5587 = vst [vmem:[%s1470 + $0x8] sm:$0xff] %v5583
        %5588 = vst [vmem:[%s1470 + $0x10] sm:$0xff] %v5584
        %5589 = vst [vmem:[%s1470 + $0x18] sm:$0xff] %v5585
        %s5590 = sand.u32 %s780, 1
        %s5591 = scalar_lea.sflag [#allocation4], %s5590
        %s5592 = sand.u32 %s780, 1
        %s5593 = smul.addr %s5592, 32
        %s5594 = scalar_lea.vmem [#allocation50], %s5593
        // Predicated region
        $region273: #{tpu_custom_call.1} parent=147 // pred_check
          %p5595 = pneg %p790
        $region274: #{tpu_custom_call.1} parent=147 // pred_check_branch
          %5597 = sbr.rel (%p5595) target = $region276
        $region275: #{tpu_custom_call.1} parent=147 // pred_region
          %s5598 = smul.u32 4, %s95
          %5600 = vsyncadd %s5591, 0
          %s5601 = smul.addr %s5598, 8
          %s5602 = scalar_lea.hbm %s65, %s5601
          %s5603 = sshll.u32 %s5594, 4
          %s5604 = int_to_ptr.vmem [resolvable:$true] %s5603
          %s5605 = sshll.u32 %s5602, 4
          %s5606 = int_to_ptr.hbm [resolvable:$true] %s5605
          %5611 = dma.vmem_to_hbm [thread:$0]  %s5604, 512, %s5606, %s5591, 128, 128, 8
        $region276: #{tpu_custom_call.1} parent=147 // pred_fallthru
          _
      $region148: #{tpu_custom_call.1} parent=5 // pred_fallthru
        _
      %p5612 = scmp.le.s32.totalorder 2, %s90
      // Predicated region
      $region277: #{tpu_custom_call.1} parent=5 // pred_check
        %p5613 = pneg %p5612
      $region278: #{tpu_custom_call.1} parent=5 // pred_check_branch
        %5615 = sbr.rel (%p5613) target = $region280
      $region279: #{tpu_custom_call.1} parent=5 // pred_region
        %s5616 = ssub.s32 %s90, 2
        // Predicated region
        $region281: #{tpu_custom_call.1} parent=279 // pred_check
          %p5617 = pneg %p796
        $region282: #{tpu_custom_call.1} parent=279 // pred_check_branch
          %5619 = sbr.rel (%p5617) target = $region284
        $region283: #{tpu_custom_call.1} parent=279 // pred_region
          %s5620 = sand.u32 %s781, 1
          %s5621 = scalar_lea.sflag [#allocation4], %s5620
          %s5622 = sand.u32 %s781, 1
          %s5623 = smul.addr %s5622, 32
          %s5624 = scalar_lea.vmem [#allocation50], %s5623
          %5626 = dma.done %s5621, 512
        $region284: #{tpu_custom_call.1} parent=279 // pred_fallthru
          _
      $region280: #{tpu_custom_call.1} parent=5 // pred_fallthru
        _
    $region6: #{tpu_custom_call.1} parent=1 // loop_footer
      %s94 = sadd.s32 1, %s90
    $region7: #{tpu_custom_call.1} parent=1 // loop_footer_branch
      %89 = sbr.rel target = $region3
    $region8: #{tpu_custom_call.1} parent=1 // loop_exit
      _
    %5627 = vsyncpa [#allocation3], 1
    %s5628 = scalar_lea.sflag [#allocation3], 1
    %5629 = vsyncpa %s5628, 1
    %5630 = vsyncpa [#allocation6], 1
    %5631 = vsyncpa [#allocation9], 1
    %5632 = vsyncpa [#allocation12], 1
    %5633 = vsyncpa [#allocation15], 1
    %5634 = vsyncpa [#allocation18], 1
    %5635 = vsyncpa [#allocation21], 1
    %5636 = vsyncpa [#allocation24], 1
    %5637 = vsyncpa [#allocation27], 1
    %5638 = vsyncpa [#allocation30], 1
    %5639 = vsyncpa [#allocation33], 1
    %5640 = vsyncpa [#allocation36], 1
    %5641 = vsyncpa [#allocation39], 1
    %5642 = vsyncpa [#allocation42], 1
    %5643 = vsyncpa [#allocation45], 1
    %5644 = vsyncpa [#allocation48], 1
    %5645 = vsyncpa [#allocation4], 1
    %s5646 = scalar_lea.sflag [#allocation4], 1
    %5647 = vsyncpa %s5646, 1

</llo_original>
